<compile_context>
chip_gen: v7x
topology: tpu7x:2x2x1
jax: 0.10.0
libtpu: 0.0.40
codegen_flags: <defaults>
</compile_context>

<pallas_src>
import jax
import jax.numpy as jnp
from jax.experimental import pallas as pl
from jax.experimental.pallas import tpu as pltpu

CONV_K = 50        # kernel_size=50 (hard-coded in the module)
HID = 100          # conv output channels and fc1 width
HID_P = 128        # lane-padded hidden width
NUM_CLASSES = 10   # output_size
NEG_INF = -1e30    # softmax mask for padded class lanes


def _round_up(x, m):
    return ((x + m - 1) // m) * m


def _dims(seq_len, in_channels):
    l1 = seq_len - CONV_K + 1            # conv1 output length (102 for L=151)
    l2 = l1 - CONV_K + 1                 # conv2 output length (53)
    assert l2 >= 2, "sequence too short for two k=50 convs + pool"
    p = l2 // 2                          # MaxPool1d(2) output length (26)
    n_pairs = (p + 1) // 2               # fc1 K=256 pair count (13)
    p_even = 2 * n_pairs
    l2_rows = _round_up(max(l2, 2 * p_even), 8)      # conv2 rows computed
    l1_rows = _round_up(l2_rows + CONV_K - 1, 8)     # conv1 rows computed
    c_pad = _round_up(max(in_channels, 8), 8)        # padded input channels
    k_raw = CONV_K * c_pad                           # im2col K before lane pad
    k_im = _round_up(k_raw, 128)                     # lane-dense im2col K
    src_rows = l1_rows + CONV_K - 1                  # zero-padded input length
    return dict(l1=l1, l2=l2, p=p, n_pairs=n_pairs, p_even=p_even,
                l2_rows=l2_rows, l1_rows=l1_rows, c_pad=c_pad,
                k_raw=k_raw, k_im=k_im, src_rows=src_rows)


def make_forward(batch, seq_len, in_channels, num_classes=NUM_CLASSES):
    """Builds the fused forward fn for fixed (batch, seq_len, in_channels)."""
    d = _dims(seq_len, in_channels)
    l1_rows, l2_rows = d["l1_rows"], d["l2_rows"]
    n_pairs = d["n_pairs"]
    c_pad, k_raw, k_im, src_rows = d["c_pad"], d["k_raw"], d["k_im"], d["src_rows"]
    n_w2_pairs = CONV_K // 2             # 25 (CONV_K is even)

    # Batch blocking: amortize per-step overhead for big batches, keep an even
    # grid for small ones (v7x two-core sharding).
    if batch % 8 == 0 and batch >= 16:
        tb = 8
    elif batch % 4 == 0 and batch >= 8:
        tb = 4
    elif batch % 2 == 0 and batch >= 4:
        tb = 2
    else:
        tb = 1
    assert batch % tb == 0
    grid = (batch // tb,)

    def kernel(x_ref, w1_ref, b1_ref, w2_ref, b2_ref,
               wf1_ref, bf1_ref, wf2_ref, bf2_ref,
               out_ref, y1_scr):
        for s in range(tb):
            # ---- Conv1d(C, 100, k=50): single lane-dense im2col matmul ----
            y1_scr[...] = (
                jnp.dot(x_ref[s], w1_ref[...],
                        preferred_element_type=jnp.float32)
                + b1_ref[...])

            # ---- Conv1d(100, 100, k=50): 25 paired taps, K=256 ------------
            acc2 = jnp.zeros((l2_rows, HID_P), jnp.float32)
            for j in range(n_w2_pairs):
                a = y1_scr[pl.ds(2 * j, l2_rows), :]
                b = y1_scr[pl.ds(2 * j + 1, l2_rows), :]
                lhs = jnp.concatenate([a, b], axis=-1).astype(jnp.bfloat16)
                acc2 = acc2 + jnp.dot(lhs, w2_ref[j],
                                      preferred_element_type=jnp.float32)
            y2 = acc2 + b2_ref[...]          # registers; Dropout = identity

            # ---- MaxPool1d(2) + Flatten + fc1: K=256 pooled-step pairs ----
            h1 = bf1_ref[...]                                   # (1, 128) f32
            for j in range(n_pairs):
                r0 = y2[4 * j:4 * j + 1, :]
                r1 = y2[4 * j + 1:4 * j + 2, :]
                r2 = y2[4 * j + 2:4 * j + 3, :]
                r3 = y2[4 * j + 3:4 * j + 4, :]
                row = jnp.concatenate(
                    [jnp.maximum(r0, r1), jnp.maximum(r2, r3)], axis=-1)
                h1 = h1 + jnp.dot(row.astype(jnp.bfloat16), wf1_ref[j],
                                  preferred_element_type=jnp.float32)
            h1 = jnp.maximum(h1, 0.0)                           # ReLU

            # ---- fc2 + Softmax(dim=1), exact divide, fp32 logits ----------
            logits = jnp.dot(h1.astype(jnp.bfloat16), wf2_ref[...],
                             preferred_element_type=jnp.float32) + bf2_ref[...]
            m = jnp.max(logits, axis=-1, keepdims=True)
            e = jnp.exp(logits - m)           # padded class lanes -> exp(-1e30)=0
            out_ref[s] = e / jnp.sum(e, axis=-1, keepdims=True)  # lane-dense (1,128)

    fused = pl.pallas_call(
        kernel,
        out_shape=jax.ShapeDtypeStruct((batch, 1, HID_P), jnp.float32),
        grid=grid,
        in_specs=[
            pl.BlockSpec((tb, l1_rows, k_im), lambda b: (b, 0, 0)),          # x im2col
            pl.BlockSpec((k_im, HID_P), lambda b: (0, 0)),                   # w1
            pl.BlockSpec((1, HID_P), lambda b: (0, 0)),                      # b1
            pl.BlockSpec((n_w2_pairs, 2 * HID_P, HID_P), lambda b: (0, 0, 0)),  # w2
            pl.BlockSpec((1, HID_P), lambda b: (0, 0)),                      # b2
            pl.BlockSpec((n_pairs, 2 * HID_P, HID_P), lambda b: (0, 0, 0)),  # wf1
            pl.BlockSpec((1, HID_P), lambda b: (0, 0)),                      # bf1
            pl.BlockSpec((HID_P, HID_P), lambda b: (0, 0)),                  # wf2
            pl.BlockSpec((1, HID_P), lambda b: (0, 0)),                      # bf2
        ],
        out_specs=pl.BlockSpec((tb, 1, HID_P), lambda b: (b, 0, 0)),
        scratch_shapes=[pltpu.VMEM((l1_rows, HID_P), jnp.float32)],          # y1
        compiler_params=pltpu.CompilerParams(
            dimension_semantics=("parallel",)),
    )

    def forward(x, params):
        B, L, C = x.shape
        # Zero-pad (time + channels) and build the lane-dense im2col slab:
        # x_im[b, i, t*c_pad + c] = x[b, i + t, c], padded to k_im lanes.
        x_pad = jnp.pad(x, ((0, 0), (0, src_rows - L), (0, c_pad - C)))
        cols = jnp.stack([x_pad[:, t:t + l1_rows, :] for t in range(CONV_K)],
                         axis=2)                       # (B, l1_rows, K, c_pad)
        x_im = cols.reshape(B, l1_rows, k_raw)
        if k_im > k_raw:
            x_im = jnp.pad(x_im, ((0, 0), (0, 0), (0, k_im - k_raw)))
        x_im = x_im.astype(jnp.bfloat16)
        out = fused(x_im, *params)                     # (B, 1, 128)
        return out[:, 0, :num_classes]

    return forward


def init_params(key, in_channels, seq_len, num_classes=NUM_CLASSES):
    """PyTorch-style uniform init, packed once into the kernel layouts.

    Packed layouts (matmul weights bf16, biases fp32):
      w1  : (k_im, 128)        conv1 im2col weight; row t*c_pad+c, padded rows/cols zero
      w2  : (25, 256, 128)     conv2 tap pairs (rows 0..127 = tap 2j, 128..255 = tap 2j+1)
      wf1 : (n_pairs, 256,128) fc1 pooled-step pairs (time-major flatten)
      wf2 : (128, 128)         fc2; padded class columns zero
      bf2 : (1, 128)           padded class lanes biased to -1e30 (softmax mask)
    """
    d = _dims(seq_len, in_channels)
    c_pad, k_raw, k_im = d["c_pad"], d["k_raw"], d["k_im"]
    p, n_pairs, p_even = d["p"], d["n_pairs"], d["p_even"]

    def uinit(k, shape, fan_in):
        bound = float(fan_in) ** -0.5
        return jax.random.uniform(k, shape, jnp.float32, -bound, bound)

    ks = jax.random.split(key, 8)

    # conv1: torch layout (out=100, in=C, K) -> im2col (k_im, 128)
    w_c1 = uinit(ks[0], (HID, in_channels, CONV_K), in_channels * CONV_K)
    b_c1 = uinit(ks[1], (HID,), in_channels * CONV_K)
    w1_t = jnp.zeros((CONV_K, c_pad, HID_P), jnp.float32)
    w1_t = w1_t.at[:, :in_channels, :HID].set(jnp.transpose(w_c1, (2, 1, 0)))
    w1 = jnp.zeros((k_im, HID_P), jnp.float32).at[:k_raw, :].set(
        w1_t.reshape(k_raw, HID_P))
    b1 = jnp.zeros((1, HID_P), jnp.float32).at[0, :HID].set(b_c1)

    # conv2: torch layout (out=100, in=100, K) -> paired taps (25, 256, 128)
    w_c2 = uinit(ks[2], (HID, HID, CONV_K), HID * CONV_K)
    b_c2 = uinit(ks[3], (HID,), HID * CONV_K)
    w2_t = jnp.zeros((CONV_K, HID_P, HID_P), jnp.float32)
    w2_t = w2_t.at[:, :HID, :HID].set(jnp.transpose(w_c2, (2, 1, 0)))
    w2 = w2_t.reshape(CONV_K // 2, 2 * HID_P, HID_P)
    b2 = jnp.zeros((1, HID_P), jnp.float32).at[0, :HID].set(b_c2)

    # fc1: in_features = 100*p (runtime-derived).  The reference re-randomizes
    # fc1 every call; here it is fixed at init, stored time-major and paired
    # along K (documented deviation).
    flat = HID * p
    w_f1 = uinit(ks[4], (p, HID, HID), flat)
    b_f1 = uinit(ks[5], (HID,), flat)
    wf1_t = jnp.zeros((p_even, HID_P, HID_P), jnp.float32)
    wf1_t = wf1_t.at[:p, :HID, :HID].set(w_f1)
    wf1 = wf1_t.reshape(n_pairs, 2 * HID_P, HID_P)
    bf1 = jnp.zeros((1, HID_P), jnp.float32).at[0, :HID].set(b_f1)

    # fc2: (100, num_classes); padded class lanes masked via huge-negative bias
    w_f2 = uinit(ks[6], (HID, num_classes), HID)
    b_f2 = uinit(ks[7], (num_classes,), HID)
    wf2 = jnp.zeros((HID_P, HID_P), jnp.float32).at[:HID, :num_classes].set(w_f2)
    bf2 = jnp.full((1, HID_P), NEG_INF, jnp.float32).at[0, :num_classes].set(b_f2)

    return (w1.astype(jnp.bfloat16), b1,
            w2.astype(jnp.bfloat16), b2,
            wf1.astype(jnp.bfloat16), bf1,
            wf2.astype(jnp.bfloat16), bf2)


if __name__ == "__main__":
    # seq_len=151 is implied by the module's fc1 comment (151 - 50*2 + 2);
    # small batch / channel counts chosen freely.
    B, L, C = 2, 151, 4
    key = jax.random.PRNGKey(0)
    k_x, k_p = jax.random.split(key)
    x = jax.random.normal(k_x, (B, L, C), dtype=jnp.float32)

    params = init_params(k_p, C, L, NUM_CLASSES)
    forward = jax.jit(make_forward(B, L, C, NUM_CLASSES))

    out = jax.block_until_ready(forward(x, params))

    assert out.shape == (B, NUM_CLASSES), out.shape
    assert bool(jnp.all(jnp.isfinite(out)))
    assert bool(jnp.all(out >= 0.0))
    row_sums = jnp.sum(out, axis=1)     # exact softmax divide -> ~1.0
    assert bool(jnp.all(jnp.abs(row_sums - 1.0) < 1e-3)), row_sums
    print("KERNEL_OK")
</pallas_src>

<mosaic_0001>
module attributes {stable_mosaic.version = 11 : i64} {
  func.func @kernel(%arg0: i32, %arg1: memref<1x112x512xbf16, #tpu.memory_space<vmem>>, %arg2: memref<512x128xbf16, #tpu.memory_space<vmem>>, %arg3: memref<1x128xf32, #tpu.memory_space<vmem>>, %arg4: memref<25x256x128xbf16, #tpu.memory_space<vmem>>, %arg5: memref<1x128xf32, #tpu.memory_space<vmem>>, %arg6: memref<13x256x128xbf16, #tpu.memory_space<vmem>>, %arg7: memref<1x128xf32, #tpu.memory_space<vmem>>, %arg8: memref<128x128xbf16, #tpu.memory_space<vmem>>, %arg9: memref<1x128xf32, #tpu.memory_space<vmem>>, %arg10: memref<1x1x128xf32, #tpu.memory_space<vmem>>, %arg11: memref<112x128xf32, #tpu.memory_space<vmem>>) attributes {dimension_semantics = [#tpu.dimension_semantics<parallel>], iteration_bounds = array<i64: 2>, scalar_prefetch = 0 : i64, scratch_operands = 1 : i64, tpu.core_type = #tpu.core_type<tc>, window_params = [{transform_indices = @transform_0, window_bounds = array<i64: 1, 112, 512>}, {pipeline_mode = #tpu.pipeline_mode<synchronous>, transform_indices = @transform_1, window_bounds = array<i64: 512, 128>}, {pipeline_mode = #tpu.pipeline_mode<synchronous>, transform_indices = @transform_2, window_bounds = array<i64: 1, 128>}, {pipeline_mode = #tpu.pipeline_mode<synchronous>, transform_indices = @transform_3, window_bounds = array<i64: 25, 256, 128>}, {pipeline_mode = #tpu.pipeline_mode<synchronous>, transform_indices = @transform_4, window_bounds = array<i64: 1, 128>}, {pipeline_mode = #tpu.pipeline_mode<synchronous>, transform_indices = @transform_5, window_bounds = array<i64: 13, 256, 128>}, {pipeline_mode = #tpu.pipeline_mode<synchronous>, transform_indices = @transform_6, window_bounds = array<i64: 1, 128>}, {pipeline_mode = #tpu.pipeline_mode<synchronous>, transform_indices = @transform_7, window_bounds = array<i64: 128, 128>}, {pipeline_mode = #tpu.pipeline_mode<synchronous>, transform_indices = @transform_8, window_bounds = array<i64: 1, 128>}, {transform_indices = @transform_9, window_bounds = array<i64: 1, 1, 128>}]} {
    %c0 = arith.constant 0 : index
    %c0_0 = arith.constant 0 : index
    %c0_1 = arith.constant 0 : index
    %0 = vector.load %arg1[%c0, %c0_0, %c0_1] : memref<1x112x512xbf16, #tpu.memory_space<vmem>>, vector<1x112x512xbf16>
    %1 = vector.shape_cast %0 : vector<1x112x512xbf16> to vector<112x512xbf16>
    %c0_2 = arith.constant 0 : index
    %c0_3 = arith.constant 0 : index
    %2 = vector.load %arg2[%c0_2, %c0_3] : memref<512x128xbf16, #tpu.memory_space<vmem>>, vector<512x128xbf16>
    %cst = arith.constant dense<0.000000e+00> : vector<112x128xf32>
    %3 = tpu.matmul %1, %2, %cst {dimension_numbers = #tpu.dot_dimension_numbers<[1], [0], [0], [1], [0, 0, 1, 1], [], []>} : vector<112x512xbf16>, vector<512x128xbf16>, vector<112x128xf32> -> vector<112x128xf32>
    %c0_4 = arith.constant 0 : index
    %c0_5 = arith.constant 0 : index
    %4 = vector.load %arg3[%c0_4, %c0_5] : memref<1x128xf32, #tpu.memory_space<vmem>>, vector<1x128xf32>
    %5 = vector.broadcast %4 : vector<1x128xf32> to vector<112x128xf32>
    %6 = arith.addf %3, %5 : vector<112x128xf32>
    %c0_6 = arith.constant 0 : index
    %c0_7 = arith.constant 0 : index
    %7 = vector.load %arg11[%c0_6, %c0_7] : memref<112x128xf32, #tpu.memory_space<vmem>>, vector<112x128xf32>
    tpu.vector_store %arg11[%c0_6, %c0_7], %6 {strides = array<i32>} : memref<112x128xf32, #tpu.memory_space<vmem>>, vector<112x128xf32>,
    %cst_8 = arith.constant 0.000000e+00 : f32
    %8 = vector.broadcast %cst_8 : f32 to vector<56x128xf32>
    %c0_9 = arith.constant 0 : index
    %c0_10 = arith.constant 0 : index
    %9 = vector.load %arg11[%c0_9, %c0_10] : memref<112x128xf32, #tpu.memory_space<vmem>>, vector<56x128xf32>
    %c1 = arith.constant 1 : index
    %c0_11 = arith.constant 0 : index
    %10 = vector.load %arg11[%c1, %c0_11] : memref<112x128xf32, #tpu.memory_space<vmem>>, vector<56x128xf32>
    %11 = tpu.concatenate %9, %10 in 1 : vector<56x128xf32>, vector<56x128xf32> -> vector<56x256xf32>
    %12 = arith.truncf %11 : vector<56x256xf32> to vector<56x256xbf16>
    %c0_12 = arith.constant 0 : index
    %c0_13 = arith.constant 0 : index
    %c0_14 = arith.constant 0 : index
    %13 = vector.load %arg4[%c0_12, %c0_13, %c0_14] : memref<25x256x128xbf16, #tpu.memory_space<vmem>>, vector<1x256x128xbf16>
    %14 = vector.shape_cast %13 : vector<1x256x128xbf16> to vector<256x128xbf16>
    %cst_15 = arith.constant dense<0.000000e+00> : vector<56x128xf32>
    %15 = tpu.matmul %12, %14, %cst_15 {dimension_numbers = #tpu.dot_dimension_numbers<[1], [0], [0], [1], [0, 0, 1, 1], [], []>} : vector<56x256xbf16>, vector<256x128xbf16>, vector<56x128xf32> -> vector<56x128xf32>
    %16 = arith.addf %8, %15 : vector<56x128xf32>
    %c2 = arith.constant 2 : index
    %c0_16 = arith.constant 0 : index
    %17 = vector.load %arg11[%c2, %c0_16] : memref<112x128xf32, #tpu.memory_space<vmem>>, vector<56x128xf32>
    %c3 = arith.constant 3 : index
    %c0_17 = arith.constant 0 : index
    %18 = vector.load %arg11[%c3, %c0_17] : memref<112x128xf32, #tpu.memory_space<vmem>>, vector<56x128xf32>
    %19 = tpu.concatenate %17, %18 in 1 : vector<56x128xf32>, vector<56x128xf32> -> vector<56x256xf32>
    %20 = arith.truncf %19 : vector<56x256xf32> to vector<56x256xbf16>
    %c1_18 = arith.constant 1 : index
    %c0_19 = arith.constant 0 : index
    %c0_20 = arith.constant 0 : index
    %21 = vector.load %arg4[%c1_18, %c0_19, %c0_20] : memref<25x256x128xbf16, #tpu.memory_space<vmem>>, vector<1x256x128xbf16>
    %22 = vector.shape_cast %21 : vector<1x256x128xbf16> to vector<256x128xbf16>
    %cst_21 = arith.constant dense<0.000000e+00> : vector<56x128xf32>
    %23 = tpu.matmul %20, %22, %cst_21 {dimension_numbers = #tpu.dot_dimension_numbers<[1], [0], [0], [1], [0, 0, 1, 1], [], []>} : vector<56x256xbf16>, vector<256x128xbf16>, vector<56x128xf32> -> vector<56x128xf32>
    %24 = arith.addf %16, %23 : vector<56x128xf32>
    %c4 = arith.constant 4 : index
    %c0_22 = arith.constant 0 : index
    %25 = vector.load %arg11[%c4, %c0_22] : memref<112x128xf32, #tpu.memory_space<vmem>>, vector<56x128xf32>
    %c5 = arith.constant 5 : index
    %c0_23 = arith.constant 0 : index
    %26 = vector.load %arg11[%c5, %c0_23] : memref<112x128xf32, #tpu.memory_space<vmem>>, vector<56x128xf32>
    %27 = tpu.concatenate %25, %26 in 1 : vector<56x128xf32>, vector<56x128xf32> -> vector<56x256xf32>
    %28 = arith.truncf %27 : vector<56x256xf32> to vector<56x256xbf16>
    %c2_24 = arith.constant 2 : index
    %c0_25 = arith.constant 0 : index
    %c0_26 = arith.constant 0 : index
    %29 = vector.load %arg4[%c2_24, %c0_25, %c0_26] : memref<25x256x128xbf16, #tpu.memory_space<vmem>>, vector<1x256x128xbf16>
    %30 = vector.shape_cast %29 : vector<1x256x128xbf16> to vector<256x128xbf16>
    %cst_27 = arith.constant dense<0.000000e+00> : vector<56x128xf32>
    %31 = tpu.matmul %28, %30, %cst_27 {dimension_numbers = #tpu.dot_dimension_numbers<[1], [0], [0], [1], [0, 0, 1, 1], [], []>} : vector<56x256xbf16>, vector<256x128xbf16>, vector<56x128xf32> -> vector<56x128xf32>
    %32 = arith.addf %24, %31 : vector<56x128xf32>
    %c6 = arith.constant 6 : index
    %c0_28 = arith.constant 0 : index
    %33 = vector.load %arg11[%c6, %c0_28] : memref<112x128xf32, #tpu.memory_space<vmem>>, vector<56x128xf32>
    %c7 = arith.constant 7 : index
    %c0_29 = arith.constant 0 : index
    %34 = vector.load %arg11[%c7, %c0_29] : memref<112x128xf32, #tpu.memory_space<vmem>>, vector<56x128xf32>
    %35 = tpu.concatenate %33, %34 in 1 : vector<56x128xf32>, vector<56x128xf32> -> vector<56x256xf32>
    %36 = arith.truncf %35 : vector<56x256xf32> to vector<56x256xbf16>
    %c3_30 = arith.constant 3 : index
    %c0_31 = arith.constant 0 : index
    %c0_32 = arith.constant 0 : index
    %37 = vector.load %arg4[%c3_30, %c0_31, %c0_32] : memref<25x256x128xbf16, #tpu.memory_space<vmem>>, vector<1x256x128xbf16>
    %38 = vector.shape_cast %37 : vector<1x256x128xbf16> to vector<256x128xbf16>
    %cst_33 = arith.constant dense<0.000000e+00> : vector<56x128xf32>
    %39 = tpu.matmul %36, %38, %cst_33 {dimension_numbers = #tpu.dot_dimension_numbers<[1], [0], [0], [1], [0, 0, 1, 1], [], []>} : vector<56x256xbf16>, vector<256x128xbf16>, vector<56x128xf32> -> vector<56x128xf32>
    %40 = arith.addf %32, %39 : vector<56x128xf32>
    %c8 = arith.constant 8 : index
    %c0_34 = arith.constant 0 : index
    %41 = vector.load %arg11[%c8, %c0_34] : memref<112x128xf32, #tpu.memory_space<vmem>>, vector<56x128xf32>
    %c9 = arith.constant 9 : index
    %c0_35 = arith.constant 0 : index
    %42 = vector.load %arg11[%c9, %c0_35] : memref<112x128xf32, #tpu.memory_space<vmem>>, vector<56x128xf32>
    %43 = tpu.concatenate %41, %42 in 1 : vector<56x128xf32>, vector<56x128xf32> -> vector<56x256xf32>
    %44 = arith.truncf %43 : vector<56x256xf32> to vector<56x256xbf16>
    %c4_36 = arith.constant 4 : index
    %c0_37 = arith.constant 0 : index
    %c0_38 = arith.constant 0 : index
    %45 = vector.load %arg4[%c4_36, %c0_37, %c0_38] : memref<25x256x128xbf16, #tpu.memory_space<vmem>>, vector<1x256x128xbf16>
    %46 = vector.shape_cast %45 : vector<1x256x128xbf16> to vector<256x128xbf16>
    %cst_39 = arith.constant dense<0.000000e+00> : vector<56x128xf32>
    %47 = tpu.matmul %44, %46, %cst_39 {dimension_numbers = #tpu.dot_dimension_numbers<[1], [0], [0], [1], [0, 0, 1, 1], [], []>} : vector<56x256xbf16>, vector<256x128xbf16>, vector<56x128xf32> -> vector<56x128xf32>
    %48 = arith.addf %40, %47 : vector<56x128xf32>
    %c10 = arith.constant 10 : index
    %c0_40 = arith.constant 0 : index
    %49 = vector.load %arg11[%c10, %c0_40] : memref<112x128xf32, #tpu.memory_space<vmem>>, vector<56x128xf32>
    %c11 = arith.constant 11 : index
    %c0_41 = arith.constant 0 : index
    %50 = vector.load %arg11[%c11, %c0_41] : memref<112x128xf32, #tpu.memory_space<vmem>>, vector<56x128xf32>
    %51 = tpu.concatenate %49, %50 in 1 : vector<56x128xf32>, vector<56x128xf32> -> vector<56x256xf32>
    %52 = arith.truncf %51 : vector<56x256xf32> to vector<56x256xbf16>
    %c5_42 = arith.constant 5 : index
    %c0_43 = arith.constant 0 : index
    %c0_44 = arith.constant 0 : index
    %53 = vector.load %arg4[%c5_42, %c0_43, %c0_44] : memref<25x256x128xbf16, #tpu.memory_space<vmem>>, vector<1x256x128xbf16>
    %54 = vector.shape_cast %53 : vector<1x256x128xbf16> to vector<256x128xbf16>
    %cst_45 = arith.constant dense<0.000000e+00> : vector<56x128xf32>
    %55 = tpu.matmul %52, %54, %cst_45 {dimension_numbers = #tpu.dot_dimension_numbers<[1], [0], [0], [1], [0, 0, 1, 1], [], []>} : vector<56x256xbf16>, vector<256x128xbf16>, vector<56x128xf32> -> vector<56x128xf32>
    %56 = arith.addf %48, %55 : vector<56x128xf32>
    %c12 = arith.constant 12 : index
    %c0_46 = arith.constant 0 : index
    %57 = vector.load %arg11[%c12, %c0_46] : memref<112x128xf32, #tpu.memory_space<vmem>>, vector<56x128xf32>
    %c13 = arith.constant 13 : index
    %c0_47 = arith.constant 0 : index
    %58 = vector.load %arg11[%c13, %c0_47] : memref<112x128xf32, #tpu.memory_space<vmem>>, vector<56x128xf32>
    %59 = tpu.concatenate %57, %58 in 1 : vector<56x128xf32>, vector<56x128xf32> -> vector<56x256xf32>
    %60 = arith.truncf %59 : vector<56x256xf32> to vector<56x256xbf16>
    %c6_48 = arith.constant 6 : index
    %c0_49 = arith.constant 0 : index
    %c0_50 = arith.constant 0 : index
    %61 = vector.load %arg4[%c6_48, %c0_49, %c0_50] : memref<25x256x128xbf16, #tpu.memory_space<vmem>>, vector<1x256x128xbf16>
    %62 = vector.shape_cast %61 : vector<1x256x128xbf16> to vector<256x128xbf16>
    %cst_51 = arith.constant dense<0.000000e+00> : vector<56x128xf32>
    %63 = tpu.matmul %60, %62, %cst_51 {dimension_numbers = #tpu.dot_dimension_numbers<[1], [0], [0], [1], [0, 0, 1, 1], [], []>} : vector<56x256xbf16>, vector<256x128xbf16>, vector<56x128xf32> -> vector<56x128xf32>
    %64 = arith.addf %56, %63 : vector<56x128xf32>
    %c14 = arith.constant 14 : index
    %c0_52 = arith.constant 0 : index
    %65 = vector.load %arg11[%c14, %c0_52] : memref<112x128xf32, #tpu.memory_space<vmem>>, vector<56x128xf32>
    %c15 = arith.constant 15 : index
    %c0_53 = arith.constant 0 : index
    %66 = vector.load %arg11[%c15, %c0_53] : memref<112x128xf32, #tpu.memory_space<vmem>>, vector<56x128xf32>
    %67 = tpu.concatenate %65, %66 in 1 : vector<56x128xf32>, vector<56x128xf32> -> vector<56x256xf32>
    %68 = arith.truncf %67 : vector<56x256xf32> to vector<56x256xbf16>
    %c7_54 = arith.constant 7 : index
    %c0_55 = arith.constant 0 : index
    %c0_56 = arith.constant 0 : index
    %69 = vector.load %arg4[%c7_54, %c0_55, %c0_56] : memref<25x256x128xbf16, #tpu.memory_space<vmem>>, vector<1x256x128xbf16>
    %70 = vector.shape_cast %69 : vector<1x256x128xbf16> to vector<256x128xbf16>
    %cst_57 = arith.constant dense<0.000000e+00> : vector<56x128xf32>
    %71 = tpu.matmul %68, %70, %cst_57 {dimension_numbers = #tpu.dot_dimension_numbers<[1], [0], [0], [1], [0, 0, 1, 1], [], []>} : vector<56x256xbf16>, vector<256x128xbf16>, vector<56x128xf32> -> vector<56x128xf32>
    %72 = arith.addf %64, %71 : vector<56x128xf32>
    %c16 = arith.constant 16 : index
    %c0_58 = arith.constant 0 : index
    %73 = vector.load %arg11[%c16, %c0_58] : memref<112x128xf32, #tpu.memory_space<vmem>>, vector<56x128xf32>
    %c17 = arith.constant 17 : index
    %c0_59 = arith.constant 0 : index
    %74 = vector.load %arg11[%c17, %c0_59] : memref<112x128xf32, #tpu.memory_space<vmem>>, vector<56x128xf32>
    %75 = tpu.concatenate %73, %74 in 1 : vector<56x128xf32>, vector<56x128xf32> -> vector<56x256xf32>
    %76 = arith.truncf %75 : vector<56x256xf32> to vector<56x256xbf16>
    %c8_60 = arith.constant 8 : index
    %c0_61 = arith.constant 0 : index
    %c0_62 = arith.constant 0 : index
    %77 = vector.load %arg4[%c8_60, %c0_61, %c0_62] : memref<25x256x128xbf16, #tpu.memory_space<vmem>>, vector<1x256x128xbf16>
    %78 = vector.shape_cast %77 : vector<1x256x128xbf16> to vector<256x128xbf16>
    %cst_63 = arith.constant dense<0.000000e+00> : vector<56x128xf32>
    %79 = tpu.matmul %76, %78, %cst_63 {dimension_numbers = #tpu.dot_dimension_numbers<[1], [0], [0], [1], [0, 0, 1, 1], [], []>} : vector<56x256xbf16>, vector<256x128xbf16>, vector<56x128xf32> -> vector<56x128xf32>
    %80 = arith.addf %72, %79 : vector<56x128xf32>
    %c18 = arith.constant 18 : index
    %c0_64 = arith.constant 0 : index
    %81 = vector.load %arg11[%c18, %c0_64] : memref<112x128xf32, #tpu.memory_space<vmem>>, vector<56x128xf32>
    %c19 = arith.constant 19 : index
    %c0_65 = arith.constant 0 : index
    %82 = vector.load %arg11[%c19, %c0_65] : memref<112x128xf32, #tpu.memory_space<vmem>>, vector<56x128xf32>
    %83 = tpu.concatenate %81, %82 in 1 : vector<56x128xf32>, vector<56x128xf32> -> vector<56x256xf32>
    %84 = arith.truncf %83 : vector<56x256xf32> to vector<56x256xbf16>
    %c9_66 = arith.constant 9 : index
    %c0_67 = arith.constant 0 : index
    %c0_68 = arith.constant 0 : index
    %85 = vector.load %arg4[%c9_66, %c0_67, %c0_68] : memref<25x256x128xbf16, #tpu.memory_space<vmem>>, vector<1x256x128xbf16>
    %86 = vector.shape_cast %85 : vector<1x256x128xbf16> to vector<256x128xbf16>
    %cst_69 = arith.constant dense<0.000000e+00> : vector<56x128xf32>
    %87 = tpu.matmul %84, %86, %cst_69 {dimension_numbers = #tpu.dot_dimension_numbers<[1], [0], [0], [1], [0, 0, 1, 1], [], []>} : vector<56x256xbf16>, vector<256x128xbf16>, vector<56x128xf32> -> vector<56x128xf32>
    %88 = arith.addf %80, %87 : vector<56x128xf32>
    %c20 = arith.constant 20 : index
    %c0_70 = arith.constant 0 : index
    %89 = vector.load %arg11[%c20, %c0_70] : memref<112x128xf32, #tpu.memory_space<vmem>>, vector<56x128xf32>
    %c21 = arith.constant 21 : index
    %c0_71 = arith.constant 0 : index
    %90 = vector.load %arg11[%c21, %c0_71] : memref<112x128xf32, #tpu.memory_space<vmem>>, vector<56x128xf32>
    %91 = tpu.concatenate %89, %90 in 1 : vector<56x128xf32>, vector<56x128xf32> -> vector<56x256xf32>
    %92 = arith.truncf %91 : vector<56x256xf32> to vector<56x256xbf16>
    %c10_72 = arith.constant 10 : index
    %c0_73 = arith.constant 0 : index
    %c0_74 = arith.constant 0 : index
    %93 = vector.load %arg4[%c10_72, %c0_73, %c0_74] : memref<25x256x128xbf16, #tpu.memory_space<vmem>>, vector<1x256x128xbf16>
    %94 = vector.shape_cast %93 : vector<1x256x128xbf16> to vector<256x128xbf16>
    %cst_75 = arith.constant dense<0.000000e+00> : vector<56x128xf32>
    %95 = tpu.matmul %92, %94, %cst_75 {dimension_numbers = #tpu.dot_dimension_numbers<[1], [0], [0], [1], [0, 0, 1, 1], [], []>} : vector<56x256xbf16>, vector<256x128xbf16>, vector<56x128xf32> -> vector<56x128xf32>
    %96 = arith.addf %88, %95 : vector<56x128xf32>
    %c22 = arith.constant 22 : index
    %c0_76 = arith.constant 0 : index
    %97 = vector.load %arg11[%c22, %c0_76] : memref<112x128xf32, #tpu.memory_space<vmem>>, vector<56x128xf32>
    %c23 = arith.constant 23 : index
    %c0_77 = arith.constant 0 : index
    %98 = vector.load %arg11[%c23, %c0_77] : memref<112x128xf32, #tpu.memory_space<vmem>>, vector<56x128xf32>
    %99 = tpu.concatenate %97, %98 in 1 : vector<56x128xf32>, vector<56x128xf32> -> vector<56x256xf32>
    %100 = arith.truncf %99 : vector<56x256xf32> to vector<56x256xbf16>
    %c11_78 = arith.constant 11 : index
    %c0_79 = arith.constant 0 : index
    %c0_80 = arith.constant 0 : index
    %101 = vector.load %arg4[%c11_78, %c0_79, %c0_80] : memref<25x256x128xbf16, #tpu.memory_space<vmem>>, vector<1x256x128xbf16>
    %102 = vector.shape_cast %101 : vector<1x256x128xbf16> to vector<256x128xbf16>
    %cst_81 = arith.constant dense<0.000000e+00> : vector<56x128xf32>
    %103 = tpu.matmul %100, %102, %cst_81 {dimension_numbers = #tpu.dot_dimension_numbers<[1], [0], [0], [1], [0, 0, 1, 1], [], []>} : vector<56x256xbf16>, vector<256x128xbf16>, vector<56x128xf32> -> vector<56x128xf32>
    %104 = arith.addf %96, %103 : vector<56x128xf32>
    %c24 = arith.constant 24 : index
    %c0_82 = arith.constant 0 : index
    %105 = vector.load %arg11[%c24, %c0_82] : memref<112x128xf32, #tpu.memory_space<vmem>>, vector<56x128xf32>
    %c25 = arith.constant 25 : index
    %c0_83 = arith.constant 0 : index
    %106 = vector.load %arg11[%c25, %c0_83] : memref<112x128xf32, #tpu.memory_space<vmem>>, vector<56x128xf32>
    %107 = tpu.concatenate %105, %106 in 1 : vector<56x128xf32>, vector<56x128xf32> -> vector<56x256xf32>
    %108 = arith.truncf %107 : vector<56x256xf32> to vector<56x256xbf16>
    %c12_84 = arith.constant 12 : index
    %c0_85 = arith.constant 0 : index
    %c0_86 = arith.constant 0 : index
    %109 = vector.load %arg4[%c12_84, %c0_85, %c0_86] : memref<25x256x128xbf16, #tpu.memory_space<vmem>>, vector<1x256x128xbf16>
    %110 = vector.shape_cast %109 : vector<1x256x128xbf16> to vector<256x128xbf16>
    %cst_87 = arith.constant dense<0.000000e+00> : vector<56x128xf32>
    %111 = tpu.matmul %108, %110, %cst_87 {dimension_numbers = #tpu.dot_dimension_numbers<[1], [0], [0], [1], [0, 0, 1, 1], [], []>} : vector<56x256xbf16>, vector<256x128xbf16>, vector<56x128xf32> -> vector<56x128xf32>
    %112 = arith.addf %104, %111 : vector<56x128xf32>
    %c26 = arith.constant 26 : index
    %c0_88 = arith.constant 0 : index
    %113 = vector.load %arg11[%c26, %c0_88] : memref<112x128xf32, #tpu.memory_space<vmem>>, vector<56x128xf32>
    %c27 = arith.constant 27 : index
    %c0_89 = arith.constant 0 : index
    %114 = vector.load %arg11[%c27, %c0_89] : memref<112x128xf32, #tpu.memory_space<vmem>>, vector<56x128xf32>
    %115 = tpu.concatenate %113, %114 in 1 : vector<56x128xf32>, vector<56x128xf32> -> vector<56x256xf32>
    %116 = arith.truncf %115 : vector<56x256xf32> to vector<56x256xbf16>
    %c13_90 = arith.constant 13 : index
    %c0_91 = arith.constant 0 : index
    %c0_92 = arith.constant 0 : index
    %117 = vector.load %arg4[%c13_90, %c0_91, %c0_92] : memref<25x256x128xbf16, #tpu.memory_space<vmem>>, vector<1x256x128xbf16>
    %118 = vector.shape_cast %117 : vector<1x256x128xbf16> to vector<256x128xbf16>
    %cst_93 = arith.constant dense<0.000000e+00> : vector<56x128xf32>
    %119 = tpu.matmul %116, %118, %cst_93 {dimension_numbers = #tpu.dot_dimension_numbers<[1], [0], [0], [1], [0, 0, 1, 1], [], []>} : vector<56x256xbf16>, vector<256x128xbf16>, vector<56x128xf32> -> vector<56x128xf32>
    %120 = arith.addf %112, %119 : vector<56x128xf32>
    %c28 = arith.constant 28 : index
    %c0_94 = arith.constant 0 : index
    %121 = vector.load %arg11[%c28, %c0_94] : memref<112x128xf32, #tpu.memory_space<vmem>>, vector<56x128xf32>
    %c29 = arith.constant 29 : index
    %c0_95 = arith.constant 0 : index
    %122 = vector.load %arg11[%c29, %c0_95] : memref<112x128xf32, #tpu.memory_space<vmem>>, vector<56x128xf32>
    %123 = tpu.concatenate %121, %122 in 1 : vector<56x128xf32>, vector<56x128xf32> -> vector<56x256xf32>
    %124 = arith.truncf %123 : vector<56x256xf32> to vector<56x256xbf16>
    %c14_96 = arith.constant 14 : index
    %c0_97 = arith.constant 0 : index
    %c0_98 = arith.constant 0 : index
    %125 = vector.load %arg4[%c14_96, %c0_97, %c0_98] : memref<25x256x128xbf16, #tpu.memory_space<vmem>>, vector<1x256x128xbf16>
    %126 = vector.shape_cast %125 : vector<1x256x128xbf16> to vector<256x128xbf16>
    %cst_99 = arith.constant dense<0.000000e+00> : vector<56x128xf32>
    %127 = tpu.matmul %124, %126, %cst_99 {dimension_numbers = #tpu.dot_dimension_numbers<[1], [0], [0], [1], [0, 0, 1, 1], [], []>} : vector<56x256xbf16>, vector<256x128xbf16>, vector<56x128xf32> -> vector<56x128xf32>
    %128 = arith.addf %120, %127 : vector<56x128xf32>
    %c30 = arith.constant 30 : index
    %c0_100 = arith.constant 0 : index
    %129 = vector.load %arg11[%c30, %c0_100] : memref<112x128xf32, #tpu.memory_space<vmem>>, vector<56x128xf32>
    %c31 = arith.constant 31 : index
    %c0_101 = arith.constant 0 : index
    %130 = vector.load %arg11[%c31, %c0_101] : memref<112x128xf32, #tpu.memory_space<vmem>>, vector<56x128xf32>
    %131 = tpu.concatenate %129, %130 in 1 : vector<56x128xf32>, vector<56x128xf32> -> vector<56x256xf32>
    %132 = arith.truncf %131 : vector<56x256xf32> to vector<56x256xbf16>
    %c15_102 = arith.constant 15 : index
    %c0_103 = arith.constant 0 : index
    %c0_104 = arith.constant 0 : index
    %133 = vector.load %arg4[%c15_102, %c0_103, %c0_104] : memref<25x256x128xbf16, #tpu.memory_space<vmem>>, vector<1x256x128xbf16>
    %134 = vector.shape_cast %133 : vector<1x256x128xbf16> to vector<256x128xbf16>
    %cst_105 = arith.constant dense<0.000000e+00> : vector<56x128xf32>
    %135 = tpu.matmul %132, %134, %cst_105 {dimension_numbers = #tpu.dot_dimension_numbers<[1], [0], [0], [1], [0, 0, 1, 1], [], []>} : vector<56x256xbf16>, vector<256x128xbf16>, vector<56x128xf32> -> vector<56x128xf32>
    %136 = arith.addf %128, %135 : vector<56x128xf32>
    %c32 = arith.constant 32 : index
    %c0_106 = arith.constant 0 : index
    %137 = vector.load %arg11[%c32, %c0_106] : memref<112x128xf32, #tpu.memory_space<vmem>>, vector<56x128xf32>
    %c33 = arith.constant 33 : index
    %c0_107 = arith.constant 0 : index
    %138 = vector.load %arg11[%c33, %c0_107] : memref<112x128xf32, #tpu.memory_space<vmem>>, vector<56x128xf32>
    %139 = tpu.concatenate %137, %138 in 1 : vector<56x128xf32>, vector<56x128xf32> -> vector<56x256xf32>
    %140 = arith.truncf %139 : vector<56x256xf32> to vector<56x256xbf16>
    %c16_108 = arith.constant 16 : index
    %c0_109 = arith.constant 0 : index
    %c0_110 = arith.constant 0 : index
    %141 = vector.load %arg4[%c16_108, %c0_109, %c0_110] : memref<25x256x128xbf16, #tpu.memory_space<vmem>>, vector<1x256x128xbf16>
    %142 = vector.shape_cast %141 : vector<1x256x128xbf16> to vector<256x128xbf16>
    %cst_111 = arith.constant dense<0.000000e+00> : vector<56x128xf32>
    %143 = tpu.matmul %140, %142, %cst_111 {dimension_numbers = #tpu.dot_dimension_numbers<[1], [0], [0], [1], [0, 0, 1, 1], [], []>} : vector<56x256xbf16>, vector<256x128xbf16>, vector<56x128xf32> -> vector<56x128xf32>
    %144 = arith.addf %136, %143 : vector<56x128xf32>
    %c34 = arith.constant 34 : index
    %c0_112 = arith.constant 0 : index
    %145 = vector.load %arg11[%c34, %c0_112] : memref<112x128xf32, #tpu.memory_space<vmem>>, vector<56x128xf32>
    %c35 = arith.constant 35 : index
    %c0_113 = arith.constant 0 : index
    %146 = vector.load %arg11[%c35, %c0_113] : memref<112x128xf32, #tpu.memory_space<vmem>>, vector<56x128xf32>
    %147 = tpu.concatenate %145, %146 in 1 : vector<56x128xf32>, vector<56x128xf32> -> vector<56x256xf32>
    %148 = arith.truncf %147 : vector<56x256xf32> to vector<56x256xbf16>
    %c17_114 = arith.constant 17 : index
    %c0_115 = arith.constant 0 : index
    %c0_116 = arith.constant 0 : index
    %149 = vector.load %arg4[%c17_114, %c0_115, %c0_116] : memref<25x256x128xbf16, #tpu.memory_space<vmem>>, vector<1x256x128xbf16>
    %150 = vector.shape_cast %149 : vector<1x256x128xbf16> to vector<256x128xbf16>
    %cst_117 = arith.constant dense<0.000000e+00> : vector<56x128xf32>
    %151 = tpu.matmul %148, %150, %cst_117 {dimension_numbers = #tpu.dot_dimension_numbers<[1], [0], [0], [1], [0, 0, 1, 1], [], []>} : vector<56x256xbf16>, vector<256x128xbf16>, vector<56x128xf32> -> vector<56x128xf32>
    %152 = arith.addf %144, %151 : vector<56x128xf32>
    %c36 = arith.constant 36 : index
    %c0_118 = arith.constant 0 : index
    %153 = vector.load %arg11[%c36, %c0_118] : memref<112x128xf32, #tpu.memory_space<vmem>>, vector<56x128xf32>
    %c37 = arith.constant 37 : index
    %c0_119 = arith.constant 0 : index
    %154 = vector.load %arg11[%c37, %c0_119] : memref<112x128xf32, #tpu.memory_space<vmem>>, vector<56x128xf32>
    %155 = tpu.concatenate %153, %154 in 1 : vector<56x128xf32>, vector<56x128xf32> -> vector<56x256xf32>
    %156 = arith.truncf %155 : vector<56x256xf32> to vector<56x256xbf16>
    %c18_120 = arith.constant 18 : index
    %c0_121 = arith.constant 0 : index
    %c0_122 = arith.constant 0 : index
    %157 = vector.load %arg4[%c18_120, %c0_121, %c0_122] : memref<25x256x128xbf16, #tpu.memory_space<vmem>>, vector<1x256x128xbf16>
    %158 = vector.shape_cast %157 : vector<1x256x128xbf16> to vector<256x128xbf16>
    %cst_123 = arith.constant dense<0.000000e+00> : vector<56x128xf32>
    %159 = tpu.matmul %156, %158, %cst_123 {dimension_numbers = #tpu.dot_dimension_numbers<[1], [0], [0], [1], [0, 0, 1, 1], [], []>} : vector<56x256xbf16>, vector<256x128xbf16>, vector<56x128xf32> -> vector<56x128xf32>
    %160 = arith.addf %152, %159 : vector<56x128xf32>
    %c38 = arith.constant 38 : index
    %c0_124 = arith.constant 0 : index
    %161 = vector.load %arg11[%c38, %c0_124] : memref<112x128xf32, #tpu.memory_space<vmem>>, vector<56x128xf32>
    %c39 = arith.constant 39 : index
    %c0_125 = arith.constant 0 : index
    %162 = vector.load %arg11[%c39, %c0_125] : memref<112x128xf32, #tpu.memory_space<vmem>>, vector<56x128xf32>
    %163 = tpu.concatenate %161, %162 in 1 : vector<56x128xf32>, vector<56x128xf32> -> vector<56x256xf32>
    %164 = arith.truncf %163 : vector<56x256xf32> to vector<56x256xbf16>
    %c19_126 = arith.constant 19 : index
    %c0_127 = arith.constant 0 : index
    %c0_128 = arith.constant 0 : index
    %165 = vector.load %arg4[%c19_126, %c0_127, %c0_128] : memref<25x256x128xbf16, #tpu.memory_space<vmem>>, vector<1x256x128xbf16>
    %166 = vector.shape_cast %165 : vector<1x256x128xbf16> to vector<256x128xbf16>
    %cst_129 = arith.constant dense<0.000000e+00> : vector<56x128xf32>
    %167 = tpu.matmul %164, %166, %cst_129 {dimension_numbers = #tpu.dot_dimension_numbers<[1], [0], [0], [1], [0, 0, 1, 1], [], []>} : vector<56x256xbf16>, vector<256x128xbf16>, vector<56x128xf32> -> vector<56x128xf32>
    %168 = arith.addf %160, %167 : vector<56x128xf32>
    %c40 = arith.constant 40 : index
    %c0_130 = arith.constant 0 : index
    %169 = vector.load %arg11[%c40, %c0_130] : memref<112x128xf32, #tpu.memory_space<vmem>>, vector<56x128xf32>
    %c41 = arith.constant 41 : index
    %c0_131 = arith.constant 0 : index
    %170 = vector.load %arg11[%c41, %c0_131] : memref<112x128xf32, #tpu.memory_space<vmem>>, vector<56x128xf32>
    %171 = tpu.concatenate %169, %170 in 1 : vector<56x128xf32>, vector<56x128xf32> -> vector<56x256xf32>
    %172 = arith.truncf %171 : vector<56x256xf32> to vector<56x256xbf16>
    %c20_132 = arith.constant 20 : index
    %c0_133 = arith.constant 0 : index
    %c0_134 = arith.constant 0 : index
    %173 = vector.load %arg4[%c20_132, %c0_133, %c0_134] : memref<25x256x128xbf16, #tpu.memory_space<vmem>>, vector<1x256x128xbf16>
    %174 = vector.shape_cast %173 : vector<1x256x128xbf16> to vector<256x128xbf16>
    %cst_135 = arith.constant dense<0.000000e+00> : vector<56x128xf32>
    %175 = tpu.matmul %172, %174, %cst_135 {dimension_numbers = #tpu.dot_dimension_numbers<[1], [0], [0], [1], [0, 0, 1, 1], [], []>} : vector<56x256xbf16>, vector<256x128xbf16>, vector<56x128xf32> -> vector<56x128xf32>
    %176 = arith.addf %168, %175 : vector<56x128xf32>
    %c42 = arith.constant 42 : index
    %c0_136 = arith.constant 0 : index
    %177 = vector.load %arg11[%c42, %c0_136] : memref<112x128xf32, #tpu.memory_space<vmem>>, vector<56x128xf32>
    %c43 = arith.constant 43 : index
    %c0_137 = arith.constant 0 : index
    %178 = vector.load %arg11[%c43, %c0_137] : memref<112x128xf32, #tpu.memory_space<vmem>>, vector<56x128xf32>
    %179 = tpu.concatenate %177, %178 in 1 : vector<56x128xf32>, vector<56x128xf32> -> vector<56x256xf32>
    %180 = arith.truncf %179 : vector<56x256xf32> to vector<56x256xbf16>
    %c21_138 = arith.constant 21 : index
    %c0_139 = arith.constant 0 : index
    %c0_140 = arith.constant 0 : index
    %181 = vector.load %arg4[%c21_138, %c0_139, %c0_140] : memref<25x256x128xbf16, #tpu.memory_space<vmem>>, vector<1x256x128xbf16>
    %182 = vector.shape_cast %181 : vector<1x256x128xbf16> to vector<256x128xbf16>
    %cst_141 = arith.constant dense<0.000000e+00> : vector<56x128xf32>
    %183 = tpu.matmul %180, %182, %cst_141 {dimension_numbers = #tpu.dot_dimension_numbers<[1], [0], [0], [1], [0, 0, 1, 1], [], []>} : vector<56x256xbf16>, vector<256x128xbf16>, vector<56x128xf32> -> vector<56x128xf32>
    %184 = arith.addf %176, %183 : vector<56x128xf32>
    %c44 = arith.constant 44 : index
    %c0_142 = arith.constant 0 : index
    %185 = vector.load %arg11[%c44, %c0_142] : memref<112x128xf32, #tpu.memory_space<vmem>>, vector<56x128xf32>
    %c45 = arith.constant 45 : index
    %c0_143 = arith.constant 0 : index
    %186 = vector.load %arg11[%c45, %c0_143] : memref<112x128xf32, #tpu.memory_space<vmem>>, vector<56x128xf32>
    %187 = tpu.concatenate %185, %186 in 1 : vector<56x128xf32>, vector<56x128xf32> -> vector<56x256xf32>
    %188 = arith.truncf %187 : vector<56x256xf32> to vector<56x256xbf16>
    %c22_144 = arith.constant 22 : index
    %c0_145 = arith.constant 0 : index
    %c0_146 = arith.constant 0 : index
    %189 = vector.load %arg4[%c22_144, %c0_145, %c0_146] : memref<25x256x128xbf16, #tpu.memory_space<vmem>>, vector<1x256x128xbf16>
    %190 = vector.shape_cast %189 : vector<1x256x128xbf16> to vector<256x128xbf16>
    %cst_147 = arith.constant dense<0.000000e+00> : vector<56x128xf32>
    %191 = tpu.matmul %188, %190, %cst_147 {dimension_numbers = #tpu.dot_dimension_numbers<[1], [0], [0], [1], [0, 0, 1, 1], [], []>} : vector<56x256xbf16>, vector<256x128xbf16>, vector<56x128xf32> -> vector<56x128xf32>
    %192 = arith.addf %184, %191 : vector<56x128xf32>
    %c46 = arith.constant 46 : index
    %c0_148 = arith.constant 0 : index
    %193 = vector.load %arg11[%c46, %c0_148] : memref<112x128xf32, #tpu.memory_space<vmem>>, vector<56x128xf32>
    %c47 = arith.constant 47 : index
    %c0_149 = arith.constant 0 : index
    %194 = vector.load %arg11[%c47, %c0_149] : memref<112x128xf32, #tpu.memory_space<vmem>>, vector<56x128xf32>
    %195 = tpu.concatenate %193, %194 in 1 : vector<56x128xf32>, vector<56x128xf32> -> vector<56x256xf32>
    %196 = arith.truncf %195 : vector<56x256xf32> to vector<56x256xbf16>
    %c23_150 = arith.constant 23 : index
    %c0_151 = arith.constant 0 : index
    %c0_152 = arith.constant 0 : index
    %197 = vector.load %arg4[%c23_150, %c0_151, %c0_152] : memref<25x256x128xbf16, #tpu.memory_space<vmem>>, vector<1x256x128xbf16>
    %198 = vector.shape_cast %197 : vector<1x256x128xbf16> to vector<256x128xbf16>
    %cst_153 = arith.constant dense<0.000000e+00> : vector<56x128xf32>
    %199 = tpu.matmul %196, %198, %cst_153 {dimension_numbers = #tpu.dot_dimension_numbers<[1], [0], [0], [1], [0, 0, 1, 1], [], []>} : vector<56x256xbf16>, vector<256x128xbf16>, vector<56x128xf32> -> vector<56x128xf32>
    %200 = arith.addf %192, %199 : vector<56x128xf32>
    %c48 = arith.constant 48 : index
    %c0_154 = arith.constant 0 : index
    %201 = vector.load %arg11[%c48, %c0_154] : memref<112x128xf32, #tpu.memory_space<vmem>>, vector<56x128xf32>
    %c49 = arith.constant 49 : index
    %c0_155 = arith.constant 0 : index
    %202 = vector.load %arg11[%c49, %c0_155] : memref<112x128xf32, #tpu.memory_space<vmem>>, vector<56x128xf32>
    %203 = tpu.concatenate %201, %202 in 1 : vector<56x128xf32>, vector<56x128xf32> -> vector<56x256xf32>
    %204 = arith.truncf %203 : vector<56x256xf32> to vector<56x256xbf16>
    %c24_156 = arith.constant 24 : index
    %c0_157 = arith.constant 0 : index
    %c0_158 = arith.constant 0 : index
    %205 = vector.load %arg4[%c24_156, %c0_157, %c0_158] : memref<25x256x128xbf16, #tpu.memory_space<vmem>>, vector<1x256x128xbf16>
    %206 = vector.shape_cast %205 : vector<1x256x128xbf16> to vector<256x128xbf16>
    %cst_159 = arith.constant dense<0.000000e+00> : vector<56x128xf32>
    %207 = tpu.matmul %204, %206, %cst_159 {dimension_numbers = #tpu.dot_dimension_numbers<[1], [0], [0], [1], [0, 0, 1, 1], [], []>} : vector<56x256xbf16>, vector<256x128xbf16>, vector<56x128xf32> -> vector<56x128xf32>
    %208 = arith.addf %200, %207 : vector<56x128xf32>
    %c0_160 = arith.constant 0 : index
    %c0_161 = arith.constant 0 : index
    %209 = vector.load %arg5[%c0_160, %c0_161] : memref<1x128xf32, #tpu.memory_space<vmem>>, vector<1x128xf32>
    %210 = vector.broadcast %209 : vector<1x128xf32> to vector<56x128xf32>
    %211 = arith.addf %208, %210 : vector<56x128xf32>
    %c0_162 = arith.constant 0 : index
    %c0_163 = arith.constant 0 : index
    %212 = vector.load %arg7[%c0_162, %c0_163] : memref<1x128xf32, #tpu.memory_space<vmem>>, vector<1x128xf32>
    %213 = vector.extract_strided_slice %211 {offsets = [0, 0], sizes = [1, 128], strides = [1, 1]} : vector<56x128xf32> to vector<1x128xf32>
    %214 = vector.extract_strided_slice %211 {offsets = [1, 0], sizes = [1, 128], strides = [1, 1]} : vector<56x128xf32> to vector<1x128xf32>
    %215 = vector.extract_strided_slice %211 {offsets = [2, 0], sizes = [1, 128], strides = [1, 1]} : vector<56x128xf32> to vector<1x128xf32>
    %216 = vector.extract_strided_slice %211 {offsets = [3, 0], sizes = [1, 128], strides = [1, 1]} : vector<56x128xf32> to vector<1x128xf32>
    %217 = arith.maximumf %213, %214 : vector<1x128xf32>
    %218 = arith.maximumf %215, %216 : vector<1x128xf32>
    %219 = tpu.concatenate %217, %218 in 1 : vector<1x128xf32>, vector<1x128xf32> -> vector<1x256xf32>
    %220 = arith.truncf %219 : vector<1x256xf32> to vector<1x256xbf16>
    %c0_164 = arith.constant 0 : index
    %c0_165 = arith.constant 0 : index
    %c0_166 = arith.constant 0 : index
    %221 = vector.load %arg6[%c0_164, %c0_165, %c0_166] : memref<13x256x128xbf16, #tpu.memory_space<vmem>>, vector<1x256x128xbf16>
    %222 = vector.shape_cast %221 : vector<1x256x128xbf16> to vector<256x128xbf16>
    %cst_167 = arith.constant dense<0.000000e+00> : vector<1x128xf32>
    %223 = tpu.matmul %220, %222, %cst_167 {dimension_numbers = #tpu.dot_dimension_numbers<[1], [0], [0], [1], [0, 0, 1, 1], [], []>} : vector<1x256xbf16>, vector<256x128xbf16>, vector<1x128xf32> -> vector<1x128xf32>
    %224 = arith.addf %212, %223 : vector<1x128xf32>
    %225 = vector.extract_strided_slice %211 {offsets = [4, 0], sizes = [1, 128], strides = [1, 1]} : vector<56x128xf32> to vector<1x128xf32>
    %226 = vector.extract_strided_slice %211 {offsets = [5, 0], sizes = [1, 128], strides = [1, 1]} : vector<56x128xf32> to vector<1x128xf32>
    %227 = vector.extract_strided_slice %211 {offsets = [6, 0], sizes = [1, 128], strides = [1, 1]} : vector<56x128xf32> to vector<1x128xf32>
    %228 = vector.extract_strided_slice %211 {offsets = [7, 0], sizes = [1, 128], strides = [1, 1]} : vector<56x128xf32> to vector<1x128xf32>
    %229 = arith.maximumf %225, %226 : vector<1x128xf32>
    %230 = arith.maximumf %227, %228 : vector<1x128xf32>
    %231 = tpu.concatenate %229, %230 in 1 : vector<1x128xf32>, vector<1x128xf32> -> vector<1x256xf32>
    %232 = arith.truncf %231 : vector<1x256xf32> to vector<1x256xbf16>
    %c1_168 = arith.constant 1 : index
    %c0_169 = arith.constant 0 : index
    %c0_170 = arith.constant 0 : index
    %233 = vector.load %arg6[%c1_168, %c0_169, %c0_170] : memref<13x256x128xbf16, #tpu.memory_space<vmem>>, vector<1x256x128xbf16>
    %234 = vector.shape_cast %233 : vector<1x256x128xbf16> to vector<256x128xbf16>
    %cst_171 = arith.constant dense<0.000000e+00> : vector<1x128xf32>
    %235 = tpu.matmul %232, %234, %cst_171 {dimension_numbers = #tpu.dot_dimension_numbers<[1], [0], [0], [1], [0, 0, 1, 1], [], []>} : vector<1x256xbf16>, vector<256x128xbf16>, vector<1x128xf32> -> vector<1x128xf32>
    %236 = arith.addf %224, %235 : vector<1x128xf32>
    %237 = vector.extract_strided_slice %211 {offsets = [8, 0], sizes = [1, 128], strides = [1, 1]} : vector<56x128xf32> to vector<1x128xf32>
    %238 = vector.extract_strided_slice %211 {offsets = [9, 0], sizes = [1, 128], strides = [1, 1]} : vector<56x128xf32> to vector<1x128xf32>
    %239 = vector.extract_strided_slice %211 {offsets = [10, 0], sizes = [1, 128], strides = [1, 1]} : vector<56x128xf32> to vector<1x128xf32>
    %240 = vector.extract_strided_slice %211 {offsets = [11, 0], sizes = [1, 128], strides = [1, 1]} : vector<56x128xf32> to vector<1x128xf32>
    %241 = arith.maximumf %237, %238 : vector<1x128xf32>
    %242 = arith.maximumf %239, %240 : vector<1x128xf32>
    %243 = tpu.concatenate %241, %242 in 1 : vector<1x128xf32>, vector<1x128xf32> -> vector<1x256xf32>
    %244 = arith.truncf %243 : vector<1x256xf32> to vector<1x256xbf16>
    %c2_172 = arith.constant 2 : index
    %c0_173 = arith.constant 0 : index
    %c0_174 = arith.constant 0 : index
    %245 = vector.load %arg6[%c2_172, %c0_173, %c0_174] : memref<13x256x128xbf16, #tpu.memory_space<vmem>>, vector<1x256x128xbf16>
    %246 = vector.shape_cast %245 : vector<1x256x128xbf16> to vector<256x128xbf16>
    %cst_175 = arith.constant dense<0.000000e+00> : vector<1x128xf32>
    %247 = tpu.matmul %244, %246, %cst_175 {dimension_numbers = #tpu.dot_dimension_numbers<[1], [0], [0], [1], [0, 0, 1, 1], [], []>} : vector<1x256xbf16>, vector<256x128xbf16>, vector<1x128xf32> -> vector<1x128xf32>
    %248 = arith.addf %236, %247 : vector<1x128xf32>
    %249 = vector.extract_strided_slice %211 {offsets = [12, 0], sizes = [1, 128], strides = [1, 1]} : vector<56x128xf32> to vector<1x128xf32>
    %250 = vector.extract_strided_slice %211 {offsets = [13, 0], sizes = [1, 128], strides = [1, 1]} : vector<56x128xf32> to vector<1x128xf32>
    %251 = vector.extract_strided_slice %211 {offsets = [14, 0], sizes = [1, 128], strides = [1, 1]} : vector<56x128xf32> to vector<1x128xf32>
    %252 = vector.extract_strided_slice %211 {offsets = [15, 0], sizes = [1, 128], strides = [1, 1]} : vector<56x128xf32> to vector<1x128xf32>
    %253 = arith.maximumf %249, %250 : vector<1x128xf32>
    %254 = arith.maximumf %251, %252 : vector<1x128xf32>
    %255 = tpu.concatenate %253, %254 in 1 : vector<1x128xf32>, vector<1x128xf32> -> vector<1x256xf32>
    %256 = arith.truncf %255 : vector<1x256xf32> to vector<1x256xbf16>
    %c3_176 = arith.constant 3 : index
    %c0_177 = arith.constant 0 : index
    %c0_178 = arith.constant 0 : index
    %257 = vector.load %arg6[%c3_176, %c0_177, %c0_178] : memref<13x256x128xbf16, #tpu.memory_space<vmem>>, vector<1x256x128xbf16>
    %258 = vector.shape_cast %257 : vector<1x256x128xbf16> to vector<256x128xbf16>
    %cst_179 = arith.constant dense<0.000000e+00> : vector<1x128xf32>
    %259 = tpu.matmul %256, %258, %cst_179 {dimension_numbers = #tpu.dot_dimension_numbers<[1], [0], [0], [1], [0, 0, 1, 1], [], []>} : vector<1x256xbf16>, vector<256x128xbf16>, vector<1x128xf32> -> vector<1x128xf32>
    %260 = arith.addf %248, %259 : vector<1x128xf32>
    %261 = vector.extract_strided_slice %211 {offsets = [16, 0], sizes = [1, 128], strides = [1, 1]} : vector<56x128xf32> to vector<1x128xf32>
    %262 = vector.extract_strided_slice %211 {offsets = [17, 0], sizes = [1, 128], strides = [1, 1]} : vector<56x128xf32> to vector<1x128xf32>
    %263 = vector.extract_strided_slice %211 {offsets = [18, 0], sizes = [1, 128], strides = [1, 1]} : vector<56x128xf32> to vector<1x128xf32>
    %264 = vector.extract_strided_slice %211 {offsets = [19, 0], sizes = [1, 128], strides = [1, 1]} : vector<56x128xf32> to vector<1x128xf32>
    %265 = arith.maximumf %261, %262 : vector<1x128xf32>
    %266 = arith.maximumf %263, %264 : vector<1x128xf32>
    %267 = tpu.concatenate %265, %266 in 1 : vector<1x128xf32>, vector<1x128xf32> -> vector<1x256xf32>
    %268 = arith.truncf %267 : vector<1x256xf32> to vector<1x256xbf16>
    %c4_180 = arith.constant 4 : index
    %c0_181 = arith.constant 0 : index
    %c0_182 = arith.constant 0 : index
    %269 = vector.load %arg6[%c4_180, %c0_181, %c0_182] : memref<13x256x128xbf16, #tpu.memory_space<vmem>>, vector<1x256x128xbf16>
    %270 = vector.shape_cast %269 : vector<1x256x128xbf16> to vector<256x128xbf16>
    %cst_183 = arith.constant dense<0.000000e+00> : vector<1x128xf32>
    %271 = tpu.matmul %268, %270, %cst_183 {dimension_numbers = #tpu.dot_dimension_numbers<[1], [0], [0], [1], [0, 0, 1, 1], [], []>} : vector<1x256xbf16>, vector<256x128xbf16>, vector<1x128xf32> -> vector<1x128xf32>
    %272 = arith.addf %260, %271 : vector<1x128xf32>
    %273 = vector.extract_strided_slice %211 {offsets = [20, 0], sizes = [1, 128], strides = [1, 1]} : vector<56x128xf32> to vector<1x128xf32>
    %274 = vector.extract_strided_slice %211 {offsets = [21, 0], sizes = [1, 128], strides = [1, 1]} : vector<56x128xf32> to vector<1x128xf32>
    %275 = vector.extract_strided_slice %211 {offsets = [22, 0], sizes = [1, 128], strides = [1, 1]} : vector<56x128xf32> to vector<1x128xf32>
    %276 = vector.extract_strided_slice %211 {offsets = [23, 0], sizes = [1, 128], strides = [1, 1]} : vector<56x128xf32> to vector<1x128xf32>
    %277 = arith.maximumf %273, %274 : vector<1x128xf32>
    %278 = arith.maximumf %275, %276 : vector<1x128xf32>
    %279 = tpu.concatenate %277, %278 in 1 : vector<1x128xf32>, vector<1x128xf32> -> vector<1x256xf32>
    %280 = arith.truncf %279 : vector<1x256xf32> to vector<1x256xbf16>
    %c5_184 = arith.constant 5 : index
    %c0_185 = arith.constant 0 : index
    %c0_186 = arith.constant 0 : index
    %281 = vector.load %arg6[%c5_184, %c0_185, %c0_186] : memref<13x256x128xbf16, #tpu.memory_space<vmem>>, vector<1x256x128xbf16>
    %282 = vector.shape_cast %281 : vector<1x256x128xbf16> to vector<256x128xbf16>
    %cst_187 = arith.constant dense<0.000000e+00> : vector<1x128xf32>
    %283 = tpu.matmul %280, %282, %cst_187 {dimension_numbers = #tpu.dot_dimension_numbers<[1], [0], [0], [1], [0, 0, 1, 1], [], []>} : vector<1x256xbf16>, vector<256x128xbf16>, vector<1x128xf32> -> vector<1x128xf32>
    %284 = arith.addf %272, %283 : vector<1x128xf32>
    %285 = vector.extract_strided_slice %211 {offsets = [24, 0], sizes = [1, 128], strides = [1, 1]} : vector<56x128xf32> to vector<1x128xf32>
    %286 = vector.extract_strided_slice %211 {offsets = [25, 0], sizes = [1, 128], strides = [1, 1]} : vector<56x128xf32> to vector<1x128xf32>
    %287 = vector.extract_strided_slice %211 {offsets = [26, 0], sizes = [1, 128], strides = [1, 1]} : vector<56x128xf32> to vector<1x128xf32>
    %288 = vector.extract_strided_slice %211 {offsets = [27, 0], sizes = [1, 128], strides = [1, 1]} : vector<56x128xf32> to vector<1x128xf32>
    %289 = arith.maximumf %285, %286 : vector<1x128xf32>
    %290 = arith.maximumf %287, %288 : vector<1x128xf32>
    %291 = tpu.concatenate %289, %290 in 1 : vector<1x128xf32>, vector<1x128xf32> -> vector<1x256xf32>
    %292 = arith.truncf %291 : vector<1x256xf32> to vector<1x256xbf16>
    %c6_188 = arith.constant 6 : index
    %c0_189 = arith.constant 0 : index
    %c0_190 = arith.constant 0 : index
    %293 = vector.load %arg6[%c6_188, %c0_189, %c0_190] : memref<13x256x128xbf16, #tpu.memory_space<vmem>>, vector<1x256x128xbf16>
    %294 = vector.shape_cast %293 : vector<1x256x128xbf16> to vector<256x128xbf16>
    %cst_191 = arith.constant dense<0.000000e+00> : vector<1x128xf32>
    %295 = tpu.matmul %292, %294, %cst_191 {dimension_numbers = #tpu.dot_dimension_numbers<[1], [0], [0], [1], [0, 0, 1, 1], [], []>} : vector<1x256xbf16>, vector<256x128xbf16>, vector<1x128xf32> -> vector<1x128xf32>
    %296 = arith.addf %284, %295 : vector<1x128xf32>
    %297 = vector.extract_strided_slice %211 {offsets = [28, 0], sizes = [1, 128], strides = [1, 1]} : vector<56x128xf32> to vector<1x128xf32>
    %298 = vector.extract_strided_slice %211 {offsets = [29, 0], sizes = [1, 128], strides = [1, 1]} : vector<56x128xf32> to vector<1x128xf32>
    %299 = vector.extract_strided_slice %211 {offsets = [30, 0], sizes = [1, 128], strides = [1, 1]} : vector<56x128xf32> to vector<1x128xf32>
    %300 = vector.extract_strided_slice %211 {offsets = [31, 0], sizes = [1, 128], strides = [1, 1]} : vector<56x128xf32> to vector<1x128xf32>
    %301 = arith.maximumf %297, %298 : vector<1x128xf32>
    %302 = arith.maximumf %299, %300 : vector<1x128xf32>
    %303 = tpu.concatenate %301, %302 in 1 : vector<1x128xf32>, vector<1x128xf32> -> vector<1x256xf32>
    %304 = arith.truncf %303 : vector<1x256xf32> to vector<1x256xbf16>
    %c7_192 = arith.constant 7 : index
    %c0_193 = arith.constant 0 : index
    %c0_194 = arith.constant 0 : index
    %305 = vector.load %arg6[%c7_192, %c0_193, %c0_194] : memref<13x256x128xbf16, #tpu.memory_space<vmem>>, vector<1x256x128xbf16>
    %306 = vector.shape_cast %305 : vector<1x256x128xbf16> to vector<256x128xbf16>
    %cst_195 = arith.constant dense<0.000000e+00> : vector<1x128xf32>
    %307 = tpu.matmul %304, %306, %cst_195 {dimension_numbers = #tpu.dot_dimension_numbers<[1], [0], [0], [1], [0, 0, 1, 1], [], []>} : vector<1x256xbf16>, vector<256x128xbf16>, vector<1x128xf32> -> vector<1x128xf32>
    %308 = arith.addf %296, %307 : vector<1x128xf32>
    %309 = vector.extract_strided_slice %211 {offsets = [32, 0], sizes = [1, 128], strides = [1, 1]} : vector<56x128xf32> to vector<1x128xf32>
    %310 = vector.extract_strided_slice %211 {offsets = [33, 0], sizes = [1, 128], strides = [1, 1]} : vector<56x128xf32> to vector<1x128xf32>
    %311 = vector.extract_strided_slice %211 {offsets = [34, 0], sizes = [1, 128], strides = [1, 1]} : vector<56x128xf32> to vector<1x128xf32>
    %312 = vector.extract_strided_slice %211 {offsets = [35, 0], sizes = [1, 128], strides = [1, 1]} : vector<56x128xf32> to vector<1x128xf32>
    %313 = arith.maximumf %309, %310 : vector<1x128xf32>
    %314 = arith.maximumf %311, %312 : vector<1x128xf32>
    %315 = tpu.concatenate %313, %314 in 1 : vector<1x128xf32>, vector<1x128xf32> -> vector<1x256xf32>
    %316 = arith.truncf %315 : vector<1x256xf32> to vector<1x256xbf16>
    %c8_196 = arith.constant 8 : index
    %c0_197 = arith.constant 0 : index
    %c0_198 = arith.constant 0 : index
    %317 = vector.load %arg6[%c8_196, %c0_197, %c0_198] : memref<13x256x128xbf16, #tpu.memory_space<vmem>>, vector<1x256x128xbf16>
    %318 = vector.shape_cast %317 : vector<1x256x128xbf16> to vector<256x128xbf16>
    %cst_199 = arith.constant dense<0.000000e+00> : vector<1x128xf32>
    %319 = tpu.matmul %316, %318, %cst_199 {dimension_numbers = #tpu.dot_dimension_numbers<[1], [0], [0], [1], [0, 0, 1, 1], [], []>} : vector<1x256xbf16>, vector<256x128xbf16>, vector<1x128xf32> -> vector<1x128xf32>
    %320 = arith.addf %308, %319 : vector<1x128xf32>
    %321 = vector.extract_strided_slice %211 {offsets = [36, 0], sizes = [1, 128], strides = [1, 1]} : vector<56x128xf32> to vector<1x128xf32>
    %322 = vector.extract_strided_slice %211 {offsets = [37, 0], sizes = [1, 128], strides = [1, 1]} : vector<56x128xf32> to vector<1x128xf32>
    %323 = vector.extract_strided_slice %211 {offsets = [38, 0], sizes = [1, 128], strides = [1, 1]} : vector<56x128xf32> to vector<1x128xf32>
    %324 = vector.extract_strided_slice %211 {offsets = [39, 0], sizes = [1, 128], strides = [1, 1]} : vector<56x128xf32> to vector<1x128xf32>
    %325 = arith.maximumf %321, %322 : vector<1x128xf32>
    %326 = arith.maximumf %323, %324 : vector<1x128xf32>
    %327 = tpu.concatenate %325, %326 in 1 : vector<1x128xf32>, vector<1x128xf32> -> vector<1x256xf32>
    %328 = arith.truncf %327 : vector<1x256xf32> to vector<1x256xbf16>
    %c9_200 = arith.constant 9 : index
    %c0_201 = arith.constant 0 : index
    %c0_202 = arith.constant 0 : index
    %329 = vector.load %arg6[%c9_200, %c0_201, %c0_202] : memref<13x256x128xbf16, #tpu.memory_space<vmem>>, vector<1x256x128xbf16>
    %330 = vector.shape_cast %329 : vector<1x256x128xbf16> to vector<256x128xbf16>
    %cst_203 = arith.constant dense<0.000000e+00> : vector<1x128xf32>
    %331 = tpu.matmul %328, %330, %cst_203 {dimension_numbers = #tpu.dot_dimension_numbers<[1], [0], [0], [1], [0, 0, 1, 1], [], []>} : vector<1x256xbf16>, vector<256x128xbf16>, vector<1x128xf32> -> vector<1x128xf32>
    %332 = arith.addf %320, %331 : vector<1x128xf32>
    %333 = vector.extract_strided_slice %211 {offsets = [40, 0], sizes = [1, 128], strides = [1, 1]} : vector<56x128xf32> to vector<1x128xf32>
    %334 = vector.extract_strided_slice %211 {offsets = [41, 0], sizes = [1, 128], strides = [1, 1]} : vector<56x128xf32> to vector<1x128xf32>
    %335 = vector.extract_strided_slice %211 {offsets = [42, 0], sizes = [1, 128], strides = [1, 1]} : vector<56x128xf32> to vector<1x128xf32>
    %336 = vector.extract_strided_slice %211 {offsets = [43, 0], sizes = [1, 128], strides = [1, 1]} : vector<56x128xf32> to vector<1x128xf32>
    %337 = arith.maximumf %333, %334 : vector<1x128xf32>
    %338 = arith.maximumf %335, %336 : vector<1x128xf32>
    %339 = tpu.concatenate %337, %338 in 1 : vector<1x128xf32>, vector<1x128xf32> -> vector<1x256xf32>
    %340 = arith.truncf %339 : vector<1x256xf32> to vector<1x256xbf16>
    %c10_204 = arith.constant 10 : index
    %c0_205 = arith.constant 0 : index
    %c0_206 = arith.constant 0 : index
    %341 = vector.load %arg6[%c10_204, %c0_205, %c0_206] : memref<13x256x128xbf16, #tpu.memory_space<vmem>>, vector<1x256x128xbf16>
    %342 = vector.shape_cast %341 : vector<1x256x128xbf16> to vector<256x128xbf16>
    %cst_207 = arith.constant dense<0.000000e+00> : vector<1x128xf32>
    %343 = tpu.matmul %340, %342, %cst_207 {dimension_numbers = #tpu.dot_dimension_numbers<[1], [0], [0], [1], [0, 0, 1, 1], [], []>} : vector<1x256xbf16>, vector<256x128xbf16>, vector<1x128xf32> -> vector<1x128xf32>
    %344 = arith.addf %332, %343 : vector<1x128xf32>
    %345 = vector.extract_strided_slice %211 {offsets = [44, 0], sizes = [1, 128], strides = [1, 1]} : vector<56x128xf32> to vector<1x128xf32>
    %346 = vector.extract_strided_slice %211 {offsets = [45, 0], sizes = [1, 128], strides = [1, 1]} : vector<56x128xf32> to vector<1x128xf32>
    %347 = vector.extract_strided_slice %211 {offsets = [46, 0], sizes = [1, 128], strides = [1, 1]} : vector<56x128xf32> to vector<1x128xf32>
    %348 = vector.extract_strided_slice %211 {offsets = [47, 0], sizes = [1, 128], strides = [1, 1]} : vector<56x128xf32> to vector<1x128xf32>
    %349 = arith.maximumf %345, %346 : vector<1x128xf32>
    %350 = arith.maximumf %347, %348 : vector<1x128xf32>
    %351 = tpu.concatenate %349, %350 in 1 : vector<1x128xf32>, vector<1x128xf32> -> vector<1x256xf32>
    %352 = arith.truncf %351 : vector<1x256xf32> to vector<1x256xbf16>
    %c11_208 = arith.constant 11 : index
    %c0_209 = arith.constant 0 : index
    %c0_210 = arith.constant 0 : index
    %353 = vector.load %arg6[%c11_208, %c0_209, %c0_210] : memref<13x256x128xbf16, #tpu.memory_space<vmem>>, vector<1x256x128xbf16>
    %354 = vector.shape_cast %353 : vector<1x256x128xbf16> to vector<256x128xbf16>
    %cst_211 = arith.constant dense<0.000000e+00> : vector<1x128xf32>
    %355 = tpu.matmul %352, %354, %cst_211 {dimension_numbers = #tpu.dot_dimension_numbers<[1], [0], [0], [1], [0, 0, 1, 1], [], []>} : vector<1x256xbf16>, vector<256x128xbf16>, vector<1x128xf32> -> vector<1x128xf32>
    %356 = arith.addf %344, %355 : vector<1x128xf32>
    %357 = vector.extract_strided_slice %211 {offsets = [48, 0], sizes = [1, 128], strides = [1, 1]} : vector<56x128xf32> to vector<1x128xf32>
    %358 = vector.extract_strided_slice %211 {offsets = [49, 0], sizes = [1, 128], strides = [1, 1]} : vector<56x128xf32> to vector<1x128xf32>
    %359 = vector.extract_strided_slice %211 {offsets = [50, 0], sizes = [1, 128], strides = [1, 1]} : vector<56x128xf32> to vector<1x128xf32>
    %360 = vector.extract_strided_slice %211 {offsets = [51, 0], sizes = [1, 128], strides = [1, 1]} : vector<56x128xf32> to vector<1x128xf32>
    %361 = arith.maximumf %357, %358 : vector<1x128xf32>
    %362 = arith.maximumf %359, %360 : vector<1x128xf32>
    %363 = tpu.concatenate %361, %362 in 1 : vector<1x128xf32>, vector<1x128xf32> -> vector<1x256xf32>
    %364 = arith.truncf %363 : vector<1x256xf32> to vector<1x256xbf16>
    %c12_212 = arith.constant 12 : index
    %c0_213 = arith.constant 0 : index
    %c0_214 = arith.constant 0 : index
    %365 = vector.load %arg6[%c12_212, %c0_213, %c0_214] : memref<13x256x128xbf16, #tpu.memory_space<vmem>>, vector<1x256x128xbf16>
    %366 = vector.shape_cast %365 : vector<1x256x128xbf16> to vector<256x128xbf16>
    %cst_215 = arith.constant dense<0.000000e+00> : vector<1x128xf32>
    %367 = tpu.matmul %364, %366, %cst_215 {dimension_numbers = #tpu.dot_dimension_numbers<[1], [0], [0], [1], [0, 0, 1, 1], [], []>} : vector<1x256xbf16>, vector<256x128xbf16>, vector<1x128xf32> -> vector<1x128xf32>
    %368 = arith.addf %356, %367 : vector<1x128xf32>
    %cst_216 = arith.constant 0.000000e+00 : f32
    %369 = vector.broadcast %cst_216 : f32 to vector<1x128xf32>
    %370 = arith.maximumf %368, %369 : vector<1x128xf32>
    %371 = arith.truncf %370 : vector<1x128xf32> to vector<1x128xbf16>
    %c0_217 = arith.constant 0 : index
    %c0_218 = arith.constant 0 : index
    %372 = vector.load %arg8[%c0_217, %c0_218] : memref<128x128xbf16, #tpu.memory_space<vmem>>, vector<128x128xbf16>
    %cst_219 = arith.constant dense<0.000000e+00> : vector<1x128xf32>
    %373 = tpu.matmul %371, %372, %cst_219 {dimension_numbers = #tpu.dot_dimension_numbers<[1], [0], [0], [1], [0, 0, 1, 1], [], []>} : vector<1x128xbf16>, vector<128x128xbf16>, vector<1x128xf32> -> vector<1x128xf32>
    %c0_220 = arith.constant 0 : index
    %c0_221 = arith.constant 0 : index
    %374 = vector.load %arg9[%c0_220, %c0_221] : memref<1x128xf32, #tpu.memory_space<vmem>>, vector<1x128xf32>
    %375 = arith.addf %373, %374 : vector<1x128xf32>
    %cst_222 = arith.constant dense<0xFF800000> : vector<1xf32>
    %376 = vector.multi_reduction <maximumf>, %375, %cst_222 [1] : vector<1x128xf32> to vector<1xf32>
    %377 = vector.shape_cast %376 : vector<1xf32> to vector<1x1xf32>
    %378 = vector.broadcast %377 : vector<1x1xf32> to vector<1x128xf32>
    %379 = arith.subf %375, %378 : vector<1x128xf32>
    %380 = math.exp %379 : vector<1x128xf32>
    %cst_223 = arith.constant dense<0.000000e+00> : vector<1xf32>
    %381 = vector.multi_reduction <add>, %380, %cst_223 [1] : vector<1x128xf32> to vector<1xf32>
    %382 = vector.shape_cast %381 : vector<1xf32> to vector<1x1xf32>
    %383 = vector.broadcast %382 : vector<1x1xf32> to vector<1x128xf32>
    %384 = arith.divf %380, %383 : vector<1x128xf32>
    %c0_224 = arith.constant 0 : index
    %c0_225 = arith.constant 0 : index
    %c0_226 = arith.constant 0 : index
    %385 = vector.load %arg10[%c0_224, %c0_225, %c0_226] : memref<1x1x128xf32, #tpu.memory_space<vmem>>, vector<1x1x128xf32>
    %386 = vector.shape_cast %385 : vector<1x1x128xf32> to vector<1x128xf32>
    %387 = vector.shape_cast %384 : vector<1x128xf32> to vector<1x1x128xf32>
    tpu.vector_store %arg10[%c0_224, %c0_225, %c0_226], %387 {strides = array<i32>} : memref<1x1x128xf32, #tpu.memory_space<vmem>>, vector<1x1x128xf32>,
    return
  }
  func.func @transform_0(%arg0: i32) -> (i32, i32, i32) {
    %c0_i32 = arith.constant 0 : i32
    %c0_i32_0 = arith.constant 0 : i32
    %c0_i32_1 = arith.constant 0 : i32
    return %arg0, %c0_i32, %c0_i32_0 : i32, i32, i32
  }
  func.func @transform_1(%arg0: i32) -> (i32, i32) {
    %c0_i32 = arith.constant 0 : i32
    %c0_i32_0 = arith.constant 0 : i32
    %c0_i32_1 = arith.constant 0 : i32
    return %c0_i32, %c0_i32_0 : i32, i32
  }
  func.func @transform_2(%arg0: i32) -> (i32, i32) {
    %c0_i32 = arith.constant 0 : i32
    %c0_i32_0 = arith.constant 0 : i32
    %c0_i32_1 = arith.constant 0 : i32
    return %c0_i32, %c0_i32_0 : i32, i32
  }
  func.func @transform_3(%arg0: i32) -> (i32, i32, i32) {
    %c0_i32 = arith.constant 0 : i32
    %c0_i32_0 = arith.constant 0 : i32
    %c0_i32_1 = arith.constant 0 : i32
    %c0_i32_2 = arith.constant 0 : i32
    return %c0_i32, %c0_i32_0, %c0_i32_1 : i32, i32, i32
  }
  func.func @transform_4(%arg0: i32) -> (i32, i32) {
    %c0_i32 = arith.constant 0 : i32
    %c0_i32_0 = arith.constant 0 : i32
    %c0_i32_1 = arith.constant 0 : i32
    return %c0_i32, %c0_i32_0 : i32, i32
  }
  func.func @transform_5(%arg0: i32) -> (i32, i32, i32) {
    %c0_i32 = arith.constant 0 : i32
    %c0_i32_0 = arith.constant 0 : i32
    %c0_i32_1 = arith.constant 0 : i32
    %c0_i32_2 = arith.constant 0 : i32
    return %c0_i32, %c0_i32_0, %c0_i32_1 : i32, i32, i32
  }
  func.func @transform_6(%arg0: i32) -> (i32, i32) {
    %c0_i32 = arith.constant 0 : i32
    %c0_i32_0 = arith.constant 0 : i32
    %c0_i32_1 = arith.constant 0 : i32
    return %c0_i32, %c0_i32_0 : i32, i32
  }
  func.func @transform_7(%arg0: i32) -> (i32, i32) {
    %c0_i32 = arith.constant 0 : i32
    %c0_i32_0 = arith.constant 0 : i32
    %c0_i32_1 = arith.constant 0 : i32
    return %c0_i32, %c0_i32_0 : i32, i32
  }
  func.func @transform_8(%arg0: i32) -> (i32, i32) {
    %c0_i32 = arith.constant 0 : i32
    %c0_i32_0 = arith.constant 0 : i32
    %c0_i32_1 = arith.constant 0 : i32
    return %c0_i32, %c0_i32_0 : i32, i32
  }
  func.func @transform_9(%arg0: i32) -> (i32, i32, i32) {
    %c0_i32 = arith.constant 0 : i32
    %c0_i32_0 = arith.constant 0 : i32
    %c0_i32_1 = arith.constant 0 : i32
    return %arg0, %c0_i32, %c0_i32_0 : i32, i32, i32
  }
}

</mosaic_0001>

<llo_original>
// kernel: forward.1
$region0: #{forward.1}
  #allocation0 [shape = 'u32[]', space=smem, size = 0x4, offset = 0x4, fixed_abs, tag = 'smem constant byte address 0x4 - core index']
  #allocation1 [shape = 'u32[144,128]{1,0:T(1,128)}', space=vmem, size = 0x12000, scoped, tag = 'internal scratch']
  #allocation2 [shape = 'f32[112,128]{1,0:T(8,128)}', space=vmem, size = 0xe000, scoped, tag = 'scratch operand']
  %s0 = inlined_call_operand.vmem [shape: bf16[2,112,512], index: 0, kind: input, shape index: {}]
  %s1 = inlined_call_operand.hbm [shape: bf16[512,128], index: 1, kind: input, shape index: {}]
  %s2 = inlined_call_operand.hbm [shape: f32[1,128], index: 2, kind: input, shape index: {}]
  %s3 = inlined_call_operand.hbm [shape: bf16[25,256,128], index: 3, kind: input, shape index: {}]
  %s4 = inlined_call_operand.hbm [shape: f32[1,128], index: 4, kind: input, shape index: {}]
  %s5 = inlined_call_operand.vmem [shape: bf16[13,256,128], index: 5, kind: input, shape index: {}]
  %s6 = inlined_call_operand.hbm [shape: f32[1,128], index: 6, kind: input, shape index: {}]
  %s7 = inlined_call_operand.hbm [shape: bf16[128,128], index: 7, kind: input, shape index: {}]
  %s8 = inlined_call_operand.hbm [shape: f32[1,128], index: 8, kind: input, shape index: {}]
  %s9 = inlined_call_operand.hbm [shape: f32[2,1,128], index: 9, kind: output, shape index: {}]
  %s10 = sld [smem:[#allocation0]]
  $region97: #{forward.1} parent=0
    _
  %s12 = ssub.s32 1, %s10
  %s13 = scalar_select 0, %s12, %s10
  $region1: #{forward.1} parent=0
    #allocation3 [shape = 'u8[131072]{0}', space=vmem, size = 0x20000, scoped, tag = 'input window, operand 1, single buffered']
    #allocation4 [shape = 's32[2]{0}', space=sflag, size = 0x8, scoped, tag = 'scoped memory for forward.1']
    #allocation5 [shape = 's32[2]{0}', space=sflag, size = 0x8, scoped, tag = 'scoped memory for forward.1']
    #allocation6 [shape = 'u8[512]{0}', space=vmem, size = 0x400, scoped, tag = 'input window, operand 2, single buffered']
    #allocation7 [shape = 's32[1]{0}', space=sflag, size = 0x4, scoped, tag = 'scoped memory for forward.1']
    #allocation8 [shape = 'u8[1638400]{0}', space=vmem, size = 0x190000, scoped, tag = 'input window, operand 3, single buffered']
    #allocation9 [shape = 'u8[512]{0}', space=vmem, size = 0x400, scoped, tag = 'input window, operand 4, single buffered']
    #allocation10 [shape = 's32[1]{0}', space=sflag, size = 0x4, scoped, tag = 'scoped memory for forward.1']
    #allocation11 [shape = 'u8[512]{0}', space=vmem, size = 0x400, scoped, tag = 'input window, operand 6, single buffered']
    #allocation12 [shape = 'u8[32768]{0}', space=vmem, size = 0x8000, scoped, tag = 'input window, operand 7, single buffered']
    #allocation13 [shape = 's32[1]{0}', space=sflag, size = 0x4, scoped, tag = 'scoped memory for forward.1']
    #allocation14 [shape = 'u8[512]{0}', space=vmem, size = 0x400, scoped, tag = 'input window, operand 8, single buffered']
    #allocation15 [shape = 'u8[1024]{0}', space=vmem, size = 0x400, scoped, tag = 'output window, operand 0']
    %14 = vsyncpa [#allocation4], 0
    %15 = vsyncpa [#allocation7], 0
    %16 = vsyncpa [#allocation10], 0
    %17 = vsyncpa [#allocation13], 0
    %18 = vsyncpa [#allocation5], 0
    %s19 = scalar_lea.sflag [#allocation5], 1
    %20 = vsyncpa %s19, 0
    loop: start=0, step=1, limit=4
    $region2: #{forward.1} parent=1 // loop_pre_header
      _
    $region3: #{forward.1} parent=1 // loop_header
      %s22 = sphi 0, %s26
      %p23 = scmp.ge.s32.totalorder %s22, 4
      %s32 = sphi 0, %s34
      %s35 = sphi 0, %s32
      %s36 = sphi 0, %s35
      %s52 = sphi 0, %s36
      %s56 = sphi 0, %s56
      %s58 = sphi 0, %s56
      %s59 = sphi 0, %s58
      %s73 = sphi 0, %s59
      %s77 = sphi 0, %s77
      %s79 = sphi 0, %s77
      %s80 = sphi 0, %s79
      %s94 = sphi 0, %s80
      %s98 = sphi 0, %s98
      %s100 = sphi 0, %s98
      %s101 = sphi 0, %s100
      %s115 = sphi 0, %s101
      %s119 = sphi 0, %s119
      %s121 = sphi 0, %s119
      %s122 = sphi 0, %s121
      %s136 = sphi 0, %s122
      %s140 = sphi 0, %s140
      %s142 = sphi 0, %s140
      %s143 = sphi 0, %s142
      %s157 = sphi 0, %s143
      %s161 = sphi 0, %s161
      %s163 = sphi 0, %s161
      %s164 = sphi 0, %s163
      %s178 = sphi 0, %s164
      %s182 = sphi 0, %s182
      %s184 = sphi 0, %s182
      %s185 = sphi 0, %s184
      %s199 = sphi 0, %s185
      %s203 = sphi 0, %s203
      %s205 = sphi 0, %s203
      %s206 = sphi 0, %s205
      %s220 = sphi 0, %s206
      %s226 = sphi 0, %s228
      %s229 = sphi 0, %s226
      %s230 = sphi 0, %s229
      %s246 = sphi 0, %s230
    $region4: #{forward.1} parent=1 // loop_header_branch
      %25 = sbr.rel (%p23) target = $region8
    $region5: #{forward.1} parent=1 // loop_body
      %s27 = ssub.s32 %s22, 1
      %s28 = ssub.s32 %s22, 2
      %s29 = sadd.s32 %s22, 1
      %s30 = ssub.s32 %s22, %s29
      %p31 = scmp.eq.s32.totalorder %s30, 0
      %s33 = sadd.s32 %s32, 1
      %s34 = scalar_select %p31, %s32, %s33
      %p37 = pneg %p31
      %p38 = scmp.eq.s32.totalorder %s22, 1
      %p39 = por %p37, %p38
      %p40 = scmp.ne.s32.totalorder %s32, %s35
      %p41 = scmp.eq.s32.totalorder %s22, 0
      %p42 = por %p40, %p41
      %p43 = scmp.ne.s32.totalorder %s32, %s35
      %p44 = scmp.eq.s32.totalorder %s27, 1
      %p45 = por %p43, %p44
      %p46 = scmp.ne.s32.totalorder %s35, %s36
      %p47 = scmp.eq.s32.totalorder %s27, 0
      %p48 = por %p46, %p47
      %p49 = scmp.ne.s32.totalorder %s35, %s36
      %p50 = scmp.eq.s32.totalorder %s28, 1
      %p51 = por %p49, %p50
      %p53 = scmp.ne.s32.totalorder %s36, %s52
      %p54 = scmp.eq.s32.totalorder %s28, 0
      %p55 = por %p53, %p54
      %s57 = sadd.s32 %s56, 1
      %p60 = scmp.eq.s32.totalorder %s22, 1
      %p61 = scmp.ne.s32.totalorder %s56, %s58
      %p62 = scmp.eq.s32.totalorder %s22, 0
      %p63 = por %p61, %p62
      %p64 = scmp.ne.s32.totalorder %s56, %s58
      %p65 = scmp.eq.s32.totalorder %s27, 1
      %p66 = por %p64, %p65
      %p67 = scmp.ne.s32.totalorder %s58, %s59
      %p68 = scmp.eq.s32.totalorder %s27, 0
      %p69 = por %p67, %p68
      %p70 = scmp.ne.s32.totalorder %s58, %s59
      %p71 = scmp.eq.s32.totalorder %s28, 1
      %p72 = por %p70, %p71
      %p74 = scmp.ne.s32.totalorder %s59, %s73
      %p75 = scmp.eq.s32.totalorder %s28, 0
      %p76 = por %p74, %p75
      %s78 = sadd.s32 %s77, 1
      %p81 = scmp.eq.s32.totalorder %s22, 1
      %p82 = scmp.ne.s32.totalorder %s77, %s79
      %p83 = scmp.eq.s32.totalorder %s22, 0
      %p84 = por %p82, %p83
      %p85 = scmp.ne.s32.totalorder %s77, %s79
      %p86 = scmp.eq.s32.totalorder %s27, 1
      %p87 = por %p85, %p86
      %p88 = scmp.ne.s32.totalorder %s79, %s80
      %p89 = scmp.eq.s32.totalorder %s27, 0
      %p90 = por %p88, %p89
      %p91 = scmp.ne.s32.totalorder %s79, %s80
      %p92 = scmp.eq.s32.totalorder %s28, 1
      %p93 = por %p91, %p92
      %p95 = scmp.ne.s32.totalorder %s80, %s94
      %p96 = scmp.eq.s32.totalorder %s28, 0
      %p97 = por %p95, %p96
      %s99 = sadd.s32 %s98, 1
      %p102 = scmp.eq.s32.totalorder %s22, 1
      %p103 = scmp.ne.s32.totalorder %s98, %s100
      %p104 = scmp.eq.s32.totalorder %s22, 0
      %p105 = por %p103, %p104
      %p106 = scmp.ne.s32.totalorder %s98, %s100
      %p107 = scmp.eq.s32.totalorder %s27, 1
      %p108 = por %p106, %p107
      %p109 = scmp.ne.s32.totalorder %s100, %s101
      %p110 = scmp.eq.s32.totalorder %s27, 0
      %p111 = por %p109, %p110
      %p112 = scmp.ne.s32.totalorder %s100, %s101
      %p113 = scmp.eq.s32.totalorder %s28, 1
      %p114 = por %p112, %p113
      %p116 = scmp.ne.s32.totalorder %s101, %s115
      %p117 = scmp.eq.s32.totalorder %s28, 0
      %p118 = por %p116, %p117
      %s120 = sadd.s32 %s119, 1
      %p123 = scmp.eq.s32.totalorder %s22, 1
      %p124 = scmp.ne.s32.totalorder %s119, %s121
      %p125 = scmp.eq.s32.totalorder %s22, 0
      %p126 = por %p124, %p125
      %p127 = scmp.ne.s32.totalorder %s119, %s121
      %p128 = scmp.eq.s32.totalorder %s27, 1
      %p129 = por %p127, %p128
      %p130 = scmp.ne.s32.totalorder %s121, %s122
      %p131 = scmp.eq.s32.totalorder %s27, 0
      %p132 = por %p130, %p131
      %p133 = scmp.ne.s32.totalorder %s121, %s122
      %p134 = scmp.eq.s32.totalorder %s28, 1
      %p135 = por %p133, %p134
      %p137 = scmp.ne.s32.totalorder %s122, %s136
      %p138 = scmp.eq.s32.totalorder %s28, 0
      %p139 = por %p137, %p138
      %s141 = sadd.s32 %s140, 1
      %p144 = scmp.eq.s32.totalorder %s22, 1
      %p145 = scmp.ne.s32.totalorder %s140, %s142
      %p146 = scmp.eq.s32.totalorder %s22, 0
      %p147 = por %p145, %p146
      %p148 = scmp.ne.s32.totalorder %s140, %s142
      %p149 = scmp.eq.s32.totalorder %s27, 1
      %p150 = por %p148, %p149
      %p151 = scmp.ne.s32.totalorder %s142, %s143
      %p152 = scmp.eq.s32.totalorder %s27, 0
      %p153 = por %p151, %p152
      %p154 = scmp.ne.s32.totalorder %s142, %s143
      %p155 = scmp.eq.s32.totalorder %s28, 1
      %p156 = por %p154, %p155
      %p158 = scmp.ne.s32.totalorder %s143, %s157
      %p159 = scmp.eq.s32.totalorder %s28, 0
      %p160 = por %p158, %p159
      %s162 = sadd.s32 %s161, 1
      %p165 = scmp.eq.s32.totalorder %s22, 1
      %p166 = scmp.ne.s32.totalorder %s161, %s163
      %p167 = scmp.eq.s32.totalorder %s22, 0
      %p168 = por %p166, %p167
      %p169 = scmp.ne.s32.totalorder %s161, %s163
      %p170 = scmp.eq.s32.totalorder %s27, 1
      %p171 = por %p169, %p170
      %p172 = scmp.ne.s32.totalorder %s163, %s164
      %p173 = scmp.eq.s32.totalorder %s27, 0
      %p174 = por %p172, %p173
      %p175 = scmp.ne.s32.totalorder %s163, %s164
      %p176 = scmp.eq.s32.totalorder %s28, 1
      %p177 = por %p175, %p176
      %p179 = scmp.ne.s32.totalorder %s164, %s178
      %p180 = scmp.eq.s32.totalorder %s28, 0
      %p181 = por %p179, %p180
      %s183 = sadd.s32 %s182, 1
      %p186 = scmp.eq.s32.totalorder %s22, 1
      %p187 = scmp.ne.s32.totalorder %s182, %s184
      %p188 = scmp.eq.s32.totalorder %s22, 0
      %p189 = por %p187, %p188
      %p190 = scmp.ne.s32.totalorder %s182, %s184
      %p191 = scmp.eq.s32.totalorder %s27, 1
      %p192 = por %p190, %p191
      %p193 = scmp.ne.s32.totalorder %s184, %s185
      %p194 = scmp.eq.s32.totalorder %s27, 0
      %p195 = por %p193, %p194
      %p196 = scmp.ne.s32.totalorder %s184, %s185
      %p197 = scmp.eq.s32.totalorder %s28, 1
      %p198 = por %p196, %p197
      %p200 = scmp.ne.s32.totalorder %s185, %s199
      %p201 = scmp.eq.s32.totalorder %s28, 0
      %p202 = por %p200, %p201
      %s204 = sadd.s32 %s203, 1
      %p207 = scmp.eq.s32.totalorder %s22, 1
      %p208 = scmp.ne.s32.totalorder %s203, %s205
      %p209 = scmp.eq.s32.totalorder %s22, 0
      %p210 = por %p208, %p209
      %p211 = scmp.ne.s32.totalorder %s203, %s205
      %p212 = scmp.eq.s32.totalorder %s27, 1
      %p213 = por %p211, %p212
      %p214 = scmp.ne.s32.totalorder %s205, %s206
      %p215 = scmp.eq.s32.totalorder %s27, 0
      %p216 = por %p214, %p215
      %p217 = scmp.ne.s32.totalorder %s205, %s206
      %p218 = scmp.eq.s32.totalorder %s28, 1
      %p219 = por %p217, %p218
      %p221 = scmp.ne.s32.totalorder %s206, %s220
      %p222 = scmp.eq.s32.totalorder %s28, 0
      %p223 = por %p221, %p222
      %s224 = ssub.s32 %s22, %s29
      %p225 = scmp.eq.s32.totalorder %s224, 0
      %s227 = sadd.s32 %s226, 1
      %s228 = scalar_select %p225, %s226, %s227
      %p231 = pneg %p225
      %p232 = scmp.eq.s32.totalorder %s22, 1
      %p233 = por %p231, %p232
      %p234 = scmp.ne.s32.totalorder %s226, %s229
      %p235 = scmp.eq.s32.totalorder %s22, 0
      %p236 = por %p234, %p235
      %p237 = scmp.ne.s32.totalorder %s226, %s229
      %p238 = scmp.eq.s32.totalorder %s27, 1
      %p239 = por %p237, %p238
      %p240 = scmp.ne.s32.totalorder %s229, %s230
      %p241 = scmp.eq.s32.totalorder %s27, 0
      %p242 = por %p240, %p241
      %p243 = scmp.ne.s32.totalorder %s229, %s230
      %p244 = scmp.eq.s32.totalorder %s28, 1
      %p245 = por %p243, %p244
      %p247 = scmp.ne.s32.totalorder %s230, %s246
      %p248 = scmp.eq.s32.totalorder %s28, 0
      %p249 = por %p247, %p248
      %p250 = scmp.le.s32.totalorder 1, %s22
      %p251 = scmp.lt.s32.totalorder %s22, 3
      %p252 = pnand %p250, %p251
      %p253 = pneg %p252
      // Predicated region
      $region9: #{forward.1} parent=5 // pred_check
        _
      $region10: #{forward.1} parent=5 // pred_check_branch
        %255 = sbr.rel (%p252) target = $region12
      $region11: #{forward.1} parent=5 // pred_region
        %s256 = ssub.s32 %s22, 1
        // Predicated region
        $region13: #{forward.1} parent=11 // pred_check
          %p257 = pneg %p69
        $region14: #{forward.1} parent=11 // pred_check_branch
          %259 = sbr.rel (%p257) target = $region16
        $region15: #{forward.1} parent=11 // pred_region
          %s261 = ssub.s32 4096, 4096
          %262 = vsyncadd [#allocation4], %s261
          %s263 = sshll.u32 [#allocation3], 4
          %s264 = int_to_ptr.vmem [resolvable:$true] %s263
          %269 = dma.hbm_to_vmem [thread:$0]  %s1, 4096, %s264, [#allocation4], 64, 64, 4
        $region16: #{forward.1} parent=11 // pred_fallthru
          _
        // Predicated region
        $region17: #{forward.1} parent=11 // pred_check
          %p270 = pneg %p90
        $region18: #{forward.1} parent=11 // pred_check_branch
          %272 = sbr.rel (%p270) target = $region20
        $region19: #{forward.1} parent=11 // pred_region
          %s274 = ssub.s32 16, 16
          %275 = vsyncadd [#allocation7], %s274
          %s277 = sshll.u32 [#allocation6], 4
          %s278 = int_to_ptr.vmem [resolvable:$true] %s277
          %280 = dma.hbm_to_vmem [thread:$0]  %s2, 16, %s278, [#allocation7]
        $region20: #{forward.1} parent=11 // pred_fallthru
          _
        // Predicated region
        $region21: #{forward.1} parent=11 // pred_check
          %p281 = pneg %p111
        $region22: #{forward.1} parent=11 // pred_check_branch
          %283 = sbr.rel (%p281) target = $region24
        $region23: #{forward.1} parent=11 // pred_region
          %s285 = ssub.s32 51200, 51200
          %286 = vsyncadd [#allocation7], %s285
          %s287 = sshll.u32 [#allocation8], 4
          %s288 = int_to_ptr.vmem [resolvable:$true] %s287
          %293 = dma.hbm_to_vmem [thread:$0]  %s3, 51200, %s288, [#allocation7], 64, 64, 4
        $region24: #{forward.1} parent=11 // pred_fallthru
          _
        // Predicated region
        $region25: #{forward.1} parent=11 // pred_check
          %p294 = pneg %p132
        $region26: #{forward.1} parent=11 // pred_check_branch
          %296 = sbr.rel (%p294) target = $region28
        $region27: #{forward.1} parent=11 // pred_region
          %s298 = ssub.s32 16, 16
          %299 = vsyncadd [#allocation10], %s298
          %s301 = sshll.u32 [#allocation9], 4
          %s302 = int_to_ptr.vmem [resolvable:$true] %s301
          %304 = dma.hbm_to_vmem [thread:$0]  %s4, 16, %s302, [#allocation10]
        $region28: #{forward.1} parent=11 // pred_fallthru
          _
        // Predicated region
        $region29: #{forward.1} parent=11 // pred_check
          %p305 = pneg %p153
        $region30: #{forward.1} parent=11 // pred_check_branch
          %307 = sbr.rel (%p305) target = $region32
        $region31: #{forward.1} parent=11 // pred_region
          _
        $region32: #{forward.1} parent=11 // pred_fallthru
          _
        // Predicated region
        $region33: #{forward.1} parent=11 // pred_check
          %p308 = pneg %p174
        $region34: #{forward.1} parent=11 // pred_check_branch
          %310 = sbr.rel (%p308) target = $region36
        $region35: #{forward.1} parent=11 // pred_region
          %s312 = ssub.s32 16, 16
          %313 = vsyncadd [#allocation10], %s312
          %s315 = sshll.u32 [#allocation11], 4
          %s316 = int_to_ptr.vmem [resolvable:$true] %s315
          %318 = dma.hbm_to_vmem [thread:$0]  %s6, 16, %s316, [#allocation10]
        $region36: #{forward.1} parent=11 // pred_fallthru
          _
        // Predicated region
        $region37: #{forward.1} parent=11 // pred_check
          %p319 = pneg %p195
        $region38: #{forward.1} parent=11 // pred_check_branch
          %321 = sbr.rel (%p319) target = $region40
        $region39: #{forward.1} parent=11 // pred_region
          %s323 = ssub.s32 1024, 1024
          %324 = vsyncadd [#allocation13], %s323
          %s325 = sshll.u32 [#allocation12], 4
          %s326 = int_to_ptr.vmem [resolvable:$true] %s325
          %331 = dma.hbm_to_vmem [thread:$0]  %s7, 1024, %s326, [#allocation13], 64, 64, 4
        $region40: #{forward.1} parent=11 // pred_fallthru
          _
        // Predicated region
        $region41: #{forward.1} parent=11 // pred_check
          %p332 = pneg %p216
        $region42: #{forward.1} parent=11 // pred_check_branch
          %334 = sbr.rel (%p332) target = $region44
        $region43: #{forward.1} parent=11 // pred_region
          %s336 = ssub.s32 16, 16
          %337 = vsyncadd [#allocation13], %s336
          %s339 = sshll.u32 [#allocation14], 4
          %s340 = int_to_ptr.vmem [resolvable:$true] %s339
          %342 = dma.hbm_to_vmem [thread:$0]  %s8, 16, %s340, [#allocation13]
        $region44: #{forward.1} parent=11 // pred_fallthru
          _
      $region12: #{forward.1} parent=5 // pred_fallthru
        _
      %p343 = scmp.lt.s32.totalorder %s22, 2
      // Predicated region
      $region45: #{forward.1} parent=5 // pred_check
        %p344 = pneg %p343
      $region46: #{forward.1} parent=5 // pred_check_branch
        %346 = sbr.rel (%p344) target = $region48
      $region47: #{forward.1} parent=5 // pred_region
        // Predicated region
        $region49: #{forward.1} parent=47 // pred_check
          %p347 = pneg %p42
        $region50: #{forward.1} parent=47 // pred_check_branch
          %349 = sbr.rel (%p347) target = $region52
        $region51: #{forward.1} parent=47 // pred_region
          %p350 = scmp.lt.s32.totalorder %s22, 1
          %s351 = scalar_select %p350, %s22, 1
          %s352 = smul.addr %s351, 56
          %s353 = smul.addr %s352, 4
          %s354 = scalar_lea.vmem %s0, %s353
        $region52: #{forward.1} parent=47 // pred_fallthru
          _
      $region48: #{forward.1} parent=5 // pred_fallthru
        _
      %p355 = scmp.le.s32.totalorder 1, %s22
      %p356 = scmp.lt.s32.totalorder %s22, 3
      %p357 = pnand %p355, %p356
      %p358 = pneg %p357
      // Predicated region
      $region53: #{forward.1} parent=5 // pred_check
        _
      $region54: #{forward.1} parent=5 // pred_check_branch
        %360 = sbr.rel (%p357) target = $region56
      $region55: #{forward.1} parent=5 // pred_region
        %s361 = ssub.s32 %s22, 1
        // Predicated region
        $region57: #{forward.1} parent=55 // pred_check
          %p362 = pneg %p69
        $region58: #{forward.1} parent=55 // pred_check_branch
          %364 = sbr.rel (%p362) target = $region60
        $region59: #{forward.1} parent=55 // pred_region
          %365 = dma.done [#allocation4], 4096
        $region60: #{forward.1} parent=55 // pred_fallthru
          _
        // Predicated region
        $region61: #{forward.1} parent=55 // pred_check
          %p366 = pneg %p90
        $region62: #{forward.1} parent=55 // pred_check_branch
          %368 = sbr.rel (%p366) target = $region64
        $region63: #{forward.1} parent=55 // pred_region
          %369 = dma.done [#allocation7], 16
        $region64: #{forward.1} parent=55 // pred_fallthru
          _
        // Predicated region
        $region65: #{forward.1} parent=55 // pred_check
          %p370 = pneg %p111
        $region66: #{forward.1} parent=55 // pred_check_branch
          %372 = sbr.rel (%p370) target = $region68
        $region67: #{forward.1} parent=55 // pred_region
          %373 = dma.done [#allocation7], 51200
        $region68: #{forward.1} parent=55 // pred_fallthru
          _
        // Predicated region
        $region69: #{forward.1} parent=55 // pred_check
          %p374 = pneg %p132
        $region70: #{forward.1} parent=55 // pred_check_branch
          %376 = sbr.rel (%p374) target = $region72
        $region71: #{forward.1} parent=55 // pred_region
          %377 = dma.done [#allocation10], 16
        $region72: #{forward.1} parent=55 // pred_fallthru
          _
        // Predicated region
        $region73: #{forward.1} parent=55 // pred_check
          %p378 = pneg %p174
        $region74: #{forward.1} parent=55 // pred_check_branch
          %380 = sbr.rel (%p378) target = $region76
        $region75: #{forward.1} parent=55 // pred_region
          %381 = dma.done [#allocation10], 16
        $region76: #{forward.1} parent=55 // pred_fallthru
          _
        // Predicated region
        $region77: #{forward.1} parent=55 // pred_check
          %p382 = pneg %p195
        $region78: #{forward.1} parent=55 // pred_check_branch
          %384 = sbr.rel (%p382) target = $region80
        $region79: #{forward.1} parent=55 // pred_region
          %385 = dma.done [#allocation13], 1024
        $region80: #{forward.1} parent=55 // pred_fallthru
          _
        // Predicated region
        $region81: #{forward.1} parent=55 // pred_check
          %p386 = pneg %p216
        $region82: #{forward.1} parent=55 // pred_check_branch
          %388 = sbr.rel (%p386) target = $region84
        $region83: #{forward.1} parent=55 // pred_region
          %389 = dma.done [#allocation13], 16
        $region84: #{forward.1} parent=55 // pred_fallthru
          _
        %p390 = scmp.lt.s32.totalorder %s27, 1
        %s391 = scalar_select %p390, %s27, 1
        %s392 = smul.addr %s391, 56
        %s393 = smul.addr %s392, 4
        %s394 = scalar_lea.vmem %s0, %s393
        %p395 = pneg %p48
        %p396 = pneg %p45
        %p397 = pneg %p69
        %p398 = pneg %p66
        %p399 = pneg %p90
        %p400 = pneg %p87
        %p401 = pneg %p111
        %p402 = pneg %p108
        %p403 = pneg %p132
        %p404 = pneg %p129
        %p405 = pneg %p153
        %p406 = pneg %p150
        %p407 = pneg %p174
        %p408 = pneg %p171
        %p409 = pneg %p195
        %p410 = pneg %p192
        %p411 = pneg %p216
        %p412 = pneg %p213
        %p413 = pneg %p242
        %p414 = pneg %p239
        %s415 = sand.u32 %s229, 1
        %s416 = scalar_lea.sflag [#allocation5], %s415
        %s417 = sand.u32 %s229, 1
        %s418 = scalar_lea.vmem [#allocation15], %s417
        %p419 = scmp.lt.s32.totalorder %s27, 1
        %s420 = scalar_select %p419, %s27, 1
        %s421 = smul.addr %s420, 56
        %s422 = smul.addr %s421, 4
        %s423 = scalar_lea.vmem %s0, %s422
        %v425 = vld [vmem:[%s423] sm:$0xff]
        %v426 = vld [vmem:[%s423 + $0x8] sm:$0xff]
        %v427 = vld [vmem:[%s423 + $0x10] sm:$0xff]
        %v428 = vld [vmem:[%s423 + $0x18] sm:$0xff]
        %v429 = vld [vmem:[%s423 + $0x20] sm:$0xff]
        %v430 = vld [vmem:[%s423 + $0x28] sm:$0xff]
        %v431 = vld [vmem:[%s423 + $0x30] sm:$0xff]
        %v432 = vld [vmem:[%s423 + $0x38] sm:$0xff]
        %v433 = vld [vmem:[%s423 + $0x40] sm:$0xff]
        %v434 = vld [vmem:[%s423 + $0x48] sm:$0xff]
        %v435 = vld [vmem:[%s423 + $0x50] sm:$0xff]
        %v436 = vld [vmem:[%s423 + $0x58] sm:$0xff]
        %v437 = vld [vmem:[%s423 + $0x60] sm:$0xff]
        %v438 = vld [vmem:[%s423 + $0x68] sm:$0xff]
        %v439 = vld [vmem:[%s423 + $0x70] sm:$0xff]
        %v440 = vld [vmem:[%s423 + $0x78] sm:$0xff]
        %v441 = vld [vmem:[%s423 + $0x80] sm:$0xff]
        %v442 = vld [vmem:[%s423 + $0x88] sm:$0xff]
        %v443 = vld [vmem:[%s423 + $0x90] sm:$0xff]
        %v444 = vld [vmem:[%s423 + $0x98] sm:$0xff]
        %v445 = vld [vmem:[%s423 + $0xa0] sm:$0xff]
        %v446 = vld [vmem:[%s423 + $0xa8] sm:$0xff]
        %v447 = vld [vmem:[%s423 + $0xb0] sm:$0xff]
        %v448 = vld [vmem:[%s423 + $0xb8] sm:$0xff]
        %v449 = vld [vmem:[%s423 + $0xc0] sm:$0xff]
        %v450 = vld [vmem:[%s423 + $0xc8] sm:$0xff]
        %v451 = vld [vmem:[%s423 + $0xd0] sm:$0xff]
        %v452 = vld [vmem:[%s423 + $0xd8] sm:$0xff]
        %v453 = vld [vmem:[#allocation3] sm:$0xf]
        %v454 = vld [vmem:[#allocation3 + $0x4] sm:$0xf]
        %v455 = vld [vmem:[#allocation3 + $0x8] sm:$0xf]
        %v456 = vld [vmem:[#allocation3 + $0xc] sm:$0xf]
        %v457 = vld [vmem:[#allocation3 + $0x10] sm:$0xf]
        %v458 = vld [vmem:[#allocation3 + $0x14] sm:$0xf]
        %v459 = vld [vmem:[#allocation3 + $0x18] sm:$0xf]
        %v460 = vld [vmem:[#allocation3 + $0x1c] sm:$0xf]
        %v461 = vld [vmem:[#allocation3 + $0x20] sm:$0xf]
        %v462 = vld [vmem:[#allocation3 + $0x24] sm:$0xf]
        %v463 = vld [vmem:[#allocation3 + $0x28] sm:$0xf]
        %v464 = vld [vmem:[#allocation3 + $0x2c] sm:$0xf]
        %v465 = vld [vmem:[#allocation3 + $0x30] sm:$0xf]
        %v466 = vld [vmem:[#allocation3 + $0x34] sm:$0xf]
        %v467 = vld [vmem:[#allocation3 + $0x38] sm:$0xf]
        %v468 = vld [vmem:[#allocation3 + $0x3c] sm:$0xf]
        %v469 = vld [vmem:[#allocation3 + $0x40] sm:$0xf]
        %v470 = vld [vmem:[#allocation3 + $0x44] sm:$0xf]
        %v471 = vld [vmem:[#allocation3 + $0x48] sm:$0xf]
        %v472 = vld [vmem:[#allocation3 + $0x4c] sm:$0xf]
        %v473 = vld [vmem:[#allocation3 + $0x50] sm:$0xf]
        %v474 = vld [vmem:[#allocation3 + $0x54] sm:$0xf]
        %v475 = vld [vmem:[#allocation3 + $0x58] sm:$0xf]
        %v476 = vld [vmem:[#allocation3 + $0x5c] sm:$0xf]
        %v477 = vld [vmem:[#allocation3 + $0x60] sm:$0xf]
        %v478 = vld [vmem:[#allocation3 + $0x64] sm:$0xf]
        %v479 = vld [vmem:[#allocation3 + $0x68] sm:$0xf]
        %v480 = vld [vmem:[#allocation3 + $0x6c] sm:$0xf]
        %v481 = vld [vmem:[#allocation3 + $0x70] sm:$0xf]
        %v482 = vld [vmem:[#allocation3 + $0x74] sm:$0xf]
        %v483 = vld [vmem:[#allocation3 + $0x78] sm:$0xf]
        %v484 = vld [vmem:[#allocation3 + $0x7c] sm:$0xf]
        %v485 = vld [vmem:[#allocation3 + $0x80] sm:$0xf]
        %v486 = vld [vmem:[#allocation3 + $0x84] sm:$0xf]
        %v487 = vld [vmem:[#allocation3 + $0x88] sm:$0xf]
        %v488 = vld [vmem:[#allocation3 + $0x8c] sm:$0xf]
        %v489 = vld [vmem:[#allocation3 + $0x90] sm:$0xf]
        %v490 = vld [vmem:[#allocation3 + $0x94] sm:$0xf]
        %v491 = vld [vmem:[#allocation3 + $0x98] sm:$0xf]
        %v492 = vld [vmem:[#allocation3 + $0x9c] sm:$0xf]
        %v493 = vld [vmem:[#allocation3 + $0xa0] sm:$0xf]
        %v494 = vld [vmem:[#allocation3 + $0xa4] sm:$0xf]
        %v495 = vld [vmem:[#allocation3 + $0xa8] sm:$0xf]
        %v496 = vld [vmem:[#allocation3 + $0xac] sm:$0xf]
        %v497 = vld [vmem:[#allocation3 + $0xb0] sm:$0xf]
        %v498 = vld [vmem:[#allocation3 + $0xb4] sm:$0xf]
        %v499 = vld [vmem:[#allocation3 + $0xb8] sm:$0xf]
        %v500 = vld [vmem:[#allocation3 + $0xbc] sm:$0xf]
        %v501 = vld [vmem:[#allocation3 + $0xc0] sm:$0xf]
        %v502 = vld [vmem:[#allocation3 + $0xc4] sm:$0xf]
        %v503 = vld [vmem:[#allocation3 + $0xc8] sm:$0xf]
        %v504 = vld [vmem:[#allocation3 + $0xcc] sm:$0xf]
        %v505 = vld [vmem:[#allocation3 + $0xd0] sm:$0xf]
        %v506 = vld [vmem:[#allocation3 + $0xd4] sm:$0xf]
        %v507 = vld [vmem:[#allocation3 + $0xd8] sm:$0xf]
        %v508 = vld [vmem:[#allocation3 + $0xdc] sm:$0xf]
        %v509 = vld [vmem:[#allocation3 + $0xe0] sm:$0xf]
        %v510 = vld [vmem:[#allocation3 + $0xe4] sm:$0xf]
        %v511 = vld [vmem:[#allocation3 + $0xe8] sm:$0xf]
        %v512 = vld [vmem:[#allocation3 + $0xec] sm:$0xf]
        %v513 = vld [vmem:[#allocation3 + $0xf0] sm:$0xf]
        %v514 = vld [vmem:[#allocation3 + $0xf4] sm:$0xf]
        %v515 = vld [vmem:[#allocation3 + $0xf8] sm:$0xf]
        %v516 = vld [vmem:[#allocation3 + $0xfc] sm:$0xf]
        %v517 = vld [vmem:[#allocation6] sm:$0x1]
        %v519 = vlaneseq
        %v520 = vshrl.u32 %v519, 7
        %v521 = vsub.s32 0, %v520
        %v522 = vrot.slane %v517, %v521
        %v552 = vunpack.c.l.b16 %v425
        %v553 = vunpack.c.h.b16 %v425
        %v554 = vunpack.c.l.b16 %v426
        %v555 = vunpack.c.h.b16 %v426
        %v556 = vunpack.c.l.b16 %v427
        %v557 = vunpack.c.h.b16 %v427
        %v558 = vunpack.c.l.b16 %v428
        %v559 = vunpack.c.h.b16 %v428
        %v560 = vunpack.c.l.b16 %v429
        %v561 = vunpack.c.h.b16 %v429
        %v562 = vunpack.c.l.b16 %v430
        %v563 = vunpack.c.h.b16 %v430
        %v564 = vunpack.c.l.b16 %v431
        %v565 = vunpack.c.h.b16 %v431
        %v566 = vunpack.c.l.b16 %v432
        %v567 = vunpack.c.h.b16 %v432
        %v568 = vunpack.c.l.b16 %v433
        %v569 = vunpack.c.h.b16 %v433
        %v570 = vunpack.c.l.b16 %v434
        %v571 = vunpack.c.h.b16 %v434
        %v572 = vunpack.c.l.b16 %v435
        %v573 = vunpack.c.h.b16 %v435
        %v574 = vunpack.c.l.b16 %v436
        %v575 = vunpack.c.h.b16 %v436
        %v576 = vunpack.c.l.b16 %v437
        %v577 = vunpack.c.h.b16 %v437
        %v578 = vunpack.c.l.b16 %v438
        %v579 = vunpack.c.h.b16 %v438
        %v580 = vunpack.c.l.b16 %v439
        %v581 = vunpack.c.h.b16 %v439
        %v582 = vunpack.c.l.b16 %v440
        %v583 = vunpack.c.h.b16 %v440
        %v584 = vunpack.c.l.b16 %v441
        %v585 = vunpack.c.h.b16 %v441
        %v586 = vunpack.c.l.b16 %v442
        %v587 = vunpack.c.h.b16 %v442
        %v588 = vunpack.c.l.b16 %v443
        %v589 = vunpack.c.h.b16 %v443
        %v590 = vunpack.c.l.b16 %v444
        %v591 = vunpack.c.h.b16 %v444
        %v592 = vunpack.c.l.b16 %v445
        %v593 = vunpack.c.h.b16 %v445
        %v594 = vunpack.c.l.b16 %v446
        %v595 = vunpack.c.h.b16 %v446
        %v596 = vunpack.c.l.b16 %v447
        %v597 = vunpack.c.h.b16 %v447
        %v598 = vunpack.c.l.b16 %v448
        %v599 = vunpack.c.h.b16 %v448
        %v600 = vunpack.c.l.b16 %v449
        %v601 = vunpack.c.h.b16 %v449
        %v602 = vunpack.c.l.b16 %v450
        %v603 = vunpack.c.h.b16 %v450
        %v604 = vunpack.c.l.b16 %v451
        %v605 = vunpack.c.h.b16 %v451
        %v606 = vunpack.c.l.b16 %v452
        %v607 = vunpack.c.h.b16 %v452
        %v608 = vpack.c.b16 %v556, %v552
        %v609 = vpack.c.b16 %v557, %v553
        %v610 = vpack.c.b16 %v558, %v554
        %v611 = vpack.c.b16 %v559, %v555
        %v612 = vpack.c.b16 %v564, %v560
        %v613 = vpack.c.b16 %v565, %v561
        %v614 = vpack.c.b16 %v566, %v562
        %v615 = vpack.c.b16 %v567, %v563
        %v616 = vpack.c.b16 %v572, %v568
        %v617 = vpack.c.b16 %v573, %v569
        %v618 = vpack.c.b16 %v574, %v570
        %v619 = vpack.c.b16 %v575, %v571
        %v620 = vpack.c.b16 %v580, %v576
        %v621 = vpack.c.b16 %v581, %v577
        %v622 = vpack.c.b16 %v582, %v578
        %v623 = vpack.c.b16 %v583, %v579
        %v624 = vpack.c.b16 %v588, %v584
        %v625 = vpack.c.b16 %v589, %v585
        %v626 = vpack.c.b16 %v590, %v586
        %v627 = vpack.c.b16 %v591, %v587
        %v628 = vpack.c.b16 %v596, %v592
        %v629 = vpack.c.b16 %v597, %v593
        %v630 = vpack.c.b16 %v598, %v594
        %v631 = vpack.c.b16 %v599, %v595
        %v632 = vpack.c.b16 %v604, %v600
        %v633 = vpack.c.b16 %v605, %v601
        %v634 = vpack.c.b16 %v606, %v602
        %v635 = vpack.c.b16 %v607, %v603
        %v728 = vunpack.c.l.b16 %v453
        %v729 = vunpack.c.l.b16 %v454
        %v730 = vunpack.c.l.b16 %v455
        %v731 = vunpack.c.l.b16 %v456
        %v732 = vunpack.c.l.b16 %v457
        %v733 = vunpack.c.l.b16 %v458
        %v734 = vunpack.c.l.b16 %v459
        %v735 = vunpack.c.l.b16 %v460
        %v736 = vunpack.c.l.b16 %v461
        %v737 = vunpack.c.l.b16 %v462
        %v738 = vunpack.c.l.b16 %v463
        %v739 = vunpack.c.l.b16 %v464
        %v740 = vunpack.c.l.b16 %v465
        %v741 = vunpack.c.l.b16 %v466
        %v742 = vunpack.c.l.b16 %v467
        %v743 = vunpack.c.l.b16 %v468
        %v744 = vunpack.c.l.b16 %v469
        %v745 = vunpack.c.l.b16 %v470
        %v746 = vunpack.c.l.b16 %v471
        %v747 = vunpack.c.l.b16 %v472
        %v748 = vunpack.c.l.b16 %v473
        %v749 = vunpack.c.l.b16 %v474
        %v750 = vunpack.c.l.b16 %v475
        %v751 = vunpack.c.l.b16 %v476
        %v752 = vunpack.c.l.b16 %v477
        %v753 = vunpack.c.l.b16 %v478
        %v754 = vunpack.c.l.b16 %v479
        %v755 = vunpack.c.l.b16 %v480
        %v756 = vunpack.c.l.b16 %v481
        %v757 = vunpack.c.l.b16 %v482
        %v758 = vunpack.c.l.b16 %v483
        %v759 = vunpack.c.l.b16 %v484
        %v760 = vunpack.c.l.b16 %v485
        %v761 = vunpack.c.l.b16 %v486
        %v762 = vunpack.c.l.b16 %v487
        %v763 = vunpack.c.l.b16 %v488
        %v764 = vunpack.c.l.b16 %v489
        %v765 = vunpack.c.l.b16 %v490
        %v766 = vunpack.c.l.b16 %v491
        %v767 = vunpack.c.l.b16 %v492
        %v768 = vunpack.c.l.b16 %v493
        %v769 = vunpack.c.l.b16 %v494
        %v770 = vunpack.c.l.b16 %v495
        %v771 = vunpack.c.l.b16 %v496
        %v772 = vunpack.c.l.b16 %v497
        %v773 = vunpack.c.l.b16 %v498
        %v774 = vunpack.c.l.b16 %v499
        %v775 = vunpack.c.l.b16 %v500
        %v776 = vunpack.c.l.b16 %v501
        %v777 = vunpack.c.l.b16 %v502
        %v778 = vunpack.c.l.b16 %v503
        %v779 = vunpack.c.l.b16 %v504
        %v780 = vunpack.c.l.b16 %v505
        %v781 = vunpack.c.l.b16 %v506
        %v782 = vunpack.c.l.b16 %v507
        %v783 = vunpack.c.l.b16 %v508
        %v784 = vunpack.c.l.b16 %v509
        %v785 = vunpack.c.l.b16 %v510
        %v786 = vunpack.c.l.b16 %v511
        %v787 = vunpack.c.l.b16 %v512
        %v788 = vunpack.c.l.b16 %v513
        %v789 = vunpack.c.l.b16 %v514
        %v790 = vunpack.c.l.b16 %v515
        %v791 = vunpack.c.l.b16 %v516
        %v792 = vpack.c.b16 %v729, %v728
        %v793 = vpack.c.b16 %v731, %v730
        %v794 = vpack.c.b16 %v733, %v732
        %v795 = vpack.c.b16 %v735, %v734
        %v796 = vpack.c.b16 %v737, %v736
        %v797 = vpack.c.b16 %v739, %v738
        %v798 = vpack.c.b16 %v741, %v740
        %v799 = vpack.c.b16 %v743, %v742
        %v800 = vpack.c.b16 %v745, %v744
        %v801 = vpack.c.b16 %v747, %v746
        %v802 = vpack.c.b16 %v749, %v748
        %v803 = vpack.c.b16 %v751, %v750
        %v804 = vpack.c.b16 %v753, %v752
        %v805 = vpack.c.b16 %v755, %v754
        %v806 = vpack.c.b16 %v757, %v756
        %v807 = vpack.c.b16 %v759, %v758
        %v808 = vpack.c.b16 %v761, %v760
        %v809 = vpack.c.b16 %v763, %v762
        %v810 = vpack.c.b16 %v765, %v764
        %v811 = vpack.c.b16 %v767, %v766
        %v812 = vpack.c.b16 %v769, %v768
        %v813 = vpack.c.b16 %v771, %v770
        %v814 = vpack.c.b16 %v773, %v772
        %v815 = vpack.c.b16 %v775, %v774
        %v816 = vpack.c.b16 %v777, %v776
        %v817 = vpack.c.b16 %v779, %v778
        %v818 = vpack.c.b16 %v781, %v780
        %v819 = vpack.c.b16 %v783, %v782
        %v820 = vpack.c.b16 %v785, %v784
        %v821 = vpack.c.b16 %v787, %v786
        %v822 = vpack.c.b16 %v789, %v788
        %v823 = vpack.c.b16 %v791, %v790
        %856 = vmatprep.subr.bf16.mxu0 0
        %857 = vmatpush1.bf16.msra.mxu0 %v792
        %858 = vmatprep.subr.bf16.mxu0 0
        %859 = vmatpush1.bf16.msra.mxu0 %v793
        %860 = vmatprep.subr.bf16.mxu0 0
        %861 = vmatpush1.bf16.msra.mxu0 %v794
        %862 = vmatprep.subr.bf16.mxu0 0
        %863 = vmatpush1.bf16.msra.mxu0 %v795
        %864 = vmatprep.subr.bf16.mxu0 0
        %865 = vmatpush1.bf16.msra.mxu0 %v796
        %866 = vmatprep.subr.bf16.mxu0 0
        %867 = vmatpush1.bf16.msra.mxu0 %v797
        %868 = vmatprep.subr.bf16.mxu0 0
        %869 = vmatpush1.bf16.msra.mxu0 %v798
        %870 = vmatprep.subr.bf16.mxu0 0
        %871 = vmatpush1.bf16.msra.mxu0 %v799
        %872 = vmatprep.subr.bf16.mxu0 0
        %873 = vmatpush1.bf16.msra.mxu0 %v800
        %874 = vmatprep.subr.bf16.mxu0 0
        %875 = vmatpush1.bf16.msra.mxu0 %v801
        %876 = vmatprep.subr.bf16.mxu0 0
        %877 = vmatpush1.bf16.msra.mxu0 %v802
        %878 = vmatprep.subr.bf16.mxu0 0
        %879 = vmatpush1.bf16.msra.mxu0 %v803
        %880 = vmatprep.subr.bf16.mxu0 0
        %881 = vmatpush1.bf16.msra.mxu0 %v804
        %882 = vmatprep.subr.bf16.mxu0 0
        %883 = vmatpush1.bf16.msra.mxu0 %v805
        %884 = vmatprep.subr.bf16.mxu0 0
        %885 = vmatpush1.bf16.msra.mxu0 %v806
        %886 = vmatprep.subr.bf16.mxu0 0
        %887 = vmatpush1.bf16.msra.mxu0 %v807
        %888 = vmatprep.mubr.bf16.mxu0 %v609
        %889 = vmatmul.mubr.bf16.gmra.mrb[0].mxu0 %v608
        %v890 = vpop.f32.mrb[0].mxu0
        %v891 = vadd.f32 %v522, %v890
        %v892 = vpop.f32.mrb[0].mxu0
        %v893 = vpop.f32.mrb[0].mxu0
        %v894 = vadd.f32 %v522, %v893
        %v895 = vpop.f32.mrb[0].mxu0
        %896 = vmatprep.mubr.bf16.mxu0 %v613
        %897 = vmatmul.mubr.bf16.gmra.mrb[0].mxu0 %v612
        %v898 = vpop.f32.mrb[0].mxu0
        %v899 = vadd.f32 %v522, %v898
        %v900 = vpop.f32.mrb[0].mxu0
        %v901 = vpop.f32.mrb[0].mxu0
        %v902 = vadd.f32 %v522, %v901
        %v903 = vpop.f32.mrb[0].mxu0
        %904 = vmatprep.mubr.bf16.mxu0 %v617
        %905 = vmatmul.mubr.bf16.gmra.mrb[0].mxu0 %v616
        %v906 = vpop.f32.mrb[0].mxu0
        %v907 = vadd.f32 %v522, %v906
        %v908 = vpop.f32.mrb[0].mxu0
        %v909 = vpop.f32.mrb[0].mxu0
        %v910 = vadd.f32 %v522, %v909
        %v911 = vpop.f32.mrb[0].mxu0
        %912 = vmatprep.mubr.bf16.mxu0 %v621
        %913 = vmatmul.mubr.bf16.gmra.mrb[0].mxu0 %v620
        %v914 = vpop.f32.mrb[0].mxu0
        %v915 = vadd.f32 %v522, %v914
        %v916 = vpop.f32.mrb[0].mxu0
        %v917 = vpop.f32.mrb[0].mxu0
        %v918 = vadd.f32 %v522, %v917
        %v919 = vpop.f32.mrb[0].mxu0
        %920 = vmatprep.mubr.bf16.mxu0 %v625
        %921 = vmatmul.mubr.bf16.gmra.mrb[0].mxu0 %v624
        %v922 = vpop.f32.mrb[0].mxu0
        %v923 = vadd.f32 %v522, %v922
        %v924 = vpop.f32.mrb[0].mxu0
        %v925 = vpop.f32.mrb[0].mxu0
        %v926 = vadd.f32 %v522, %v925
        %v927 = vpop.f32.mrb[0].mxu0
        %928 = vmatprep.mubr.bf16.mxu0 %v629
        %929 = vmatmul.mubr.bf16.gmra.mrb[0].mxu0 %v628
        %v930 = vpop.f32.mrb[0].mxu0
        %v931 = vadd.f32 %v522, %v930
        %v932 = vpop.f32.mrb[0].mxu0
        %v933 = vpop.f32.mrb[0].mxu0
        %v934 = vadd.f32 %v522, %v933
        %v935 = vpop.f32.mrb[0].mxu0
        %936 = vmatprep.mubr.bf16.mxu0 %v633
        %937 = vmatmul.mubr.bf16.gmra.mrb[0].mxu0 %v632
        %v938 = vpop.f32.mrb[0].mxu0
        %v939 = vadd.f32 %v522, %v938
        %v940 = vpop.f32.mrb[0].mxu0
        %v941 = vpop.f32.mrb[0].mxu0
        %v942 = vadd.f32 %v522, %v941
        %v943 = vpop.f32.mrb[0].mxu0
        %944 = vdwg.mxu0
        %945 = vmatprep.subr.bf16.mxu0 0
        %946 = vmatpush1.bf16.msra.mxu0 %v808
        %947 = vmatprep.subr.bf16.mxu0 0
        %948 = vmatpush1.bf16.msra.mxu0 %v809
        %949 = vmatprep.subr.bf16.mxu0 0
        %950 = vmatpush1.bf16.msra.mxu0 %v810
        %951 = vmatprep.subr.bf16.mxu0 0
        %952 = vmatpush1.bf16.msra.mxu0 %v811
        %953 = vmatprep.subr.bf16.mxu0 0
        %954 = vmatpush1.bf16.msra.mxu0 %v812
        %955 = vmatprep.subr.bf16.mxu0 0
        %956 = vmatpush1.bf16.msra.mxu0 %v813
        %957 = vmatprep.subr.bf16.mxu0 0
        %958 = vmatpush1.bf16.msra.mxu0 %v814
        %959 = vmatprep.subr.bf16.mxu0 0
        %960 = vmatpush1.bf16.msra.mxu0 %v815
        %961 = vmatprep.subr.bf16.mxu0 0
        %962 = vmatpush1.bf16.msra.mxu0 %v816
        %963 = vmatprep.subr.bf16.mxu0 0
        %964 = vmatpush1.bf16.msra.mxu0 %v817
        %965 = vmatprep.subr.bf16.mxu0 0
        %966 = vmatpush1.bf16.msra.mxu0 %v818
        %967 = vmatprep.subr.bf16.mxu0 0
        %968 = vmatpush1.bf16.msra.mxu0 %v819
        %969 = vmatprep.subr.bf16.mxu0 0
        %970 = vmatpush1.bf16.msra.mxu0 %v820
        %971 = vmatprep.subr.bf16.mxu0 0
        %972 = vmatpush1.bf16.msra.mxu0 %v821
        %973 = vmatprep.subr.bf16.mxu0 0
        %974 = vmatpush1.bf16.msra.mxu0 %v822
        %975 = vmatprep.subr.bf16.mxu0 0
        %976 = vmatpush1.bf16.msra.mxu0 %v823
        %977 = vmatprep.mubr.bf16.mxu0 %v611
        %978 = vmatmul.mubr.bf16.gmra.mrb[0].mxu0 %v610
        %v979 = vpop.f32.mrb[0].mxu0
        %v980 = vadd.f32 %v891, %v979
        %v981 = vpop.f32.mrb[0].mxu0
        %v982 = vpop.f32.mrb[0].mxu0
        %v983 = vadd.f32 %v894, %v982
        %v984 = vpop.f32.mrb[0].mxu0
        %985 = vmatprep.mubr.bf16.mxu0 %v615
        %986 = vmatmul.mubr.bf16.gmra.mrb[0].mxu0 %v614
        %v987 = vpop.f32.mrb[0].mxu0
        %v988 = vadd.f32 %v899, %v987
        %v989 = vpop.f32.mrb[0].mxu0
        %v990 = vpop.f32.mrb[0].mxu0
        %v991 = vadd.f32 %v902, %v990
        %v992 = vpop.f32.mrb[0].mxu0
        %993 = vmatprep.mubr.bf16.mxu0 %v619
        %994 = vmatmul.mubr.bf16.gmra.mrb[0].mxu0 %v618
        %v995 = vpop.f32.mrb[0].mxu0
        %v996 = vadd.f32 %v907, %v995
        %v997 = vpop.f32.mrb[0].mxu0
        %v998 = vpop.f32.mrb[0].mxu0
        %v999 = vadd.f32 %v910, %v998
        %v1000 = vpop.f32.mrb[0].mxu0
        %1001 = vmatprep.mubr.bf16.mxu0 %v623
        %1002 = vmatmul.mubr.bf16.gmra.mrb[0].mxu0 %v622
        %v1003 = vpop.f32.mrb[0].mxu0
        %v1004 = vadd.f32 %v915, %v1003
        %v1005 = vpop.f32.mrb[0].mxu0
        %v1006 = vpop.f32.mrb[0].mxu0
        %v1007 = vadd.f32 %v918, %v1006
        %v1008 = vpop.f32.mrb[0].mxu0
        %1009 = vmatprep.mubr.bf16.mxu0 %v627
        %1010 = vmatmul.mubr.bf16.gmra.mrb[0].mxu0 %v626
        %v1011 = vpop.f32.mrb[0].mxu0
        %v1012 = vadd.f32 %v923, %v1011
        %v1013 = vpop.f32.mrb[0].mxu0
        %v1014 = vpop.f32.mrb[0].mxu0
        %v1015 = vadd.f32 %v926, %v1014
        %v1016 = vpop.f32.mrb[0].mxu0
        %1017 = vmatprep.mubr.bf16.mxu0 %v631
        %1018 = vmatmul.mubr.bf16.gmra.mrb[0].mxu0 %v630
        %v1019 = vpop.f32.mrb[0].mxu0
        %v1020 = vadd.f32 %v931, %v1019
        %v1021 = vpop.f32.mrb[0].mxu0
        %v1022 = vpop.f32.mrb[0].mxu0
        %v1023 = vadd.f32 %v934, %v1022
        %v1024 = vpop.f32.mrb[0].mxu0
        %1025 = vmatprep.mubr.bf16.mxu0 %v635
        %1026 = vmatmul.mubr.bf16.gmra.mrb[0].mxu0 %v634
        %v1027 = vpop.f32.mrb[0].mxu0
        %v1028 = vadd.f32 %v939, %v1027
        %v1029 = vpop.f32.mrb[0].mxu0
        %v1030 = vpop.f32.mrb[0].mxu0
        %v1031 = vadd.f32 %v942, %v1030
        %v1032 = vpop.f32.mrb[0].mxu0
        %1033 = vdwg.mxu0
        %1034 = vst [vmem:[#allocation2] sm:$0xff] %v980
        %1035 = vst [vmem:[#allocation2 + $0x8] sm:$0xff] %v983
        %1036 = vst [vmem:[#allocation2 + $0x10] sm:$0xff] %v988
        %1037 = vst [vmem:[#allocation2 + $0x18] sm:$0xff] %v991
        %1038 = vst [vmem:[#allocation2 + $0x20] sm:$0xff] %v996
        %1039 = vst [vmem:[#allocation2 + $0x28] sm:$0xff] %v999
        %1040 = vst [vmem:[#allocation2 + $0x30] sm:$0xff] %v1004
        %1041 = vst [vmem:[#allocation2 + $0x38] sm:$0xff] %v1007
        %1042 = vst [vmem:[#allocation2 + $0x40] sm:$0xff] %v1012
        %1043 = vst [vmem:[#allocation2 + $0x48] sm:$0xff] %v1015
        %1044 = vst [vmem:[#allocation2 + $0x50] sm:$0xff] %v1020
        %1045 = vst [vmem:[#allocation2 + $0x58] sm:$0xff] %v1023
        %1046 = vst [vmem:[#allocation2 + $0x60] sm:$0xff] %v1028
        %1047 = vst [vmem:[#allocation2 + $0x68] sm:$0xff] %v1031
        %v1048 = vld [vmem:[#allocation2] sm:$0xff]
        %v1049 = vld [vmem:[#allocation2 + $0x8] sm:$0xff]
        %v1050 = vld [vmem:[#allocation2 + $0x10] sm:$0xff]
        %v1051 = vld [vmem:[#allocation2 + $0x18] sm:$0xff]
        %v1052 = vld [vmem:[#allocation2 + $0x20] sm:$0xff]
        %v1053 = vld [vmem:[#allocation2 + $0x28] sm:$0xff]
        %v1054 = vld [vmem:[#allocation2 + $0x30] sm:$0xff]
        %v1055 = vld [vmem:[#allocation2 + $0x1] sm:$0xff]
        %v1056 = vld [vmem:[#allocation2 + $0x9] sm:$0xff]
        %v1057 = vld [vmem:[#allocation2 + $0x11] sm:$0xff]
        %v1058 = vld [vmem:[#allocation2 + $0x19] sm:$0xff]
        %v1059 = vld [vmem:[#allocation2 + $0x21] sm:$0xff]
        %v1060 = vld [vmem:[#allocation2 + $0x29] sm:$0xff]
        %v1061 = vld [vmem:[#allocation2 + $0x31] sm:$0xff]
        %v1062 = vpack.c.bf16 %v1049, %v1048
        %v1063 = vpack.c.bf16 %v1056, %v1055
        %v1064 = vpack.c.bf16 %v1051, %v1050
        %v1065 = vpack.c.bf16 %v1058, %v1057
        %v1066 = vpack.c.bf16 %v1053, %v1052
        %v1067 = vpack.c.bf16 %v1060, %v1059
        %v1068 = vpack.c.bf16 %v1054, %v1054
        %v1069 = vpack.c.bf16 %v1061, %v1061
        %v1070 = vld [vmem:[#allocation8] sm:$0xf]
        %v1071 = vld [vmem:[#allocation8 + $0x4] sm:$0xf]
        %v1072 = vld [vmem:[#allocation8 + $0x8] sm:$0xf]
        %v1073 = vld [vmem:[#allocation8 + $0xc] sm:$0xf]
        %v1074 = vld [vmem:[#allocation8 + $0x10] sm:$0xf]
        %v1075 = vld [vmem:[#allocation8 + $0x14] sm:$0xf]
        %v1076 = vld [vmem:[#allocation8 + $0x18] sm:$0xf]
        %v1077 = vld [vmem:[#allocation8 + $0x1c] sm:$0xf]
        %v1078 = vld [vmem:[#allocation8 + $0x20] sm:$0xf]
        %v1079 = vld [vmem:[#allocation8 + $0x24] sm:$0xf]
        %v1080 = vld [vmem:[#allocation8 + $0x28] sm:$0xf]
        %v1081 = vld [vmem:[#allocation8 + $0x2c] sm:$0xf]
        %v1082 = vld [vmem:[#allocation8 + $0x30] sm:$0xf]
        %v1083 = vld [vmem:[#allocation8 + $0x34] sm:$0xf]
        %v1084 = vld [vmem:[#allocation8 + $0x38] sm:$0xf]
        %v1085 = vld [vmem:[#allocation8 + $0x3c] sm:$0xf]
        %v1086 = vld [vmem:[#allocation8 + $0x40] sm:$0xf]
        %v1087 = vld [vmem:[#allocation8 + $0x44] sm:$0xf]
        %v1088 = vld [vmem:[#allocation8 + $0x48] sm:$0xf]
        %v1089 = vld [vmem:[#allocation8 + $0x4c] sm:$0xf]
        %v1090 = vld [vmem:[#allocation8 + $0x50] sm:$0xf]
        %v1091 = vld [vmem:[#allocation8 + $0x54] sm:$0xf]
        %v1092 = vld [vmem:[#allocation8 + $0x58] sm:$0xf]
        %v1093 = vld [vmem:[#allocation8 + $0x5c] sm:$0xf]
        %v1094 = vld [vmem:[#allocation8 + $0x60] sm:$0xf]
        %v1095 = vld [vmem:[#allocation8 + $0x64] sm:$0xf]
        %v1096 = vld [vmem:[#allocation8 + $0x68] sm:$0xf]
        %v1097 = vld [vmem:[#allocation8 + $0x6c] sm:$0xf]
        %v1098 = vld [vmem:[#allocation8 + $0x70] sm:$0xf]
        %v1099 = vld [vmem:[#allocation8 + $0x74] sm:$0xf]
        %v1100 = vld [vmem:[#allocation8 + $0x78] sm:$0xf]
        %v1101 = vld [vmem:[#allocation8 + $0x7c] sm:$0xf]
        %v1102 = vld [vmem:[#allocation2 + $0x2] sm:$0xff]
        %v1103 = vld [vmem:[#allocation2 + $0xa] sm:$0xff]
        %v1104 = vld [vmem:[#allocation2 + $0x12] sm:$0xff]
        %v1105 = vld [vmem:[#allocation2 + $0x1a] sm:$0xff]
        %v1106 = vld [vmem:[#allocation2 + $0x22] sm:$0xff]
        %v1107 = vld [vmem:[#allocation2 + $0x2a] sm:$0xff]
        %v1108 = vld [vmem:[#allocation2 + $0x32] sm:$0xff]
        %v1109 = vld [vmem:[#allocation2 + $0x3] sm:$0xff]
        %v1110 = vld [vmem:[#allocation2 + $0xb] sm:$0xff]
        %v1111 = vld [vmem:[#allocation2 + $0x13] sm:$0xff]
        %v1112 = vld [vmem:[#allocation2 + $0x1b] sm:$0xff]
        %v1113 = vld [vmem:[#allocation2 + $0x23] sm:$0xff]
        %v1114 = vld [vmem:[#allocation2 + $0x2b] sm:$0xff]
        %v1115 = vld [vmem:[#allocation2 + $0x33] sm:$0xff]
        %v1116 = vpack.c.bf16 %v1103, %v1102
        %v1117 = vpack.c.bf16 %v1110, %v1109
        %v1118 = vpack.c.bf16 %v1105, %v1104
        %v1119 = vpack.c.bf16 %v1112, %v1111
        %v1120 = vpack.c.bf16 %v1107, %v1106
        %v1121 = vpack.c.bf16 %v1114, %v1113
        %v1122 = vpack.c.bf16 %v1108, %v1108
        %v1123 = vpack.c.bf16 %v1115, %v1115
        %s1124 = scalar_lea.vmem [#allocation8], 128
        %v1125 = vld [vmem:[%s1124] sm:$0xf]
        %v1126 = vld [vmem:[%s1124 + $0x4] sm:$0xf]
        %v1127 = vld [vmem:[%s1124 + $0x8] sm:$0xf]
        %v1128 = vld [vmem:[%s1124 + $0xc] sm:$0xf]
        %v1129 = vld [vmem:[%s1124 + $0x10] sm:$0xf]
        %v1130 = vld [vmem:[%s1124 + $0x14] sm:$0xf]
        %v1131 = vld [vmem:[%s1124 + $0x18] sm:$0xf]
        %v1132 = vld [vmem:[%s1124 + $0x1c] sm:$0xf]
        %v1133 = vld [vmem:[%s1124 + $0x20] sm:$0xf]
        %v1134 = vld [vmem:[%s1124 + $0x24] sm:$0xf]
        %v1135 = vld [vmem:[%s1124 + $0x28] sm:$0xf]
        %v1136 = vld [vmem:[%s1124 + $0x2c] sm:$0xf]
        %v1137 = vld [vmem:[%s1124 + $0x30] sm:$0xf]
        %v1138 = vld [vmem:[%s1124 + $0x34] sm:$0xf]
        %v1139 = vld [vmem:[%s1124 + $0x38] sm:$0xf]
        %v1140 = vld [vmem:[%s1124 + $0x3c] sm:$0xf]
        %v1141 = vld [vmem:[%s1124 + $0x40] sm:$0xf]
        %v1142 = vld [vmem:[%s1124 + $0x44] sm:$0xf]
        %v1143 = vld [vmem:[%s1124 + $0x48] sm:$0xf]
        %v1144 = vld [vmem:[%s1124 + $0x4c] sm:$0xf]
        %v1145 = vld [vmem:[%s1124 + $0x50] sm:$0xf]
        %v1146 = vld [vmem:[%s1124 + $0x54] sm:$0xf]
        %v1147 = vld [vmem:[%s1124 + $0x58] sm:$0xf]
        %v1148 = vld [vmem:[%s1124 + $0x5c] sm:$0xf]
        %v1149 = vld [vmem:[%s1124 + $0x60] sm:$0xf]
        %v1150 = vld [vmem:[%s1124 + $0x64] sm:$0xf]
        %v1151 = vld [vmem:[%s1124 + $0x68] sm:$0xf]
        %v1152 = vld [vmem:[%s1124 + $0x6c] sm:$0xf]
        %v1153 = vld [vmem:[%s1124 + $0x70] sm:$0xf]
        %v1154 = vld [vmem:[%s1124 + $0x74] sm:$0xf]
        %v1155 = vld [vmem:[%s1124 + $0x78] sm:$0xf]
        %v1156 = vld [vmem:[%s1124 + $0x7c] sm:$0xf]
        %v1189 = vunpack.c.l.b16 %v1125
        %v1190 = vunpack.c.l.b16 %v1126
        %v1191 = vunpack.c.l.b16 %v1127
        %v1192 = vunpack.c.l.b16 %v1128
        %v1193 = vunpack.c.l.b16 %v1129
        %v1194 = vunpack.c.l.b16 %v1130
        %v1195 = vunpack.c.l.b16 %v1131
        %v1196 = vunpack.c.l.b16 %v1132
        %v1197 = vunpack.c.l.b16 %v1133
        %v1198 = vunpack.c.l.b16 %v1134
        %v1199 = vunpack.c.l.b16 %v1135
        %v1200 = vunpack.c.l.b16 %v1136
        %v1201 = vunpack.c.l.b16 %v1137
        %v1202 = vunpack.c.l.b16 %v1138
        %v1203 = vunpack.c.l.b16 %v1139
        %v1204 = vunpack.c.l.b16 %v1140
        %v1205 = vunpack.c.l.b16 %v1141
        %v1206 = vunpack.c.l.b16 %v1142
        %v1207 = vunpack.c.l.b16 %v1143
        %v1208 = vunpack.c.l.b16 %v1144
        %v1209 = vunpack.c.l.b16 %v1145
        %v1210 = vunpack.c.l.b16 %v1146
        %v1211 = vunpack.c.l.b16 %v1147
        %v1212 = vunpack.c.l.b16 %v1148
        %v1213 = vunpack.c.l.b16 %v1149
        %v1214 = vunpack.c.l.b16 %v1150
        %v1215 = vunpack.c.l.b16 %v1151
        %v1216 = vunpack.c.l.b16 %v1152
        %v1217 = vunpack.c.l.b16 %v1153
        %v1218 = vunpack.c.l.b16 %v1154
        %v1219 = vunpack.c.l.b16 %v1155
        %v1220 = vunpack.c.l.b16 %v1156
        %v1221 = vpack.c.b16 %v1190, %v1189
        %v1222 = vpack.c.b16 %v1192, %v1191
        %v1223 = vpack.c.b16 %v1194, %v1193
        %v1224 = vpack.c.b16 %v1196, %v1195
        %v1225 = vpack.c.b16 %v1198, %v1197
        %v1226 = vpack.c.b16 %v1200, %v1199
        %v1227 = vpack.c.b16 %v1202, %v1201
        %v1228 = vpack.c.b16 %v1204, %v1203
        %v1229 = vpack.c.b16 %v1206, %v1205
        %v1230 = vpack.c.b16 %v1208, %v1207
        %v1231 = vpack.c.b16 %v1210, %v1209
        %v1232 = vpack.c.b16 %v1212, %v1211
        %v1233 = vpack.c.b16 %v1214, %v1213
        %v1234 = vpack.c.b16 %v1216, %v1215
        %v1235 = vpack.c.b16 %v1218, %v1217
        %v1236 = vpack.c.b16 %v1220, %v1219
        %1253 = vmatprep.subr.bf16.mxu0 0
        %1254 = vmatpush1.bf16.msra.mxu0 %v1221
        %1255 = vmatprep.subr.bf16.mxu0 0
        %1256 = vmatpush1.bf16.msra.mxu0 %v1222
        %1257 = vmatprep.subr.bf16.mxu0 0
        %1258 = vmatpush1.bf16.msra.mxu0 %v1223
        %1259 = vmatprep.subr.bf16.mxu0 0
        %1260 = vmatpush1.bf16.msra.mxu0 %v1224
        %1261 = vmatprep.subr.bf16.mxu0 0
        %1262 = vmatpush1.bf16.msra.mxu0 %v1225
        %1263 = vmatprep.subr.bf16.mxu0 0
        %1264 = vmatpush1.bf16.msra.mxu0 %v1226
        %1265 = vmatprep.subr.bf16.mxu0 0
        %1266 = vmatpush1.bf16.msra.mxu0 %v1227
        %1267 = vmatprep.subr.bf16.mxu0 0
        %1268 = vmatpush1.bf16.msra.mxu0 %v1228
        %1269 = vmatprep.subr.bf16.mxu0 0
        %1270 = vmatpush1.bf16.msra.mxu0 %v1229
        %1271 = vmatprep.subr.bf16.mxu0 0
        %1272 = vmatpush1.bf16.msra.mxu0 %v1230
        %1273 = vmatprep.subr.bf16.mxu0 0
        %1274 = vmatpush1.bf16.msra.mxu0 %v1231
        %1275 = vmatprep.subr.bf16.mxu0 0
        %1276 = vmatpush1.bf16.msra.mxu0 %v1232
        %1277 = vmatprep.subr.bf16.mxu0 0
        %1278 = vmatpush1.bf16.msra.mxu0 %v1233
        %1279 = vmatprep.subr.bf16.mxu0 0
        %1280 = vmatpush1.bf16.msra.mxu0 %v1234
        %1281 = vmatprep.subr.bf16.mxu0 0
        %1282 = vmatpush1.bf16.msra.mxu0 %v1235
        %1283 = vmatprep.subr.bf16.mxu0 0
        %1284 = vmatpush1.bf16.msra.mxu0 %v1236
        %1285 = vmatprep.mubr.bf16.mxu0 %v1117
        %1286 = vmatmul.mubr.bf16.gmra.mrb[0].mxu0 %v1116
        %v1287 = vpop.f32.mrb[0].mxu0
        %v1288 = vadd.f32 0.0, %v1287
        %v1289 = vpop.f32.mrb[0].mxu0
        %v1290 = vpop.f32.mrb[0].mxu0
        %v1291 = vadd.f32 0.0, %v1290
        %v1292 = vpop.f32.mrb[0].mxu0
        %1293 = vmatprep.mubr.bf16.mxu0 %v1119
        %1294 = vmatmul.mubr.bf16.gmra.mrb[0].mxu0 %v1118
        %v1295 = vpop.f32.mrb[0].mxu0
        %v1296 = vadd.f32 0.0, %v1295
        %v1297 = vpop.f32.mrb[0].mxu0
        %v1298 = vpop.f32.mrb[0].mxu0
        %v1299 = vadd.f32 0.0, %v1298
        %v1300 = vpop.f32.mrb[0].mxu0
        %1301 = vmatprep.mubr.bf16.mxu0 %v1121
        %1302 = vmatmul.mubr.bf16.gmra.mrb[0].mxu0 %v1120
        %v1303 = vpop.f32.mrb[0].mxu0
        %v1304 = vadd.f32 0.0, %v1303
        %v1305 = vpop.f32.mrb[0].mxu0
        %v1306 = vpop.f32.mrb[0].mxu0
        %v1307 = vadd.f32 0.0, %v1306
        %v1308 = vpop.f32.mrb[0].mxu0
        %1309 = vmatprep.mubr.bf16.mxu0 %v1123
        %1310 = vmatmul.mubr.bf16.gmra.mrb[0].mxu0 %v1122
        %v1311 = vpop.f32.mrb[0].mxu0
        %v1312 = vadd.f32 0.0, %v1311
        %v1313 = vpop.f32.mrb[0].mxu0
        %v1314 = vpop.f32.mrb[0].mxu0
        %v1315 = vpop.f32.mrb[0].mxu0
        %1316 = vdwg.mxu0
        %v1349 = vunpack.c.l.b16 %v1070
        %v1350 = vunpack.c.l.b16 %v1071
        %v1351 = vunpack.c.l.b16 %v1072
        %v1352 = vunpack.c.l.b16 %v1073
        %v1353 = vunpack.c.l.b16 %v1074
        %v1354 = vunpack.c.l.b16 %v1075
        %v1355 = vunpack.c.l.b16 %v1076
        %v1356 = vunpack.c.l.b16 %v1077
        %v1357 = vunpack.c.l.b16 %v1078
        %v1358 = vunpack.c.l.b16 %v1079
        %v1359 = vunpack.c.l.b16 %v1080
        %v1360 = vunpack.c.l.b16 %v1081
        %v1361 = vunpack.c.l.b16 %v1082
        %v1362 = vunpack.c.l.b16 %v1083
        %v1363 = vunpack.c.l.b16 %v1084
        %v1364 = vunpack.c.l.b16 %v1085
        %v1365 = vunpack.c.l.b16 %v1086
        %v1366 = vunpack.c.l.b16 %v1087
        %v1367 = vunpack.c.l.b16 %v1088
        %v1368 = vunpack.c.l.b16 %v1089
        %v1369 = vunpack.c.l.b16 %v1090
        %v1370 = vunpack.c.l.b16 %v1091
        %v1371 = vunpack.c.l.b16 %v1092
        %v1372 = vunpack.c.l.b16 %v1093
        %v1373 = vunpack.c.l.b16 %v1094
        %v1374 = vunpack.c.l.b16 %v1095
        %v1375 = vunpack.c.l.b16 %v1096
        %v1376 = vunpack.c.l.b16 %v1097
        %v1377 = vunpack.c.l.b16 %v1098
        %v1378 = vunpack.c.l.b16 %v1099
        %v1379 = vunpack.c.l.b16 %v1100
        %v1380 = vunpack.c.l.b16 %v1101
        %v1381 = vpack.c.b16 %v1350, %v1349
        %v1382 = vpack.c.b16 %v1352, %v1351
        %v1383 = vpack.c.b16 %v1354, %v1353
        %v1384 = vpack.c.b16 %v1356, %v1355
        %v1385 = vpack.c.b16 %v1358, %v1357
        %v1386 = vpack.c.b16 %v1360, %v1359
        %v1387 = vpack.c.b16 %v1362, %v1361
        %v1388 = vpack.c.b16 %v1364, %v1363
        %v1389 = vpack.c.b16 %v1366, %v1365
        %v1390 = vpack.c.b16 %v1368, %v1367
        %v1391 = vpack.c.b16 %v1370, %v1369
        %v1392 = vpack.c.b16 %v1372, %v1371
        %v1393 = vpack.c.b16 %v1374, %v1373
        %v1394 = vpack.c.b16 %v1376, %v1375
        %v1395 = vpack.c.b16 %v1378, %v1377
        %v1396 = vpack.c.b16 %v1380, %v1379
        %1413 = vmatprep.subr.bf16.mxu0 0
        %1414 = vmatpush1.bf16.msra.mxu0 %v1381
        %1415 = vmatprep.subr.bf16.mxu0 0
        %1416 = vmatpush1.bf16.msra.mxu0 %v1382
        %1417 = vmatprep.subr.bf16.mxu0 0
        %1418 = vmatpush1.bf16.msra.mxu0 %v1383
        %1419 = vmatprep.subr.bf16.mxu0 0
        %1420 = vmatpush1.bf16.msra.mxu0 %v1384
        %1421 = vmatprep.subr.bf16.mxu0 0
        %1422 = vmatpush1.bf16.msra.mxu0 %v1385
        %1423 = vmatprep.subr.bf16.mxu0 0
        %1424 = vmatpush1.bf16.msra.mxu0 %v1386
        %1425 = vmatprep.subr.bf16.mxu0 0
        %1426 = vmatpush1.bf16.msra.mxu0 %v1387
        %1427 = vmatprep.subr.bf16.mxu0 0
        %1428 = vmatpush1.bf16.msra.mxu0 %v1388
        %1429 = vmatprep.subr.bf16.mxu0 0
        %1430 = vmatpush1.bf16.msra.mxu0 %v1389
        %1431 = vmatprep.subr.bf16.mxu0 0
        %1432 = vmatpush1.bf16.msra.mxu0 %v1390
        %1433 = vmatprep.subr.bf16.mxu0 0
        %1434 = vmatpush1.bf16.msra.mxu0 %v1391
        %1435 = vmatprep.subr.bf16.mxu0 0
        %1436 = vmatpush1.bf16.msra.mxu0 %v1392
        %1437 = vmatprep.subr.bf16.mxu0 0
        %1438 = vmatpush1.bf16.msra.mxu0 %v1393
        %1439 = vmatprep.subr.bf16.mxu0 0
        %1440 = vmatpush1.bf16.msra.mxu0 %v1394
        %1441 = vmatprep.subr.bf16.mxu0 0
        %1442 = vmatpush1.bf16.msra.mxu0 %v1395
        %1443 = vmatprep.subr.bf16.mxu0 0
        %1444 = vmatpush1.bf16.msra.mxu0 %v1396
        %1445 = vmatprep.mubr.bf16.mxu0 %v1063
        %1446 = vmatmul.mubr.bf16.gmra.mrb[0].mxu0 %v1062
        %v1447 = vpop.f32.mrb[0].mxu0
        %v1448 = vadd.f32 %v1288, %v1447
        %v1449 = vpop.f32.mrb[0].mxu0
        %v1450 = vpop.f32.mrb[0].mxu0
        %v1451 = vadd.f32 %v1291, %v1450
        %v1452 = vpop.f32.mrb[0].mxu0
        %1453 = vmatprep.mubr.bf16.mxu0 %v1065
        %1454 = vmatmul.mubr.bf16.gmra.mrb[0].mxu0 %v1064
        %v1455 = vpop.f32.mrb[0].mxu0
        %v1456 = vadd.f32 %v1296, %v1455
        %v1457 = vpop.f32.mrb[0].mxu0
        %v1458 = vpop.f32.mrb[0].mxu0
        %v1459 = vadd.f32 %v1299, %v1458
        %v1460 = vpop.f32.mrb[0].mxu0
        %1461 = vmatprep.mubr.bf16.mxu0 %v1067
        %1462 = vmatmul.mubr.bf16.gmra.mrb[0].mxu0 %v1066
        %v1463 = vpop.f32.mrb[0].mxu0
        %v1464 = vadd.f32 %v1304, %v1463
        %v1465 = vpop.f32.mrb[0].mxu0
        %v1466 = vpop.f32.mrb[0].mxu0
        %v1467 = vadd.f32 %v1307, %v1466
        %v1468 = vpop.f32.mrb[0].mxu0
        %1469 = vmatprep.mubr.bf16.mxu0 %v1069
        %1470 = vmatmul.mubr.bf16.gmra.mrb[0].mxu0 %v1068
        %v1471 = vpop.f32.mrb[0].mxu0
        %v1472 = vadd.f32 %v1312, %v1471
        %v1473 = vpop.f32.mrb[0].mxu0
        %v1474 = vpop.f32.mrb[0].mxu0
        %v1475 = vpop.f32.mrb[0].mxu0
        %1476 = vdwg.mxu0
        %v1477 = vld [vmem:[#allocation2 + $0x4] sm:$0xff]
        %v1478 = vld [vmem:[#allocation2 + $0xc] sm:$0xff]
        %v1479 = vld [vmem:[#allocation2 + $0x14] sm:$0xff]
        %v1480 = vld [vmem:[#allocation2 + $0x1c] sm:$0xff]
        %v1481 = vld [vmem:[#allocation2 + $0x24] sm:$0xff]
        %v1482 = vld [vmem:[#allocation2 + $0x2c] sm:$0xff]
        %v1483 = vld [vmem:[#allocation2 + $0x34] sm:$0xff]
        %v1484 = vld [vmem:[#allocation2 + $0x5] sm:$0xff]
        %v1485 = vld [vmem:[#allocation2 + $0xd] sm:$0xff]
        %v1486 = vld [vmem:[#allocation2 + $0x15] sm:$0xff]
        %v1487 = vld [vmem:[#allocation2 + $0x1d] sm:$0xff]
        %v1488 = vld [vmem:[#allocation2 + $0x25] sm:$0xff]
        %v1489 = vld [vmem:[#allocation2 + $0x2d] sm:$0xff]
        %v1490 = vld [vmem:[#allocation2 + $0x35] sm:$0xff]
        %v1491 = vpack.c.bf16 %v1478, %v1477
        %v1492 = vpack.c.bf16 %v1485, %v1484
        %v1493 = vpack.c.bf16 %v1480, %v1479
        %v1494 = vpack.c.bf16 %v1487, %v1486
        %v1495 = vpack.c.bf16 %v1482, %v1481
        %v1496 = vpack.c.bf16 %v1489, %v1488
        %v1497 = vpack.c.bf16 %v1483, %v1483
        %v1498 = vpack.c.bf16 %v1490, %v1490
        %s1499 = scalar_lea.vmem [#allocation8], 256
        %v1500 = vld [vmem:[%s1499] sm:$0xf]
        %v1501 = vld [vmem:[%s1499 + $0x4] sm:$0xf]
        %v1502 = vld [vmem:[%s1499 + $0x8] sm:$0xf]
        %v1503 = vld [vmem:[%s1499 + $0xc] sm:$0xf]
        %v1504 = vld [vmem:[%s1499 + $0x10] sm:$0xf]
        %v1505 = vld [vmem:[%s1499 + $0x14] sm:$0xf]
        %v1506 = vld [vmem:[%s1499 + $0x18] sm:$0xf]
        %v1507 = vld [vmem:[%s1499 + $0x1c] sm:$0xf]
        %v1508 = vld [vmem:[%s1499 + $0x20] sm:$0xf]
        %v1509 = vld [vmem:[%s1499 + $0x24] sm:$0xf]
        %v1510 = vld [vmem:[%s1499 + $0x28] sm:$0xf]
        %v1511 = vld [vmem:[%s1499 + $0x2c] sm:$0xf]
        %v1512 = vld [vmem:[%s1499 + $0x30] sm:$0xf]
        %v1513 = vld [vmem:[%s1499 + $0x34] sm:$0xf]
        %v1514 = vld [vmem:[%s1499 + $0x38] sm:$0xf]
        %v1515 = vld [vmem:[%s1499 + $0x3c] sm:$0xf]
        %v1516 = vld [vmem:[%s1499 + $0x40] sm:$0xf]
        %v1517 = vld [vmem:[%s1499 + $0x44] sm:$0xf]
        %v1518 = vld [vmem:[%s1499 + $0x48] sm:$0xf]
        %v1519 = vld [vmem:[%s1499 + $0x4c] sm:$0xf]
        %v1520 = vld [vmem:[%s1499 + $0x50] sm:$0xf]
        %v1521 = vld [vmem:[%s1499 + $0x54] sm:$0xf]
        %v1522 = vld [vmem:[%s1499 + $0x58] sm:$0xf]
        %v1523 = vld [vmem:[%s1499 + $0x5c] sm:$0xf]
        %v1524 = vld [vmem:[%s1499 + $0x60] sm:$0xf]
        %v1525 = vld [vmem:[%s1499 + $0x64] sm:$0xf]
        %v1526 = vld [vmem:[%s1499 + $0x68] sm:$0xf]
        %v1527 = vld [vmem:[%s1499 + $0x6c] sm:$0xf]
        %v1528 = vld [vmem:[%s1499 + $0x70] sm:$0xf]
        %v1529 = vld [vmem:[%s1499 + $0x74] sm:$0xf]
        %v1530 = vld [vmem:[%s1499 + $0x78] sm:$0xf]
        %v1531 = vld [vmem:[%s1499 + $0x7c] sm:$0xf]
        %v1564 = vunpack.c.l.b16 %v1500
        %v1565 = vunpack.c.l.b16 %v1501
        %v1566 = vunpack.c.l.b16 %v1502
        %v1567 = vunpack.c.l.b16 %v1503
        %v1568 = vunpack.c.l.b16 %v1504
        %v1569 = vunpack.c.l.b16 %v1505
        %v1570 = vunpack.c.l.b16 %v1506
        %v1571 = vunpack.c.l.b16 %v1507
        %v1572 = vunpack.c.l.b16 %v1508
        %v1573 = vunpack.c.l.b16 %v1509
        %v1574 = vunpack.c.l.b16 %v1510
        %v1575 = vunpack.c.l.b16 %v1511
        %v1576 = vunpack.c.l.b16 %v1512
        %v1577 = vunpack.c.l.b16 %v1513
        %v1578 = vunpack.c.l.b16 %v1514
        %v1579 = vunpack.c.l.b16 %v1515
        %v1580 = vunpack.c.l.b16 %v1516
        %v1581 = vunpack.c.l.b16 %v1517
        %v1582 = vunpack.c.l.b16 %v1518
        %v1583 = vunpack.c.l.b16 %v1519
        %v1584 = vunpack.c.l.b16 %v1520
        %v1585 = vunpack.c.l.b16 %v1521
        %v1586 = vunpack.c.l.b16 %v1522
        %v1587 = vunpack.c.l.b16 %v1523
        %v1588 = vunpack.c.l.b16 %v1524
        %v1589 = vunpack.c.l.b16 %v1525
        %v1590 = vunpack.c.l.b16 %v1526
        %v1591 = vunpack.c.l.b16 %v1527
        %v1592 = vunpack.c.l.b16 %v1528
        %v1593 = vunpack.c.l.b16 %v1529
        %v1594 = vunpack.c.l.b16 %v1530
        %v1595 = vunpack.c.l.b16 %v1531
        %v1596 = vpack.c.b16 %v1565, %v1564
        %v1597 = vpack.c.b16 %v1567, %v1566
        %v1598 = vpack.c.b16 %v1569, %v1568
        %v1599 = vpack.c.b16 %v1571, %v1570
        %v1600 = vpack.c.b16 %v1573, %v1572
        %v1601 = vpack.c.b16 %v1575, %v1574
        %v1602 = vpack.c.b16 %v1577, %v1576
        %v1603 = vpack.c.b16 %v1579, %v1578
        %v1604 = vpack.c.b16 %v1581, %v1580
        %v1605 = vpack.c.b16 %v1583, %v1582
        %v1606 = vpack.c.b16 %v1585, %v1584
        %v1607 = vpack.c.b16 %v1587, %v1586
        %v1608 = vpack.c.b16 %v1589, %v1588
        %v1609 = vpack.c.b16 %v1591, %v1590
        %v1610 = vpack.c.b16 %v1593, %v1592
        %v1611 = vpack.c.b16 %v1595, %v1594
        %1628 = vmatprep.subr.bf16.mxu0 0
        %1629 = vmatpush1.bf16.msra.mxu0 %v1596
        %1630 = vmatprep.subr.bf16.mxu0 0
        %1631 = vmatpush1.bf16.msra.mxu0 %v1597
        %1632 = vmatprep.subr.bf16.mxu0 0
        %1633 = vmatpush1.bf16.msra.mxu0 %v1598
        %1634 = vmatprep.subr.bf16.mxu0 0
        %1635 = vmatpush1.bf16.msra.mxu0 %v1599
        %1636 = vmatprep.subr.bf16.mxu0 0
        %1637 = vmatpush1.bf16.msra.mxu0 %v1600
        %1638 = vmatprep.subr.bf16.mxu0 0
        %1639 = vmatpush1.bf16.msra.mxu0 %v1601
        %1640 = vmatprep.subr.bf16.mxu0 0
        %1641 = vmatpush1.bf16.msra.mxu0 %v1602
        %1642 = vmatprep.subr.bf16.mxu0 0
        %1643 = vmatpush1.bf16.msra.mxu0 %v1603
        %1644 = vmatprep.subr.bf16.mxu0 0
        %1645 = vmatpush1.bf16.msra.mxu0 %v1604
        %1646 = vmatprep.subr.bf16.mxu0 0
        %1647 = vmatpush1.bf16.msra.mxu0 %v1605
        %1648 = vmatprep.subr.bf16.mxu0 0
        %1649 = vmatpush1.bf16.msra.mxu0 %v1606
        %1650 = vmatprep.subr.bf16.mxu0 0
        %1651 = vmatpush1.bf16.msra.mxu0 %v1607
        %1652 = vmatprep.subr.bf16.mxu0 0
        %1653 = vmatpush1.bf16.msra.mxu0 %v1608
        %1654 = vmatprep.subr.bf16.mxu0 0
        %1655 = vmatpush1.bf16.msra.mxu0 %v1609
        %1656 = vmatprep.subr.bf16.mxu0 0
        %1657 = vmatpush1.bf16.msra.mxu0 %v1610
        %1658 = vmatprep.subr.bf16.mxu0 0
        %1659 = vmatpush1.bf16.msra.mxu0 %v1611
        %1660 = vmatprep.mubr.bf16.mxu0 %v1492
        %1661 = vmatmul.mubr.bf16.gmra.mrb[0].mxu0 %v1491
        %v1662 = vpop.f32.mrb[0].mxu0
        %v1663 = vadd.f32 0.0, %v1662
        %v1664 = vpop.f32.mrb[0].mxu0
        %v1665 = vpop.f32.mrb[0].mxu0
        %v1666 = vadd.f32 0.0, %v1665
        %v1667 = vpop.f32.mrb[0].mxu0
        %1668 = vmatprep.mubr.bf16.mxu0 %v1494
        %1669 = vmatmul.mubr.bf16.gmra.mrb[0].mxu0 %v1493
        %v1670 = vpop.f32.mrb[0].mxu0
        %v1671 = vadd.f32 0.0, %v1670
        %v1672 = vpop.f32.mrb[0].mxu0
        %v1673 = vpop.f32.mrb[0].mxu0
        %v1674 = vadd.f32 0.0, %v1673
        %v1675 = vpop.f32.mrb[0].mxu0
        %1676 = vmatprep.mubr.bf16.mxu0 %v1496
        %1677 = vmatmul.mubr.bf16.gmra.mrb[0].mxu0 %v1495
        %v1678 = vpop.f32.mrb[0].mxu0
        %v1679 = vadd.f32 0.0, %v1678
        %v1680 = vpop.f32.mrb[0].mxu0
        %v1681 = vpop.f32.mrb[0].mxu0
        %v1682 = vadd.f32 0.0, %v1681
        %v1683 = vpop.f32.mrb[0].mxu0
        %1684 = vmatprep.mubr.bf16.mxu0 %v1498
        %1685 = vmatmul.mubr.bf16.gmra.mrb[0].mxu0 %v1497
        %v1686 = vpop.f32.mrb[0].mxu0
        %v1687 = vadd.f32 0.0, %v1686
        %v1688 = vpop.f32.mrb[0].mxu0
        %v1689 = vpop.f32.mrb[0].mxu0
        %v1690 = vpop.f32.mrb[0].mxu0
        %1691 = vdwg.mxu0
        %v1692 = vadd.f32 %v1448, %v1663
        %v1693 = vadd.f32 %v1451, %v1666
        %v1694 = vadd.f32 %v1456, %v1671
        %v1695 = vadd.f32 %v1459, %v1674
        %v1696 = vadd.f32 %v1464, %v1679
        %v1697 = vadd.f32 %v1467, %v1682
        %v1698 = vadd.f32 %v1472, %v1687
        %v1699 = vld [vmem:[#allocation2 + $0x6] sm:$0xff]
        %v1700 = vld [vmem:[#allocation2 + $0xe] sm:$0xff]
        %v1701 = vld [vmem:[#allocation2 + $0x16] sm:$0xff]
        %v1702 = vld [vmem:[#allocation2 + $0x1e] sm:$0xff]
        %v1703 = vld [vmem:[#allocation2 + $0x26] sm:$0xff]
        %v1704 = vld [vmem:[#allocation2 + $0x2e] sm:$0xff]
        %v1705 = vld [vmem:[#allocation2 + $0x36] sm:$0xff]
        %v1706 = vld [vmem:[#allocation2 + $0x7] sm:$0xff]
        %v1707 = vld [vmem:[#allocation2 + $0xf] sm:$0xff]
        %v1708 = vld [vmem:[#allocation2 + $0x17] sm:$0xff]
        %v1709 = vld [vmem:[#allocation2 + $0x1f] sm:$0xff]
        %v1710 = vld [vmem:[#allocation2 + $0x27] sm:$0xff]
        %v1711 = vld [vmem:[#allocation2 + $0x2f] sm:$0xff]
        %v1712 = vld [vmem:[#allocation2 + $0x37] sm:$0xff]
        %v1713 = vpack.c.bf16 %v1700, %v1699
        %v1714 = vpack.c.bf16 %v1707, %v1706
        %v1715 = vpack.c.bf16 %v1702, %v1701
        %v1716 = vpack.c.bf16 %v1709, %v1708
        %v1717 = vpack.c.bf16 %v1704, %v1703
        %v1718 = vpack.c.bf16 %v1711, %v1710
        %v1719 = vpack.c.bf16 %v1705, %v1705
        %v1720 = vpack.c.bf16 %v1712, %v1712
        %s1721 = scalar_lea.vmem [#allocation8], 384
        %v1722 = vld [vmem:[%s1721] sm:$0xf]
        %v1723 = vld [vmem:[%s1721 + $0x4] sm:$0xf]
        %v1724 = vld [vmem:[%s1721 + $0x8] sm:$0xf]
        %v1725 = vld [vmem:[%s1721 + $0xc] sm:$0xf]
        %v1726 = vld [vmem:[%s1721 + $0x10] sm:$0xf]
        %v1727 = vld [vmem:[%s1721 + $0x14] sm:$0xf]
        %v1728 = vld [vmem:[%s1721 + $0x18] sm:$0xf]
        %v1729 = vld [vmem:[%s1721 + $0x1c] sm:$0xf]
        %v1730 = vld [vmem:[%s1721 + $0x20] sm:$0xf]
        %v1731 = vld [vmem:[%s1721 + $0x24] sm:$0xf]
        %v1732 = vld [vmem:[%s1721 + $0x28] sm:$0xf]
        %v1733 = vld [vmem:[%s1721 + $0x2c] sm:$0xf]
        %v1734 = vld [vmem:[%s1721 + $0x30] sm:$0xf]
        %v1735 = vld [vmem:[%s1721 + $0x34] sm:$0xf]
        %v1736 = vld [vmem:[%s1721 + $0x38] sm:$0xf]
        %v1737 = vld [vmem:[%s1721 + $0x3c] sm:$0xf]
        %v1738 = vld [vmem:[%s1721 + $0x40] sm:$0xf]
        %v1739 = vld [vmem:[%s1721 + $0x44] sm:$0xf]
        %v1740 = vld [vmem:[%s1721 + $0x48] sm:$0xf]
        %v1741 = vld [vmem:[%s1721 + $0x4c] sm:$0xf]
        %v1742 = vld [vmem:[%s1721 + $0x50] sm:$0xf]
        %v1743 = vld [vmem:[%s1721 + $0x54] sm:$0xf]
        %v1744 = vld [vmem:[%s1721 + $0x58] sm:$0xf]
        %v1745 = vld [vmem:[%s1721 + $0x5c] sm:$0xf]
        %v1746 = vld [vmem:[%s1721 + $0x60] sm:$0xf]
        %v1747 = vld [vmem:[%s1721 + $0x64] sm:$0xf]
        %v1748 = vld [vmem:[%s1721 + $0x68] sm:$0xf]
        %v1749 = vld [vmem:[%s1721 + $0x6c] sm:$0xf]
        %v1750 = vld [vmem:[%s1721 + $0x70] sm:$0xf]
        %v1751 = vld [vmem:[%s1721 + $0x74] sm:$0xf]
        %v1752 = vld [vmem:[%s1721 + $0x78] sm:$0xf]
        %v1753 = vld [vmem:[%s1721 + $0x7c] sm:$0xf]
        %v1786 = vunpack.c.l.b16 %v1722
        %v1787 = vunpack.c.l.b16 %v1723
        %v1788 = vunpack.c.l.b16 %v1724
        %v1789 = vunpack.c.l.b16 %v1725
        %v1790 = vunpack.c.l.b16 %v1726
        %v1791 = vunpack.c.l.b16 %v1727
        %v1792 = vunpack.c.l.b16 %v1728
        %v1793 = vunpack.c.l.b16 %v1729
        %v1794 = vunpack.c.l.b16 %v1730
        %v1795 = vunpack.c.l.b16 %v1731
        %v1796 = vunpack.c.l.b16 %v1732
        %v1797 = vunpack.c.l.b16 %v1733
        %v1798 = vunpack.c.l.b16 %v1734
        %v1799 = vunpack.c.l.b16 %v1735
        %v1800 = vunpack.c.l.b16 %v1736
        %v1801 = vunpack.c.l.b16 %v1737
        %v1802 = vunpack.c.l.b16 %v1738
        %v1803 = vunpack.c.l.b16 %v1739
        %v1804 = vunpack.c.l.b16 %v1740
        %v1805 = vunpack.c.l.b16 %v1741
        %v1806 = vunpack.c.l.b16 %v1742
        %v1807 = vunpack.c.l.b16 %v1743
        %v1808 = vunpack.c.l.b16 %v1744
        %v1809 = vunpack.c.l.b16 %v1745
        %v1810 = vunpack.c.l.b16 %v1746
        %v1811 = vunpack.c.l.b16 %v1747
        %v1812 = vunpack.c.l.b16 %v1748
        %v1813 = vunpack.c.l.b16 %v1749
        %v1814 = vunpack.c.l.b16 %v1750
        %v1815 = vunpack.c.l.b16 %v1751
        %v1816 = vunpack.c.l.b16 %v1752
        %v1817 = vunpack.c.l.b16 %v1753
        %v1818 = vpack.c.b16 %v1787, %v1786
        %v1819 = vpack.c.b16 %v1789, %v1788
        %v1820 = vpack.c.b16 %v1791, %v1790
        %v1821 = vpack.c.b16 %v1793, %v1792
        %v1822 = vpack.c.b16 %v1795, %v1794
        %v1823 = vpack.c.b16 %v1797, %v1796
        %v1824 = vpack.c.b16 %v1799, %v1798
        %v1825 = vpack.c.b16 %v1801, %v1800
        %v1826 = vpack.c.b16 %v1803, %v1802
        %v1827 = vpack.c.b16 %v1805, %v1804
        %v1828 = vpack.c.b16 %v1807, %v1806
        %v1829 = vpack.c.b16 %v1809, %v1808
        %v1830 = vpack.c.b16 %v1811, %v1810
        %v1831 = vpack.c.b16 %v1813, %v1812
        %v1832 = vpack.c.b16 %v1815, %v1814
        %v1833 = vpack.c.b16 %v1817, %v1816
        %1850 = vmatprep.subr.bf16.mxu0 0
        %1851 = vmatpush1.bf16.msra.mxu0 %v1818
        %1852 = vmatprep.subr.bf16.mxu0 0
        %1853 = vmatpush1.bf16.msra.mxu0 %v1819
        %1854 = vmatprep.subr.bf16.mxu0 0
        %1855 = vmatpush1.bf16.msra.mxu0 %v1820
        %1856 = vmatprep.subr.bf16.mxu0 0
        %1857 = vmatpush1.bf16.msra.mxu0 %v1821
        %1858 = vmatprep.subr.bf16.mxu0 0
        %1859 = vmatpush1.bf16.msra.mxu0 %v1822
        %1860 = vmatprep.subr.bf16.mxu0 0
        %1861 = vmatpush1.bf16.msra.mxu0 %v1823
        %1862 = vmatprep.subr.bf16.mxu0 0
        %1863 = vmatpush1.bf16.msra.mxu0 %v1824
        %1864 = vmatprep.subr.bf16.mxu0 0
        %1865 = vmatpush1.bf16.msra.mxu0 %v1825
        %1866 = vmatprep.subr.bf16.mxu0 0
        %1867 = vmatpush1.bf16.msra.mxu0 %v1826
        %1868 = vmatprep.subr.bf16.mxu0 0
        %1869 = vmatpush1.bf16.msra.mxu0 %v1827
        %1870 = vmatprep.subr.bf16.mxu0 0
        %1871 = vmatpush1.bf16.msra.mxu0 %v1828
        %1872 = vmatprep.subr.bf16.mxu0 0
        %1873 = vmatpush1.bf16.msra.mxu0 %v1829
        %1874 = vmatprep.subr.bf16.mxu0 0
        %1875 = vmatpush1.bf16.msra.mxu0 %v1830
        %1876 = vmatprep.subr.bf16.mxu0 0
        %1877 = vmatpush1.bf16.msra.mxu0 %v1831
        %1878 = vmatprep.subr.bf16.mxu0 0
        %1879 = vmatpush1.bf16.msra.mxu0 %v1832
        %1880 = vmatprep.subr.bf16.mxu0 0
        %1881 = vmatpush1.bf16.msra.mxu0 %v1833
        %1882 = vmatprep.mubr.bf16.mxu0 %v1714
        %1883 = vmatmul.mubr.bf16.gmra.mrb[0].mxu0 %v1713
        %v1884 = vpop.f32.mrb[0].mxu0
        %v1885 = vadd.f32 0.0, %v1884
        %v1886 = vpop.f32.mrb[0].mxu0
        %v1887 = vpop.f32.mrb[0].mxu0
        %v1888 = vadd.f32 0.0, %v1887
        %v1889 = vpop.f32.mrb[0].mxu0
        %1890 = vmatprep.mubr.bf16.mxu0 %v1716
        %1891 = vmatmul.mubr.bf16.gmra.mrb[0].mxu0 %v1715
        %v1892 = vpop.f32.mrb[0].mxu0
        %v1893 = vadd.f32 0.0, %v1892
        %v1894 = vpop.f32.mrb[0].mxu0
        %v1895 = vpop.f32.mrb[0].mxu0
        %v1896 = vadd.f32 0.0, %v1895
        %v1897 = vpop.f32.mrb[0].mxu0
        %1898 = vmatprep.mubr.bf16.mxu0 %v1718
        %1899 = vmatmul.mubr.bf16.gmra.mrb[0].mxu0 %v1717
        %v1900 = vpop.f32.mrb[0].mxu0
        %v1901 = vadd.f32 0.0, %v1900
        %v1902 = vpop.f32.mrb[0].mxu0
        %v1903 = vpop.f32.mrb[0].mxu0
        %v1904 = vadd.f32 0.0, %v1903
        %v1905 = vpop.f32.mrb[0].mxu0
        %1906 = vmatprep.mubr.bf16.mxu0 %v1720
        %1907 = vmatmul.mubr.bf16.gmra.mrb[0].mxu0 %v1719
        %v1908 = vpop.f32.mrb[0].mxu0
        %v1909 = vadd.f32 0.0, %v1908
        %v1910 = vpop.f32.mrb[0].mxu0
        %v1911 = vpop.f32.mrb[0].mxu0
        %v1912 = vpop.f32.mrb[0].mxu0
        %1913 = vdwg.mxu0
        %v1914 = vadd.f32 %v1692, %v1885
        %v1915 = vadd.f32 %v1693, %v1888
        %v1916 = vadd.f32 %v1694, %v1893
        %v1917 = vadd.f32 %v1695, %v1896
        %v1918 = vadd.f32 %v1696, %v1901
        %v1919 = vadd.f32 %v1697, %v1904
        %v1920 = vadd.f32 %v1698, %v1909
        %v1921 = vld [vmem:[#allocation2 + $0x8] sm:$0xff]
        %v1922 = vld [vmem:[#allocation2 + $0x10] sm:$0xff]
        %v1923 = vld [vmem:[#allocation2 + $0x18] sm:$0xff]
        %v1924 = vld [vmem:[#allocation2 + $0x20] sm:$0xff]
        %v1925 = vld [vmem:[#allocation2 + $0x28] sm:$0xff]
        %v1926 = vld [vmem:[#allocation2 + $0x30] sm:$0xff]
        %v1927 = vld [vmem:[#allocation2 + $0x38] sm:$0xff]
        %v1928 = vld [vmem:[#allocation2 + $0x9] sm:$0xff]
        %v1929 = vld [vmem:[#allocation2 + $0x11] sm:$0xff]
        %v1930 = vld [vmem:[#allocation2 + $0x19] sm:$0xff]
        %v1931 = vld [vmem:[#allocation2 + $0x21] sm:$0xff]
        %v1932 = vld [vmem:[#allocation2 + $0x29] sm:$0xff]
        %v1933 = vld [vmem:[#allocation2 + $0x31] sm:$0xff]
        %v1934 = vld [vmem:[#allocation2 + $0x39] sm:$0xff]
        %v1935 = vpack.c.bf16 %v1922, %v1921
        %v1936 = vpack.c.bf16 %v1929, %v1928
        %v1937 = vpack.c.bf16 %v1924, %v1923
        %v1938 = vpack.c.bf16 %v1931, %v1930
        %v1939 = vpack.c.bf16 %v1926, %v1925
        %v1940 = vpack.c.bf16 %v1933, %v1932
        %v1941 = vpack.c.bf16 %v1927, %v1927
        %v1942 = vpack.c.bf16 %v1934, %v1934
        %s1943 = scalar_lea.vmem [#allocation8], 512
        %v1944 = vld [vmem:[%s1943] sm:$0xf]
        %v1945 = vld [vmem:[%s1943 + $0x4] sm:$0xf]
        %v1946 = vld [vmem:[%s1943 + $0x8] sm:$0xf]
        %v1947 = vld [vmem:[%s1943 + $0xc] sm:$0xf]
        %v1948 = vld [vmem:[%s1943 + $0x10] sm:$0xf]
        %v1949 = vld [vmem:[%s1943 + $0x14] sm:$0xf]
        %v1950 = vld [vmem:[%s1943 + $0x18] sm:$0xf]
        %v1951 = vld [vmem:[%s1943 + $0x1c] sm:$0xf]
        %v1952 = vld [vmem:[%s1943 + $0x20] sm:$0xf]
        %v1953 = vld [vmem:[%s1943 + $0x24] sm:$0xf]
        %v1954 = vld [vmem:[%s1943 + $0x28] sm:$0xf]
        %v1955 = vld [vmem:[%s1943 + $0x2c] sm:$0xf]
        %v1956 = vld [vmem:[%s1943 + $0x30] sm:$0xf]
        %v1957 = vld [vmem:[%s1943 + $0x34] sm:$0xf]
        %v1958 = vld [vmem:[%s1943 + $0x38] sm:$0xf]
        %v1959 = vld [vmem:[%s1943 + $0x3c] sm:$0xf]
        %v1960 = vld [vmem:[%s1943 + $0x40] sm:$0xf]
        %v1961 = vld [vmem:[%s1943 + $0x44] sm:$0xf]
        %v1962 = vld [vmem:[%s1943 + $0x48] sm:$0xf]
        %v1963 = vld [vmem:[%s1943 + $0x4c] sm:$0xf]
        %v1964 = vld [vmem:[%s1943 + $0x50] sm:$0xf]
        %v1965 = vld [vmem:[%s1943 + $0x54] sm:$0xf]
        %v1966 = vld [vmem:[%s1943 + $0x58] sm:$0xf]
        %v1967 = vld [vmem:[%s1943 + $0x5c] sm:$0xf]
        %v1968 = vld [vmem:[%s1943 + $0x60] sm:$0xf]
        %v1969 = vld [vmem:[%s1943 + $0x64] sm:$0xf]
        %v1970 = vld [vmem:[%s1943 + $0x68] sm:$0xf]
        %v1971 = vld [vmem:[%s1943 + $0x6c] sm:$0xf]
        %v1972 = vld [vmem:[%s1943 + $0x70] sm:$0xf]
        %v1973 = vld [vmem:[%s1943 + $0x74] sm:$0xf]
        %v1974 = vld [vmem:[%s1943 + $0x78] sm:$0xf]
        %v1975 = vld [vmem:[%s1943 + $0x7c] sm:$0xf]
        %v2008 = vunpack.c.l.b16 %v1944
        %v2009 = vunpack.c.l.b16 %v1945
        %v2010 = vunpack.c.l.b16 %v1946
        %v2011 = vunpack.c.l.b16 %v1947
        %v2012 = vunpack.c.l.b16 %v1948
        %v2013 = vunpack.c.l.b16 %v1949
        %v2014 = vunpack.c.l.b16 %v1950
        %v2015 = vunpack.c.l.b16 %v1951
        %v2016 = vunpack.c.l.b16 %v1952
        %v2017 = vunpack.c.l.b16 %v1953
        %v2018 = vunpack.c.l.b16 %v1954
        %v2019 = vunpack.c.l.b16 %v1955
        %v2020 = vunpack.c.l.b16 %v1956
        %v2021 = vunpack.c.l.b16 %v1957
        %v2022 = vunpack.c.l.b16 %v1958
        %v2023 = vunpack.c.l.b16 %v1959
        %v2024 = vunpack.c.l.b16 %v1960
        %v2025 = vunpack.c.l.b16 %v1961
        %v2026 = vunpack.c.l.b16 %v1962
        %v2027 = vunpack.c.l.b16 %v1963
        %v2028 = vunpack.c.l.b16 %v1964
        %v2029 = vunpack.c.l.b16 %v1965
        %v2030 = vunpack.c.l.b16 %v1966
        %v2031 = vunpack.c.l.b16 %v1967
        %v2032 = vunpack.c.l.b16 %v1968
        %v2033 = vunpack.c.l.b16 %v1969
        %v2034 = vunpack.c.l.b16 %v1970
        %v2035 = vunpack.c.l.b16 %v1971
        %v2036 = vunpack.c.l.b16 %v1972
        %v2037 = vunpack.c.l.b16 %v1973
        %v2038 = vunpack.c.l.b16 %v1974
        %v2039 = vunpack.c.l.b16 %v1975
        %v2040 = vpack.c.b16 %v2009, %v2008
        %v2041 = vpack.c.b16 %v2011, %v2010
        %v2042 = vpack.c.b16 %v2013, %v2012
        %v2043 = vpack.c.b16 %v2015, %v2014
        %v2044 = vpack.c.b16 %v2017, %v2016
        %v2045 = vpack.c.b16 %v2019, %v2018
        %v2046 = vpack.c.b16 %v2021, %v2020
        %v2047 = vpack.c.b16 %v2023, %v2022
        %v2048 = vpack.c.b16 %v2025, %v2024
        %v2049 = vpack.c.b16 %v2027, %v2026
        %v2050 = vpack.c.b16 %v2029, %v2028
        %v2051 = vpack.c.b16 %v2031, %v2030
        %v2052 = vpack.c.b16 %v2033, %v2032
        %v2053 = vpack.c.b16 %v2035, %v2034
        %v2054 = vpack.c.b16 %v2037, %v2036
        %v2055 = vpack.c.b16 %v2039, %v2038
        %2072 = vmatprep.subr.bf16.mxu0 0
        %2073 = vmatpush1.bf16.msra.mxu0 %v2040
        %2074 = vmatprep.subr.bf16.mxu0 0
        %2075 = vmatpush1.bf16.msra.mxu0 %v2041
        %2076 = vmatprep.subr.bf16.mxu0 0
        %2077 = vmatpush1.bf16.msra.mxu0 %v2042
        %2078 = vmatprep.subr.bf16.mxu0 0
        %2079 = vmatpush1.bf16.msra.mxu0 %v2043
        %2080 = vmatprep.subr.bf16.mxu0 0
        %2081 = vmatpush1.bf16.msra.mxu0 %v2044
        %2082 = vmatprep.subr.bf16.mxu0 0
        %2083 = vmatpush1.bf16.msra.mxu0 %v2045
        %2084 = vmatprep.subr.bf16.mxu0 0
        %2085 = vmatpush1.bf16.msra.mxu0 %v2046
        %2086 = vmatprep.subr.bf16.mxu0 0
        %2087 = vmatpush1.bf16.msra.mxu0 %v2047
        %2088 = vmatprep.subr.bf16.mxu0 0
        %2089 = vmatpush1.bf16.msra.mxu0 %v2048
        %2090 = vmatprep.subr.bf16.mxu0 0
        %2091 = vmatpush1.bf16.msra.mxu0 %v2049
        %2092 = vmatprep.subr.bf16.mxu0 0
        %2093 = vmatpush1.bf16.msra.mxu0 %v2050
        %2094 = vmatprep.subr.bf16.mxu0 0
        %2095 = vmatpush1.bf16.msra.mxu0 %v2051
        %2096 = vmatprep.subr.bf16.mxu0 0
        %2097 = vmatpush1.bf16.msra.mxu0 %v2052
        %2098 = vmatprep.subr.bf16.mxu0 0
        %2099 = vmatpush1.bf16.msra.mxu0 %v2053
        %2100 = vmatprep.subr.bf16.mxu0 0
        %2101 = vmatpush1.bf16.msra.mxu0 %v2054
        %2102 = vmatprep.subr.bf16.mxu0 0
        %2103 = vmatpush1.bf16.msra.mxu0 %v2055
        %2104 = vmatprep.mubr.bf16.mxu0 %v1936
        %2105 = vmatmul.mubr.bf16.gmra.mrb[0].mxu0 %v1935
        %v2106 = vpop.f32.mrb[0].mxu0
        %v2107 = vadd.f32 0.0, %v2106
        %v2108 = vpop.f32.mrb[0].mxu0
        %v2109 = vpop.f32.mrb[0].mxu0
        %v2110 = vadd.f32 0.0, %v2109
        %v2111 = vpop.f32.mrb[0].mxu0
        %2112 = vmatprep.mubr.bf16.mxu0 %v1938
        %2113 = vmatmul.mubr.bf16.gmra.mrb[0].mxu0 %v1937
        %v2114 = vpop.f32.mrb[0].mxu0
        %v2115 = vadd.f32 0.0, %v2114
        %v2116 = vpop.f32.mrb[0].mxu0
        %v2117 = vpop.f32.mrb[0].mxu0
        %v2118 = vadd.f32 0.0, %v2117
        %v2119 = vpop.f32.mrb[0].mxu0
        %2120 = vmatprep.mubr.bf16.mxu0 %v1940
        %2121 = vmatmul.mubr.bf16.gmra.mrb[0].mxu0 %v1939
        %v2122 = vpop.f32.mrb[0].mxu0
        %v2123 = vadd.f32 0.0, %v2122
        %v2124 = vpop.f32.mrb[0].mxu0
        %v2125 = vpop.f32.mrb[0].mxu0
        %v2126 = vadd.f32 0.0, %v2125
        %v2127 = vpop.f32.mrb[0].mxu0
        %2128 = vmatprep.mubr.bf16.mxu0 %v1942
        %2129 = vmatmul.mubr.bf16.gmra.mrb[0].mxu0 %v1941
        %v2130 = vpop.f32.mrb[0].mxu0
        %v2131 = vadd.f32 0.0, %v2130
        %v2132 = vpop.f32.mrb[0].mxu0
        %v2133 = vpop.f32.mrb[0].mxu0
        %v2134 = vpop.f32.mrb[0].mxu0
        %2135 = vdwg.mxu0
        %v2136 = vadd.f32 %v1914, %v2107
        %v2137 = vadd.f32 %v1915, %v2110
        %v2138 = vadd.f32 %v1916, %v2115
        %v2139 = vadd.f32 %v1917, %v2118
        %v2140 = vadd.f32 %v1918, %v2123
        %v2141 = vadd.f32 %v1919, %v2126
        %v2142 = vadd.f32 %v1920, %v2131
        %v2143 = vld [vmem:[#allocation2 + $0xa] sm:$0xff]
        %v2144 = vld [vmem:[#allocation2 + $0x12] sm:$0xff]
        %v2145 = vld [vmem:[#allocation2 + $0x1a] sm:$0xff]
        %v2146 = vld [vmem:[#allocation2 + $0x22] sm:$0xff]
        %v2147 = vld [vmem:[#allocation2 + $0x2a] sm:$0xff]
        %v2148 = vld [vmem:[#allocation2 + $0x32] sm:$0xff]
        %v2149 = vld [vmem:[#allocation2 + $0x3a] sm:$0xff]
        %v2150 = vld [vmem:[#allocation2 + $0xb] sm:$0xff]
        %v2151 = vld [vmem:[#allocation2 + $0x13] sm:$0xff]
        %v2152 = vld [vmem:[#allocation2 + $0x1b] sm:$0xff]
        %v2153 = vld [vmem:[#allocation2 + $0x23] sm:$0xff]
        %v2154 = vld [vmem:[#allocation2 + $0x2b] sm:$0xff]
        %v2155 = vld [vmem:[#allocation2 + $0x33] sm:$0xff]
        %v2156 = vld [vmem:[#allocation2 + $0x3b] sm:$0xff]
        %v2157 = vpack.c.bf16 %v2144, %v2143
        %v2158 = vpack.c.bf16 %v2151, %v2150
        %v2159 = vpack.c.bf16 %v2146, %v2145
        %v2160 = vpack.c.bf16 %v2153, %v2152
        %v2161 = vpack.c.bf16 %v2148, %v2147
        %v2162 = vpack.c.bf16 %v2155, %v2154
        %v2163 = vpack.c.bf16 %v2149, %v2149
        %v2164 = vpack.c.bf16 %v2156, %v2156
        %s2165 = scalar_lea.vmem [#allocation8], 640
        %v2166 = vld [vmem:[%s2165] sm:$0xf]
        %v2167 = vld [vmem:[%s2165 + $0x4] sm:$0xf]
        %v2168 = vld [vmem:[%s2165 + $0x8] sm:$0xf]
        %v2169 = vld [vmem:[%s2165 + $0xc] sm:$0xf]
        %v2170 = vld [vmem:[%s2165 + $0x10] sm:$0xf]
        %v2171 = vld [vmem:[%s2165 + $0x14] sm:$0xf]
        %v2172 = vld [vmem:[%s2165 + $0x18] sm:$0xf]
        %v2173 = vld [vmem:[%s2165 + $0x1c] sm:$0xf]
        %v2174 = vld [vmem:[%s2165 + $0x20] sm:$0xf]
        %v2175 = vld [vmem:[%s2165 + $0x24] sm:$0xf]
        %v2176 = vld [vmem:[%s2165 + $0x28] sm:$0xf]
        %v2177 = vld [vmem:[%s2165 + $0x2c] sm:$0xf]
        %v2178 = vld [vmem:[%s2165 + $0x30] sm:$0xf]
        %v2179 = vld [vmem:[%s2165 + $0x34] sm:$0xf]
        %v2180 = vld [vmem:[%s2165 + $0x38] sm:$0xf]
        %v2181 = vld [vmem:[%s2165 + $0x3c] sm:$0xf]
        %v2182 = vld [vmem:[%s2165 + $0x40] sm:$0xf]
        %v2183 = vld [vmem:[%s2165 + $0x44] sm:$0xf]
        %v2184 = vld [vmem:[%s2165 + $0x48] sm:$0xf]
        %v2185 = vld [vmem:[%s2165 + $0x4c] sm:$0xf]
        %v2186 = vld [vmem:[%s2165 + $0x50] sm:$0xf]
        %v2187 = vld [vmem:[%s2165 + $0x54] sm:$0xf]
        %v2188 = vld [vmem:[%s2165 + $0x58] sm:$0xf]
        %v2189 = vld [vmem:[%s2165 + $0x5c] sm:$0xf]
        %v2190 = vld [vmem:[%s2165 + $0x60] sm:$0xf]
        %v2191 = vld [vmem:[%s2165 + $0x64] sm:$0xf]
        %v2192 = vld [vmem:[%s2165 + $0x68] sm:$0xf]
        %v2193 = vld [vmem:[%s2165 + $0x6c] sm:$0xf]
        %v2194 = vld [vmem:[%s2165 + $0x70] sm:$0xf]
        %v2195 = vld [vmem:[%s2165 + $0x74] sm:$0xf]
        %v2196 = vld [vmem:[%s2165 + $0x78] sm:$0xf]
        %v2197 = vld [vmem:[%s2165 + $0x7c] sm:$0xf]
        %v2230 = vunpack.c.l.b16 %v2166
        %v2231 = vunpack.c.l.b16 %v2167
        %v2232 = vunpack.c.l.b16 %v2168
        %v2233 = vunpack.c.l.b16 %v2169
        %v2234 = vunpack.c.l.b16 %v2170
        %v2235 = vunpack.c.l.b16 %v2171
        %v2236 = vunpack.c.l.b16 %v2172
        %v2237 = vunpack.c.l.b16 %v2173
        %v2238 = vunpack.c.l.b16 %v2174
        %v2239 = vunpack.c.l.b16 %v2175
        %v2240 = vunpack.c.l.b16 %v2176
        %v2241 = vunpack.c.l.b16 %v2177
        %v2242 = vunpack.c.l.b16 %v2178
        %v2243 = vunpack.c.l.b16 %v2179
        %v2244 = vunpack.c.l.b16 %v2180
        %v2245 = vunpack.c.l.b16 %v2181
        %v2246 = vunpack.c.l.b16 %v2182
        %v2247 = vunpack.c.l.b16 %v2183
        %v2248 = vunpack.c.l.b16 %v2184
        %v2249 = vunpack.c.l.b16 %v2185
        %v2250 = vunpack.c.l.b16 %v2186
        %v2251 = vunpack.c.l.b16 %v2187
        %v2252 = vunpack.c.l.b16 %v2188
        %v2253 = vunpack.c.l.b16 %v2189
        %v2254 = vunpack.c.l.b16 %v2190
        %v2255 = vunpack.c.l.b16 %v2191
        %v2256 = vunpack.c.l.b16 %v2192
        %v2257 = vunpack.c.l.b16 %v2193
        %v2258 = vunpack.c.l.b16 %v2194
        %v2259 = vunpack.c.l.b16 %v2195
        %v2260 = vunpack.c.l.b16 %v2196
        %v2261 = vunpack.c.l.b16 %v2197
        %v2262 = vpack.c.b16 %v2231, %v2230
        %v2263 = vpack.c.b16 %v2233, %v2232
        %v2264 = vpack.c.b16 %v2235, %v2234
        %v2265 = vpack.c.b16 %v2237, %v2236
        %v2266 = vpack.c.b16 %v2239, %v2238
        %v2267 = vpack.c.b16 %v2241, %v2240
        %v2268 = vpack.c.b16 %v2243, %v2242
        %v2269 = vpack.c.b16 %v2245, %v2244
        %v2270 = vpack.c.b16 %v2247, %v2246
        %v2271 = vpack.c.b16 %v2249, %v2248
        %v2272 = vpack.c.b16 %v2251, %v2250
        %v2273 = vpack.c.b16 %v2253, %v2252
        %v2274 = vpack.c.b16 %v2255, %v2254
        %v2275 = vpack.c.b16 %v2257, %v2256
        %v2276 = vpack.c.b16 %v2259, %v2258
        %v2277 = vpack.c.b16 %v2261, %v2260
        %2294 = vmatprep.subr.bf16.mxu0 0
        %2295 = vmatpush1.bf16.msra.mxu0 %v2262
        %2296 = vmatprep.subr.bf16.mxu0 0
        %2297 = vmatpush1.bf16.msra.mxu0 %v2263
        %2298 = vmatprep.subr.bf16.mxu0 0
        %2299 = vmatpush1.bf16.msra.mxu0 %v2264
        %2300 = vmatprep.subr.bf16.mxu0 0
        %2301 = vmatpush1.bf16.msra.mxu0 %v2265
        %2302 = vmatprep.subr.bf16.mxu0 0
        %2303 = vmatpush1.bf16.msra.mxu0 %v2266
        %2304 = vmatprep.subr.bf16.mxu0 0
        %2305 = vmatpush1.bf16.msra.mxu0 %v2267
        %2306 = vmatprep.subr.bf16.mxu0 0
        %2307 = vmatpush1.bf16.msra.mxu0 %v2268
        %2308 = vmatprep.subr.bf16.mxu0 0
        %2309 = vmatpush1.bf16.msra.mxu0 %v2269
        %2310 = vmatprep.subr.bf16.mxu0 0
        %2311 = vmatpush1.bf16.msra.mxu0 %v2270
        %2312 = vmatprep.subr.bf16.mxu0 0
        %2313 = vmatpush1.bf16.msra.mxu0 %v2271
        %2314 = vmatprep.subr.bf16.mxu0 0
        %2315 = vmatpush1.bf16.msra.mxu0 %v2272
        %2316 = vmatprep.subr.bf16.mxu0 0
        %2317 = vmatpush1.bf16.msra.mxu0 %v2273
        %2318 = vmatprep.subr.bf16.mxu0 0
        %2319 = vmatpush1.bf16.msra.mxu0 %v2274
        %2320 = vmatprep.subr.bf16.mxu0 0
        %2321 = vmatpush1.bf16.msra.mxu0 %v2275
        %2322 = vmatprep.subr.bf16.mxu0 0
        %2323 = vmatpush1.bf16.msra.mxu0 %v2276
        %2324 = vmatprep.subr.bf16.mxu0 0
        %2325 = vmatpush1.bf16.msra.mxu0 %v2277
        %2326 = vmatprep.mubr.bf16.mxu0 %v2158
        %2327 = vmatmul.mubr.bf16.gmra.mrb[0].mxu0 %v2157
        %v2328 = vpop.f32.mrb[0].mxu0
        %v2329 = vadd.f32 0.0, %v2328
        %v2330 = vpop.f32.mrb[0].mxu0
        %v2331 = vpop.f32.mrb[0].mxu0
        %v2332 = vadd.f32 0.0, %v2331
        %v2333 = vpop.f32.mrb[0].mxu0
        %2334 = vmatprep.mubr.bf16.mxu0 %v2160
        %2335 = vmatmul.mubr.bf16.gmra.mrb[0].mxu0 %v2159
        %v2336 = vpop.f32.mrb[0].mxu0
        %v2337 = vadd.f32 0.0, %v2336
        %v2338 = vpop.f32.mrb[0].mxu0
        %v2339 = vpop.f32.mrb[0].mxu0
        %v2340 = vadd.f32 0.0, %v2339
        %v2341 = vpop.f32.mrb[0].mxu0
        %2342 = vmatprep.mubr.bf16.mxu0 %v2162
        %2343 = vmatmul.mubr.bf16.gmra.mrb[0].mxu0 %v2161
        %v2344 = vpop.f32.mrb[0].mxu0
        %v2345 = vadd.f32 0.0, %v2344
        %v2346 = vpop.f32.mrb[0].mxu0
        %v2347 = vpop.f32.mrb[0].mxu0
        %v2348 = vadd.f32 0.0, %v2347
        %v2349 = vpop.f32.mrb[0].mxu0
        %2350 = vmatprep.mubr.bf16.mxu0 %v2164
        %2351 = vmatmul.mubr.bf16.gmra.mrb[0].mxu0 %v2163
        %v2352 = vpop.f32.mrb[0].mxu0
        %v2353 = vadd.f32 0.0, %v2352
        %v2354 = vpop.f32.mrb[0].mxu0
        %v2355 = vpop.f32.mrb[0].mxu0
        %v2356 = vpop.f32.mrb[0].mxu0
        %2357 = vdwg.mxu0
        %v2358 = vadd.f32 %v2136, %v2329
        %v2359 = vadd.f32 %v2137, %v2332
        %v2360 = vadd.f32 %v2138, %v2337
        %v2361 = vadd.f32 %v2139, %v2340
        %v2362 = vadd.f32 %v2140, %v2345
        %v2363 = vadd.f32 %v2141, %v2348
        %v2364 = vadd.f32 %v2142, %v2353
        %v2365 = vld [vmem:[#allocation2 + $0xc] sm:$0xff]
        %v2366 = vld [vmem:[#allocation2 + $0x14] sm:$0xff]
        %v2367 = vld [vmem:[#allocation2 + $0x1c] sm:$0xff]
        %v2368 = vld [vmem:[#allocation2 + $0x24] sm:$0xff]
        %v2369 = vld [vmem:[#allocation2 + $0x2c] sm:$0xff]
        %v2370 = vld [vmem:[#allocation2 + $0x34] sm:$0xff]
        %v2371 = vld [vmem:[#allocation2 + $0x3c] sm:$0xff]
        %v2372 = vld [vmem:[#allocation2 + $0xd] sm:$0xff]
        %v2373 = vld [vmem:[#allocation2 + $0x15] sm:$0xff]
        %v2374 = vld [vmem:[#allocation2 + $0x1d] sm:$0xff]
        %v2375 = vld [vmem:[#allocation2 + $0x25] sm:$0xff]
        %v2376 = vld [vmem:[#allocation2 + $0x2d] sm:$0xff]
        %v2377 = vld [vmem:[#allocation2 + $0x35] sm:$0xff]
        %v2378 = vld [vmem:[#allocation2 + $0x3d] sm:$0xff]
        %v2379 = vpack.c.bf16 %v2366, %v2365
        %v2380 = vpack.c.bf16 %v2373, %v2372
        %v2381 = vpack.c.bf16 %v2368, %v2367
        %v2382 = vpack.c.bf16 %v2375, %v2374
        %v2383 = vpack.c.bf16 %v2370, %v2369
        %v2384 = vpack.c.bf16 %v2377, %v2376
        %v2385 = vpack.c.bf16 %v2371, %v2371
        %v2386 = vpack.c.bf16 %v2378, %v2378
        %s2387 = scalar_lea.vmem [#allocation8], 768
        %v2388 = vld [vmem:[%s2387] sm:$0xf]
        %v2389 = vld [vmem:[%s2387 + $0x4] sm:$0xf]
        %v2390 = vld [vmem:[%s2387 + $0x8] sm:$0xf]
        %v2391 = vld [vmem:[%s2387 + $0xc] sm:$0xf]
        %v2392 = vld [vmem:[%s2387 + $0x10] sm:$0xf]
        %v2393 = vld [vmem:[%s2387 + $0x14] sm:$0xf]
        %v2394 = vld [vmem:[%s2387 + $0x18] sm:$0xf]
        %v2395 = vld [vmem:[%s2387 + $0x1c] sm:$0xf]
        %v2396 = vld [vmem:[%s2387 + $0x20] sm:$0xf]
        %v2397 = vld [vmem:[%s2387 + $0x24] sm:$0xf]
        %v2398 = vld [vmem:[%s2387 + $0x28] sm:$0xf]
        %v2399 = vld [vmem:[%s2387 + $0x2c] sm:$0xf]
        %v2400 = vld [vmem:[%s2387 + $0x30] sm:$0xf]
        %v2401 = vld [vmem:[%s2387 + $0x34] sm:$0xf]
        %v2402 = vld [vmem:[%s2387 + $0x38] sm:$0xf]
        %v2403 = vld [vmem:[%s2387 + $0x3c] sm:$0xf]
        %v2404 = vld [vmem:[%s2387 + $0x40] sm:$0xf]
        %v2405 = vld [vmem:[%s2387 + $0x44] sm:$0xf]
        %v2406 = vld [vmem:[%s2387 + $0x48] sm:$0xf]
        %v2407 = vld [vmem:[%s2387 + $0x4c] sm:$0xf]
        %v2408 = vld [vmem:[%s2387 + $0x50] sm:$0xf]
        %v2409 = vld [vmem:[%s2387 + $0x54] sm:$0xf]
        %v2410 = vld [vmem:[%s2387 + $0x58] sm:$0xf]
        %v2411 = vld [vmem:[%s2387 + $0x5c] sm:$0xf]
        %v2412 = vld [vmem:[%s2387 + $0x60] sm:$0xf]
        %v2413 = vld [vmem:[%s2387 + $0x64] sm:$0xf]
        %v2414 = vld [vmem:[%s2387 + $0x68] sm:$0xf]
        %v2415 = vld [vmem:[%s2387 + $0x6c] sm:$0xf]
        %v2416 = vld [vmem:[%s2387 + $0x70] sm:$0xf]
        %v2417 = vld [vmem:[%s2387 + $0x74] sm:$0xf]
        %v2418 = vld [vmem:[%s2387 + $0x78] sm:$0xf]
        %v2419 = vld [vmem:[%s2387 + $0x7c] sm:$0xf]
        %v2452 = vunpack.c.l.b16 %v2388
        %v2453 = vunpack.c.l.b16 %v2389
        %v2454 = vunpack.c.l.b16 %v2390
        %v2455 = vunpack.c.l.b16 %v2391
        %v2456 = vunpack.c.l.b16 %v2392
        %v2457 = vunpack.c.l.b16 %v2393
        %v2458 = vunpack.c.l.b16 %v2394
        %v2459 = vunpack.c.l.b16 %v2395
        %v2460 = vunpack.c.l.b16 %v2396
        %v2461 = vunpack.c.l.b16 %v2397
        %v2462 = vunpack.c.l.b16 %v2398
        %v2463 = vunpack.c.l.b16 %v2399
        %v2464 = vunpack.c.l.b16 %v2400
        %v2465 = vunpack.c.l.b16 %v2401
        %v2466 = vunpack.c.l.b16 %v2402
        %v2467 = vunpack.c.l.b16 %v2403
        %v2468 = vunpack.c.l.b16 %v2404
        %v2469 = vunpack.c.l.b16 %v2405
        %v2470 = vunpack.c.l.b16 %v2406
        %v2471 = vunpack.c.l.b16 %v2407
        %v2472 = vunpack.c.l.b16 %v2408
        %v2473 = vunpack.c.l.b16 %v2409
        %v2474 = vunpack.c.l.b16 %v2410
        %v2475 = vunpack.c.l.b16 %v2411
        %v2476 = vunpack.c.l.b16 %v2412
        %v2477 = vunpack.c.l.b16 %v2413
        %v2478 = vunpack.c.l.b16 %v2414
        %v2479 = vunpack.c.l.b16 %v2415
        %v2480 = vunpack.c.l.b16 %v2416
        %v2481 = vunpack.c.l.b16 %v2417
        %v2482 = vunpack.c.l.b16 %v2418
        %v2483 = vunpack.c.l.b16 %v2419
        %v2484 = vpack.c.b16 %v2453, %v2452
        %v2485 = vpack.c.b16 %v2455, %v2454
        %v2486 = vpack.c.b16 %v2457, %v2456
        %v2487 = vpack.c.b16 %v2459, %v2458
        %v2488 = vpack.c.b16 %v2461, %v2460
        %v2489 = vpack.c.b16 %v2463, %v2462
        %v2490 = vpack.c.b16 %v2465, %v2464
        %v2491 = vpack.c.b16 %v2467, %v2466
        %v2492 = vpack.c.b16 %v2469, %v2468
        %v2493 = vpack.c.b16 %v2471, %v2470
        %v2494 = vpack.c.b16 %v2473, %v2472
        %v2495 = vpack.c.b16 %v2475, %v2474
        %v2496 = vpack.c.b16 %v2477, %v2476
        %v2497 = vpack.c.b16 %v2479, %v2478
        %v2498 = vpack.c.b16 %v2481, %v2480
        %v2499 = vpack.c.b16 %v2483, %v2482
        %2516 = vmatprep.subr.bf16.mxu0 0
        %2517 = vmatpush1.bf16.msra.mxu0 %v2484
        %2518 = vmatprep.subr.bf16.mxu0 0
        %2519 = vmatpush1.bf16.msra.mxu0 %v2485
        %2520 = vmatprep.subr.bf16.mxu0 0
        %2521 = vmatpush1.bf16.msra.mxu0 %v2486
        %2522 = vmatprep.subr.bf16.mxu0 0
        %2523 = vmatpush1.bf16.msra.mxu0 %v2487
        %2524 = vmatprep.subr.bf16.mxu0 0
        %2525 = vmatpush1.bf16.msra.mxu0 %v2488
        %2526 = vmatprep.subr.bf16.mxu0 0
        %2527 = vmatpush1.bf16.msra.mxu0 %v2489
        %2528 = vmatprep.subr.bf16.mxu0 0
        %2529 = vmatpush1.bf16.msra.mxu0 %v2490
        %2530 = vmatprep.subr.bf16.mxu0 0
        %2531 = vmatpush1.bf16.msra.mxu0 %v2491
        %2532 = vmatprep.subr.bf16.mxu0 0
        %2533 = vmatpush1.bf16.msra.mxu0 %v2492
        %2534 = vmatprep.subr.bf16.mxu0 0
        %2535 = vmatpush1.bf16.msra.mxu0 %v2493
        %2536 = vmatprep.subr.bf16.mxu0 0
        %2537 = vmatpush1.bf16.msra.mxu0 %v2494
        %2538 = vmatprep.subr.bf16.mxu0 0
        %2539 = vmatpush1.bf16.msra.mxu0 %v2495
        %2540 = vmatprep.subr.bf16.mxu0 0
        %2541 = vmatpush1.bf16.msra.mxu0 %v2496
        %2542 = vmatprep.subr.bf16.mxu0 0
        %2543 = vmatpush1.bf16.msra.mxu0 %v2497
        %2544 = vmatprep.subr.bf16.mxu0 0
        %2545 = vmatpush1.bf16.msra.mxu0 %v2498
        %2546 = vmatprep.subr.bf16.mxu0 0
        %2547 = vmatpush1.bf16.msra.mxu0 %v2499
        %2548 = vmatprep.mubr.bf16.mxu0 %v2380
        %2549 = vmatmul.mubr.bf16.gmra.mrb[0].mxu0 %v2379
        %v2550 = vpop.f32.mrb[0].mxu0
        %v2551 = vadd.f32 0.0, %v2550
        %v2552 = vpop.f32.mrb[0].mxu0
        %v2553 = vpop.f32.mrb[0].mxu0
        %v2554 = vadd.f32 0.0, %v2553
        %v2555 = vpop.f32.mrb[0].mxu0
        %2556 = vmatprep.mubr.bf16.mxu0 %v2382
        %2557 = vmatmul.mubr.bf16.gmra.mrb[0].mxu0 %v2381
        %v2558 = vpop.f32.mrb[0].mxu0
        %v2559 = vadd.f32 0.0, %v2558
        %v2560 = vpop.f32.mrb[0].mxu0
        %v2561 = vpop.f32.mrb[0].mxu0
        %v2562 = vadd.f32 0.0, %v2561
        %v2563 = vpop.f32.mrb[0].mxu0
        %2564 = vmatprep.mubr.bf16.mxu0 %v2384
        %2565 = vmatmul.mubr.bf16.gmra.mrb[0].mxu0 %v2383
        %v2566 = vpop.f32.mrb[0].mxu0
        %v2567 = vadd.f32 0.0, %v2566
        %v2568 = vpop.f32.mrb[0].mxu0
        %v2569 = vpop.f32.mrb[0].mxu0
        %v2570 = vadd.f32 0.0, %v2569
        %v2571 = vpop.f32.mrb[0].mxu0
        %2572 = vmatprep.mubr.bf16.mxu0 %v2386
        %2573 = vmatmul.mubr.bf16.gmra.mrb[0].mxu0 %v2385
        %v2574 = vpop.f32.mrb[0].mxu0
        %v2575 = vadd.f32 0.0, %v2574
        %v2576 = vpop.f32.mrb[0].mxu0
        %v2577 = vpop.f32.mrb[0].mxu0
        %v2578 = vpop.f32.mrb[0].mxu0
        %2579 = vdwg.mxu0
        %v2580 = vadd.f32 %v2358, %v2551
        %v2581 = vadd.f32 %v2359, %v2554
        %v2582 = vadd.f32 %v2360, %v2559
        %v2583 = vadd.f32 %v2361, %v2562
        %v2584 = vadd.f32 %v2362, %v2567
        %v2585 = vadd.f32 %v2363, %v2570
        %v2586 = vadd.f32 %v2364, %v2575
        %v2587 = vld [vmem:[#allocation2 + $0xe] sm:$0xff]
        %v2588 = vld [vmem:[#allocation2 + $0x16] sm:$0xff]
        %v2589 = vld [vmem:[#allocation2 + $0x1e] sm:$0xff]
        %v2590 = vld [vmem:[#allocation2 + $0x26] sm:$0xff]
        %v2591 = vld [vmem:[#allocation2 + $0x2e] sm:$0xff]
        %v2592 = vld [vmem:[#allocation2 + $0x36] sm:$0xff]
        %v2593 = vld [vmem:[#allocation2 + $0x3e] sm:$0xff]
        %v2594 = vld [vmem:[#allocation2 + $0xf] sm:$0xff]
        %v2595 = vld [vmem:[#allocation2 + $0x17] sm:$0xff]
        %v2596 = vld [vmem:[#allocation2 + $0x1f] sm:$0xff]
        %v2597 = vld [vmem:[#allocation2 + $0x27] sm:$0xff]
        %v2598 = vld [vmem:[#allocation2 + $0x2f] sm:$0xff]
        %v2599 = vld [vmem:[#allocation2 + $0x37] sm:$0xff]
        %v2600 = vld [vmem:[#allocation2 + $0x3f] sm:$0xff]
        %v2601 = vpack.c.bf16 %v2588, %v2587
        %v2602 = vpack.c.bf16 %v2595, %v2594
        %v2603 = vpack.c.bf16 %v2590, %v2589
        %v2604 = vpack.c.bf16 %v2597, %v2596
        %v2605 = vpack.c.bf16 %v2592, %v2591
        %v2606 = vpack.c.bf16 %v2599, %v2598
        %v2607 = vpack.c.bf16 %v2593, %v2593
        %v2608 = vpack.c.bf16 %v2600, %v2600
        %s2609 = scalar_lea.vmem [#allocation8], 896
        %v2610 = vld [vmem:[%s2609] sm:$0xf]
        %v2611 = vld [vmem:[%s2609 + $0x4] sm:$0xf]
        %v2612 = vld [vmem:[%s2609 + $0x8] sm:$0xf]
        %v2613 = vld [vmem:[%s2609 + $0xc] sm:$0xf]
        %v2614 = vld [vmem:[%s2609 + $0x10] sm:$0xf]
        %v2615 = vld [vmem:[%s2609 + $0x14] sm:$0xf]
        %v2616 = vld [vmem:[%s2609 + $0x18] sm:$0xf]
        %v2617 = vld [vmem:[%s2609 + $0x1c] sm:$0xf]
        %v2618 = vld [vmem:[%s2609 + $0x20] sm:$0xf]
        %v2619 = vld [vmem:[%s2609 + $0x24] sm:$0xf]
        %v2620 = vld [vmem:[%s2609 + $0x28] sm:$0xf]
        %v2621 = vld [vmem:[%s2609 + $0x2c] sm:$0xf]
        %v2622 = vld [vmem:[%s2609 + $0x30] sm:$0xf]
        %v2623 = vld [vmem:[%s2609 + $0x34] sm:$0xf]
        %v2624 = vld [vmem:[%s2609 + $0x38] sm:$0xf]
        %v2625 = vld [vmem:[%s2609 + $0x3c] sm:$0xf]
        %v2626 = vld [vmem:[%s2609 + $0x40] sm:$0xf]
        %v2627 = vld [vmem:[%s2609 + $0x44] sm:$0xf]
        %v2628 = vld [vmem:[%s2609 + $0x48] sm:$0xf]
        %v2629 = vld [vmem:[%s2609 + $0x4c] sm:$0xf]
        %v2630 = vld [vmem:[%s2609 + $0x50] sm:$0xf]
        %v2631 = vld [vmem:[%s2609 + $0x54] sm:$0xf]
        %v2632 = vld [vmem:[%s2609 + $0x58] sm:$0xf]
        %v2633 = vld [vmem:[%s2609 + $0x5c] sm:$0xf]
        %v2634 = vld [vmem:[%s2609 + $0x60] sm:$0xf]
        %v2635 = vld [vmem:[%s2609 + $0x64] sm:$0xf]
        %v2636 = vld [vmem:[%s2609 + $0x68] sm:$0xf]
        %v2637 = vld [vmem:[%s2609 + $0x6c] sm:$0xf]
        %v2638 = vld [vmem:[%s2609 + $0x70] sm:$0xf]
        %v2639 = vld [vmem:[%s2609 + $0x74] sm:$0xf]
        %v2640 = vld [vmem:[%s2609 + $0x78] sm:$0xf]
        %v2641 = vld [vmem:[%s2609 + $0x7c] sm:$0xf]
        %v2674 = vunpack.c.l.b16 %v2610
        %v2675 = vunpack.c.l.b16 %v2611
        %v2676 = vunpack.c.l.b16 %v2612
        %v2677 = vunpack.c.l.b16 %v2613
        %v2678 = vunpack.c.l.b16 %v2614
        %v2679 = vunpack.c.l.b16 %v2615
        %v2680 = vunpack.c.l.b16 %v2616
        %v2681 = vunpack.c.l.b16 %v2617
        %v2682 = vunpack.c.l.b16 %v2618
        %v2683 = vunpack.c.l.b16 %v2619
        %v2684 = vunpack.c.l.b16 %v2620
        %v2685 = vunpack.c.l.b16 %v2621
        %v2686 = vunpack.c.l.b16 %v2622
        %v2687 = vunpack.c.l.b16 %v2623
        %v2688 = vunpack.c.l.b16 %v2624
        %v2689 = vunpack.c.l.b16 %v2625
        %v2690 = vunpack.c.l.b16 %v2626
        %v2691 = vunpack.c.l.b16 %v2627
        %v2692 = vunpack.c.l.b16 %v2628
        %v2693 = vunpack.c.l.b16 %v2629
        %v2694 = vunpack.c.l.b16 %v2630
        %v2695 = vunpack.c.l.b16 %v2631
        %v2696 = vunpack.c.l.b16 %v2632
        %v2697 = vunpack.c.l.b16 %v2633
        %v2698 = vunpack.c.l.b16 %v2634
        %v2699 = vunpack.c.l.b16 %v2635
        %v2700 = vunpack.c.l.b16 %v2636
        %v2701 = vunpack.c.l.b16 %v2637
        %v2702 = vunpack.c.l.b16 %v2638
        %v2703 = vunpack.c.l.b16 %v2639
        %v2704 = vunpack.c.l.b16 %v2640
        %v2705 = vunpack.c.l.b16 %v2641
        %v2706 = vpack.c.b16 %v2675, %v2674
        %v2707 = vpack.c.b16 %v2677, %v2676
        %v2708 = vpack.c.b16 %v2679, %v2678
        %v2709 = vpack.c.b16 %v2681, %v2680
        %v2710 = vpack.c.b16 %v2683, %v2682
        %v2711 = vpack.c.b16 %v2685, %v2684
        %v2712 = vpack.c.b16 %v2687, %v2686
        %v2713 = vpack.c.b16 %v2689, %v2688
        %v2714 = vpack.c.b16 %v2691, %v2690
        %v2715 = vpack.c.b16 %v2693, %v2692
        %v2716 = vpack.c.b16 %v2695, %v2694
        %v2717 = vpack.c.b16 %v2697, %v2696
        %v2718 = vpack.c.b16 %v2699, %v2698
        %v2719 = vpack.c.b16 %v2701, %v2700
        %v2720 = vpack.c.b16 %v2703, %v2702
        %v2721 = vpack.c.b16 %v2705, %v2704
        %2738 = vmatprep.subr.bf16.mxu0 0
        %2739 = vmatpush1.bf16.msra.mxu0 %v2706
        %2740 = vmatprep.subr.bf16.mxu0 0
        %2741 = vmatpush1.bf16.msra.mxu0 %v2707
        %2742 = vmatprep.subr.bf16.mxu0 0
        %2743 = vmatpush1.bf16.msra.mxu0 %v2708
        %2744 = vmatprep.subr.bf16.mxu0 0
        %2745 = vmatpush1.bf16.msra.mxu0 %v2709
        %2746 = vmatprep.subr.bf16.mxu0 0
        %2747 = vmatpush1.bf16.msra.mxu0 %v2710
        %2748 = vmatprep.subr.bf16.mxu0 0
        %2749 = vmatpush1.bf16.msra.mxu0 %v2711
        %2750 = vmatprep.subr.bf16.mxu0 0
        %2751 = vmatpush1.bf16.msra.mxu0 %v2712
        %2752 = vmatprep.subr.bf16.mxu0 0
        %2753 = vmatpush1.bf16.msra.mxu0 %v2713
        %2754 = vmatprep.subr.bf16.mxu0 0
        %2755 = vmatpush1.bf16.msra.mxu0 %v2714
        %2756 = vmatprep.subr.bf16.mxu0 0
        %2757 = vmatpush1.bf16.msra.mxu0 %v2715
        %2758 = vmatprep.subr.bf16.mxu0 0
        %2759 = vmatpush1.bf16.msra.mxu0 %v2716
        %2760 = vmatprep.subr.bf16.mxu0 0
        %2761 = vmatpush1.bf16.msra.mxu0 %v2717
        %2762 = vmatprep.subr.bf16.mxu0 0
        %2763 = vmatpush1.bf16.msra.mxu0 %v2718
        %2764 = vmatprep.subr.bf16.mxu0 0
        %2765 = vmatpush1.bf16.msra.mxu0 %v2719
        %2766 = vmatprep.subr.bf16.mxu0 0
        %2767 = vmatpush1.bf16.msra.mxu0 %v2720
        %2768 = vmatprep.subr.bf16.mxu0 0
        %2769 = vmatpush1.bf16.msra.mxu0 %v2721
        %2770 = vmatprep.mubr.bf16.mxu0 %v2602
        %2771 = vmatmul.mubr.bf16.gmra.mrb[0].mxu0 %v2601
        %v2772 = vpop.f32.mrb[0].mxu0
        %v2773 = vadd.f32 0.0, %v2772
        %v2774 = vpop.f32.mrb[0].mxu0
        %v2775 = vpop.f32.mrb[0].mxu0
        %v2776 = vadd.f32 0.0, %v2775
        %v2777 = vpop.f32.mrb[0].mxu0
        %2778 = vmatprep.mubr.bf16.mxu0 %v2604
        %2779 = vmatmul.mubr.bf16.gmra.mrb[0].mxu0 %v2603
        %v2780 = vpop.f32.mrb[0].mxu0
        %v2781 = vadd.f32 0.0, %v2780
        %v2782 = vpop.f32.mrb[0].mxu0
        %v2783 = vpop.f32.mrb[0].mxu0
        %v2784 = vadd.f32 0.0, %v2783
        %v2785 = vpop.f32.mrb[0].mxu0
        %2786 = vmatprep.mubr.bf16.mxu0 %v2606
        %2787 = vmatmul.mubr.bf16.gmra.mrb[0].mxu0 %v2605
        %v2788 = vpop.f32.mrb[0].mxu0
        %v2789 = vadd.f32 0.0, %v2788
        %v2790 = vpop.f32.mrb[0].mxu0
        %v2791 = vpop.f32.mrb[0].mxu0
        %v2792 = vadd.f32 0.0, %v2791
        %v2793 = vpop.f32.mrb[0].mxu0
        %2794 = vmatprep.mubr.bf16.mxu0 %v2608
        %2795 = vmatmul.mubr.bf16.gmra.mrb[0].mxu0 %v2607
        %v2796 = vpop.f32.mrb[0].mxu0
        %v2797 = vadd.f32 0.0, %v2796
        %v2798 = vpop.f32.mrb[0].mxu0
        %v2799 = vpop.f32.mrb[0].mxu0
        %v2800 = vpop.f32.mrb[0].mxu0
        %2801 = vdwg.mxu0
        %v2802 = vadd.f32 %v2580, %v2773
        %v2803 = vadd.f32 %v2581, %v2776
        %v2804 = vadd.f32 %v2582, %v2781
        %v2805 = vadd.f32 %v2583, %v2784
        %v2806 = vadd.f32 %v2584, %v2789
        %v2807 = vadd.f32 %v2585, %v2792
        %v2808 = vadd.f32 %v2586, %v2797
        %v2809 = vld [vmem:[#allocation2 + $0x10] sm:$0xff]
        %v2810 = vld [vmem:[#allocation2 + $0x18] sm:$0xff]
        %v2811 = vld [vmem:[#allocation2 + $0x20] sm:$0xff]
        %v2812 = vld [vmem:[#allocation2 + $0x28] sm:$0xff]
        %v2813 = vld [vmem:[#allocation2 + $0x30] sm:$0xff]
        %v2814 = vld [vmem:[#allocation2 + $0x38] sm:$0xff]
        %v2815 = vld [vmem:[#allocation2 + $0x40] sm:$0xff]
        %v2816 = vld [vmem:[#allocation2 + $0x11] sm:$0xff]
        %v2817 = vld [vmem:[#allocation2 + $0x19] sm:$0xff]
        %v2818 = vld [vmem:[#allocation2 + $0x21] sm:$0xff]
        %v2819 = vld [vmem:[#allocation2 + $0x29] sm:$0xff]
        %v2820 = vld [vmem:[#allocation2 + $0x31] sm:$0xff]
        %v2821 = vld [vmem:[#allocation2 + $0x39] sm:$0xff]
        %v2822 = vld [vmem:[#allocation2 + $0x41] sm:$0xff]
        %v2823 = vpack.c.bf16 %v2810, %v2809
        %v2824 = vpack.c.bf16 %v2817, %v2816
        %v2825 = vpack.c.bf16 %v2812, %v2811
        %v2826 = vpack.c.bf16 %v2819, %v2818
        %v2827 = vpack.c.bf16 %v2814, %v2813
        %v2828 = vpack.c.bf16 %v2821, %v2820
        %v2829 = vpack.c.bf16 %v2815, %v2815
        %v2830 = vpack.c.bf16 %v2822, %v2822
        %s2831 = scalar_lea.vmem [#allocation8], 1024
        %v2832 = vld [vmem:[%s2831] sm:$0xf]
        %v2833 = vld [vmem:[%s2831 + $0x4] sm:$0xf]
        %v2834 = vld [vmem:[%s2831 + $0x8] sm:$0xf]
        %v2835 = vld [vmem:[%s2831 + $0xc] sm:$0xf]
        %v2836 = vld [vmem:[%s2831 + $0x10] sm:$0xf]
        %v2837 = vld [vmem:[%s2831 + $0x14] sm:$0xf]
        %v2838 = vld [vmem:[%s2831 + $0x18] sm:$0xf]
        %v2839 = vld [vmem:[%s2831 + $0x1c] sm:$0xf]
        %v2840 = vld [vmem:[%s2831 + $0x20] sm:$0xf]
        %v2841 = vld [vmem:[%s2831 + $0x24] sm:$0xf]
        %v2842 = vld [vmem:[%s2831 + $0x28] sm:$0xf]
        %v2843 = vld [vmem:[%s2831 + $0x2c] sm:$0xf]
        %v2844 = vld [vmem:[%s2831 + $0x30] sm:$0xf]
        %v2845 = vld [vmem:[%s2831 + $0x34] sm:$0xf]
        %v2846 = vld [vmem:[%s2831 + $0x38] sm:$0xf]
        %v2847 = vld [vmem:[%s2831 + $0x3c] sm:$0xf]
        %v2848 = vld [vmem:[%s2831 + $0x40] sm:$0xf]
        %v2849 = vld [vmem:[%s2831 + $0x44] sm:$0xf]
        %v2850 = vld [vmem:[%s2831 + $0x48] sm:$0xf]
        %v2851 = vld [vmem:[%s2831 + $0x4c] sm:$0xf]
        %v2852 = vld [vmem:[%s2831 + $0x50] sm:$0xf]
        %v2853 = vld [vmem:[%s2831 + $0x54] sm:$0xf]
        %v2854 = vld [vmem:[%s2831 + $0x58] sm:$0xf]
        %v2855 = vld [vmem:[%s2831 + $0x5c] sm:$0xf]
        %v2856 = vld [vmem:[%s2831 + $0x60] sm:$0xf]
        %v2857 = vld [vmem:[%s2831 + $0x64] sm:$0xf]
        %v2858 = vld [vmem:[%s2831 + $0x68] sm:$0xf]
        %v2859 = vld [vmem:[%s2831 + $0x6c] sm:$0xf]
        %v2860 = vld [vmem:[%s2831 + $0x70] sm:$0xf]
        %v2861 = vld [vmem:[%s2831 + $0x74] sm:$0xf]
        %v2862 = vld [vmem:[%s2831 + $0x78] sm:$0xf]
        %v2863 = vld [vmem:[%s2831 + $0x7c] sm:$0xf]
        %v2896 = vunpack.c.l.b16 %v2832
        %v2897 = vunpack.c.l.b16 %v2833
        %v2898 = vunpack.c.l.b16 %v2834
        %v2899 = vunpack.c.l.b16 %v2835
        %v2900 = vunpack.c.l.b16 %v2836
        %v2901 = vunpack.c.l.b16 %v2837
        %v2902 = vunpack.c.l.b16 %v2838
        %v2903 = vunpack.c.l.b16 %v2839
        %v2904 = vunpack.c.l.b16 %v2840
        %v2905 = vunpack.c.l.b16 %v2841
        %v2906 = vunpack.c.l.b16 %v2842
        %v2907 = vunpack.c.l.b16 %v2843
        %v2908 = vunpack.c.l.b16 %v2844
        %v2909 = vunpack.c.l.b16 %v2845
        %v2910 = vunpack.c.l.b16 %v2846
        %v2911 = vunpack.c.l.b16 %v2847
        %v2912 = vunpack.c.l.b16 %v2848
        %v2913 = vunpack.c.l.b16 %v2849
        %v2914 = vunpack.c.l.b16 %v2850
        %v2915 = vunpack.c.l.b16 %v2851
        %v2916 = vunpack.c.l.b16 %v2852
        %v2917 = vunpack.c.l.b16 %v2853
        %v2918 = vunpack.c.l.b16 %v2854
        %v2919 = vunpack.c.l.b16 %v2855
        %v2920 = vunpack.c.l.b16 %v2856
        %v2921 = vunpack.c.l.b16 %v2857
        %v2922 = vunpack.c.l.b16 %v2858
        %v2923 = vunpack.c.l.b16 %v2859
        %v2924 = vunpack.c.l.b16 %v2860
        %v2925 = vunpack.c.l.b16 %v2861
        %v2926 = vunpack.c.l.b16 %v2862
        %v2927 = vunpack.c.l.b16 %v2863
        %v2928 = vpack.c.b16 %v2897, %v2896
        %v2929 = vpack.c.b16 %v2899, %v2898
        %v2930 = vpack.c.b16 %v2901, %v2900
        %v2931 = vpack.c.b16 %v2903, %v2902
        %v2932 = vpack.c.b16 %v2905, %v2904
        %v2933 = vpack.c.b16 %v2907, %v2906
        %v2934 = vpack.c.b16 %v2909, %v2908
        %v2935 = vpack.c.b16 %v2911, %v2910
        %v2936 = vpack.c.b16 %v2913, %v2912
        %v2937 = vpack.c.b16 %v2915, %v2914
        %v2938 = vpack.c.b16 %v2917, %v2916
        %v2939 = vpack.c.b16 %v2919, %v2918
        %v2940 = vpack.c.b16 %v2921, %v2920
        %v2941 = vpack.c.b16 %v2923, %v2922
        %v2942 = vpack.c.b16 %v2925, %v2924
        %v2943 = vpack.c.b16 %v2927, %v2926
        %2960 = vmatprep.subr.bf16.mxu0 0
        %2961 = vmatpush1.bf16.msra.mxu0 %v2928
        %2962 = vmatprep.subr.bf16.mxu0 0
        %2963 = vmatpush1.bf16.msra.mxu0 %v2929
        %2964 = vmatprep.subr.bf16.mxu0 0
        %2965 = vmatpush1.bf16.msra.mxu0 %v2930
        %2966 = vmatprep.subr.bf16.mxu0 0
        %2967 = vmatpush1.bf16.msra.mxu0 %v2931
        %2968 = vmatprep.subr.bf16.mxu0 0
        %2969 = vmatpush1.bf16.msra.mxu0 %v2932
        %2970 = vmatprep.subr.bf16.mxu0 0
        %2971 = vmatpush1.bf16.msra.mxu0 %v2933
        %2972 = vmatprep.subr.bf16.mxu0 0
        %2973 = vmatpush1.bf16.msra.mxu0 %v2934
        %2974 = vmatprep.subr.bf16.mxu0 0
        %2975 = vmatpush1.bf16.msra.mxu0 %v2935
        %2976 = vmatprep.subr.bf16.mxu0 0
        %2977 = vmatpush1.bf16.msra.mxu0 %v2936
        %2978 = vmatprep.subr.bf16.mxu0 0
        %2979 = vmatpush1.bf16.msra.mxu0 %v2937
        %2980 = vmatprep.subr.bf16.mxu0 0
        %2981 = vmatpush1.bf16.msra.mxu0 %v2938
        %2982 = vmatprep.subr.bf16.mxu0 0
        %2983 = vmatpush1.bf16.msra.mxu0 %v2939
        %2984 = vmatprep.subr.bf16.mxu0 0
        %2985 = vmatpush1.bf16.msra.mxu0 %v2940
        %2986 = vmatprep.subr.bf16.mxu0 0
        %2987 = vmatpush1.bf16.msra.mxu0 %v2941
        %2988 = vmatprep.subr.bf16.mxu0 0
        %2989 = vmatpush1.bf16.msra.mxu0 %v2942
        %2990 = vmatprep.subr.bf16.mxu0 0
        %2991 = vmatpush1.bf16.msra.mxu0 %v2943
        %2992 = vmatprep.mubr.bf16.mxu0 %v2824
        %2993 = vmatmul.mubr.bf16.gmra.mrb[0].mxu0 %v2823
        %v2994 = vpop.f32.mrb[0].mxu0
        %v2995 = vadd.f32 0.0, %v2994
        %v2996 = vpop.f32.mrb[0].mxu0
        %v2997 = vpop.f32.mrb[0].mxu0
        %v2998 = vadd.f32 0.0, %v2997
        %v2999 = vpop.f32.mrb[0].mxu0
        %3000 = vmatprep.mubr.bf16.mxu0 %v2826
        %3001 = vmatmul.mubr.bf16.gmra.mrb[0].mxu0 %v2825
        %v3002 = vpop.f32.mrb[0].mxu0
        %v3003 = vadd.f32 0.0, %v3002
        %v3004 = vpop.f32.mrb[0].mxu0
        %v3005 = vpop.f32.mrb[0].mxu0
        %v3006 = vadd.f32 0.0, %v3005
        %v3007 = vpop.f32.mrb[0].mxu0
        %3008 = vmatprep.mubr.bf16.mxu0 %v2828
        %3009 = vmatmul.mubr.bf16.gmra.mrb[0].mxu0 %v2827
        %v3010 = vpop.f32.mrb[0].mxu0
        %v3011 = vadd.f32 0.0, %v3010
        %v3012 = vpop.f32.mrb[0].mxu0
        %v3013 = vpop.f32.mrb[0].mxu0
        %v3014 = vadd.f32 0.0, %v3013
        %v3015 = vpop.f32.mrb[0].mxu0
        %3016 = vmatprep.mubr.bf16.mxu0 %v2830
        %3017 = vmatmul.mubr.bf16.gmra.mrb[0].mxu0 %v2829
        %v3018 = vpop.f32.mrb[0].mxu0
        %v3019 = vadd.f32 0.0, %v3018
        %v3020 = vpop.f32.mrb[0].mxu0
        %v3021 = vpop.f32.mrb[0].mxu0
        %v3022 = vpop.f32.mrb[0].mxu0
        %3023 = vdwg.mxu0
        %v3024 = vadd.f32 %v2802, %v2995
        %v3025 = vadd.f32 %v2803, %v2998
        %v3026 = vadd.f32 %v2804, %v3003
        %v3027 = vadd.f32 %v2805, %v3006
        %v3028 = vadd.f32 %v2806, %v3011
        %v3029 = vadd.f32 %v2807, %v3014
        %v3030 = vadd.f32 %v2808, %v3019
        %v3031 = vld [vmem:[#allocation2 + $0x12] sm:$0xff]
        %v3032 = vld [vmem:[#allocation2 + $0x1a] sm:$0xff]
        %v3033 = vld [vmem:[#allocation2 + $0x22] sm:$0xff]
        %v3034 = vld [vmem:[#allocation2 + $0x2a] sm:$0xff]
        %v3035 = vld [vmem:[#allocation2 + $0x32] sm:$0xff]
        %v3036 = vld [vmem:[#allocation2 + $0x3a] sm:$0xff]
        %v3037 = vld [vmem:[#allocation2 + $0x42] sm:$0xff]
        %v3038 = vld [vmem:[#allocation2 + $0x13] sm:$0xff]
        %v3039 = vld [vmem:[#allocation2 + $0x1b] sm:$0xff]
        %v3040 = vld [vmem:[#allocation2 + $0x23] sm:$0xff]
        %v3041 = vld [vmem:[#allocation2 + $0x2b] sm:$0xff]
        %v3042 = vld [vmem:[#allocation2 + $0x33] sm:$0xff]
        %v3043 = vld [vmem:[#allocation2 + $0x3b] sm:$0xff]
        %v3044 = vld [vmem:[#allocation2 + $0x43] sm:$0xff]
        %v3045 = vpack.c.bf16 %v3032, %v3031
        %v3046 = vpack.c.bf16 %v3039, %v3038
        %v3047 = vpack.c.bf16 %v3034, %v3033
        %v3048 = vpack.c.bf16 %v3041, %v3040
        %v3049 = vpack.c.bf16 %v3036, %v3035
        %v3050 = vpack.c.bf16 %v3043, %v3042
        %v3051 = vpack.c.bf16 %v3037, %v3037
        %v3052 = vpack.c.bf16 %v3044, %v3044
        %s3053 = scalar_lea.vmem [#allocation8], 1152
        %v3054 = vld [vmem:[%s3053] sm:$0xf]
        %v3055 = vld [vmem:[%s3053 + $0x4] sm:$0xf]
        %v3056 = vld [vmem:[%s3053 + $0x8] sm:$0xf]
        %v3057 = vld [vmem:[%s3053 + $0xc] sm:$0xf]
        %v3058 = vld [vmem:[%s3053 + $0x10] sm:$0xf]
        %v3059 = vld [vmem:[%s3053 + $0x14] sm:$0xf]
        %v3060 = vld [vmem:[%s3053 + $0x18] sm:$0xf]
        %v3061 = vld [vmem:[%s3053 + $0x1c] sm:$0xf]
        %v3062 = vld [vmem:[%s3053 + $0x20] sm:$0xf]
        %v3063 = vld [vmem:[%s3053 + $0x24] sm:$0xf]
        %v3064 = vld [vmem:[%s3053 + $0x28] sm:$0xf]
        %v3065 = vld [vmem:[%s3053 + $0x2c] sm:$0xf]
        %v3066 = vld [vmem:[%s3053 + $0x30] sm:$0xf]
        %v3067 = vld [vmem:[%s3053 + $0x34] sm:$0xf]
        %v3068 = vld [vmem:[%s3053 + $0x38] sm:$0xf]
        %v3069 = vld [vmem:[%s3053 + $0x3c] sm:$0xf]
        %v3070 = vld [vmem:[%s3053 + $0x40] sm:$0xf]
        %v3071 = vld [vmem:[%s3053 + $0x44] sm:$0xf]
        %v3072 = vld [vmem:[%s3053 + $0x48] sm:$0xf]
        %v3073 = vld [vmem:[%s3053 + $0x4c] sm:$0xf]
        %v3074 = vld [vmem:[%s3053 + $0x50] sm:$0xf]
        %v3075 = vld [vmem:[%s3053 + $0x54] sm:$0xf]
        %v3076 = vld [vmem:[%s3053 + $0x58] sm:$0xf]
        %v3077 = vld [vmem:[%s3053 + $0x5c] sm:$0xf]
        %v3078 = vld [vmem:[%s3053 + $0x60] sm:$0xf]
        %v3079 = vld [vmem:[%s3053 + $0x64] sm:$0xf]
        %v3080 = vld [vmem:[%s3053 + $0x68] sm:$0xf]
        %v3081 = vld [vmem:[%s3053 + $0x6c] sm:$0xf]
        %v3082 = vld [vmem:[%s3053 + $0x70] sm:$0xf]
        %v3083 = vld [vmem:[%s3053 + $0x74] sm:$0xf]
        %v3084 = vld [vmem:[%s3053 + $0x78] sm:$0xf]
        %v3085 = vld [vmem:[%s3053 + $0x7c] sm:$0xf]
        %v3118 = vunpack.c.l.b16 %v3054
        %v3119 = vunpack.c.l.b16 %v3055
        %v3120 = vunpack.c.l.b16 %v3056
        %v3121 = vunpack.c.l.b16 %v3057
        %v3122 = vunpack.c.l.b16 %v3058
        %v3123 = vunpack.c.l.b16 %v3059
        %v3124 = vunpack.c.l.b16 %v3060
        %v3125 = vunpack.c.l.b16 %v3061
        %v3126 = vunpack.c.l.b16 %v3062
        %v3127 = vunpack.c.l.b16 %v3063
        %v3128 = vunpack.c.l.b16 %v3064
        %v3129 = vunpack.c.l.b16 %v3065
        %v3130 = vunpack.c.l.b16 %v3066
        %v3131 = vunpack.c.l.b16 %v3067
        %v3132 = vunpack.c.l.b16 %v3068
        %v3133 = vunpack.c.l.b16 %v3069
        %v3134 = vunpack.c.l.b16 %v3070
        %v3135 = vunpack.c.l.b16 %v3071
        %v3136 = vunpack.c.l.b16 %v3072
        %v3137 = vunpack.c.l.b16 %v3073
        %v3138 = vunpack.c.l.b16 %v3074
        %v3139 = vunpack.c.l.b16 %v3075
        %v3140 = vunpack.c.l.b16 %v3076
        %v3141 = vunpack.c.l.b16 %v3077
        %v3142 = vunpack.c.l.b16 %v3078
        %v3143 = vunpack.c.l.b16 %v3079
        %v3144 = vunpack.c.l.b16 %v3080
        %v3145 = vunpack.c.l.b16 %v3081
        %v3146 = vunpack.c.l.b16 %v3082
        %v3147 = vunpack.c.l.b16 %v3083
        %v3148 = vunpack.c.l.b16 %v3084
        %v3149 = vunpack.c.l.b16 %v3085
        %v3150 = vpack.c.b16 %v3119, %v3118
        %v3151 = vpack.c.b16 %v3121, %v3120
        %v3152 = vpack.c.b16 %v3123, %v3122
        %v3153 = vpack.c.b16 %v3125, %v3124
        %v3154 = vpack.c.b16 %v3127, %v3126
        %v3155 = vpack.c.b16 %v3129, %v3128
        %v3156 = vpack.c.b16 %v3131, %v3130
        %v3157 = vpack.c.b16 %v3133, %v3132
        %v3158 = vpack.c.b16 %v3135, %v3134
        %v3159 = vpack.c.b16 %v3137, %v3136
        %v3160 = vpack.c.b16 %v3139, %v3138
        %v3161 = vpack.c.b16 %v3141, %v3140
        %v3162 = vpack.c.b16 %v3143, %v3142
        %v3163 = vpack.c.b16 %v3145, %v3144
        %v3164 = vpack.c.b16 %v3147, %v3146
        %v3165 = vpack.c.b16 %v3149, %v3148
        %3182 = vmatprep.subr.bf16.mxu0 0
        %3183 = vmatpush1.bf16.msra.mxu0 %v3150
        %3184 = vmatprep.subr.bf16.mxu0 0
        %3185 = vmatpush1.bf16.msra.mxu0 %v3151
        %3186 = vmatprep.subr.bf16.mxu0 0
        %3187 = vmatpush1.bf16.msra.mxu0 %v3152
        %3188 = vmatprep.subr.bf16.mxu0 0
        %3189 = vmatpush1.bf16.msra.mxu0 %v3153
        %3190 = vmatprep.subr.bf16.mxu0 0
        %3191 = vmatpush1.bf16.msra.mxu0 %v3154
        %3192 = vmatprep.subr.bf16.mxu0 0
        %3193 = vmatpush1.bf16.msra.mxu0 %v3155
        %3194 = vmatprep.subr.bf16.mxu0 0
        %3195 = vmatpush1.bf16.msra.mxu0 %v3156
        %3196 = vmatprep.subr.bf16.mxu0 0
        %3197 = vmatpush1.bf16.msra.mxu0 %v3157
        %3198 = vmatprep.subr.bf16.mxu0 0
        %3199 = vmatpush1.bf16.msra.mxu0 %v3158
        %3200 = vmatprep.subr.bf16.mxu0 0
        %3201 = vmatpush1.bf16.msra.mxu0 %v3159
        %3202 = vmatprep.subr.bf16.mxu0 0
        %3203 = vmatpush1.bf16.msra.mxu0 %v3160
        %3204 = vmatprep.subr.bf16.mxu0 0
        %3205 = vmatpush1.bf16.msra.mxu0 %v3161
        %3206 = vmatprep.subr.bf16.mxu0 0
        %3207 = vmatpush1.bf16.msra.mxu0 %v3162
        %3208 = vmatprep.subr.bf16.mxu0 0
        %3209 = vmatpush1.bf16.msra.mxu0 %v3163
        %3210 = vmatprep.subr.bf16.mxu0 0
        %3211 = vmatpush1.bf16.msra.mxu0 %v3164
        %3212 = vmatprep.subr.bf16.mxu0 0
        %3213 = vmatpush1.bf16.msra.mxu0 %v3165
        %3214 = vmatprep.mubr.bf16.mxu0 %v3046
        %3215 = vmatmul.mubr.bf16.gmra.mrb[0].mxu0 %v3045
        %v3216 = vpop.f32.mrb[0].mxu0
        %v3217 = vadd.f32 0.0, %v3216
        %v3218 = vpop.f32.mrb[0].mxu0
        %v3219 = vpop.f32.mrb[0].mxu0
        %v3220 = vadd.f32 0.0, %v3219
        %v3221 = vpop.f32.mrb[0].mxu0
        %3222 = vmatprep.mubr.bf16.mxu0 %v3048
        %3223 = vmatmul.mubr.bf16.gmra.mrb[0].mxu0 %v3047
        %v3224 = vpop.f32.mrb[0].mxu0
        %v3225 = vadd.f32 0.0, %v3224
        %v3226 = vpop.f32.mrb[0].mxu0
        %v3227 = vpop.f32.mrb[0].mxu0
        %v3228 = vadd.f32 0.0, %v3227
        %v3229 = vpop.f32.mrb[0].mxu0
        %3230 = vmatprep.mubr.bf16.mxu0 %v3050
        %3231 = vmatmul.mubr.bf16.gmra.mrb[0].mxu0 %v3049
        %v3232 = vpop.f32.mrb[0].mxu0
        %v3233 = vadd.f32 0.0, %v3232
        %v3234 = vpop.f32.mrb[0].mxu0
        %v3235 = vpop.f32.mrb[0].mxu0
        %v3236 = vadd.f32 0.0, %v3235
        %v3237 = vpop.f32.mrb[0].mxu0
        %3238 = vmatprep.mubr.bf16.mxu0 %v3052
        %3239 = vmatmul.mubr.bf16.gmra.mrb[0].mxu0 %v3051
        %v3240 = vpop.f32.mrb[0].mxu0
        %v3241 = vadd.f32 0.0, %v3240
        %v3242 = vpop.f32.mrb[0].mxu0
        %v3243 = vpop.f32.mrb[0].mxu0
        %v3244 = vpop.f32.mrb[0].mxu0
        %3245 = vdwg.mxu0
        %v3246 = vadd.f32 %v3024, %v3217
        %v3247 = vadd.f32 %v3025, %v3220
        %v3248 = vadd.f32 %v3026, %v3225
        %v3249 = vadd.f32 %v3027, %v3228
        %v3250 = vadd.f32 %v3028, %v3233
        %v3251 = vadd.f32 %v3029, %v3236
        %v3252 = vadd.f32 %v3030, %v3241
        %v3253 = vld [vmem:[#allocation2 + $0x14] sm:$0xff]
        %v3254 = vld [vmem:[#allocation2 + $0x1c] sm:$0xff]
        %v3255 = vld [vmem:[#allocation2 + $0x24] sm:$0xff]
        %v3256 = vld [vmem:[#allocation2 + $0x2c] sm:$0xff]
        %v3257 = vld [vmem:[#allocation2 + $0x34] sm:$0xff]
        %v3258 = vld [vmem:[#allocation2 + $0x3c] sm:$0xff]
        %v3259 = vld [vmem:[#allocation2 + $0x44] sm:$0xff]
        %v3260 = vld [vmem:[#allocation2 + $0x15] sm:$0xff]
        %v3261 = vld [vmem:[#allocation2 + $0x1d] sm:$0xff]
        %v3262 = vld [vmem:[#allocation2 + $0x25] sm:$0xff]
        %v3263 = vld [vmem:[#allocation2 + $0x2d] sm:$0xff]
        %v3264 = vld [vmem:[#allocation2 + $0x35] sm:$0xff]
        %v3265 = vld [vmem:[#allocation2 + $0x3d] sm:$0xff]
        %v3266 = vld [vmem:[#allocation2 + $0x45] sm:$0xff]
        %v3267 = vpack.c.bf16 %v3254, %v3253
        %v3268 = vpack.c.bf16 %v3261, %v3260
        %v3269 = vpack.c.bf16 %v3256, %v3255
        %v3270 = vpack.c.bf16 %v3263, %v3262
        %v3271 = vpack.c.bf16 %v3258, %v3257
        %v3272 = vpack.c.bf16 %v3265, %v3264
        %v3273 = vpack.c.bf16 %v3259, %v3259
        %v3274 = vpack.c.bf16 %v3266, %v3266
        %s3275 = scalar_lea.vmem [#allocation8], 1280
        %v3276 = vld [vmem:[%s3275] sm:$0xf]
        %v3277 = vld [vmem:[%s3275 + $0x4] sm:$0xf]
        %v3278 = vld [vmem:[%s3275 + $0x8] sm:$0xf]
        %v3279 = vld [vmem:[%s3275 + $0xc] sm:$0xf]
        %v3280 = vld [vmem:[%s3275 + $0x10] sm:$0xf]
        %v3281 = vld [vmem:[%s3275 + $0x14] sm:$0xf]
        %v3282 = vld [vmem:[%s3275 + $0x18] sm:$0xf]
        %v3283 = vld [vmem:[%s3275 + $0x1c] sm:$0xf]
        %v3284 = vld [vmem:[%s3275 + $0x20] sm:$0xf]
        %v3285 = vld [vmem:[%s3275 + $0x24] sm:$0xf]
        %v3286 = vld [vmem:[%s3275 + $0x28] sm:$0xf]
        %v3287 = vld [vmem:[%s3275 + $0x2c] sm:$0xf]
        %v3288 = vld [vmem:[%s3275 + $0x30] sm:$0xf]
        %v3289 = vld [vmem:[%s3275 + $0x34] sm:$0xf]
        %v3290 = vld [vmem:[%s3275 + $0x38] sm:$0xf]
        %v3291 = vld [vmem:[%s3275 + $0x3c] sm:$0xf]
        %v3292 = vld [vmem:[%s3275 + $0x40] sm:$0xf]
        %v3293 = vld [vmem:[%s3275 + $0x44] sm:$0xf]
        %v3294 = vld [vmem:[%s3275 + $0x48] sm:$0xf]
        %v3295 = vld [vmem:[%s3275 + $0x4c] sm:$0xf]
        %v3296 = vld [vmem:[%s3275 + $0x50] sm:$0xf]
        %v3297 = vld [vmem:[%s3275 + $0x54] sm:$0xf]
        %v3298 = vld [vmem:[%s3275 + $0x58] sm:$0xf]
        %v3299 = vld [vmem:[%s3275 + $0x5c] sm:$0xf]
        %v3300 = vld [vmem:[%s3275 + $0x60] sm:$0xf]
        %v3301 = vld [vmem:[%s3275 + $0x64] sm:$0xf]
        %v3302 = vld [vmem:[%s3275 + $0x68] sm:$0xf]
        %v3303 = vld [vmem:[%s3275 + $0x6c] sm:$0xf]
        %v3304 = vld [vmem:[%s3275 + $0x70] sm:$0xf]
        %v3305 = vld [vmem:[%s3275 + $0x74] sm:$0xf]
        %v3306 = vld [vmem:[%s3275 + $0x78] sm:$0xf]
        %v3307 = vld [vmem:[%s3275 + $0x7c] sm:$0xf]
        %v3340 = vunpack.c.l.b16 %v3276
        %v3341 = vunpack.c.l.b16 %v3277
        %v3342 = vunpack.c.l.b16 %v3278
        %v3343 = vunpack.c.l.b16 %v3279
        %v3344 = vunpack.c.l.b16 %v3280
        %v3345 = vunpack.c.l.b16 %v3281
        %v3346 = vunpack.c.l.b16 %v3282
        %v3347 = vunpack.c.l.b16 %v3283
        %v3348 = vunpack.c.l.b16 %v3284
        %v3349 = vunpack.c.l.b16 %v3285
        %v3350 = vunpack.c.l.b16 %v3286
        %v3351 = vunpack.c.l.b16 %v3287
        %v3352 = vunpack.c.l.b16 %v3288
        %v3353 = vunpack.c.l.b16 %v3289
        %v3354 = vunpack.c.l.b16 %v3290
        %v3355 = vunpack.c.l.b16 %v3291
        %v3356 = vunpack.c.l.b16 %v3292
        %v3357 = vunpack.c.l.b16 %v3293
        %v3358 = vunpack.c.l.b16 %v3294
        %v3359 = vunpack.c.l.b16 %v3295
        %v3360 = vunpack.c.l.b16 %v3296
        %v3361 = vunpack.c.l.b16 %v3297
        %v3362 = vunpack.c.l.b16 %v3298
        %v3363 = vunpack.c.l.b16 %v3299
        %v3364 = vunpack.c.l.b16 %v3300
        %v3365 = vunpack.c.l.b16 %v3301
        %v3366 = vunpack.c.l.b16 %v3302
        %v3367 = vunpack.c.l.b16 %v3303
        %v3368 = vunpack.c.l.b16 %v3304
        %v3369 = vunpack.c.l.b16 %v3305
        %v3370 = vunpack.c.l.b16 %v3306
        %v3371 = vunpack.c.l.b16 %v3307
        %v3372 = vpack.c.b16 %v3341, %v3340
        %v3373 = vpack.c.b16 %v3343, %v3342
        %v3374 = vpack.c.b16 %v3345, %v3344
        %v3375 = vpack.c.b16 %v3347, %v3346
        %v3376 = vpack.c.b16 %v3349, %v3348
        %v3377 = vpack.c.b16 %v3351, %v3350
        %v3378 = vpack.c.b16 %v3353, %v3352
        %v3379 = vpack.c.b16 %v3355, %v3354
        %v3380 = vpack.c.b16 %v3357, %v3356
        %v3381 = vpack.c.b16 %v3359, %v3358
        %v3382 = vpack.c.b16 %v3361, %v3360
        %v3383 = vpack.c.b16 %v3363, %v3362
        %v3384 = vpack.c.b16 %v3365, %v3364
        %v3385 = vpack.c.b16 %v3367, %v3366
        %v3386 = vpack.c.b16 %v3369, %v3368
        %v3387 = vpack.c.b16 %v3371, %v3370
        %3404 = vmatprep.subr.bf16.mxu0 0
        %3405 = vmatpush1.bf16.msra.mxu0 %v3372
        %3406 = vmatprep.subr.bf16.mxu0 0
        %3407 = vmatpush1.bf16.msra.mxu0 %v3373
        %3408 = vmatprep.subr.bf16.mxu0 0
        %3409 = vmatpush1.bf16.msra.mxu0 %v3374
        %3410 = vmatprep.subr.bf16.mxu0 0
        %3411 = vmatpush1.bf16.msra.mxu0 %v3375
        %3412 = vmatprep.subr.bf16.mxu0 0
        %3413 = vmatpush1.bf16.msra.mxu0 %v3376
        %3414 = vmatprep.subr.bf16.mxu0 0
        %3415 = vmatpush1.bf16.msra.mxu0 %v3377
        %3416 = vmatprep.subr.bf16.mxu0 0
        %3417 = vmatpush1.bf16.msra.mxu0 %v3378
        %3418 = vmatprep.subr.bf16.mxu0 0
        %3419 = vmatpush1.bf16.msra.mxu0 %v3379
        %3420 = vmatprep.subr.bf16.mxu0 0
        %3421 = vmatpush1.bf16.msra.mxu0 %v3380
        %3422 = vmatprep.subr.bf16.mxu0 0
        %3423 = vmatpush1.bf16.msra.mxu0 %v3381
        %3424 = vmatprep.subr.bf16.mxu0 0
        %3425 = vmatpush1.bf16.msra.mxu0 %v3382
        %3426 = vmatprep.subr.bf16.mxu0 0
        %3427 = vmatpush1.bf16.msra.mxu0 %v3383
        %3428 = vmatprep.subr.bf16.mxu0 0
        %3429 = vmatpush1.bf16.msra.mxu0 %v3384
        %3430 = vmatprep.subr.bf16.mxu0 0
        %3431 = vmatpush1.bf16.msra.mxu0 %v3385
        %3432 = vmatprep.subr.bf16.mxu0 0
        %3433 = vmatpush1.bf16.msra.mxu0 %v3386
        %3434 = vmatprep.subr.bf16.mxu0 0
        %3435 = vmatpush1.bf16.msra.mxu0 %v3387
        %3436 = vmatprep.mubr.bf16.mxu0 %v3268
        %3437 = vmatmul.mubr.bf16.gmra.mrb[0].mxu0 %v3267
        %v3438 = vpop.f32.mrb[0].mxu0
        %v3439 = vadd.f32 0.0, %v3438
        %v3440 = vpop.f32.mrb[0].mxu0
        %v3441 = vpop.f32.mrb[0].mxu0
        %v3442 = vadd.f32 0.0, %v3441
        %v3443 = vpop.f32.mrb[0].mxu0
        %3444 = vmatprep.mubr.bf16.mxu0 %v3270
        %3445 = vmatmul.mubr.bf16.gmra.mrb[0].mxu0 %v3269
        %v3446 = vpop.f32.mrb[0].mxu0
        %v3447 = vadd.f32 0.0, %v3446
        %v3448 = vpop.f32.mrb[0].mxu0
        %v3449 = vpop.f32.mrb[0].mxu0
        %v3450 = vadd.f32 0.0, %v3449
        %v3451 = vpop.f32.mrb[0].mxu0
        %3452 = vmatprep.mubr.bf16.mxu0 %v3272
        %3453 = vmatmul.mubr.bf16.gmra.mrb[0].mxu0 %v3271
        %v3454 = vpop.f32.mrb[0].mxu0
        %v3455 = vadd.f32 0.0, %v3454
        %v3456 = vpop.f32.mrb[0].mxu0
        %v3457 = vpop.f32.mrb[0].mxu0
        %v3458 = vadd.f32 0.0, %v3457
        %v3459 = vpop.f32.mrb[0].mxu0
        %3460 = vmatprep.mubr.bf16.mxu0 %v3274
        %3461 = vmatmul.mubr.bf16.gmra.mrb[0].mxu0 %v3273
        %v3462 = vpop.f32.mrb[0].mxu0
        %v3463 = vadd.f32 0.0, %v3462
        %v3464 = vpop.f32.mrb[0].mxu0
        %v3465 = vpop.f32.mrb[0].mxu0
        %v3466 = vpop.f32.mrb[0].mxu0
        %3467 = vdwg.mxu0
        %v3468 = vadd.f32 %v3246, %v3439
        %v3469 = vadd.f32 %v3247, %v3442
        %v3470 = vadd.f32 %v3248, %v3447
        %v3471 = vadd.f32 %v3249, %v3450
        %v3472 = vadd.f32 %v3250, %v3455
        %v3473 = vadd.f32 %v3251, %v3458
        %v3474 = vadd.f32 %v3252, %v3463
        %v3475 = vld [vmem:[#allocation2 + $0x16] sm:$0xff]
        %v3476 = vld [vmem:[#allocation2 + $0x1e] sm:$0xff]
        %v3477 = vld [vmem:[#allocation2 + $0x26] sm:$0xff]
        %v3478 = vld [vmem:[#allocation2 + $0x2e] sm:$0xff]
        %v3479 = vld [vmem:[#allocation2 + $0x36] sm:$0xff]
        %v3480 = vld [vmem:[#allocation2 + $0x3e] sm:$0xff]
        %v3481 = vld [vmem:[#allocation2 + $0x46] sm:$0xff]
        %v3482 = vld [vmem:[#allocation2 + $0x17] sm:$0xff]
        %v3483 = vld [vmem:[#allocation2 + $0x1f] sm:$0xff]
        %v3484 = vld [vmem:[#allocation2 + $0x27] sm:$0xff]
        %v3485 = vld [vmem:[#allocation2 + $0x2f] sm:$0xff]
        %v3486 = vld [vmem:[#allocation2 + $0x37] sm:$0xff]
        %v3487 = vld [vmem:[#allocation2 + $0x3f] sm:$0xff]
        %v3488 = vld [vmem:[#allocation2 + $0x47] sm:$0xff]
        %v3489 = vpack.c.bf16 %v3476, %v3475
        %v3490 = vpack.c.bf16 %v3483, %v3482
        %v3491 = vpack.c.bf16 %v3478, %v3477
        %v3492 = vpack.c.bf16 %v3485, %v3484
        %v3493 = vpack.c.bf16 %v3480, %v3479
        %v3494 = vpack.c.bf16 %v3487, %v3486
        %v3495 = vpack.c.bf16 %v3481, %v3481
        %v3496 = vpack.c.bf16 %v3488, %v3488
        %s3497 = scalar_lea.vmem [#allocation8], 1408
        %v3498 = vld [vmem:[%s3497] sm:$0xf]
        %v3499 = vld [vmem:[%s3497 + $0x4] sm:$0xf]
        %v3500 = vld [vmem:[%s3497 + $0x8] sm:$0xf]
        %v3501 = vld [vmem:[%s3497 + $0xc] sm:$0xf]
        %v3502 = vld [vmem:[%s3497 + $0x10] sm:$0xf]
        %v3503 = vld [vmem:[%s3497 + $0x14] sm:$0xf]
        %v3504 = vld [vmem:[%s3497 + $0x18] sm:$0xf]
        %v3505 = vld [vmem:[%s3497 + $0x1c] sm:$0xf]
        %v3506 = vld [vmem:[%s3497 + $0x20] sm:$0xf]
        %v3507 = vld [vmem:[%s3497 + $0x24] sm:$0xf]
        %v3508 = vld [vmem:[%s3497 + $0x28] sm:$0xf]
        %v3509 = vld [vmem:[%s3497 + $0x2c] sm:$0xf]
        %v3510 = vld [vmem:[%s3497 + $0x30] sm:$0xf]
        %v3511 = vld [vmem:[%s3497 + $0x34] sm:$0xf]
        %v3512 = vld [vmem:[%s3497 + $0x38] sm:$0xf]
        %v3513 = vld [vmem:[%s3497 + $0x3c] sm:$0xf]
        %v3514 = vld [vmem:[%s3497 + $0x40] sm:$0xf]
        %v3515 = vld [vmem:[%s3497 + $0x44] sm:$0xf]
        %v3516 = vld [vmem:[%s3497 + $0x48] sm:$0xf]
        %v3517 = vld [vmem:[%s3497 + $0x4c] sm:$0xf]
        %v3518 = vld [vmem:[%s3497 + $0x50] sm:$0xf]
        %v3519 = vld [vmem:[%s3497 + $0x54] sm:$0xf]
        %v3520 = vld [vmem:[%s3497 + $0x58] sm:$0xf]
        %v3521 = vld [vmem:[%s3497 + $0x5c] sm:$0xf]
        %v3522 = vld [vmem:[%s3497 + $0x60] sm:$0xf]
        %v3523 = vld [vmem:[%s3497 + $0x64] sm:$0xf]
        %v3524 = vld [vmem:[%s3497 + $0x68] sm:$0xf]
        %v3525 = vld [vmem:[%s3497 + $0x6c] sm:$0xf]
        %v3526 = vld [vmem:[%s3497 + $0x70] sm:$0xf]
        %v3527 = vld [vmem:[%s3497 + $0x74] sm:$0xf]
        %v3528 = vld [vmem:[%s3497 + $0x78] sm:$0xf]
        %v3529 = vld [vmem:[%s3497 + $0x7c] sm:$0xf]
        %v3562 = vunpack.c.l.b16 %v3498
        %v3563 = vunpack.c.l.b16 %v3499
        %v3564 = vunpack.c.l.b16 %v3500
        %v3565 = vunpack.c.l.b16 %v3501
        %v3566 = vunpack.c.l.b16 %v3502
        %v3567 = vunpack.c.l.b16 %v3503
        %v3568 = vunpack.c.l.b16 %v3504
        %v3569 = vunpack.c.l.b16 %v3505
        %v3570 = vunpack.c.l.b16 %v3506
        %v3571 = vunpack.c.l.b16 %v3507
        %v3572 = vunpack.c.l.b16 %v3508
        %v3573 = vunpack.c.l.b16 %v3509
        %v3574 = vunpack.c.l.b16 %v3510
        %v3575 = vunpack.c.l.b16 %v3511
        %v3576 = vunpack.c.l.b16 %v3512
        %v3577 = vunpack.c.l.b16 %v3513
        %v3578 = vunpack.c.l.b16 %v3514
        %v3579 = vunpack.c.l.b16 %v3515
        %v3580 = vunpack.c.l.b16 %v3516
        %v3581 = vunpack.c.l.b16 %v3517
        %v3582 = vunpack.c.l.b16 %v3518
        %v3583 = vunpack.c.l.b16 %v3519
        %v3584 = vunpack.c.l.b16 %v3520
        %v3585 = vunpack.c.l.b16 %v3521
        %v3586 = vunpack.c.l.b16 %v3522
        %v3587 = vunpack.c.l.b16 %v3523
        %v3588 = vunpack.c.l.b16 %v3524
        %v3589 = vunpack.c.l.b16 %v3525
        %v3590 = vunpack.c.l.b16 %v3526
        %v3591 = vunpack.c.l.b16 %v3527
        %v3592 = vunpack.c.l.b16 %v3528
        %v3593 = vunpack.c.l.b16 %v3529
        %v3594 = vpack.c.b16 %v3563, %v3562
        %v3595 = vpack.c.b16 %v3565, %v3564
        %v3596 = vpack.c.b16 %v3567, %v3566
        %v3597 = vpack.c.b16 %v3569, %v3568
        %v3598 = vpack.c.b16 %v3571, %v3570
        %v3599 = vpack.c.b16 %v3573, %v3572
        %v3600 = vpack.c.b16 %v3575, %v3574
        %v3601 = vpack.c.b16 %v3577, %v3576
        %v3602 = vpack.c.b16 %v3579, %v3578
        %v3603 = vpack.c.b16 %v3581, %v3580
        %v3604 = vpack.c.b16 %v3583, %v3582
        %v3605 = vpack.c.b16 %v3585, %v3584
        %v3606 = vpack.c.b16 %v3587, %v3586
        %v3607 = vpack.c.b16 %v3589, %v3588
        %v3608 = vpack.c.b16 %v3591, %v3590
        %v3609 = vpack.c.b16 %v3593, %v3592
        %3626 = vmatprep.subr.bf16.mxu0 0
        %3627 = vmatpush1.bf16.msra.mxu0 %v3594
        %3628 = vmatprep.subr.bf16.mxu0 0
        %3629 = vmatpush1.bf16.msra.mxu0 %v3595
        %3630 = vmatprep.subr.bf16.mxu0 0
        %3631 = vmatpush1.bf16.msra.mxu0 %v3596
        %3632 = vmatprep.subr.bf16.mxu0 0
        %3633 = vmatpush1.bf16.msra.mxu0 %v3597
        %3634 = vmatprep.subr.bf16.mxu0 0
        %3635 = vmatpush1.bf16.msra.mxu0 %v3598
        %3636 = vmatprep.subr.bf16.mxu0 0
        %3637 = vmatpush1.bf16.msra.mxu0 %v3599
        %3638 = vmatprep.subr.bf16.mxu0 0
        %3639 = vmatpush1.bf16.msra.mxu0 %v3600
        %3640 = vmatprep.subr.bf16.mxu0 0
        %3641 = vmatpush1.bf16.msra.mxu0 %v3601
        %3642 = vmatprep.subr.bf16.mxu0 0
        %3643 = vmatpush1.bf16.msra.mxu0 %v3602
        %3644 = vmatprep.subr.bf16.mxu0 0
        %3645 = vmatpush1.bf16.msra.mxu0 %v3603
        %3646 = vmatprep.subr.bf16.mxu0 0
        %3647 = vmatpush1.bf16.msra.mxu0 %v3604
        %3648 = vmatprep.subr.bf16.mxu0 0
        %3649 = vmatpush1.bf16.msra.mxu0 %v3605
        %3650 = vmatprep.subr.bf16.mxu0 0
        %3651 = vmatpush1.bf16.msra.mxu0 %v3606
        %3652 = vmatprep.subr.bf16.mxu0 0
        %3653 = vmatpush1.bf16.msra.mxu0 %v3607
        %3654 = vmatprep.subr.bf16.mxu0 0
        %3655 = vmatpush1.bf16.msra.mxu0 %v3608
        %3656 = vmatprep.subr.bf16.mxu0 0
        %3657 = vmatpush1.bf16.msra.mxu0 %v3609
        %3658 = vmatprep.mubr.bf16.mxu0 %v3490
        %3659 = vmatmul.mubr.bf16.gmra.mrb[0].mxu0 %v3489
        %v3660 = vpop.f32.mrb[0].mxu0
        %v3661 = vadd.f32 0.0, %v3660
        %v3662 = vpop.f32.mrb[0].mxu0
        %v3663 = vpop.f32.mrb[0].mxu0
        %v3664 = vadd.f32 0.0, %v3663
        %v3665 = vpop.f32.mrb[0].mxu0
        %3666 = vmatprep.mubr.bf16.mxu0 %v3492
        %3667 = vmatmul.mubr.bf16.gmra.mrb[0].mxu0 %v3491
        %v3668 = vpop.f32.mrb[0].mxu0
        %v3669 = vadd.f32 0.0, %v3668
        %v3670 = vpop.f32.mrb[0].mxu0
        %v3671 = vpop.f32.mrb[0].mxu0
        %v3672 = vadd.f32 0.0, %v3671
        %v3673 = vpop.f32.mrb[0].mxu0
        %3674 = vmatprep.mubr.bf16.mxu0 %v3494
        %3675 = vmatmul.mubr.bf16.gmra.mrb[0].mxu0 %v3493
        %v3676 = vpop.f32.mrb[0].mxu0
        %v3677 = vadd.f32 0.0, %v3676
        %v3678 = vpop.f32.mrb[0].mxu0
        %v3679 = vpop.f32.mrb[0].mxu0
        %v3680 = vadd.f32 0.0, %v3679
        %v3681 = vpop.f32.mrb[0].mxu0
        %3682 = vmatprep.mubr.bf16.mxu0 %v3496
        %3683 = vmatmul.mubr.bf16.gmra.mrb[0].mxu0 %v3495
        %v3684 = vpop.f32.mrb[0].mxu0
        %v3685 = vadd.f32 0.0, %v3684
        %v3686 = vpop.f32.mrb[0].mxu0
        %v3687 = vpop.f32.mrb[0].mxu0
        %v3688 = vpop.f32.mrb[0].mxu0
        %3689 = vdwg.mxu0
        %v3690 = vadd.f32 %v3468, %v3661
        %v3691 = vadd.f32 %v3469, %v3664
        %v3692 = vadd.f32 %v3470, %v3669
        %v3693 = vadd.f32 %v3471, %v3672
        %v3694 = vadd.f32 %v3472, %v3677
        %v3695 = vadd.f32 %v3473, %v3680
        %v3696 = vadd.f32 %v3474, %v3685
        %v3697 = vld [vmem:[#allocation2 + $0x18] sm:$0xff]
        %v3698 = vld [vmem:[#allocation2 + $0x20] sm:$0xff]
        %v3699 = vld [vmem:[#allocation2 + $0x28] sm:$0xff]
        %v3700 = vld [vmem:[#allocation2 + $0x30] sm:$0xff]
        %v3701 = vld [vmem:[#allocation2 + $0x38] sm:$0xff]
        %v3702 = vld [vmem:[#allocation2 + $0x40] sm:$0xff]
        %v3703 = vld [vmem:[#allocation2 + $0x48] sm:$0xff]
        %v3704 = vld [vmem:[#allocation2 + $0x19] sm:$0xff]
        %v3705 = vld [vmem:[#allocation2 + $0x21] sm:$0xff]
        %v3706 = vld [vmem:[#allocation2 + $0x29] sm:$0xff]
        %v3707 = vld [vmem:[#allocation2 + $0x31] sm:$0xff]
        %v3708 = vld [vmem:[#allocation2 + $0x39] sm:$0xff]
        %v3709 = vld [vmem:[#allocation2 + $0x41] sm:$0xff]
        %v3710 = vld [vmem:[#allocation2 + $0x49] sm:$0xff]
        %v3711 = vpack.c.bf16 %v3698, %v3697
        %v3712 = vpack.c.bf16 %v3705, %v3704
        %v3713 = vpack.c.bf16 %v3700, %v3699
        %v3714 = vpack.c.bf16 %v3707, %v3706
        %v3715 = vpack.c.bf16 %v3702, %v3701
        %v3716 = vpack.c.bf16 %v3709, %v3708
        %v3717 = vpack.c.bf16 %v3703, %v3703
        %v3718 = vpack.c.bf16 %v3710, %v3710
        %s3719 = scalar_lea.vmem [#allocation8], 1536
        %v3720 = vld [vmem:[%s3719] sm:$0xf]
        %v3721 = vld [vmem:[%s3719 + $0x4] sm:$0xf]
        %v3722 = vld [vmem:[%s3719 + $0x8] sm:$0xf]
        %v3723 = vld [vmem:[%s3719 + $0xc] sm:$0xf]
        %v3724 = vld [vmem:[%s3719 + $0x10] sm:$0xf]
        %v3725 = vld [vmem:[%s3719 + $0x14] sm:$0xf]
        %v3726 = vld [vmem:[%s3719 + $0x18] sm:$0xf]
        %v3727 = vld [vmem:[%s3719 + $0x1c] sm:$0xf]
        %v3728 = vld [vmem:[%s3719 + $0x20] sm:$0xf]
        %v3729 = vld [vmem:[%s3719 + $0x24] sm:$0xf]
        %v3730 = vld [vmem:[%s3719 + $0x28] sm:$0xf]
        %v3731 = vld [vmem:[%s3719 + $0x2c] sm:$0xf]
        %v3732 = vld [vmem:[%s3719 + $0x30] sm:$0xf]
        %v3733 = vld [vmem:[%s3719 + $0x34] sm:$0xf]
        %v3734 = vld [vmem:[%s3719 + $0x38] sm:$0xf]
        %v3735 = vld [vmem:[%s3719 + $0x3c] sm:$0xf]
        %v3736 = vld [vmem:[%s3719 + $0x40] sm:$0xf]
        %v3737 = vld [vmem:[%s3719 + $0x44] sm:$0xf]
        %v3738 = vld [vmem:[%s3719 + $0x48] sm:$0xf]
        %v3739 = vld [vmem:[%s3719 + $0x4c] sm:$0xf]
        %v3740 = vld [vmem:[%s3719 + $0x50] sm:$0xf]
        %v3741 = vld [vmem:[%s3719 + $0x54] sm:$0xf]
        %v3742 = vld [vmem:[%s3719 + $0x58] sm:$0xf]
        %v3743 = vld [vmem:[%s3719 + $0x5c] sm:$0xf]
        %v3744 = vld [vmem:[%s3719 + $0x60] sm:$0xf]
        %v3745 = vld [vmem:[%s3719 + $0x64] sm:$0xf]
        %v3746 = vld [vmem:[%s3719 + $0x68] sm:$0xf]
        %v3747 = vld [vmem:[%s3719 + $0x6c] sm:$0xf]
        %v3748 = vld [vmem:[%s3719 + $0x70] sm:$0xf]
        %v3749 = vld [vmem:[%s3719 + $0x74] sm:$0xf]
        %v3750 = vld [vmem:[%s3719 + $0x78] sm:$0xf]
        %v3751 = vld [vmem:[%s3719 + $0x7c] sm:$0xf]
        %v3784 = vunpack.c.l.b16 %v3720
        %v3785 = vunpack.c.l.b16 %v3721
        %v3786 = vunpack.c.l.b16 %v3722
        %v3787 = vunpack.c.l.b16 %v3723
        %v3788 = vunpack.c.l.b16 %v3724
        %v3789 = vunpack.c.l.b16 %v3725
        %v3790 = vunpack.c.l.b16 %v3726
        %v3791 = vunpack.c.l.b16 %v3727
        %v3792 = vunpack.c.l.b16 %v3728
        %v3793 = vunpack.c.l.b16 %v3729
        %v3794 = vunpack.c.l.b16 %v3730
        %v3795 = vunpack.c.l.b16 %v3731
        %v3796 = vunpack.c.l.b16 %v3732
        %v3797 = vunpack.c.l.b16 %v3733
        %v3798 = vunpack.c.l.b16 %v3734
        %v3799 = vunpack.c.l.b16 %v3735
        %v3800 = vunpack.c.l.b16 %v3736
        %v3801 = vunpack.c.l.b16 %v3737
        %v3802 = vunpack.c.l.b16 %v3738
        %v3803 = vunpack.c.l.b16 %v3739
        %v3804 = vunpack.c.l.b16 %v3740
        %v3805 = vunpack.c.l.b16 %v3741
        %v3806 = vunpack.c.l.b16 %v3742
        %v3807 = vunpack.c.l.b16 %v3743
        %v3808 = vunpack.c.l.b16 %v3744
        %v3809 = vunpack.c.l.b16 %v3745
        %v3810 = vunpack.c.l.b16 %v3746
        %v3811 = vunpack.c.l.b16 %v3747
        %v3812 = vunpack.c.l.b16 %v3748
        %v3813 = vunpack.c.l.b16 %v3749
        %v3814 = vunpack.c.l.b16 %v3750
        %v3815 = vunpack.c.l.b16 %v3751
        %v3816 = vpack.c.b16 %v3785, %v3784
        %v3817 = vpack.c.b16 %v3787, %v3786
        %v3818 = vpack.c.b16 %v3789, %v3788
        %v3819 = vpack.c.b16 %v3791, %v3790
        %v3820 = vpack.c.b16 %v3793, %v3792
        %v3821 = vpack.c.b16 %v3795, %v3794
        %v3822 = vpack.c.b16 %v3797, %v3796
        %v3823 = vpack.c.b16 %v3799, %v3798
        %v3824 = vpack.c.b16 %v3801, %v3800
        %v3825 = vpack.c.b16 %v3803, %v3802
        %v3826 = vpack.c.b16 %v3805, %v3804
        %v3827 = vpack.c.b16 %v3807, %v3806
        %v3828 = vpack.c.b16 %v3809, %v3808
        %v3829 = vpack.c.b16 %v3811, %v3810
        %v3830 = vpack.c.b16 %v3813, %v3812
        %v3831 = vpack.c.b16 %v3815, %v3814
        %3848 = vmatprep.subr.bf16.mxu0 0
        %3849 = vmatpush1.bf16.msra.mxu0 %v3816
        %3850 = vmatprep.subr.bf16.mxu0 0
        %3851 = vmatpush1.bf16.msra.mxu0 %v3817
        %3852 = vmatprep.subr.bf16.mxu0 0
        %3853 = vmatpush1.bf16.msra.mxu0 %v3818
        %3854 = vmatprep.subr.bf16.mxu0 0
        %3855 = vmatpush1.bf16.msra.mxu0 %v3819
        %3856 = vmatprep.subr.bf16.mxu0 0
        %3857 = vmatpush1.bf16.msra.mxu0 %v3820
        %3858 = vmatprep.subr.bf16.mxu0 0
        %3859 = vmatpush1.bf16.msra.mxu0 %v3821
        %3860 = vmatprep.subr.bf16.mxu0 0
        %3861 = vmatpush1.bf16.msra.mxu0 %v3822
        %3862 = vmatprep.subr.bf16.mxu0 0
        %3863 = vmatpush1.bf16.msra.mxu0 %v3823
        %3864 = vmatprep.subr.bf16.mxu0 0
        %3865 = vmatpush1.bf16.msra.mxu0 %v3824
        %3866 = vmatprep.subr.bf16.mxu0 0
        %3867 = vmatpush1.bf16.msra.mxu0 %v3825
        %3868 = vmatprep.subr.bf16.mxu0 0
        %3869 = vmatpush1.bf16.msra.mxu0 %v3826
        %3870 = vmatprep.subr.bf16.mxu0 0
        %3871 = vmatpush1.bf16.msra.mxu0 %v3827
        %3872 = vmatprep.subr.bf16.mxu0 0
        %3873 = vmatpush1.bf16.msra.mxu0 %v3828
        %3874 = vmatprep.subr.bf16.mxu0 0
        %3875 = vmatpush1.bf16.msra.mxu0 %v3829
        %3876 = vmatprep.subr.bf16.mxu0 0
        %3877 = vmatpush1.bf16.msra.mxu0 %v3830
        %3878 = vmatprep.subr.bf16.mxu0 0
        %3879 = vmatpush1.bf16.msra.mxu0 %v3831
        %3880 = vmatprep.mubr.bf16.mxu0 %v3712
        %3881 = vmatmul.mubr.bf16.gmra.mrb[0].mxu0 %v3711
        %v3882 = vpop.f32.mrb[0].mxu0
        %v3883 = vadd.f32 0.0, %v3882
        %v3884 = vpop.f32.mrb[0].mxu0
        %v3885 = vpop.f32.mrb[0].mxu0
        %v3886 = vadd.f32 0.0, %v3885
        %v3887 = vpop.f32.mrb[0].mxu0
        %3888 = vmatprep.mubr.bf16.mxu0 %v3714
        %3889 = vmatmul.mubr.bf16.gmra.mrb[0].mxu0 %v3713
        %v3890 = vpop.f32.mrb[0].mxu0
        %v3891 = vadd.f32 0.0, %v3890
        %v3892 = vpop.f32.mrb[0].mxu0
        %v3893 = vpop.f32.mrb[0].mxu0
        %v3894 = vadd.f32 0.0, %v3893
        %v3895 = vpop.f32.mrb[0].mxu0
        %3896 = vmatprep.mubr.bf16.mxu0 %v3716
        %3897 = vmatmul.mubr.bf16.gmra.mrb[0].mxu0 %v3715
        %v3898 = vpop.f32.mrb[0].mxu0
        %v3899 = vadd.f32 0.0, %v3898
        %v3900 = vpop.f32.mrb[0].mxu0
        %v3901 = vpop.f32.mrb[0].mxu0
        %v3902 = vadd.f32 0.0, %v3901
        %v3903 = vpop.f32.mrb[0].mxu0
        %3904 = vmatprep.mubr.bf16.mxu0 %v3718
        %3905 = vmatmul.mubr.bf16.gmra.mrb[0].mxu0 %v3717
        %v3906 = vpop.f32.mrb[0].mxu0
        %v3907 = vadd.f32 0.0, %v3906
        %v3908 = vpop.f32.mrb[0].mxu0
        %v3909 = vpop.f32.mrb[0].mxu0
        %v3910 = vpop.f32.mrb[0].mxu0
        %3911 = vdwg.mxu0
        %v3912 = vadd.f32 %v3690, %v3883
        %v3913 = vadd.f32 %v3691, %v3886
        %v3914 = vadd.f32 %v3692, %v3891
        %v3915 = vadd.f32 %v3693, %v3894
        %v3916 = vadd.f32 %v3694, %v3899
        %v3917 = vadd.f32 %v3695, %v3902
        %v3918 = vadd.f32 %v3696, %v3907
        %v3919 = vld [vmem:[#allocation2 + $0x1a] sm:$0xff]
        %v3920 = vld [vmem:[#allocation2 + $0x22] sm:$0xff]
        %v3921 = vld [vmem:[#allocation2 + $0x2a] sm:$0xff]
        %v3922 = vld [vmem:[#allocation2 + $0x32] sm:$0xff]
        %v3923 = vld [vmem:[#allocation2 + $0x3a] sm:$0xff]
        %v3924 = vld [vmem:[#allocation2 + $0x42] sm:$0xff]
        %v3925 = vld [vmem:[#allocation2 + $0x4a] sm:$0xff]
        %v3926 = vld [vmem:[#allocation2 + $0x1b] sm:$0xff]
        %v3927 = vld [vmem:[#allocation2 + $0x23] sm:$0xff]
        %v3928 = vld [vmem:[#allocation2 + $0x2b] sm:$0xff]
        %v3929 = vld [vmem:[#allocation2 + $0x33] sm:$0xff]
        %v3930 = vld [vmem:[#allocation2 + $0x3b] sm:$0xff]
        %v3931 = vld [vmem:[#allocation2 + $0x43] sm:$0xff]
        %v3932 = vld [vmem:[#allocation2 + $0x4b] sm:$0xff]
        %v3933 = vpack.c.bf16 %v3920, %v3919
        %v3934 = vpack.c.bf16 %v3927, %v3926
        %v3935 = vpack.c.bf16 %v3922, %v3921
        %v3936 = vpack.c.bf16 %v3929, %v3928
        %v3937 = vpack.c.bf16 %v3924, %v3923
        %v3938 = vpack.c.bf16 %v3931, %v3930
        %v3939 = vpack.c.bf16 %v3925, %v3925
        %v3940 = vpack.c.bf16 %v3932, %v3932
        %s3941 = scalar_lea.vmem [#allocation8], 1664
        %v3942 = vld [vmem:[%s3941] sm:$0xf]
        %v3943 = vld [vmem:[%s3941 + $0x4] sm:$0xf]
        %v3944 = vld [vmem:[%s3941 + $0x8] sm:$0xf]
        %v3945 = vld [vmem:[%s3941 + $0xc] sm:$0xf]
        %v3946 = vld [vmem:[%s3941 + $0x10] sm:$0xf]
        %v3947 = vld [vmem:[%s3941 + $0x14] sm:$0xf]
        %v3948 = vld [vmem:[%s3941 + $0x18] sm:$0xf]
        %v3949 = vld [vmem:[%s3941 + $0x1c] sm:$0xf]
        %v3950 = vld [vmem:[%s3941 + $0x20] sm:$0xf]
        %v3951 = vld [vmem:[%s3941 + $0x24] sm:$0xf]
        %v3952 = vld [vmem:[%s3941 + $0x28] sm:$0xf]
        %v3953 = vld [vmem:[%s3941 + $0x2c] sm:$0xf]
        %v3954 = vld [vmem:[%s3941 + $0x30] sm:$0xf]
        %v3955 = vld [vmem:[%s3941 + $0x34] sm:$0xf]
        %v3956 = vld [vmem:[%s3941 + $0x38] sm:$0xf]
        %v3957 = vld [vmem:[%s3941 + $0x3c] sm:$0xf]
        %v3958 = vld [vmem:[%s3941 + $0x40] sm:$0xf]
        %v3959 = vld [vmem:[%s3941 + $0x44] sm:$0xf]
        %v3960 = vld [vmem:[%s3941 + $0x48] sm:$0xf]
        %v3961 = vld [vmem:[%s3941 + $0x4c] sm:$0xf]
        %v3962 = vld [vmem:[%s3941 + $0x50] sm:$0xf]
        %v3963 = vld [vmem:[%s3941 + $0x54] sm:$0xf]
        %v3964 = vld [vmem:[%s3941 + $0x58] sm:$0xf]
        %v3965 = vld [vmem:[%s3941 + $0x5c] sm:$0xf]
        %v3966 = vld [vmem:[%s3941 + $0x60] sm:$0xf]
        %v3967 = vld [vmem:[%s3941 + $0x64] sm:$0xf]
        %v3968 = vld [vmem:[%s3941 + $0x68] sm:$0xf]
        %v3969 = vld [vmem:[%s3941 + $0x6c] sm:$0xf]
        %v3970 = vld [vmem:[%s3941 + $0x70] sm:$0xf]
        %v3971 = vld [vmem:[%s3941 + $0x74] sm:$0xf]
        %v3972 = vld [vmem:[%s3941 + $0x78] sm:$0xf]
        %v3973 = vld [vmem:[%s3941 + $0x7c] sm:$0xf]
        %v4006 = vunpack.c.l.b16 %v3942
        %v4007 = vunpack.c.l.b16 %v3943
        %v4008 = vunpack.c.l.b16 %v3944
        %v4009 = vunpack.c.l.b16 %v3945
        %v4010 = vunpack.c.l.b16 %v3946
        %v4011 = vunpack.c.l.b16 %v3947
        %v4012 = vunpack.c.l.b16 %v3948
        %v4013 = vunpack.c.l.b16 %v3949
        %v4014 = vunpack.c.l.b16 %v3950
        %v4015 = vunpack.c.l.b16 %v3951
        %v4016 = vunpack.c.l.b16 %v3952
        %v4017 = vunpack.c.l.b16 %v3953
        %v4018 = vunpack.c.l.b16 %v3954
        %v4019 = vunpack.c.l.b16 %v3955
        %v4020 = vunpack.c.l.b16 %v3956
        %v4021 = vunpack.c.l.b16 %v3957
        %v4022 = vunpack.c.l.b16 %v3958
        %v4023 = vunpack.c.l.b16 %v3959
        %v4024 = vunpack.c.l.b16 %v3960
        %v4025 = vunpack.c.l.b16 %v3961
        %v4026 = vunpack.c.l.b16 %v3962
        %v4027 = vunpack.c.l.b16 %v3963
        %v4028 = vunpack.c.l.b16 %v3964
        %v4029 = vunpack.c.l.b16 %v3965
        %v4030 = vunpack.c.l.b16 %v3966
        %v4031 = vunpack.c.l.b16 %v3967
        %v4032 = vunpack.c.l.b16 %v3968
        %v4033 = vunpack.c.l.b16 %v3969
        %v4034 = vunpack.c.l.b16 %v3970
        %v4035 = vunpack.c.l.b16 %v3971
        %v4036 = vunpack.c.l.b16 %v3972
        %v4037 = vunpack.c.l.b16 %v3973
        %v4038 = vpack.c.b16 %v4007, %v4006
        %v4039 = vpack.c.b16 %v4009, %v4008
        %v4040 = vpack.c.b16 %v4011, %v4010
        %v4041 = vpack.c.b16 %v4013, %v4012
        %v4042 = vpack.c.b16 %v4015, %v4014
        %v4043 = vpack.c.b16 %v4017, %v4016
        %v4044 = vpack.c.b16 %v4019, %v4018
        %v4045 = vpack.c.b16 %v4021, %v4020
        %v4046 = vpack.c.b16 %v4023, %v4022
        %v4047 = vpack.c.b16 %v4025, %v4024
        %v4048 = vpack.c.b16 %v4027, %v4026
        %v4049 = vpack.c.b16 %v4029, %v4028
        %v4050 = vpack.c.b16 %v4031, %v4030
        %v4051 = vpack.c.b16 %v4033, %v4032
        %v4052 = vpack.c.b16 %v4035, %v4034
        %v4053 = vpack.c.b16 %v4037, %v4036
        %4070 = vmatprep.subr.bf16.mxu0 0
        %4071 = vmatpush1.bf16.msra.mxu0 %v4038
        %4072 = vmatprep.subr.bf16.mxu0 0
        %4073 = vmatpush1.bf16.msra.mxu0 %v4039
        %4074 = vmatprep.subr.bf16.mxu0 0
        %4075 = vmatpush1.bf16.msra.mxu0 %v4040
        %4076 = vmatprep.subr.bf16.mxu0 0
        %4077 = vmatpush1.bf16.msra.mxu0 %v4041
        %4078 = vmatprep.subr.bf16.mxu0 0
        %4079 = vmatpush1.bf16.msra.mxu0 %v4042
        %4080 = vmatprep.subr.bf16.mxu0 0
        %4081 = vmatpush1.bf16.msra.mxu0 %v4043
        %4082 = vmatprep.subr.bf16.mxu0 0
        %4083 = vmatpush1.bf16.msra.mxu0 %v4044
        %4084 = vmatprep.subr.bf16.mxu0 0
        %4085 = vmatpush1.bf16.msra.mxu0 %v4045
        %4086 = vmatprep.subr.bf16.mxu0 0
        %4087 = vmatpush1.bf16.msra.mxu0 %v4046
        %4088 = vmatprep.subr.bf16.mxu0 0
        %4089 = vmatpush1.bf16.msra.mxu0 %v4047
        %4090 = vmatprep.subr.bf16.mxu0 0
        %4091 = vmatpush1.bf16.msra.mxu0 %v4048
        %4092 = vmatprep.subr.bf16.mxu0 0
        %4093 = vmatpush1.bf16.msra.mxu0 %v4049
        %4094 = vmatprep.subr.bf16.mxu0 0
        %4095 = vmatpush1.bf16.msra.mxu0 %v4050
        %4096 = vmatprep.subr.bf16.mxu0 0
        %4097 = vmatpush1.bf16.msra.mxu0 %v4051
        %4098 = vmatprep.subr.bf16.mxu0 0
        %4099 = vmatpush1.bf16.msra.mxu0 %v4052
        %4100 = vmatprep.subr.bf16.mxu0 0
        %4101 = vmatpush1.bf16.msra.mxu0 %v4053
        %4102 = vmatprep.mubr.bf16.mxu0 %v3934
        %4103 = vmatmul.mubr.bf16.gmra.mrb[0].mxu0 %v3933
        %v4104 = vpop.f32.mrb[0].mxu0
        %v4105 = vadd.f32 0.0, %v4104
        %v4106 = vpop.f32.mrb[0].mxu0
        %v4107 = vpop.f32.mrb[0].mxu0
        %v4108 = vadd.f32 0.0, %v4107
        %v4109 = vpop.f32.mrb[0].mxu0
        %4110 = vmatprep.mubr.bf16.mxu0 %v3936
        %4111 = vmatmul.mubr.bf16.gmra.mrb[0].mxu0 %v3935
        %v4112 = vpop.f32.mrb[0].mxu0
        %v4113 = vadd.f32 0.0, %v4112
        %v4114 = vpop.f32.mrb[0].mxu0
        %v4115 = vpop.f32.mrb[0].mxu0
        %v4116 = vadd.f32 0.0, %v4115
        %v4117 = vpop.f32.mrb[0].mxu0
        %4118 = vmatprep.mubr.bf16.mxu0 %v3938
        %4119 = vmatmul.mubr.bf16.gmra.mrb[0].mxu0 %v3937
        %v4120 = vpop.f32.mrb[0].mxu0
        %v4121 = vadd.f32 0.0, %v4120
        %v4122 = vpop.f32.mrb[0].mxu0
        %v4123 = vpop.f32.mrb[0].mxu0
        %v4124 = vadd.f32 0.0, %v4123
        %v4125 = vpop.f32.mrb[0].mxu0
        %4126 = vmatprep.mubr.bf16.mxu0 %v3940
        %4127 = vmatmul.mubr.bf16.gmra.mrb[0].mxu0 %v3939
        %v4128 = vpop.f32.mrb[0].mxu0
        %v4129 = vadd.f32 0.0, %v4128
        %v4130 = vpop.f32.mrb[0].mxu0
        %v4131 = vpop.f32.mrb[0].mxu0
        %v4132 = vpop.f32.mrb[0].mxu0
        %4133 = vdwg.mxu0
        %v4134 = vadd.f32 %v3912, %v4105
        %v4135 = vadd.f32 %v3913, %v4108
        %v4136 = vadd.f32 %v3914, %v4113
        %v4137 = vadd.f32 %v3915, %v4116
        %v4138 = vadd.f32 %v3916, %v4121
        %v4139 = vadd.f32 %v3917, %v4124
        %v4140 = vadd.f32 %v3918, %v4129
        %v4141 = vld [vmem:[#allocation2 + $0x1c] sm:$0xff]
        %v4142 = vld [vmem:[#allocation2 + $0x24] sm:$0xff]
        %v4143 = vld [vmem:[#allocation2 + $0x2c] sm:$0xff]
        %v4144 = vld [vmem:[#allocation2 + $0x34] sm:$0xff]
        %v4145 = vld [vmem:[#allocation2 + $0x3c] sm:$0xff]
        %v4146 = vld [vmem:[#allocation2 + $0x44] sm:$0xff]
        %v4147 = vld [vmem:[#allocation2 + $0x4c] sm:$0xff]
        %v4148 = vld [vmem:[#allocation2 + $0x1d] sm:$0xff]
        %v4149 = vld [vmem:[#allocation2 + $0x25] sm:$0xff]
        %v4150 = vld [vmem:[#allocation2 + $0x2d] sm:$0xff]
        %v4151 = vld [vmem:[#allocation2 + $0x35] sm:$0xff]
        %v4152 = vld [vmem:[#allocation2 + $0x3d] sm:$0xff]
        %v4153 = vld [vmem:[#allocation2 + $0x45] sm:$0xff]
        %v4154 = vld [vmem:[#allocation2 + $0x4d] sm:$0xff]
        %v4155 = vpack.c.bf16 %v4142, %v4141
        %v4156 = vpack.c.bf16 %v4149, %v4148
        %v4157 = vpack.c.bf16 %v4144, %v4143
        %v4158 = vpack.c.bf16 %v4151, %v4150
        %v4159 = vpack.c.bf16 %v4146, %v4145
        %v4160 = vpack.c.bf16 %v4153, %v4152
        %v4161 = vpack.c.bf16 %v4147, %v4147
        %v4162 = vpack.c.bf16 %v4154, %v4154
        %s4163 = scalar_lea.vmem [#allocation8], 1792
        %v4164 = vld [vmem:[%s4163] sm:$0xf]
        %v4165 = vld [vmem:[%s4163 + $0x4] sm:$0xf]
        %v4166 = vld [vmem:[%s4163 + $0x8] sm:$0xf]
        %v4167 = vld [vmem:[%s4163 + $0xc] sm:$0xf]
        %v4168 = vld [vmem:[%s4163 + $0x10] sm:$0xf]
        %v4169 = vld [vmem:[%s4163 + $0x14] sm:$0xf]
        %v4170 = vld [vmem:[%s4163 + $0x18] sm:$0xf]
        %v4171 = vld [vmem:[%s4163 + $0x1c] sm:$0xf]
        %v4172 = vld [vmem:[%s4163 + $0x20] sm:$0xf]
        %v4173 = vld [vmem:[%s4163 + $0x24] sm:$0xf]
        %v4174 = vld [vmem:[%s4163 + $0x28] sm:$0xf]
        %v4175 = vld [vmem:[%s4163 + $0x2c] sm:$0xf]
        %v4176 = vld [vmem:[%s4163 + $0x30] sm:$0xf]
        %v4177 = vld [vmem:[%s4163 + $0x34] sm:$0xf]
        %v4178 = vld [vmem:[%s4163 + $0x38] sm:$0xf]
        %v4179 = vld [vmem:[%s4163 + $0x3c] sm:$0xf]
        %v4180 = vld [vmem:[%s4163 + $0x40] sm:$0xf]
        %v4181 = vld [vmem:[%s4163 + $0x44] sm:$0xf]
        %v4182 = vld [vmem:[%s4163 + $0x48] sm:$0xf]
        %v4183 = vld [vmem:[%s4163 + $0x4c] sm:$0xf]
        %v4184 = vld [vmem:[%s4163 + $0x50] sm:$0xf]
        %v4185 = vld [vmem:[%s4163 + $0x54] sm:$0xf]
        %v4186 = vld [vmem:[%s4163 + $0x58] sm:$0xf]
        %v4187 = vld [vmem:[%s4163 + $0x5c] sm:$0xf]
        %v4188 = vld [vmem:[%s4163 + $0x60] sm:$0xf]
        %v4189 = vld [vmem:[%s4163 + $0x64] sm:$0xf]
        %v4190 = vld [vmem:[%s4163 + $0x68] sm:$0xf]
        %v4191 = vld [vmem:[%s4163 + $0x6c] sm:$0xf]
        %v4192 = vld [vmem:[%s4163 + $0x70] sm:$0xf]
        %v4193 = vld [vmem:[%s4163 + $0x74] sm:$0xf]
        %v4194 = vld [vmem:[%s4163 + $0x78] sm:$0xf]
        %v4195 = vld [vmem:[%s4163 + $0x7c] sm:$0xf]
        %v4228 = vunpack.c.l.b16 %v4164
        %v4229 = vunpack.c.l.b16 %v4165
        %v4230 = vunpack.c.l.b16 %v4166
        %v4231 = vunpack.c.l.b16 %v4167
        %v4232 = vunpack.c.l.b16 %v4168
        %v4233 = vunpack.c.l.b16 %v4169
        %v4234 = vunpack.c.l.b16 %v4170
        %v4235 = vunpack.c.l.b16 %v4171
        %v4236 = vunpack.c.l.b16 %v4172
        %v4237 = vunpack.c.l.b16 %v4173
        %v4238 = vunpack.c.l.b16 %v4174
        %v4239 = vunpack.c.l.b16 %v4175
        %v4240 = vunpack.c.l.b16 %v4176
        %v4241 = vunpack.c.l.b16 %v4177
        %v4242 = vunpack.c.l.b16 %v4178
        %v4243 = vunpack.c.l.b16 %v4179
        %v4244 = vunpack.c.l.b16 %v4180
        %v4245 = vunpack.c.l.b16 %v4181
        %v4246 = vunpack.c.l.b16 %v4182
        %v4247 = vunpack.c.l.b16 %v4183
        %v4248 = vunpack.c.l.b16 %v4184
        %v4249 = vunpack.c.l.b16 %v4185
        %v4250 = vunpack.c.l.b16 %v4186
        %v4251 = vunpack.c.l.b16 %v4187
        %v4252 = vunpack.c.l.b16 %v4188
        %v4253 = vunpack.c.l.b16 %v4189
        %v4254 = vunpack.c.l.b16 %v4190
        %v4255 = vunpack.c.l.b16 %v4191
        %v4256 = vunpack.c.l.b16 %v4192
        %v4257 = vunpack.c.l.b16 %v4193
        %v4258 = vunpack.c.l.b16 %v4194
        %v4259 = vunpack.c.l.b16 %v4195
        %v4260 = vpack.c.b16 %v4229, %v4228
        %v4261 = vpack.c.b16 %v4231, %v4230
        %v4262 = vpack.c.b16 %v4233, %v4232
        %v4263 = vpack.c.b16 %v4235, %v4234
        %v4264 = vpack.c.b16 %v4237, %v4236
        %v4265 = vpack.c.b16 %v4239, %v4238
        %v4266 = vpack.c.b16 %v4241, %v4240
        %v4267 = vpack.c.b16 %v4243, %v4242
        %v4268 = vpack.c.b16 %v4245, %v4244
        %v4269 = vpack.c.b16 %v4247, %v4246
        %v4270 = vpack.c.b16 %v4249, %v4248
        %v4271 = vpack.c.b16 %v4251, %v4250
        %v4272 = vpack.c.b16 %v4253, %v4252
        %v4273 = vpack.c.b16 %v4255, %v4254
        %v4274 = vpack.c.b16 %v4257, %v4256
        %v4275 = vpack.c.b16 %v4259, %v4258
        %4292 = vmatprep.subr.bf16.mxu0 0
        %4293 = vmatpush1.bf16.msra.mxu0 %v4260
        %4294 = vmatprep.subr.bf16.mxu0 0
        %4295 = vmatpush1.bf16.msra.mxu0 %v4261
        %4296 = vmatprep.subr.bf16.mxu0 0
        %4297 = vmatpush1.bf16.msra.mxu0 %v4262
        %4298 = vmatprep.subr.bf16.mxu0 0
        %4299 = vmatpush1.bf16.msra.mxu0 %v4263
        %4300 = vmatprep.subr.bf16.mxu0 0
        %4301 = vmatpush1.bf16.msra.mxu0 %v4264
        %4302 = vmatprep.subr.bf16.mxu0 0
        %4303 = vmatpush1.bf16.msra.mxu0 %v4265
        %4304 = vmatprep.subr.bf16.mxu0 0
        %4305 = vmatpush1.bf16.msra.mxu0 %v4266
        %4306 = vmatprep.subr.bf16.mxu0 0
        %4307 = vmatpush1.bf16.msra.mxu0 %v4267
        %4308 = vmatprep.subr.bf16.mxu0 0
        %4309 = vmatpush1.bf16.msra.mxu0 %v4268
        %4310 = vmatprep.subr.bf16.mxu0 0
        %4311 = vmatpush1.bf16.msra.mxu0 %v4269
        %4312 = vmatprep.subr.bf16.mxu0 0
        %4313 = vmatpush1.bf16.msra.mxu0 %v4270
        %4314 = vmatprep.subr.bf16.mxu0 0
        %4315 = vmatpush1.bf16.msra.mxu0 %v4271
        %4316 = vmatprep.subr.bf16.mxu0 0
        %4317 = vmatpush1.bf16.msra.mxu0 %v4272
        %4318 = vmatprep.subr.bf16.mxu0 0
        %4319 = vmatpush1.bf16.msra.mxu0 %v4273
        %4320 = vmatprep.subr.bf16.mxu0 0
        %4321 = vmatpush1.bf16.msra.mxu0 %v4274
        %4322 = vmatprep.subr.bf16.mxu0 0
        %4323 = vmatpush1.bf16.msra.mxu0 %v4275
        %4324 = vmatprep.mubr.bf16.mxu0 %v4156
        %4325 = vmatmul.mubr.bf16.gmra.mrb[0].mxu0 %v4155
        %v4326 = vpop.f32.mrb[0].mxu0
        %v4327 = vadd.f32 0.0, %v4326
        %v4328 = vpop.f32.mrb[0].mxu0
        %v4329 = vpop.f32.mrb[0].mxu0
        %v4330 = vadd.f32 0.0, %v4329
        %v4331 = vpop.f32.mrb[0].mxu0
        %4332 = vmatprep.mubr.bf16.mxu0 %v4158
        %4333 = vmatmul.mubr.bf16.gmra.mrb[0].mxu0 %v4157
        %v4334 = vpop.f32.mrb[0].mxu0
        %v4335 = vadd.f32 0.0, %v4334
        %v4336 = vpop.f32.mrb[0].mxu0
        %v4337 = vpop.f32.mrb[0].mxu0
        %v4338 = vadd.f32 0.0, %v4337
        %v4339 = vpop.f32.mrb[0].mxu0
        %4340 = vmatprep.mubr.bf16.mxu0 %v4160
        %4341 = vmatmul.mubr.bf16.gmra.mrb[0].mxu0 %v4159
        %v4342 = vpop.f32.mrb[0].mxu0
        %v4343 = vadd.f32 0.0, %v4342
        %v4344 = vpop.f32.mrb[0].mxu0
        %v4345 = vpop.f32.mrb[0].mxu0
        %v4346 = vadd.f32 0.0, %v4345
        %v4347 = vpop.f32.mrb[0].mxu0
        %4348 = vmatprep.mubr.bf16.mxu0 %v4162
        %4349 = vmatmul.mubr.bf16.gmra.mrb[0].mxu0 %v4161
        %v4350 = vpop.f32.mrb[0].mxu0
        %v4351 = vadd.f32 0.0, %v4350
        %v4352 = vpop.f32.mrb[0].mxu0
        %v4353 = vpop.f32.mrb[0].mxu0
        %v4354 = vpop.f32.mrb[0].mxu0
        %4355 = vdwg.mxu0
        %v4356 = vadd.f32 %v4134, %v4327
        %v4357 = vadd.f32 %v4135, %v4330
        %v4358 = vadd.f32 %v4136, %v4335
        %v4359 = vadd.f32 %v4137, %v4338
        %v4360 = vadd.f32 %v4138, %v4343
        %v4361 = vadd.f32 %v4139, %v4346
        %v4362 = vadd.f32 %v4140, %v4351
        %v4363 = vld [vmem:[#allocation2 + $0x1e] sm:$0xff]
        %v4364 = vld [vmem:[#allocation2 + $0x26] sm:$0xff]
        %v4365 = vld [vmem:[#allocation2 + $0x2e] sm:$0xff]
        %v4366 = vld [vmem:[#allocation2 + $0x36] sm:$0xff]
        %v4367 = vld [vmem:[#allocation2 + $0x3e] sm:$0xff]
        %v4368 = vld [vmem:[#allocation2 + $0x46] sm:$0xff]
        %v4369 = vld [vmem:[#allocation2 + $0x4e] sm:$0xff]
        %v4370 = vld [vmem:[#allocation2 + $0x1f] sm:$0xff]
        %v4371 = vld [vmem:[#allocation2 + $0x27] sm:$0xff]
        %v4372 = vld [vmem:[#allocation2 + $0x2f] sm:$0xff]
        %v4373 = vld [vmem:[#allocation2 + $0x37] sm:$0xff]
        %v4374 = vld [vmem:[#allocation2 + $0x3f] sm:$0xff]
        %v4375 = vld [vmem:[#allocation2 + $0x47] sm:$0xff]
        %v4376 = vld [vmem:[#allocation2 + $0x4f] sm:$0xff]
        %v4377 = vpack.c.bf16 %v4364, %v4363
        %v4378 = vpack.c.bf16 %v4371, %v4370
        %v4379 = vpack.c.bf16 %v4366, %v4365
        %v4380 = vpack.c.bf16 %v4373, %v4372
        %v4381 = vpack.c.bf16 %v4368, %v4367
        %v4382 = vpack.c.bf16 %v4375, %v4374
        %v4383 = vpack.c.bf16 %v4369, %v4369
        %v4384 = vpack.c.bf16 %v4376, %v4376
        %s4385 = scalar_lea.vmem [#allocation8], 1920
        %v4386 = vld [vmem:[%s4385] sm:$0xf]
        %v4387 = vld [vmem:[%s4385 + $0x4] sm:$0xf]
        %v4388 = vld [vmem:[%s4385 + $0x8] sm:$0xf]
        %v4389 = vld [vmem:[%s4385 + $0xc] sm:$0xf]
        %v4390 = vld [vmem:[%s4385 + $0x10] sm:$0xf]
        %v4391 = vld [vmem:[%s4385 + $0x14] sm:$0xf]
        %v4392 = vld [vmem:[%s4385 + $0x18] sm:$0xf]
        %v4393 = vld [vmem:[%s4385 + $0x1c] sm:$0xf]
        %v4394 = vld [vmem:[%s4385 + $0x20] sm:$0xf]
        %v4395 = vld [vmem:[%s4385 + $0x24] sm:$0xf]
        %v4396 = vld [vmem:[%s4385 + $0x28] sm:$0xf]
        %v4397 = vld [vmem:[%s4385 + $0x2c] sm:$0xf]
        %v4398 = vld [vmem:[%s4385 + $0x30] sm:$0xf]
        %v4399 = vld [vmem:[%s4385 + $0x34] sm:$0xf]
        %v4400 = vld [vmem:[%s4385 + $0x38] sm:$0xf]
        %v4401 = vld [vmem:[%s4385 + $0x3c] sm:$0xf]
        %v4402 = vld [vmem:[%s4385 + $0x40] sm:$0xf]
        %v4403 = vld [vmem:[%s4385 + $0x44] sm:$0xf]
        %v4404 = vld [vmem:[%s4385 + $0x48] sm:$0xf]
        %v4405 = vld [vmem:[%s4385 + $0x4c] sm:$0xf]
        %v4406 = vld [vmem:[%s4385 + $0x50] sm:$0xf]
        %v4407 = vld [vmem:[%s4385 + $0x54] sm:$0xf]
        %v4408 = vld [vmem:[%s4385 + $0x58] sm:$0xf]
        %v4409 = vld [vmem:[%s4385 + $0x5c] sm:$0xf]
        %v4410 = vld [vmem:[%s4385 + $0x60] sm:$0xf]
        %v4411 = vld [vmem:[%s4385 + $0x64] sm:$0xf]
        %v4412 = vld [vmem:[%s4385 + $0x68] sm:$0xf]
        %v4413 = vld [vmem:[%s4385 + $0x6c] sm:$0xf]
        %v4414 = vld [vmem:[%s4385 + $0x70] sm:$0xf]
        %v4415 = vld [vmem:[%s4385 + $0x74] sm:$0xf]
        %v4416 = vld [vmem:[%s4385 + $0x78] sm:$0xf]
        %v4417 = vld [vmem:[%s4385 + $0x7c] sm:$0xf]
        %v4450 = vunpack.c.l.b16 %v4386
        %v4451 = vunpack.c.l.b16 %v4387
        %v4452 = vunpack.c.l.b16 %v4388
        %v4453 = vunpack.c.l.b16 %v4389
        %v4454 = vunpack.c.l.b16 %v4390
        %v4455 = vunpack.c.l.b16 %v4391
        %v4456 = vunpack.c.l.b16 %v4392
        %v4457 = vunpack.c.l.b16 %v4393
        %v4458 = vunpack.c.l.b16 %v4394
        %v4459 = vunpack.c.l.b16 %v4395
        %v4460 = vunpack.c.l.b16 %v4396
        %v4461 = vunpack.c.l.b16 %v4397
        %v4462 = vunpack.c.l.b16 %v4398
        %v4463 = vunpack.c.l.b16 %v4399
        %v4464 = vunpack.c.l.b16 %v4400
        %v4465 = vunpack.c.l.b16 %v4401
        %v4466 = vunpack.c.l.b16 %v4402
        %v4467 = vunpack.c.l.b16 %v4403
        %v4468 = vunpack.c.l.b16 %v4404
        %v4469 = vunpack.c.l.b16 %v4405
        %v4470 = vunpack.c.l.b16 %v4406
        %v4471 = vunpack.c.l.b16 %v4407
        %v4472 = vunpack.c.l.b16 %v4408
        %v4473 = vunpack.c.l.b16 %v4409
        %v4474 = vunpack.c.l.b16 %v4410
        %v4475 = vunpack.c.l.b16 %v4411
        %v4476 = vunpack.c.l.b16 %v4412
        %v4477 = vunpack.c.l.b16 %v4413
        %v4478 = vunpack.c.l.b16 %v4414
        %v4479 = vunpack.c.l.b16 %v4415
        %v4480 = vunpack.c.l.b16 %v4416
        %v4481 = vunpack.c.l.b16 %v4417
        %v4482 = vpack.c.b16 %v4451, %v4450
        %v4483 = vpack.c.b16 %v4453, %v4452
        %v4484 = vpack.c.b16 %v4455, %v4454
        %v4485 = vpack.c.b16 %v4457, %v4456
        %v4486 = vpack.c.b16 %v4459, %v4458
        %v4487 = vpack.c.b16 %v4461, %v4460
        %v4488 = vpack.c.b16 %v4463, %v4462
        %v4489 = vpack.c.b16 %v4465, %v4464
        %v4490 = vpack.c.b16 %v4467, %v4466
        %v4491 = vpack.c.b16 %v4469, %v4468
        %v4492 = vpack.c.b16 %v4471, %v4470
        %v4493 = vpack.c.b16 %v4473, %v4472
        %v4494 = vpack.c.b16 %v4475, %v4474
        %v4495 = vpack.c.b16 %v4477, %v4476
        %v4496 = vpack.c.b16 %v4479, %v4478
        %v4497 = vpack.c.b16 %v4481, %v4480
        %4514 = vmatprep.subr.bf16.mxu0 0
        %4515 = vmatpush1.bf16.msra.mxu0 %v4482
        %4516 = vmatprep.subr.bf16.mxu0 0
        %4517 = vmatpush1.bf16.msra.mxu0 %v4483
        %4518 = vmatprep.subr.bf16.mxu0 0
        %4519 = vmatpush1.bf16.msra.mxu0 %v4484
        %4520 = vmatprep.subr.bf16.mxu0 0
        %4521 = vmatpush1.bf16.msra.mxu0 %v4485
        %4522 = vmatprep.subr.bf16.mxu0 0
        %4523 = vmatpush1.bf16.msra.mxu0 %v4486
        %4524 = vmatprep.subr.bf16.mxu0 0
        %4525 = vmatpush1.bf16.msra.mxu0 %v4487
        %4526 = vmatprep.subr.bf16.mxu0 0
        %4527 = vmatpush1.bf16.msra.mxu0 %v4488
        %4528 = vmatprep.subr.bf16.mxu0 0
        %4529 = vmatpush1.bf16.msra.mxu0 %v4489
        %4530 = vmatprep.subr.bf16.mxu0 0
        %4531 = vmatpush1.bf16.msra.mxu0 %v4490
        %4532 = vmatprep.subr.bf16.mxu0 0
        %4533 = vmatpush1.bf16.msra.mxu0 %v4491
        %4534 = vmatprep.subr.bf16.mxu0 0
        %4535 = vmatpush1.bf16.msra.mxu0 %v4492
        %4536 = vmatprep.subr.bf16.mxu0 0
        %4537 = vmatpush1.bf16.msra.mxu0 %v4493
        %4538 = vmatprep.subr.bf16.mxu0 0
        %4539 = vmatpush1.bf16.msra.mxu0 %v4494
        %4540 = vmatprep.subr.bf16.mxu0 0
        %4541 = vmatpush1.bf16.msra.mxu0 %v4495
        %4542 = vmatprep.subr.bf16.mxu0 0
        %4543 = vmatpush1.bf16.msra.mxu0 %v4496
        %4544 = vmatprep.subr.bf16.mxu0 0
        %4545 = vmatpush1.bf16.msra.mxu0 %v4497
        %4546 = vmatprep.mubr.bf16.mxu0 %v4378
        %4547 = vmatmul.mubr.bf16.gmra.mrb[0].mxu0 %v4377
        %v4548 = vpop.f32.mrb[0].mxu0
        %v4549 = vadd.f32 0.0, %v4548
        %v4550 = vpop.f32.mrb[0].mxu0
        %v4551 = vpop.f32.mrb[0].mxu0
        %v4552 = vadd.f32 0.0, %v4551
        %v4553 = vpop.f32.mrb[0].mxu0
        %4554 = vmatprep.mubr.bf16.mxu0 %v4380
        %4555 = vmatmul.mubr.bf16.gmra.mrb[0].mxu0 %v4379
        %v4556 = vpop.f32.mrb[0].mxu0
        %v4557 = vadd.f32 0.0, %v4556
        %v4558 = vpop.f32.mrb[0].mxu0
        %v4559 = vpop.f32.mrb[0].mxu0
        %v4560 = vadd.f32 0.0, %v4559
        %v4561 = vpop.f32.mrb[0].mxu0
        %4562 = vmatprep.mubr.bf16.mxu0 %v4382
        %4563 = vmatmul.mubr.bf16.gmra.mrb[0].mxu0 %v4381
        %v4564 = vpop.f32.mrb[0].mxu0
        %v4565 = vadd.f32 0.0, %v4564
        %v4566 = vpop.f32.mrb[0].mxu0
        %v4567 = vpop.f32.mrb[0].mxu0
        %v4568 = vadd.f32 0.0, %v4567
        %v4569 = vpop.f32.mrb[0].mxu0
        %4570 = vmatprep.mubr.bf16.mxu0 %v4384
        %4571 = vmatmul.mubr.bf16.gmra.mrb[0].mxu0 %v4383
        %v4572 = vpop.f32.mrb[0].mxu0
        %v4573 = vadd.f32 0.0, %v4572
        %v4574 = vpop.f32.mrb[0].mxu0
        %v4575 = vpop.f32.mrb[0].mxu0
        %v4576 = vpop.f32.mrb[0].mxu0
        %4577 = vdwg.mxu0
        %v4578 = vadd.f32 %v4356, %v4549
        %v4579 = vadd.f32 %v4357, %v4552
        %v4580 = vadd.f32 %v4358, %v4557
        %v4581 = vadd.f32 %v4359, %v4560
        %v4582 = vadd.f32 %v4360, %v4565
        %v4583 = vadd.f32 %v4361, %v4568
        %v4584 = vadd.f32 %v4362, %v4573
        %v4585 = vld [vmem:[#allocation2 + $0x20] sm:$0xff]
        %v4586 = vld [vmem:[#allocation2 + $0x28] sm:$0xff]
        %v4587 = vld [vmem:[#allocation2 + $0x30] sm:$0xff]
        %v4588 = vld [vmem:[#allocation2 + $0x38] sm:$0xff]
        %v4589 = vld [vmem:[#allocation2 + $0x40] sm:$0xff]
        %v4590 = vld [vmem:[#allocation2 + $0x48] sm:$0xff]
        %v4591 = vld [vmem:[#allocation2 + $0x50] sm:$0xff]
        %v4592 = vld [vmem:[#allocation2 + $0x21] sm:$0xff]
        %v4593 = vld [vmem:[#allocation2 + $0x29] sm:$0xff]
        %v4594 = vld [vmem:[#allocation2 + $0x31] sm:$0xff]
        %v4595 = vld [vmem:[#allocation2 + $0x39] sm:$0xff]
        %v4596 = vld [vmem:[#allocation2 + $0x41] sm:$0xff]
        %v4597 = vld [vmem:[#allocation2 + $0x49] sm:$0xff]
        %v4598 = vld [vmem:[#allocation2 + $0x51] sm:$0xff]
        %v4599 = vpack.c.bf16 %v4586, %v4585
        %v4600 = vpack.c.bf16 %v4593, %v4592
        %v4601 = vpack.c.bf16 %v4588, %v4587
        %v4602 = vpack.c.bf16 %v4595, %v4594
        %v4603 = vpack.c.bf16 %v4590, %v4589
        %v4604 = vpack.c.bf16 %v4597, %v4596
        %v4605 = vpack.c.bf16 %v4591, %v4591
        %v4606 = vpack.c.bf16 %v4598, %v4598
        %s4607 = scalar_lea.vmem [#allocation8], 2048
        %v4608 = vld [vmem:[%s4607] sm:$0xf]
        %v4609 = vld [vmem:[%s4607 + $0x4] sm:$0xf]
        %v4610 = vld [vmem:[%s4607 + $0x8] sm:$0xf]
        %v4611 = vld [vmem:[%s4607 + $0xc] sm:$0xf]
        %v4612 = vld [vmem:[%s4607 + $0x10] sm:$0xf]
        %v4613 = vld [vmem:[%s4607 + $0x14] sm:$0xf]
        %v4614 = vld [vmem:[%s4607 + $0x18] sm:$0xf]
        %v4615 = vld [vmem:[%s4607 + $0x1c] sm:$0xf]
        %v4616 = vld [vmem:[%s4607 + $0x20] sm:$0xf]
        %v4617 = vld [vmem:[%s4607 + $0x24] sm:$0xf]
        %v4618 = vld [vmem:[%s4607 + $0x28] sm:$0xf]
        %v4619 = vld [vmem:[%s4607 + $0x2c] sm:$0xf]
        %v4620 = vld [vmem:[%s4607 + $0x30] sm:$0xf]
        %v4621 = vld [vmem:[%s4607 + $0x34] sm:$0xf]
        %v4622 = vld [vmem:[%s4607 + $0x38] sm:$0xf]
        %v4623 = vld [vmem:[%s4607 + $0x3c] sm:$0xf]
        %v4624 = vld [vmem:[%s4607 + $0x40] sm:$0xf]
        %v4625 = vld [vmem:[%s4607 + $0x44] sm:$0xf]
        %v4626 = vld [vmem:[%s4607 + $0x48] sm:$0xf]
        %v4627 = vld [vmem:[%s4607 + $0x4c] sm:$0xf]
        %v4628 = vld [vmem:[%s4607 + $0x50] sm:$0xf]
        %v4629 = vld [vmem:[%s4607 + $0x54] sm:$0xf]
        %v4630 = vld [vmem:[%s4607 + $0x58] sm:$0xf]
        %v4631 = vld [vmem:[%s4607 + $0x5c] sm:$0xf]
        %v4632 = vld [vmem:[%s4607 + $0x60] sm:$0xf]
        %v4633 = vld [vmem:[%s4607 + $0x64] sm:$0xf]
        %v4634 = vld [vmem:[%s4607 + $0x68] sm:$0xf]
        %v4635 = vld [vmem:[%s4607 + $0x6c] sm:$0xf]
        %v4636 = vld [vmem:[%s4607 + $0x70] sm:$0xf]
        %v4637 = vld [vmem:[%s4607 + $0x74] sm:$0xf]
        %v4638 = vld [vmem:[%s4607 + $0x78] sm:$0xf]
        %v4639 = vld [vmem:[%s4607 + $0x7c] sm:$0xf]
        %v4672 = vunpack.c.l.b16 %v4608
        %v4673 = vunpack.c.l.b16 %v4609
        %v4674 = vunpack.c.l.b16 %v4610
        %v4675 = vunpack.c.l.b16 %v4611
        %v4676 = vunpack.c.l.b16 %v4612
        %v4677 = vunpack.c.l.b16 %v4613
        %v4678 = vunpack.c.l.b16 %v4614
        %v4679 = vunpack.c.l.b16 %v4615
        %v4680 = vunpack.c.l.b16 %v4616
        %v4681 = vunpack.c.l.b16 %v4617
        %v4682 = vunpack.c.l.b16 %v4618
        %v4683 = vunpack.c.l.b16 %v4619
        %v4684 = vunpack.c.l.b16 %v4620
        %v4685 = vunpack.c.l.b16 %v4621
        %v4686 = vunpack.c.l.b16 %v4622
        %v4687 = vunpack.c.l.b16 %v4623
        %v4688 = vunpack.c.l.b16 %v4624
        %v4689 = vunpack.c.l.b16 %v4625
        %v4690 = vunpack.c.l.b16 %v4626
        %v4691 = vunpack.c.l.b16 %v4627
        %v4692 = vunpack.c.l.b16 %v4628
        %v4693 = vunpack.c.l.b16 %v4629
        %v4694 = vunpack.c.l.b16 %v4630
        %v4695 = vunpack.c.l.b16 %v4631
        %v4696 = vunpack.c.l.b16 %v4632
        %v4697 = vunpack.c.l.b16 %v4633
        %v4698 = vunpack.c.l.b16 %v4634
        %v4699 = vunpack.c.l.b16 %v4635
        %v4700 = vunpack.c.l.b16 %v4636
        %v4701 = vunpack.c.l.b16 %v4637
        %v4702 = vunpack.c.l.b16 %v4638
        %v4703 = vunpack.c.l.b16 %v4639
        %v4704 = vpack.c.b16 %v4673, %v4672
        %v4705 = vpack.c.b16 %v4675, %v4674
        %v4706 = vpack.c.b16 %v4677, %v4676
        %v4707 = vpack.c.b16 %v4679, %v4678
        %v4708 = vpack.c.b16 %v4681, %v4680
        %v4709 = vpack.c.b16 %v4683, %v4682
        %v4710 = vpack.c.b16 %v4685, %v4684
        %v4711 = vpack.c.b16 %v4687, %v4686
        %v4712 = vpack.c.b16 %v4689, %v4688
        %v4713 = vpack.c.b16 %v4691, %v4690
        %v4714 = vpack.c.b16 %v4693, %v4692
        %v4715 = vpack.c.b16 %v4695, %v4694
        %v4716 = vpack.c.b16 %v4697, %v4696
        %v4717 = vpack.c.b16 %v4699, %v4698
        %v4718 = vpack.c.b16 %v4701, %v4700
        %v4719 = vpack.c.b16 %v4703, %v4702
        %4736 = vmatprep.subr.bf16.mxu0 0
        %4737 = vmatpush1.bf16.msra.mxu0 %v4704
        %4738 = vmatprep.subr.bf16.mxu0 0
        %4739 = vmatpush1.bf16.msra.mxu0 %v4705
        %4740 = vmatprep.subr.bf16.mxu0 0
        %4741 = vmatpush1.bf16.msra.mxu0 %v4706
        %4742 = vmatprep.subr.bf16.mxu0 0
        %4743 = vmatpush1.bf16.msra.mxu0 %v4707
        %4744 = vmatprep.subr.bf16.mxu0 0
        %4745 = vmatpush1.bf16.msra.mxu0 %v4708
        %4746 = vmatprep.subr.bf16.mxu0 0
        %4747 = vmatpush1.bf16.msra.mxu0 %v4709
        %4748 = vmatprep.subr.bf16.mxu0 0
        %4749 = vmatpush1.bf16.msra.mxu0 %v4710
        %4750 = vmatprep.subr.bf16.mxu0 0
        %4751 = vmatpush1.bf16.msra.mxu0 %v4711
        %4752 = vmatprep.subr.bf16.mxu0 0
        %4753 = vmatpush1.bf16.msra.mxu0 %v4712
        %4754 = vmatprep.subr.bf16.mxu0 0
        %4755 = vmatpush1.bf16.msra.mxu0 %v4713
        %4756 = vmatprep.subr.bf16.mxu0 0
        %4757 = vmatpush1.bf16.msra.mxu0 %v4714
        %4758 = vmatprep.subr.bf16.mxu0 0
        %4759 = vmatpush1.bf16.msra.mxu0 %v4715
        %4760 = vmatprep.subr.bf16.mxu0 0
        %4761 = vmatpush1.bf16.msra.mxu0 %v4716
        %4762 = vmatprep.subr.bf16.mxu0 0
        %4763 = vmatpush1.bf16.msra.mxu0 %v4717
        %4764 = vmatprep.subr.bf16.mxu0 0
        %4765 = vmatpush1.bf16.msra.mxu0 %v4718
        %4766 = vmatprep.subr.bf16.mxu0 0
        %4767 = vmatpush1.bf16.msra.mxu0 %v4719
        %4768 = vmatprep.mubr.bf16.mxu0 %v4600
        %4769 = vmatmul.mubr.bf16.gmra.mrb[0].mxu0 %v4599
        %v4770 = vpop.f32.mrb[0].mxu0
        %v4771 = vadd.f32 0.0, %v4770
        %v4772 = vpop.f32.mrb[0].mxu0
        %v4773 = vpop.f32.mrb[0].mxu0
        %v4774 = vadd.f32 0.0, %v4773
        %v4775 = vpop.f32.mrb[0].mxu0
        %4776 = vmatprep.mubr.bf16.mxu0 %v4602
        %4777 = vmatmul.mubr.bf16.gmra.mrb[0].mxu0 %v4601
        %v4778 = vpop.f32.mrb[0].mxu0
        %v4779 = vadd.f32 0.0, %v4778
        %v4780 = vpop.f32.mrb[0].mxu0
        %v4781 = vpop.f32.mrb[0].mxu0
        %v4782 = vadd.f32 0.0, %v4781
        %v4783 = vpop.f32.mrb[0].mxu0
        %4784 = vmatprep.mubr.bf16.mxu0 %v4604
        %4785 = vmatmul.mubr.bf16.gmra.mrb[0].mxu0 %v4603
        %v4786 = vpop.f32.mrb[0].mxu0
        %v4787 = vadd.f32 0.0, %v4786
        %v4788 = vpop.f32.mrb[0].mxu0
        %v4789 = vpop.f32.mrb[0].mxu0
        %v4790 = vadd.f32 0.0, %v4789
        %v4791 = vpop.f32.mrb[0].mxu0
        %4792 = vmatprep.mubr.bf16.mxu0 %v4606
        %4793 = vmatmul.mubr.bf16.gmra.mrb[0].mxu0 %v4605
        %v4794 = vpop.f32.mrb[0].mxu0
        %v4795 = vadd.f32 0.0, %v4794
        %v4796 = vpop.f32.mrb[0].mxu0
        %v4797 = vpop.f32.mrb[0].mxu0
        %v4798 = vpop.f32.mrb[0].mxu0
        %4799 = vdwg.mxu0
        %v4800 = vadd.f32 %v4578, %v4771
        %v4801 = vadd.f32 %v4579, %v4774
        %v4802 = vadd.f32 %v4580, %v4779
        %v4803 = vadd.f32 %v4581, %v4782
        %v4804 = vadd.f32 %v4582, %v4787
        %v4805 = vadd.f32 %v4583, %v4790
        %v4806 = vadd.f32 %v4584, %v4795
        %v4807 = vld [vmem:[#allocation2 + $0x22] sm:$0xff]
        %v4808 = vld [vmem:[#allocation2 + $0x2a] sm:$0xff]
        %v4809 = vld [vmem:[#allocation2 + $0x32] sm:$0xff]
        %v4810 = vld [vmem:[#allocation2 + $0x3a] sm:$0xff]
        %v4811 = vld [vmem:[#allocation2 + $0x42] sm:$0xff]
        %v4812 = vld [vmem:[#allocation2 + $0x4a] sm:$0xff]
        %v4813 = vld [vmem:[#allocation2 + $0x52] sm:$0xff]
        %v4814 = vld [vmem:[#allocation2 + $0x23] sm:$0xff]
        %v4815 = vld [vmem:[#allocation2 + $0x2b] sm:$0xff]
        %v4816 = vld [vmem:[#allocation2 + $0x33] sm:$0xff]
        %v4817 = vld [vmem:[#allocation2 + $0x3b] sm:$0xff]
        %v4818 = vld [vmem:[#allocation2 + $0x43] sm:$0xff]
        %v4819 = vld [vmem:[#allocation2 + $0x4b] sm:$0xff]
        %v4820 = vld [vmem:[#allocation2 + $0x53] sm:$0xff]
        %v4821 = vpack.c.bf16 %v4808, %v4807
        %v4822 = vpack.c.bf16 %v4815, %v4814
        %v4823 = vpack.c.bf16 %v4810, %v4809
        %v4824 = vpack.c.bf16 %v4817, %v4816
        %v4825 = vpack.c.bf16 %v4812, %v4811
        %v4826 = vpack.c.bf16 %v4819, %v4818
        %v4827 = vpack.c.bf16 %v4813, %v4813
        %v4828 = vpack.c.bf16 %v4820, %v4820
        %s4829 = scalar_lea.vmem [#allocation8], 2176
        %v4830 = vld [vmem:[%s4829] sm:$0xf]
        %v4831 = vld [vmem:[%s4829 + $0x4] sm:$0xf]
        %v4832 = vld [vmem:[%s4829 + $0x8] sm:$0xf]
        %v4833 = vld [vmem:[%s4829 + $0xc] sm:$0xf]
        %v4834 = vld [vmem:[%s4829 + $0x10] sm:$0xf]
        %v4835 = vld [vmem:[%s4829 + $0x14] sm:$0xf]
        %v4836 = vld [vmem:[%s4829 + $0x18] sm:$0xf]
        %v4837 = vld [vmem:[%s4829 + $0x1c] sm:$0xf]
        %v4838 = vld [vmem:[%s4829 + $0x20] sm:$0xf]
        %v4839 = vld [vmem:[%s4829 + $0x24] sm:$0xf]
        %v4840 = vld [vmem:[%s4829 + $0x28] sm:$0xf]
        %v4841 = vld [vmem:[%s4829 + $0x2c] sm:$0xf]
        %v4842 = vld [vmem:[%s4829 + $0x30] sm:$0xf]
        %v4843 = vld [vmem:[%s4829 + $0x34] sm:$0xf]
        %v4844 = vld [vmem:[%s4829 + $0x38] sm:$0xf]
        %v4845 = vld [vmem:[%s4829 + $0x3c] sm:$0xf]
        %v4846 = vld [vmem:[%s4829 + $0x40] sm:$0xf]
        %v4847 = vld [vmem:[%s4829 + $0x44] sm:$0xf]
        %v4848 = vld [vmem:[%s4829 + $0x48] sm:$0xf]
        %v4849 = vld [vmem:[%s4829 + $0x4c] sm:$0xf]
        %v4850 = vld [vmem:[%s4829 + $0x50] sm:$0xf]
        %v4851 = vld [vmem:[%s4829 + $0x54] sm:$0xf]
        %v4852 = vld [vmem:[%s4829 + $0x58] sm:$0xf]
        %v4853 = vld [vmem:[%s4829 + $0x5c] sm:$0xf]
        %v4854 = vld [vmem:[%s4829 + $0x60] sm:$0xf]
        %v4855 = vld [vmem:[%s4829 + $0x64] sm:$0xf]
        %v4856 = vld [vmem:[%s4829 + $0x68] sm:$0xf]
        %v4857 = vld [vmem:[%s4829 + $0x6c] sm:$0xf]
        %v4858 = vld [vmem:[%s4829 + $0x70] sm:$0xf]
        %v4859 = vld [vmem:[%s4829 + $0x74] sm:$0xf]
        %v4860 = vld [vmem:[%s4829 + $0x78] sm:$0xf]
        %v4861 = vld [vmem:[%s4829 + $0x7c] sm:$0xf]
        %v4894 = vunpack.c.l.b16 %v4830
        %v4895 = vunpack.c.l.b16 %v4831
        %v4896 = vunpack.c.l.b16 %v4832
        %v4897 = vunpack.c.l.b16 %v4833
        %v4898 = vunpack.c.l.b16 %v4834
        %v4899 = vunpack.c.l.b16 %v4835
        %v4900 = vunpack.c.l.b16 %v4836
        %v4901 = vunpack.c.l.b16 %v4837
        %v4902 = vunpack.c.l.b16 %v4838
        %v4903 = vunpack.c.l.b16 %v4839
        %v4904 = vunpack.c.l.b16 %v4840
        %v4905 = vunpack.c.l.b16 %v4841
        %v4906 = vunpack.c.l.b16 %v4842
        %v4907 = vunpack.c.l.b16 %v4843
        %v4908 = vunpack.c.l.b16 %v4844
        %v4909 = vunpack.c.l.b16 %v4845
        %v4910 = vunpack.c.l.b16 %v4846
        %v4911 = vunpack.c.l.b16 %v4847
        %v4912 = vunpack.c.l.b16 %v4848
        %v4913 = vunpack.c.l.b16 %v4849
        %v4914 = vunpack.c.l.b16 %v4850
        %v4915 = vunpack.c.l.b16 %v4851
        %v4916 = vunpack.c.l.b16 %v4852
        %v4917 = vunpack.c.l.b16 %v4853
        %v4918 = vunpack.c.l.b16 %v4854
        %v4919 = vunpack.c.l.b16 %v4855
        %v4920 = vunpack.c.l.b16 %v4856
        %v4921 = vunpack.c.l.b16 %v4857
        %v4922 = vunpack.c.l.b16 %v4858
        %v4923 = vunpack.c.l.b16 %v4859
        %v4924 = vunpack.c.l.b16 %v4860
        %v4925 = vunpack.c.l.b16 %v4861
        %v4926 = vpack.c.b16 %v4895, %v4894
        %v4927 = vpack.c.b16 %v4897, %v4896
        %v4928 = vpack.c.b16 %v4899, %v4898
        %v4929 = vpack.c.b16 %v4901, %v4900
        %v4930 = vpack.c.b16 %v4903, %v4902
        %v4931 = vpack.c.b16 %v4905, %v4904
        %v4932 = vpack.c.b16 %v4907, %v4906
        %v4933 = vpack.c.b16 %v4909, %v4908
        %v4934 = vpack.c.b16 %v4911, %v4910
        %v4935 = vpack.c.b16 %v4913, %v4912
        %v4936 = vpack.c.b16 %v4915, %v4914
        %v4937 = vpack.c.b16 %v4917, %v4916
        %v4938 = vpack.c.b16 %v4919, %v4918
        %v4939 = vpack.c.b16 %v4921, %v4920
        %v4940 = vpack.c.b16 %v4923, %v4922
        %v4941 = vpack.c.b16 %v4925, %v4924
        %4958 = vmatprep.subr.bf16.mxu0 0
        %4959 = vmatpush1.bf16.msra.mxu0 %v4926
        %4960 = vmatprep.subr.bf16.mxu0 0
        %4961 = vmatpush1.bf16.msra.mxu0 %v4927
        %4962 = vmatprep.subr.bf16.mxu0 0
        %4963 = vmatpush1.bf16.msra.mxu0 %v4928
        %4964 = vmatprep.subr.bf16.mxu0 0
        %4965 = vmatpush1.bf16.msra.mxu0 %v4929
        %4966 = vmatprep.subr.bf16.mxu0 0
        %4967 = vmatpush1.bf16.msra.mxu0 %v4930
        %4968 = vmatprep.subr.bf16.mxu0 0
        %4969 = vmatpush1.bf16.msra.mxu0 %v4931
        %4970 = vmatprep.subr.bf16.mxu0 0
        %4971 = vmatpush1.bf16.msra.mxu0 %v4932
        %4972 = vmatprep.subr.bf16.mxu0 0
        %4973 = vmatpush1.bf16.msra.mxu0 %v4933
        %4974 = vmatprep.subr.bf16.mxu0 0
        %4975 = vmatpush1.bf16.msra.mxu0 %v4934
        %4976 = vmatprep.subr.bf16.mxu0 0
        %4977 = vmatpush1.bf16.msra.mxu0 %v4935
        %4978 = vmatprep.subr.bf16.mxu0 0
        %4979 = vmatpush1.bf16.msra.mxu0 %v4936
        %4980 = vmatprep.subr.bf16.mxu0 0
        %4981 = vmatpush1.bf16.msra.mxu0 %v4937
        %4982 = vmatprep.subr.bf16.mxu0 0
        %4983 = vmatpush1.bf16.msra.mxu0 %v4938
        %4984 = vmatprep.subr.bf16.mxu0 0
        %4985 = vmatpush1.bf16.msra.mxu0 %v4939
        %4986 = vmatprep.subr.bf16.mxu0 0
        %4987 = vmatpush1.bf16.msra.mxu0 %v4940
        %4988 = vmatprep.subr.bf16.mxu0 0
        %4989 = vmatpush1.bf16.msra.mxu0 %v4941
        %4990 = vmatprep.mubr.bf16.mxu0 %v4822
        %4991 = vmatmul.mubr.bf16.gmra.mrb[0].mxu0 %v4821
        %v4992 = vpop.f32.mrb[0].mxu0
        %v4993 = vadd.f32 0.0, %v4992
        %v4994 = vpop.f32.mrb[0].mxu0
        %v4995 = vpop.f32.mrb[0].mxu0
        %v4996 = vadd.f32 0.0, %v4995
        %v4997 = vpop.f32.mrb[0].mxu0
        %4998 = vmatprep.mubr.bf16.mxu0 %v4824
        %4999 = vmatmul.mubr.bf16.gmra.mrb[0].mxu0 %v4823
        %v5000 = vpop.f32.mrb[0].mxu0
        %v5001 = vadd.f32 0.0, %v5000
        %v5002 = vpop.f32.mrb[0].mxu0
        %v5003 = vpop.f32.mrb[0].mxu0
        %v5004 = vadd.f32 0.0, %v5003
        %v5005 = vpop.f32.mrb[0].mxu0
        %5006 = vmatprep.mubr.bf16.mxu0 %v4826
        %5007 = vmatmul.mubr.bf16.gmra.mrb[0].mxu0 %v4825
        %v5008 = vpop.f32.mrb[0].mxu0
        %v5009 = vadd.f32 0.0, %v5008
        %v5010 = vpop.f32.mrb[0].mxu0
        %v5011 = vpop.f32.mrb[0].mxu0
        %v5012 = vadd.f32 0.0, %v5011
        %v5013 = vpop.f32.mrb[0].mxu0
        %5014 = vmatprep.mubr.bf16.mxu0 %v4828
        %5015 = vmatmul.mubr.bf16.gmra.mrb[0].mxu0 %v4827
        %v5016 = vpop.f32.mrb[0].mxu0
        %v5017 = vadd.f32 0.0, %v5016
        %v5018 = vpop.f32.mrb[0].mxu0
        %v5019 = vpop.f32.mrb[0].mxu0
        %v5020 = vpop.f32.mrb[0].mxu0
        %5021 = vdwg.mxu0
        %v5022 = vadd.f32 %v4800, %v4993
        %v5023 = vadd.f32 %v4801, %v4996
        %v5024 = vadd.f32 %v4802, %v5001
        %v5025 = vadd.f32 %v4803, %v5004
        %v5026 = vadd.f32 %v4804, %v5009
        %v5027 = vadd.f32 %v4805, %v5012
        %v5028 = vadd.f32 %v4806, %v5017
        %v5029 = vld [vmem:[#allocation2 + $0x24] sm:$0xff]
        %v5030 = vld [vmem:[#allocation2 + $0x2c] sm:$0xff]
        %v5031 = vld [vmem:[#allocation2 + $0x34] sm:$0xff]
        %v5032 = vld [vmem:[#allocation2 + $0x3c] sm:$0xff]
        %v5033 = vld [vmem:[#allocation2 + $0x44] sm:$0xff]
        %v5034 = vld [vmem:[#allocation2 + $0x4c] sm:$0xff]
        %v5035 = vld [vmem:[#allocation2 + $0x54] sm:$0xff]
        %v5036 = vld [vmem:[#allocation2 + $0x25] sm:$0xff]
        %v5037 = vld [vmem:[#allocation2 + $0x2d] sm:$0xff]
        %v5038 = vld [vmem:[#allocation2 + $0x35] sm:$0xff]
        %v5039 = vld [vmem:[#allocation2 + $0x3d] sm:$0xff]
        %v5040 = vld [vmem:[#allocation2 + $0x45] sm:$0xff]
        %v5041 = vld [vmem:[#allocation2 + $0x4d] sm:$0xff]
        %v5042 = vld [vmem:[#allocation2 + $0x55] sm:$0xff]
        %v5043 = vpack.c.bf16 %v5030, %v5029
        %v5044 = vpack.c.bf16 %v5037, %v5036
        %v5045 = vpack.c.bf16 %v5032, %v5031
        %v5046 = vpack.c.bf16 %v5039, %v5038
        %v5047 = vpack.c.bf16 %v5034, %v5033
        %v5048 = vpack.c.bf16 %v5041, %v5040
        %v5049 = vpack.c.bf16 %v5035, %v5035
        %v5050 = vpack.c.bf16 %v5042, %v5042
        %s5051 = scalar_lea.vmem [#allocation8], 2304
        %v5052 = vld [vmem:[%s5051] sm:$0xf]
        %v5053 = vld [vmem:[%s5051 + $0x4] sm:$0xf]
        %v5054 = vld [vmem:[%s5051 + $0x8] sm:$0xf]
        %v5055 = vld [vmem:[%s5051 + $0xc] sm:$0xf]
        %v5056 = vld [vmem:[%s5051 + $0x10] sm:$0xf]
        %v5057 = vld [vmem:[%s5051 + $0x14] sm:$0xf]
        %v5058 = vld [vmem:[%s5051 + $0x18] sm:$0xf]
        %v5059 = vld [vmem:[%s5051 + $0x1c] sm:$0xf]
        %v5060 = vld [vmem:[%s5051 + $0x20] sm:$0xf]
        %v5061 = vld [vmem:[%s5051 + $0x24] sm:$0xf]
        %v5062 = vld [vmem:[%s5051 + $0x28] sm:$0xf]
        %v5063 = vld [vmem:[%s5051 + $0x2c] sm:$0xf]
        %v5064 = vld [vmem:[%s5051 + $0x30] sm:$0xf]
        %v5065 = vld [vmem:[%s5051 + $0x34] sm:$0xf]
        %v5066 = vld [vmem:[%s5051 + $0x38] sm:$0xf]
        %v5067 = vld [vmem:[%s5051 + $0x3c] sm:$0xf]
        %v5068 = vld [vmem:[%s5051 + $0x40] sm:$0xf]
        %v5069 = vld [vmem:[%s5051 + $0x44] sm:$0xf]
        %v5070 = vld [vmem:[%s5051 + $0x48] sm:$0xf]
        %v5071 = vld [vmem:[%s5051 + $0x4c] sm:$0xf]
        %v5072 = vld [vmem:[%s5051 + $0x50] sm:$0xf]
        %v5073 = vld [vmem:[%s5051 + $0x54] sm:$0xf]
        %v5074 = vld [vmem:[%s5051 + $0x58] sm:$0xf]
        %v5075 = vld [vmem:[%s5051 + $0x5c] sm:$0xf]
        %v5076 = vld [vmem:[%s5051 + $0x60] sm:$0xf]
        %v5077 = vld [vmem:[%s5051 + $0x64] sm:$0xf]
        %v5078 = vld [vmem:[%s5051 + $0x68] sm:$0xf]
        %v5079 = vld [vmem:[%s5051 + $0x6c] sm:$0xf]
        %v5080 = vld [vmem:[%s5051 + $0x70] sm:$0xf]
        %v5081 = vld [vmem:[%s5051 + $0x74] sm:$0xf]
        %v5082 = vld [vmem:[%s5051 + $0x78] sm:$0xf]
        %v5083 = vld [vmem:[%s5051 + $0x7c] sm:$0xf]
        %v5116 = vunpack.c.l.b16 %v5052
        %v5117 = vunpack.c.l.b16 %v5053
        %v5118 = vunpack.c.l.b16 %v5054
        %v5119 = vunpack.c.l.b16 %v5055
        %v5120 = vunpack.c.l.b16 %v5056
        %v5121 = vunpack.c.l.b16 %v5057
        %v5122 = vunpack.c.l.b16 %v5058
        %v5123 = vunpack.c.l.b16 %v5059
        %v5124 = vunpack.c.l.b16 %v5060
        %v5125 = vunpack.c.l.b16 %v5061
        %v5126 = vunpack.c.l.b16 %v5062
        %v5127 = vunpack.c.l.b16 %v5063
        %v5128 = vunpack.c.l.b16 %v5064
        %v5129 = vunpack.c.l.b16 %v5065
        %v5130 = vunpack.c.l.b16 %v5066
        %v5131 = vunpack.c.l.b16 %v5067
        %v5132 = vunpack.c.l.b16 %v5068
        %v5133 = vunpack.c.l.b16 %v5069
        %v5134 = vunpack.c.l.b16 %v5070
        %v5135 = vunpack.c.l.b16 %v5071
        %v5136 = vunpack.c.l.b16 %v5072
        %v5137 = vunpack.c.l.b16 %v5073
        %v5138 = vunpack.c.l.b16 %v5074
        %v5139 = vunpack.c.l.b16 %v5075
        %v5140 = vunpack.c.l.b16 %v5076
        %v5141 = vunpack.c.l.b16 %v5077
        %v5142 = vunpack.c.l.b16 %v5078
        %v5143 = vunpack.c.l.b16 %v5079
        %v5144 = vunpack.c.l.b16 %v5080
        %v5145 = vunpack.c.l.b16 %v5081
        %v5146 = vunpack.c.l.b16 %v5082
        %v5147 = vunpack.c.l.b16 %v5083
        %v5148 = vpack.c.b16 %v5117, %v5116
        %v5149 = vpack.c.b16 %v5119, %v5118
        %v5150 = vpack.c.b16 %v5121, %v5120
        %v5151 = vpack.c.b16 %v5123, %v5122
        %v5152 = vpack.c.b16 %v5125, %v5124
        %v5153 = vpack.c.b16 %v5127, %v5126
        %v5154 = vpack.c.b16 %v5129, %v5128
        %v5155 = vpack.c.b16 %v5131, %v5130
        %v5156 = vpack.c.b16 %v5133, %v5132
        %v5157 = vpack.c.b16 %v5135, %v5134
        %v5158 = vpack.c.b16 %v5137, %v5136
        %v5159 = vpack.c.b16 %v5139, %v5138
        %v5160 = vpack.c.b16 %v5141, %v5140
        %v5161 = vpack.c.b16 %v5143, %v5142
        %v5162 = vpack.c.b16 %v5145, %v5144
        %v5163 = vpack.c.b16 %v5147, %v5146
        %5180 = vmatprep.subr.bf16.mxu0 0
        %5181 = vmatpush1.bf16.msra.mxu0 %v5148
        %5182 = vmatprep.subr.bf16.mxu0 0
        %5183 = vmatpush1.bf16.msra.mxu0 %v5149
        %5184 = vmatprep.subr.bf16.mxu0 0
        %5185 = vmatpush1.bf16.msra.mxu0 %v5150
        %5186 = vmatprep.subr.bf16.mxu0 0
        %5187 = vmatpush1.bf16.msra.mxu0 %v5151
        %5188 = vmatprep.subr.bf16.mxu0 0
        %5189 = vmatpush1.bf16.msra.mxu0 %v5152
        %5190 = vmatprep.subr.bf16.mxu0 0
        %5191 = vmatpush1.bf16.msra.mxu0 %v5153
        %5192 = vmatprep.subr.bf16.mxu0 0
        %5193 = vmatpush1.bf16.msra.mxu0 %v5154
        %5194 = vmatprep.subr.bf16.mxu0 0
        %5195 = vmatpush1.bf16.msra.mxu0 %v5155
        %5196 = vmatprep.subr.bf16.mxu0 0
        %5197 = vmatpush1.bf16.msra.mxu0 %v5156
        %5198 = vmatprep.subr.bf16.mxu0 0
        %5199 = vmatpush1.bf16.msra.mxu0 %v5157
        %5200 = vmatprep.subr.bf16.mxu0 0
        %5201 = vmatpush1.bf16.msra.mxu0 %v5158
        %5202 = vmatprep.subr.bf16.mxu0 0
        %5203 = vmatpush1.bf16.msra.mxu0 %v5159
        %5204 = vmatprep.subr.bf16.mxu0 0
        %5205 = vmatpush1.bf16.msra.mxu0 %v5160
        %5206 = vmatprep.subr.bf16.mxu0 0
        %5207 = vmatpush1.bf16.msra.mxu0 %v5161
        %5208 = vmatprep.subr.bf16.mxu0 0
        %5209 = vmatpush1.bf16.msra.mxu0 %v5162
        %5210 = vmatprep.subr.bf16.mxu0 0
        %5211 = vmatpush1.bf16.msra.mxu0 %v5163
        %5212 = vmatprep.mubr.bf16.mxu0 %v5044
        %5213 = vmatmul.mubr.bf16.gmra.mrb[0].mxu0 %v5043
        %v5214 = vpop.f32.mrb[0].mxu0
        %v5215 = vadd.f32 0.0, %v5214
        %v5216 = vpop.f32.mrb[0].mxu0
        %v5217 = vpop.f32.mrb[0].mxu0
        %v5218 = vadd.f32 0.0, %v5217
        %v5219 = vpop.f32.mrb[0].mxu0
        %5220 = vmatprep.mubr.bf16.mxu0 %v5046
        %5221 = vmatmul.mubr.bf16.gmra.mrb[0].mxu0 %v5045
        %v5222 = vpop.f32.mrb[0].mxu0
        %v5223 = vadd.f32 0.0, %v5222
        %v5224 = vpop.f32.mrb[0].mxu0
        %v5225 = vpop.f32.mrb[0].mxu0
        %v5226 = vadd.f32 0.0, %v5225
        %v5227 = vpop.f32.mrb[0].mxu0
        %5228 = vmatprep.mubr.bf16.mxu0 %v5048
        %5229 = vmatmul.mubr.bf16.gmra.mrb[0].mxu0 %v5047
        %v5230 = vpop.f32.mrb[0].mxu0
        %v5231 = vadd.f32 0.0, %v5230
        %v5232 = vpop.f32.mrb[0].mxu0
        %v5233 = vpop.f32.mrb[0].mxu0
        %v5234 = vadd.f32 0.0, %v5233
        %v5235 = vpop.f32.mrb[0].mxu0
        %5236 = vmatprep.mubr.bf16.mxu0 %v5050
        %5237 = vmatmul.mubr.bf16.gmra.mrb[0].mxu0 %v5049
        %v5238 = vpop.f32.mrb[0].mxu0
        %v5239 = vadd.f32 0.0, %v5238
        %v5240 = vpop.f32.mrb[0].mxu0
        %v5241 = vpop.f32.mrb[0].mxu0
        %v5242 = vpop.f32.mrb[0].mxu0
        %5243 = vdwg.mxu0
        %v5244 = vadd.f32 %v5022, %v5215
        %v5245 = vadd.f32 %v5023, %v5218
        %v5246 = vadd.f32 %v5024, %v5223
        %v5247 = vadd.f32 %v5025, %v5226
        %v5248 = vadd.f32 %v5026, %v5231
        %v5249 = vadd.f32 %v5027, %v5234
        %v5250 = vadd.f32 %v5028, %v5239
        %v5251 = vld [vmem:[#allocation2 + $0x26] sm:$0xff]
        %v5252 = vld [vmem:[#allocation2 + $0x2e] sm:$0xff]
        %v5253 = vld [vmem:[#allocation2 + $0x36] sm:$0xff]
        %v5254 = vld [vmem:[#allocation2 + $0x3e] sm:$0xff]
        %v5255 = vld [vmem:[#allocation2 + $0x46] sm:$0xff]
        %v5256 = vld [vmem:[#allocation2 + $0x4e] sm:$0xff]
        %v5257 = vld [vmem:[#allocation2 + $0x56] sm:$0xff]
        %v5258 = vld [vmem:[#allocation2 + $0x27] sm:$0xff]
        %v5259 = vld [vmem:[#allocation2 + $0x2f] sm:$0xff]
        %v5260 = vld [vmem:[#allocation2 + $0x37] sm:$0xff]
        %v5261 = vld [vmem:[#allocation2 + $0x3f] sm:$0xff]
        %v5262 = vld [vmem:[#allocation2 + $0x47] sm:$0xff]
        %v5263 = vld [vmem:[#allocation2 + $0x4f] sm:$0xff]
        %v5264 = vld [vmem:[#allocation2 + $0x57] sm:$0xff]
        %v5265 = vpack.c.bf16 %v5252, %v5251
        %v5266 = vpack.c.bf16 %v5259, %v5258
        %v5267 = vpack.c.bf16 %v5254, %v5253
        %v5268 = vpack.c.bf16 %v5261, %v5260
        %v5269 = vpack.c.bf16 %v5256, %v5255
        %v5270 = vpack.c.bf16 %v5263, %v5262
        %v5271 = vpack.c.bf16 %v5257, %v5257
        %v5272 = vpack.c.bf16 %v5264, %v5264
        %s5273 = scalar_lea.vmem [#allocation8], 2432
        %v5274 = vld [vmem:[%s5273] sm:$0xf]
        %v5275 = vld [vmem:[%s5273 + $0x4] sm:$0xf]
        %v5276 = vld [vmem:[%s5273 + $0x8] sm:$0xf]
        %v5277 = vld [vmem:[%s5273 + $0xc] sm:$0xf]
        %v5278 = vld [vmem:[%s5273 + $0x10] sm:$0xf]
        %v5279 = vld [vmem:[%s5273 + $0x14] sm:$0xf]
        %v5280 = vld [vmem:[%s5273 + $0x18] sm:$0xf]
        %v5281 = vld [vmem:[%s5273 + $0x1c] sm:$0xf]
        %v5282 = vld [vmem:[%s5273 + $0x20] sm:$0xf]
        %v5283 = vld [vmem:[%s5273 + $0x24] sm:$0xf]
        %v5284 = vld [vmem:[%s5273 + $0x28] sm:$0xf]
        %v5285 = vld [vmem:[%s5273 + $0x2c] sm:$0xf]
        %v5286 = vld [vmem:[%s5273 + $0x30] sm:$0xf]
        %v5287 = vld [vmem:[%s5273 + $0x34] sm:$0xf]
        %v5288 = vld [vmem:[%s5273 + $0x38] sm:$0xf]
        %v5289 = vld [vmem:[%s5273 + $0x3c] sm:$0xf]
        %v5290 = vld [vmem:[%s5273 + $0x40] sm:$0xf]
        %v5291 = vld [vmem:[%s5273 + $0x44] sm:$0xf]
        %v5292 = vld [vmem:[%s5273 + $0x48] sm:$0xf]
        %v5293 = vld [vmem:[%s5273 + $0x4c] sm:$0xf]
        %v5294 = vld [vmem:[%s5273 + $0x50] sm:$0xf]
        %v5295 = vld [vmem:[%s5273 + $0x54] sm:$0xf]
        %v5296 = vld [vmem:[%s5273 + $0x58] sm:$0xf]
        %v5297 = vld [vmem:[%s5273 + $0x5c] sm:$0xf]
        %v5298 = vld [vmem:[%s5273 + $0x60] sm:$0xf]
        %v5299 = vld [vmem:[%s5273 + $0x64] sm:$0xf]
        %v5300 = vld [vmem:[%s5273 + $0x68] sm:$0xf]
        %v5301 = vld [vmem:[%s5273 + $0x6c] sm:$0xf]
        %v5302 = vld [vmem:[%s5273 + $0x70] sm:$0xf]
        %v5303 = vld [vmem:[%s5273 + $0x74] sm:$0xf]
        %v5304 = vld [vmem:[%s5273 + $0x78] sm:$0xf]
        %v5305 = vld [vmem:[%s5273 + $0x7c] sm:$0xf]
        %v5338 = vunpack.c.l.b16 %v5274
        %v5339 = vunpack.c.l.b16 %v5275
        %v5340 = vunpack.c.l.b16 %v5276
        %v5341 = vunpack.c.l.b16 %v5277
        %v5342 = vunpack.c.l.b16 %v5278
        %v5343 = vunpack.c.l.b16 %v5279
        %v5344 = vunpack.c.l.b16 %v5280
        %v5345 = vunpack.c.l.b16 %v5281
        %v5346 = vunpack.c.l.b16 %v5282
        %v5347 = vunpack.c.l.b16 %v5283
        %v5348 = vunpack.c.l.b16 %v5284
        %v5349 = vunpack.c.l.b16 %v5285
        %v5350 = vunpack.c.l.b16 %v5286
        %v5351 = vunpack.c.l.b16 %v5287
        %v5352 = vunpack.c.l.b16 %v5288
        %v5353 = vunpack.c.l.b16 %v5289
        %v5354 = vunpack.c.l.b16 %v5290
        %v5355 = vunpack.c.l.b16 %v5291
        %v5356 = vunpack.c.l.b16 %v5292
        %v5357 = vunpack.c.l.b16 %v5293
        %v5358 = vunpack.c.l.b16 %v5294
        %v5359 = vunpack.c.l.b16 %v5295
        %v5360 = vunpack.c.l.b16 %v5296
        %v5361 = vunpack.c.l.b16 %v5297
        %v5362 = vunpack.c.l.b16 %v5298
        %v5363 = vunpack.c.l.b16 %v5299
        %v5364 = vunpack.c.l.b16 %v5300
        %v5365 = vunpack.c.l.b16 %v5301
        %v5366 = vunpack.c.l.b16 %v5302
        %v5367 = vunpack.c.l.b16 %v5303
        %v5368 = vunpack.c.l.b16 %v5304
        %v5369 = vunpack.c.l.b16 %v5305
        %v5370 = vpack.c.b16 %v5339, %v5338
        %v5371 = vpack.c.b16 %v5341, %v5340
        %v5372 = vpack.c.b16 %v5343, %v5342
        %v5373 = vpack.c.b16 %v5345, %v5344
        %v5374 = vpack.c.b16 %v5347, %v5346
        %v5375 = vpack.c.b16 %v5349, %v5348
        %v5376 = vpack.c.b16 %v5351, %v5350
        %v5377 = vpack.c.b16 %v5353, %v5352
        %v5378 = vpack.c.b16 %v5355, %v5354
        %v5379 = vpack.c.b16 %v5357, %v5356
        %v5380 = vpack.c.b16 %v5359, %v5358
        %v5381 = vpack.c.b16 %v5361, %v5360
        %v5382 = vpack.c.b16 %v5363, %v5362
        %v5383 = vpack.c.b16 %v5365, %v5364
        %v5384 = vpack.c.b16 %v5367, %v5366
        %v5385 = vpack.c.b16 %v5369, %v5368
        %5402 = vmatprep.subr.bf16.mxu0 0
        %5403 = vmatpush1.bf16.msra.mxu0 %v5370
        %5404 = vmatprep.subr.bf16.mxu0 0
        %5405 = vmatpush1.bf16.msra.mxu0 %v5371
        %5406 = vmatprep.subr.bf16.mxu0 0
        %5407 = vmatpush1.bf16.msra.mxu0 %v5372
        %5408 = vmatprep.subr.bf16.mxu0 0
        %5409 = vmatpush1.bf16.msra.mxu0 %v5373
        %5410 = vmatprep.subr.bf16.mxu0 0
        %5411 = vmatpush1.bf16.msra.mxu0 %v5374
        %5412 = vmatprep.subr.bf16.mxu0 0
        %5413 = vmatpush1.bf16.msra.mxu0 %v5375
        %5414 = vmatprep.subr.bf16.mxu0 0
        %5415 = vmatpush1.bf16.msra.mxu0 %v5376
        %5416 = vmatprep.subr.bf16.mxu0 0
        %5417 = vmatpush1.bf16.msra.mxu0 %v5377
        %5418 = vmatprep.subr.bf16.mxu0 0
        %5419 = vmatpush1.bf16.msra.mxu0 %v5378
        %5420 = vmatprep.subr.bf16.mxu0 0
        %5421 = vmatpush1.bf16.msra.mxu0 %v5379
        %5422 = vmatprep.subr.bf16.mxu0 0
        %5423 = vmatpush1.bf16.msra.mxu0 %v5380
        %5424 = vmatprep.subr.bf16.mxu0 0
        %5425 = vmatpush1.bf16.msra.mxu0 %v5381
        %5426 = vmatprep.subr.bf16.mxu0 0
        %5427 = vmatpush1.bf16.msra.mxu0 %v5382
        %5428 = vmatprep.subr.bf16.mxu0 0
        %5429 = vmatpush1.bf16.msra.mxu0 %v5383
        %5430 = vmatprep.subr.bf16.mxu0 0
        %5431 = vmatpush1.bf16.msra.mxu0 %v5384
        %5432 = vmatprep.subr.bf16.mxu0 0
        %5433 = vmatpush1.bf16.msra.mxu0 %v5385
        %5434 = vmatprep.mubr.bf16.mxu0 %v5266
        %5435 = vmatmul.mubr.bf16.gmra.mrb[0].mxu0 %v5265
        %v5436 = vpop.f32.mrb[0].mxu0
        %v5437 = vadd.f32 0.0, %v5436
        %v5438 = vpop.f32.mrb[0].mxu0
        %v5439 = vpop.f32.mrb[0].mxu0
        %v5440 = vadd.f32 0.0, %v5439
        %v5441 = vpop.f32.mrb[0].mxu0
        %5442 = vmatprep.mubr.bf16.mxu0 %v5268
        %5443 = vmatmul.mubr.bf16.gmra.mrb[0].mxu0 %v5267
        %v5444 = vpop.f32.mrb[0].mxu0
        %v5445 = vadd.f32 0.0, %v5444
        %v5446 = vpop.f32.mrb[0].mxu0
        %v5447 = vpop.f32.mrb[0].mxu0
        %v5448 = vadd.f32 0.0, %v5447
        %v5449 = vpop.f32.mrb[0].mxu0
        %5450 = vmatprep.mubr.bf16.mxu0 %v5270
        %5451 = vmatmul.mubr.bf16.gmra.mrb[0].mxu0 %v5269
        %v5452 = vpop.f32.mrb[0].mxu0
        %v5453 = vadd.f32 0.0, %v5452
        %v5454 = vpop.f32.mrb[0].mxu0
        %v5455 = vpop.f32.mrb[0].mxu0
        %v5456 = vadd.f32 0.0, %v5455
        %v5457 = vpop.f32.mrb[0].mxu0
        %5458 = vmatprep.mubr.bf16.mxu0 %v5272
        %5459 = vmatmul.mubr.bf16.gmra.mrb[0].mxu0 %v5271
        %v5460 = vpop.f32.mrb[0].mxu0
        %v5461 = vadd.f32 0.0, %v5460
        %v5462 = vpop.f32.mrb[0].mxu0
        %v5463 = vpop.f32.mrb[0].mxu0
        %v5464 = vpop.f32.mrb[0].mxu0
        %5465 = vdwg.mxu0
        %v5466 = vadd.f32 %v5244, %v5437
        %v5467 = vadd.f32 %v5245, %v5440
        %v5468 = vadd.f32 %v5246, %v5445
        %v5469 = vadd.f32 %v5247, %v5448
        %v5470 = vadd.f32 %v5248, %v5453
        %v5471 = vadd.f32 %v5249, %v5456
        %v5472 = vadd.f32 %v5250, %v5461
        %v5473 = vld [vmem:[#allocation2 + $0x28] sm:$0xff]
        %v5474 = vld [vmem:[#allocation2 + $0x30] sm:$0xff]
        %v5475 = vld [vmem:[#allocation2 + $0x38] sm:$0xff]
        %v5476 = vld [vmem:[#allocation2 + $0x40] sm:$0xff]
        %v5477 = vld [vmem:[#allocation2 + $0x48] sm:$0xff]
        %v5478 = vld [vmem:[#allocation2 + $0x50] sm:$0xff]
        %v5479 = vld [vmem:[#allocation2 + $0x58] sm:$0xff]
        %v5480 = vld [vmem:[#allocation2 + $0x29] sm:$0xff]
        %v5481 = vld [vmem:[#allocation2 + $0x31] sm:$0xff]
        %v5482 = vld [vmem:[#allocation2 + $0x39] sm:$0xff]
        %v5483 = vld [vmem:[#allocation2 + $0x41] sm:$0xff]
        %v5484 = vld [vmem:[#allocation2 + $0x49] sm:$0xff]
        %v5485 = vld [vmem:[#allocation2 + $0x51] sm:$0xff]
        %v5486 = vld [vmem:[#allocation2 + $0x59] sm:$0xff]
        %v5487 = vpack.c.bf16 %v5474, %v5473
        %v5488 = vpack.c.bf16 %v5481, %v5480
        %v5489 = vpack.c.bf16 %v5476, %v5475
        %v5490 = vpack.c.bf16 %v5483, %v5482
        %v5491 = vpack.c.bf16 %v5478, %v5477
        %v5492 = vpack.c.bf16 %v5485, %v5484
        %v5493 = vpack.c.bf16 %v5479, %v5479
        %v5494 = vpack.c.bf16 %v5486, %v5486
        %s5495 = scalar_lea.vmem [#allocation8], 2560
        %v5496 = vld [vmem:[%s5495] sm:$0xf]
        %v5497 = vld [vmem:[%s5495 + $0x4] sm:$0xf]
        %v5498 = vld [vmem:[%s5495 + $0x8] sm:$0xf]
        %v5499 = vld [vmem:[%s5495 + $0xc] sm:$0xf]
        %v5500 = vld [vmem:[%s5495 + $0x10] sm:$0xf]
        %v5501 = vld [vmem:[%s5495 + $0x14] sm:$0xf]
        %v5502 = vld [vmem:[%s5495 + $0x18] sm:$0xf]
        %v5503 = vld [vmem:[%s5495 + $0x1c] sm:$0xf]
        %v5504 = vld [vmem:[%s5495 + $0x20] sm:$0xf]
        %v5505 = vld [vmem:[%s5495 + $0x24] sm:$0xf]
        %v5506 = vld [vmem:[%s5495 + $0x28] sm:$0xf]
        %v5507 = vld [vmem:[%s5495 + $0x2c] sm:$0xf]
        %v5508 = vld [vmem:[%s5495 + $0x30] sm:$0xf]
        %v5509 = vld [vmem:[%s5495 + $0x34] sm:$0xf]
        %v5510 = vld [vmem:[%s5495 + $0x38] sm:$0xf]
        %v5511 = vld [vmem:[%s5495 + $0x3c] sm:$0xf]
        %v5512 = vld [vmem:[%s5495 + $0x40] sm:$0xf]
        %v5513 = vld [vmem:[%s5495 + $0x44] sm:$0xf]
        %v5514 = vld [vmem:[%s5495 + $0x48] sm:$0xf]
        %v5515 = vld [vmem:[%s5495 + $0x4c] sm:$0xf]
        %v5516 = vld [vmem:[%s5495 + $0x50] sm:$0xf]
        %v5517 = vld [vmem:[%s5495 + $0x54] sm:$0xf]
        %v5518 = vld [vmem:[%s5495 + $0x58] sm:$0xf]
        %v5519 = vld [vmem:[%s5495 + $0x5c] sm:$0xf]
        %v5520 = vld [vmem:[%s5495 + $0x60] sm:$0xf]
        %v5521 = vld [vmem:[%s5495 + $0x64] sm:$0xf]
        %v5522 = vld [vmem:[%s5495 + $0x68] sm:$0xf]
        %v5523 = vld [vmem:[%s5495 + $0x6c] sm:$0xf]
        %v5524 = vld [vmem:[%s5495 + $0x70] sm:$0xf]
        %v5525 = vld [vmem:[%s5495 + $0x74] sm:$0xf]
        %v5526 = vld [vmem:[%s5495 + $0x78] sm:$0xf]
        %v5527 = vld [vmem:[%s5495 + $0x7c] sm:$0xf]
        %v5560 = vunpack.c.l.b16 %v5496
        %v5561 = vunpack.c.l.b16 %v5497
        %v5562 = vunpack.c.l.b16 %v5498
        %v5563 = vunpack.c.l.b16 %v5499
        %v5564 = vunpack.c.l.b16 %v5500
        %v5565 = vunpack.c.l.b16 %v5501
        %v5566 = vunpack.c.l.b16 %v5502
        %v5567 = vunpack.c.l.b16 %v5503
        %v5568 = vunpack.c.l.b16 %v5504
        %v5569 = vunpack.c.l.b16 %v5505
        %v5570 = vunpack.c.l.b16 %v5506
        %v5571 = vunpack.c.l.b16 %v5507
        %v5572 = vunpack.c.l.b16 %v5508
        %v5573 = vunpack.c.l.b16 %v5509
        %v5574 = vunpack.c.l.b16 %v5510
        %v5575 = vunpack.c.l.b16 %v5511
        %v5576 = vunpack.c.l.b16 %v5512
        %v5577 = vunpack.c.l.b16 %v5513
        %v5578 = vunpack.c.l.b16 %v5514
        %v5579 = vunpack.c.l.b16 %v5515
        %v5580 = vunpack.c.l.b16 %v5516
        %v5581 = vunpack.c.l.b16 %v5517
        %v5582 = vunpack.c.l.b16 %v5518
        %v5583 = vunpack.c.l.b16 %v5519
        %v5584 = vunpack.c.l.b16 %v5520
        %v5585 = vunpack.c.l.b16 %v5521
        %v5586 = vunpack.c.l.b16 %v5522
        %v5587 = vunpack.c.l.b16 %v5523
        %v5588 = vunpack.c.l.b16 %v5524
        %v5589 = vunpack.c.l.b16 %v5525
        %v5590 = vunpack.c.l.b16 %v5526
        %v5591 = vunpack.c.l.b16 %v5527
        %v5592 = vpack.c.b16 %v5561, %v5560
        %v5593 = vpack.c.b16 %v5563, %v5562
        %v5594 = vpack.c.b16 %v5565, %v5564
        %v5595 = vpack.c.b16 %v5567, %v5566
        %v5596 = vpack.c.b16 %v5569, %v5568
        %v5597 = vpack.c.b16 %v5571, %v5570
        %v5598 = vpack.c.b16 %v5573, %v5572
        %v5599 = vpack.c.b16 %v5575, %v5574
        %v5600 = vpack.c.b16 %v5577, %v5576
        %v5601 = vpack.c.b16 %v5579, %v5578
        %v5602 = vpack.c.b16 %v5581, %v5580
        %v5603 = vpack.c.b16 %v5583, %v5582
        %v5604 = vpack.c.b16 %v5585, %v5584
        %v5605 = vpack.c.b16 %v5587, %v5586
        %v5606 = vpack.c.b16 %v5589, %v5588
        %v5607 = vpack.c.b16 %v5591, %v5590
        %5624 = vmatprep.subr.bf16.mxu0 0
        %5625 = vmatpush1.bf16.msra.mxu0 %v5592
        %5626 = vmatprep.subr.bf16.mxu0 0
        %5627 = vmatpush1.bf16.msra.mxu0 %v5593
        %5628 = vmatprep.subr.bf16.mxu0 0
        %5629 = vmatpush1.bf16.msra.mxu0 %v5594
        %5630 = vmatprep.subr.bf16.mxu0 0
        %5631 = vmatpush1.bf16.msra.mxu0 %v5595
        %5632 = vmatprep.subr.bf16.mxu0 0
        %5633 = vmatpush1.bf16.msra.mxu0 %v5596
        %5634 = vmatprep.subr.bf16.mxu0 0
        %5635 = vmatpush1.bf16.msra.mxu0 %v5597
        %5636 = vmatprep.subr.bf16.mxu0 0
        %5637 = vmatpush1.bf16.msra.mxu0 %v5598
        %5638 = vmatprep.subr.bf16.mxu0 0
        %5639 = vmatpush1.bf16.msra.mxu0 %v5599
        %5640 = vmatprep.subr.bf16.mxu0 0
        %5641 = vmatpush1.bf16.msra.mxu0 %v5600
        %5642 = vmatprep.subr.bf16.mxu0 0
        %5643 = vmatpush1.bf16.msra.mxu0 %v5601
        %5644 = vmatprep.subr.bf16.mxu0 0
        %5645 = vmatpush1.bf16.msra.mxu0 %v5602
        %5646 = vmatprep.subr.bf16.mxu0 0
        %5647 = vmatpush1.bf16.msra.mxu0 %v5603
        %5648 = vmatprep.subr.bf16.mxu0 0
        %5649 = vmatpush1.bf16.msra.mxu0 %v5604
        %5650 = vmatprep.subr.bf16.mxu0 0
        %5651 = vmatpush1.bf16.msra.mxu0 %v5605
        %5652 = vmatprep.subr.bf16.mxu0 0
        %5653 = vmatpush1.bf16.msra.mxu0 %v5606
        %5654 = vmatprep.subr.bf16.mxu0 0
        %5655 = vmatpush1.bf16.msra.mxu0 %v5607
        %5656 = vmatprep.mubr.bf16.mxu0 %v5488
        %5657 = vmatmul.mubr.bf16.gmra.mrb[0].mxu0 %v5487
        %v5658 = vpop.f32.mrb[0].mxu0
        %v5659 = vadd.f32 0.0, %v5658
        %v5660 = vpop.f32.mrb[0].mxu0
        %v5661 = vpop.f32.mrb[0].mxu0
        %v5662 = vadd.f32 0.0, %v5661
        %v5663 = vpop.f32.mrb[0].mxu0
        %5664 = vmatprep.mubr.bf16.mxu0 %v5490
        %5665 = vmatmul.mubr.bf16.gmra.mrb[0].mxu0 %v5489
        %v5666 = vpop.f32.mrb[0].mxu0
        %v5667 = vadd.f32 0.0, %v5666
        %v5668 = vpop.f32.mrb[0].mxu0
        %v5669 = vpop.f32.mrb[0].mxu0
        %v5670 = vadd.f32 0.0, %v5669
        %v5671 = vpop.f32.mrb[0].mxu0
        %5672 = vmatprep.mubr.bf16.mxu0 %v5492
        %5673 = vmatmul.mubr.bf16.gmra.mrb[0].mxu0 %v5491
        %v5674 = vpop.f32.mrb[0].mxu0
        %v5675 = vadd.f32 0.0, %v5674
        %v5676 = vpop.f32.mrb[0].mxu0
        %v5677 = vpop.f32.mrb[0].mxu0
        %v5678 = vadd.f32 0.0, %v5677
        %v5679 = vpop.f32.mrb[0].mxu0
        %5680 = vmatprep.mubr.bf16.mxu0 %v5494
        %5681 = vmatmul.mubr.bf16.gmra.mrb[0].mxu0 %v5493
        %v5682 = vpop.f32.mrb[0].mxu0
        %v5683 = vadd.f32 0.0, %v5682
        %v5684 = vpop.f32.mrb[0].mxu0
        %v5685 = vpop.f32.mrb[0].mxu0
        %v5686 = vpop.f32.mrb[0].mxu0
        %5687 = vdwg.mxu0
        %v5688 = vadd.f32 %v5466, %v5659
        %v5689 = vadd.f32 %v5467, %v5662
        %v5690 = vadd.f32 %v5468, %v5667
        %v5691 = vadd.f32 %v5469, %v5670
        %v5692 = vadd.f32 %v5470, %v5675
        %v5693 = vadd.f32 %v5471, %v5678
        %v5694 = vadd.f32 %v5472, %v5683
        %v5695 = vld [vmem:[#allocation2 + $0x2a] sm:$0xff]
        %v5696 = vld [vmem:[#allocation2 + $0x32] sm:$0xff]
        %v5697 = vld [vmem:[#allocation2 + $0x3a] sm:$0xff]
        %v5698 = vld [vmem:[#allocation2 + $0x42] sm:$0xff]
        %v5699 = vld [vmem:[#allocation2 + $0x4a] sm:$0xff]
        %v5700 = vld [vmem:[#allocation2 + $0x52] sm:$0xff]
        %v5701 = vld [vmem:[#allocation2 + $0x5a] sm:$0xff]
        %v5702 = vld [vmem:[#allocation2 + $0x2b] sm:$0xff]
        %v5703 = vld [vmem:[#allocation2 + $0x33] sm:$0xff]
        %v5704 = vld [vmem:[#allocation2 + $0x3b] sm:$0xff]
        %v5705 = vld [vmem:[#allocation2 + $0x43] sm:$0xff]
        %v5706 = vld [vmem:[#allocation2 + $0x4b] sm:$0xff]
        %v5707 = vld [vmem:[#allocation2 + $0x53] sm:$0xff]
        %v5708 = vld [vmem:[#allocation2 + $0x5b] sm:$0xff]
        %v5709 = vpack.c.bf16 %v5696, %v5695
        %v5710 = vpack.c.bf16 %v5703, %v5702
        %v5711 = vpack.c.bf16 %v5698, %v5697
        %v5712 = vpack.c.bf16 %v5705, %v5704
        %v5713 = vpack.c.bf16 %v5700, %v5699
        %v5714 = vpack.c.bf16 %v5707, %v5706
        %v5715 = vpack.c.bf16 %v5701, %v5701
        %v5716 = vpack.c.bf16 %v5708, %v5708
        %s5717 = scalar_lea.vmem [#allocation8], 2688
        %v5718 = vld [vmem:[%s5717] sm:$0xf]
        %v5719 = vld [vmem:[%s5717 + $0x4] sm:$0xf]
        %v5720 = vld [vmem:[%s5717 + $0x8] sm:$0xf]
        %v5721 = vld [vmem:[%s5717 + $0xc] sm:$0xf]
        %v5722 = vld [vmem:[%s5717 + $0x10] sm:$0xf]
        %v5723 = vld [vmem:[%s5717 + $0x14] sm:$0xf]
        %v5724 = vld [vmem:[%s5717 + $0x18] sm:$0xf]
        %v5725 = vld [vmem:[%s5717 + $0x1c] sm:$0xf]
        %v5726 = vld [vmem:[%s5717 + $0x20] sm:$0xf]
        %v5727 = vld [vmem:[%s5717 + $0x24] sm:$0xf]
        %v5728 = vld [vmem:[%s5717 + $0x28] sm:$0xf]
        %v5729 = vld [vmem:[%s5717 + $0x2c] sm:$0xf]
        %v5730 = vld [vmem:[%s5717 + $0x30] sm:$0xf]
        %v5731 = vld [vmem:[%s5717 + $0x34] sm:$0xf]
        %v5732 = vld [vmem:[%s5717 + $0x38] sm:$0xf]
        %v5733 = vld [vmem:[%s5717 + $0x3c] sm:$0xf]
        %v5734 = vld [vmem:[%s5717 + $0x40] sm:$0xf]
        %v5735 = vld [vmem:[%s5717 + $0x44] sm:$0xf]
        %v5736 = vld [vmem:[%s5717 + $0x48] sm:$0xf]
        %v5737 = vld [vmem:[%s5717 + $0x4c] sm:$0xf]
        %v5738 = vld [vmem:[%s5717 + $0x50] sm:$0xf]
        %v5739 = vld [vmem:[%s5717 + $0x54] sm:$0xf]
        %v5740 = vld [vmem:[%s5717 + $0x58] sm:$0xf]
        %v5741 = vld [vmem:[%s5717 + $0x5c] sm:$0xf]
        %v5742 = vld [vmem:[%s5717 + $0x60] sm:$0xf]
        %v5743 = vld [vmem:[%s5717 + $0x64] sm:$0xf]
        %v5744 = vld [vmem:[%s5717 + $0x68] sm:$0xf]
        %v5745 = vld [vmem:[%s5717 + $0x6c] sm:$0xf]
        %v5746 = vld [vmem:[%s5717 + $0x70] sm:$0xf]
        %v5747 = vld [vmem:[%s5717 + $0x74] sm:$0xf]
        %v5748 = vld [vmem:[%s5717 + $0x78] sm:$0xf]
        %v5749 = vld [vmem:[%s5717 + $0x7c] sm:$0xf]
        %v5782 = vunpack.c.l.b16 %v5718
        %v5783 = vunpack.c.l.b16 %v5719
        %v5784 = vunpack.c.l.b16 %v5720
        %v5785 = vunpack.c.l.b16 %v5721
        %v5786 = vunpack.c.l.b16 %v5722
        %v5787 = vunpack.c.l.b16 %v5723
        %v5788 = vunpack.c.l.b16 %v5724
        %v5789 = vunpack.c.l.b16 %v5725
        %v5790 = vunpack.c.l.b16 %v5726
        %v5791 = vunpack.c.l.b16 %v5727
        %v5792 = vunpack.c.l.b16 %v5728
        %v5793 = vunpack.c.l.b16 %v5729
        %v5794 = vunpack.c.l.b16 %v5730
        %v5795 = vunpack.c.l.b16 %v5731
        %v5796 = vunpack.c.l.b16 %v5732
        %v5797 = vunpack.c.l.b16 %v5733
        %v5798 = vunpack.c.l.b16 %v5734
        %v5799 = vunpack.c.l.b16 %v5735
        %v5800 = vunpack.c.l.b16 %v5736
        %v5801 = vunpack.c.l.b16 %v5737
        %v5802 = vunpack.c.l.b16 %v5738
        %v5803 = vunpack.c.l.b16 %v5739
        %v5804 = vunpack.c.l.b16 %v5740
        %v5805 = vunpack.c.l.b16 %v5741
        %v5806 = vunpack.c.l.b16 %v5742
        %v5807 = vunpack.c.l.b16 %v5743
        %v5808 = vunpack.c.l.b16 %v5744
        %v5809 = vunpack.c.l.b16 %v5745
        %v5810 = vunpack.c.l.b16 %v5746
        %v5811 = vunpack.c.l.b16 %v5747
        %v5812 = vunpack.c.l.b16 %v5748
        %v5813 = vunpack.c.l.b16 %v5749
        %v5814 = vpack.c.b16 %v5783, %v5782
        %v5815 = vpack.c.b16 %v5785, %v5784
        %v5816 = vpack.c.b16 %v5787, %v5786
        %v5817 = vpack.c.b16 %v5789, %v5788
        %v5818 = vpack.c.b16 %v5791, %v5790
        %v5819 = vpack.c.b16 %v5793, %v5792
        %v5820 = vpack.c.b16 %v5795, %v5794
        %v5821 = vpack.c.b16 %v5797, %v5796
        %v5822 = vpack.c.b16 %v5799, %v5798
        %v5823 = vpack.c.b16 %v5801, %v5800
        %v5824 = vpack.c.b16 %v5803, %v5802
        %v5825 = vpack.c.b16 %v5805, %v5804
        %v5826 = vpack.c.b16 %v5807, %v5806
        %v5827 = vpack.c.b16 %v5809, %v5808
        %v5828 = vpack.c.b16 %v5811, %v5810
        %v5829 = vpack.c.b16 %v5813, %v5812
        %5846 = vmatprep.subr.bf16.mxu0 0
        %5847 = vmatpush1.bf16.msra.mxu0 %v5814
        %5848 = vmatprep.subr.bf16.mxu0 0
        %5849 = vmatpush1.bf16.msra.mxu0 %v5815
        %5850 = vmatprep.subr.bf16.mxu0 0
        %5851 = vmatpush1.bf16.msra.mxu0 %v5816
        %5852 = vmatprep.subr.bf16.mxu0 0
        %5853 = vmatpush1.bf16.msra.mxu0 %v5817
        %5854 = vmatprep.subr.bf16.mxu0 0
        %5855 = vmatpush1.bf16.msra.mxu0 %v5818
        %5856 = vmatprep.subr.bf16.mxu0 0
        %5857 = vmatpush1.bf16.msra.mxu0 %v5819
        %5858 = vmatprep.subr.bf16.mxu0 0
        %5859 = vmatpush1.bf16.msra.mxu0 %v5820
        %5860 = vmatprep.subr.bf16.mxu0 0
        %5861 = vmatpush1.bf16.msra.mxu0 %v5821
        %5862 = vmatprep.subr.bf16.mxu0 0
        %5863 = vmatpush1.bf16.msra.mxu0 %v5822
        %5864 = vmatprep.subr.bf16.mxu0 0
        %5865 = vmatpush1.bf16.msra.mxu0 %v5823
        %5866 = vmatprep.subr.bf16.mxu0 0
        %5867 = vmatpush1.bf16.msra.mxu0 %v5824
        %5868 = vmatprep.subr.bf16.mxu0 0
        %5869 = vmatpush1.bf16.msra.mxu0 %v5825
        %5870 = vmatprep.subr.bf16.mxu0 0
        %5871 = vmatpush1.bf16.msra.mxu0 %v5826
        %5872 = vmatprep.subr.bf16.mxu0 0
        %5873 = vmatpush1.bf16.msra.mxu0 %v5827
        %5874 = vmatprep.subr.bf16.mxu0 0
        %5875 = vmatpush1.bf16.msra.mxu0 %v5828
        %5876 = vmatprep.subr.bf16.mxu0 0
        %5877 = vmatpush1.bf16.msra.mxu0 %v5829
        %5878 = vmatprep.mubr.bf16.mxu0 %v5710
        %5879 = vmatmul.mubr.bf16.gmra.mrb[0].mxu0 %v5709
        %v5880 = vpop.f32.mrb[0].mxu0
        %v5881 = vadd.f32 0.0, %v5880
        %v5882 = vpop.f32.mrb[0].mxu0
        %v5883 = vpop.f32.mrb[0].mxu0
        %v5884 = vadd.f32 0.0, %v5883
        %v5885 = vpop.f32.mrb[0].mxu0
        %5886 = vmatprep.mubr.bf16.mxu0 %v5712
        %5887 = vmatmul.mubr.bf16.gmra.mrb[0].mxu0 %v5711
        %v5888 = vpop.f32.mrb[0].mxu0
        %v5889 = vadd.f32 0.0, %v5888
        %v5890 = vpop.f32.mrb[0].mxu0
        %v5891 = vpop.f32.mrb[0].mxu0
        %v5892 = vadd.f32 0.0, %v5891
        %v5893 = vpop.f32.mrb[0].mxu0
        %5894 = vmatprep.mubr.bf16.mxu0 %v5714
        %5895 = vmatmul.mubr.bf16.gmra.mrb[0].mxu0 %v5713
        %v5896 = vpop.f32.mrb[0].mxu0
        %v5897 = vadd.f32 0.0, %v5896
        %v5898 = vpop.f32.mrb[0].mxu0
        %v5899 = vpop.f32.mrb[0].mxu0
        %v5900 = vadd.f32 0.0, %v5899
        %v5901 = vpop.f32.mrb[0].mxu0
        %5902 = vmatprep.mubr.bf16.mxu0 %v5716
        %5903 = vmatmul.mubr.bf16.gmra.mrb[0].mxu0 %v5715
        %v5904 = vpop.f32.mrb[0].mxu0
        %v5905 = vadd.f32 0.0, %v5904
        %v5906 = vpop.f32.mrb[0].mxu0
        %v5907 = vpop.f32.mrb[0].mxu0
        %v5908 = vpop.f32.mrb[0].mxu0
        %5909 = vdwg.mxu0
        %v5910 = vadd.f32 %v5688, %v5881
        %v5911 = vadd.f32 %v5689, %v5884
        %v5912 = vadd.f32 %v5690, %v5889
        %v5913 = vadd.f32 %v5691, %v5892
        %v5914 = vadd.f32 %v5692, %v5897
        %v5915 = vadd.f32 %v5693, %v5900
        %v5916 = vadd.f32 %v5694, %v5905
        %v5917 = vld [vmem:[#allocation2 + $0x2c] sm:$0xff]
        %v5918 = vld [vmem:[#allocation2 + $0x34] sm:$0xff]
        %v5919 = vld [vmem:[#allocation2 + $0x3c] sm:$0xff]
        %v5920 = vld [vmem:[#allocation2 + $0x44] sm:$0xff]
        %v5921 = vld [vmem:[#allocation2 + $0x4c] sm:$0xff]
        %v5922 = vld [vmem:[#allocation2 + $0x54] sm:$0xff]
        %v5923 = vld [vmem:[#allocation2 + $0x5c] sm:$0xff]
        %v5924 = vld [vmem:[#allocation2 + $0x2d] sm:$0xff]
        %v5925 = vld [vmem:[#allocation2 + $0x35] sm:$0xff]
        %v5926 = vld [vmem:[#allocation2 + $0x3d] sm:$0xff]
        %v5927 = vld [vmem:[#allocation2 + $0x45] sm:$0xff]
        %v5928 = vld [vmem:[#allocation2 + $0x4d] sm:$0xff]
        %v5929 = vld [vmem:[#allocation2 + $0x55] sm:$0xff]
        %v5930 = vld [vmem:[#allocation2 + $0x5d] sm:$0xff]
        %v5931 = vpack.c.bf16 %v5918, %v5917
        %v5932 = vpack.c.bf16 %v5925, %v5924
        %v5933 = vpack.c.bf16 %v5920, %v5919
        %v5934 = vpack.c.bf16 %v5927, %v5926
        %v5935 = vpack.c.bf16 %v5922, %v5921
        %v5936 = vpack.c.bf16 %v5929, %v5928
        %v5937 = vpack.c.bf16 %v5923, %v5923
        %v5938 = vpack.c.bf16 %v5930, %v5930
        %s5939 = scalar_lea.vmem [#allocation8], 2816
        %v5940 = vld [vmem:[%s5939] sm:$0xf]
        %v5941 = vld [vmem:[%s5939 + $0x4] sm:$0xf]
        %v5942 = vld [vmem:[%s5939 + $0x8] sm:$0xf]
        %v5943 = vld [vmem:[%s5939 + $0xc] sm:$0xf]
        %v5944 = vld [vmem:[%s5939 + $0x10] sm:$0xf]
        %v5945 = vld [vmem:[%s5939 + $0x14] sm:$0xf]
        %v5946 = vld [vmem:[%s5939 + $0x18] sm:$0xf]
        %v5947 = vld [vmem:[%s5939 + $0x1c] sm:$0xf]
        %v5948 = vld [vmem:[%s5939 + $0x20] sm:$0xf]
        %v5949 = vld [vmem:[%s5939 + $0x24] sm:$0xf]
        %v5950 = vld [vmem:[%s5939 + $0x28] sm:$0xf]
        %v5951 = vld [vmem:[%s5939 + $0x2c] sm:$0xf]
        %v5952 = vld [vmem:[%s5939 + $0x30] sm:$0xf]
        %v5953 = vld [vmem:[%s5939 + $0x34] sm:$0xf]
        %v5954 = vld [vmem:[%s5939 + $0x38] sm:$0xf]
        %v5955 = vld [vmem:[%s5939 + $0x3c] sm:$0xf]
        %v5956 = vld [vmem:[%s5939 + $0x40] sm:$0xf]
        %v5957 = vld [vmem:[%s5939 + $0x44] sm:$0xf]
        %v5958 = vld [vmem:[%s5939 + $0x48] sm:$0xf]
        %v5959 = vld [vmem:[%s5939 + $0x4c] sm:$0xf]
        %v5960 = vld [vmem:[%s5939 + $0x50] sm:$0xf]
        %v5961 = vld [vmem:[%s5939 + $0x54] sm:$0xf]
        %v5962 = vld [vmem:[%s5939 + $0x58] sm:$0xf]
        %v5963 = vld [vmem:[%s5939 + $0x5c] sm:$0xf]
        %v5964 = vld [vmem:[%s5939 + $0x60] sm:$0xf]
        %v5965 = vld [vmem:[%s5939 + $0x64] sm:$0xf]
        %v5966 = vld [vmem:[%s5939 + $0x68] sm:$0xf]
        %v5967 = vld [vmem:[%s5939 + $0x6c] sm:$0xf]
        %v5968 = vld [vmem:[%s5939 + $0x70] sm:$0xf]
        %v5969 = vld [vmem:[%s5939 + $0x74] sm:$0xf]
        %v5970 = vld [vmem:[%s5939 + $0x78] sm:$0xf]
        %v5971 = vld [vmem:[%s5939 + $0x7c] sm:$0xf]
        %v6004 = vunpack.c.l.b16 %v5940
        %v6005 = vunpack.c.l.b16 %v5941
        %v6006 = vunpack.c.l.b16 %v5942
        %v6007 = vunpack.c.l.b16 %v5943
        %v6008 = vunpack.c.l.b16 %v5944
        %v6009 = vunpack.c.l.b16 %v5945
        %v6010 = vunpack.c.l.b16 %v5946
        %v6011 = vunpack.c.l.b16 %v5947
        %v6012 = vunpack.c.l.b16 %v5948
        %v6013 = vunpack.c.l.b16 %v5949
        %v6014 = vunpack.c.l.b16 %v5950
        %v6015 = vunpack.c.l.b16 %v5951
        %v6016 = vunpack.c.l.b16 %v5952
        %v6017 = vunpack.c.l.b16 %v5953
        %v6018 = vunpack.c.l.b16 %v5954
        %v6019 = vunpack.c.l.b16 %v5955
        %v6020 = vunpack.c.l.b16 %v5956
        %v6021 = vunpack.c.l.b16 %v5957
        %v6022 = vunpack.c.l.b16 %v5958
        %v6023 = vunpack.c.l.b16 %v5959
        %v6024 = vunpack.c.l.b16 %v5960
        %v6025 = vunpack.c.l.b16 %v5961
        %v6026 = vunpack.c.l.b16 %v5962
        %v6027 = vunpack.c.l.b16 %v5963
        %v6028 = vunpack.c.l.b16 %v5964
        %v6029 = vunpack.c.l.b16 %v5965
        %v6030 = vunpack.c.l.b16 %v5966
        %v6031 = vunpack.c.l.b16 %v5967
        %v6032 = vunpack.c.l.b16 %v5968
        %v6033 = vunpack.c.l.b16 %v5969
        %v6034 = vunpack.c.l.b16 %v5970
        %v6035 = vunpack.c.l.b16 %v5971
        %v6036 = vpack.c.b16 %v6005, %v6004
        %v6037 = vpack.c.b16 %v6007, %v6006
        %v6038 = vpack.c.b16 %v6009, %v6008
        %v6039 = vpack.c.b16 %v6011, %v6010
        %v6040 = vpack.c.b16 %v6013, %v6012
        %v6041 = vpack.c.b16 %v6015, %v6014
        %v6042 = vpack.c.b16 %v6017, %v6016
        %v6043 = vpack.c.b16 %v6019, %v6018
        %v6044 = vpack.c.b16 %v6021, %v6020
        %v6045 = vpack.c.b16 %v6023, %v6022
        %v6046 = vpack.c.b16 %v6025, %v6024
        %v6047 = vpack.c.b16 %v6027, %v6026
        %v6048 = vpack.c.b16 %v6029, %v6028
        %v6049 = vpack.c.b16 %v6031, %v6030
        %v6050 = vpack.c.b16 %v6033, %v6032
        %v6051 = vpack.c.b16 %v6035, %v6034
        %6068 = vmatprep.subr.bf16.mxu0 0
        %6069 = vmatpush1.bf16.msra.mxu0 %v6036
        %6070 = vmatprep.subr.bf16.mxu0 0
        %6071 = vmatpush1.bf16.msra.mxu0 %v6037
        %6072 = vmatprep.subr.bf16.mxu0 0
        %6073 = vmatpush1.bf16.msra.mxu0 %v6038
        %6074 = vmatprep.subr.bf16.mxu0 0
        %6075 = vmatpush1.bf16.msra.mxu0 %v6039
        %6076 = vmatprep.subr.bf16.mxu0 0
        %6077 = vmatpush1.bf16.msra.mxu0 %v6040
        %6078 = vmatprep.subr.bf16.mxu0 0
        %6079 = vmatpush1.bf16.msra.mxu0 %v6041
        %6080 = vmatprep.subr.bf16.mxu0 0
        %6081 = vmatpush1.bf16.msra.mxu0 %v6042
        %6082 = vmatprep.subr.bf16.mxu0 0
        %6083 = vmatpush1.bf16.msra.mxu0 %v6043
        %6084 = vmatprep.subr.bf16.mxu0 0
        %6085 = vmatpush1.bf16.msra.mxu0 %v6044
        %6086 = vmatprep.subr.bf16.mxu0 0
        %6087 = vmatpush1.bf16.msra.mxu0 %v6045
        %6088 = vmatprep.subr.bf16.mxu0 0
        %6089 = vmatpush1.bf16.msra.mxu0 %v6046
        %6090 = vmatprep.subr.bf16.mxu0 0
        %6091 = vmatpush1.bf16.msra.mxu0 %v6047
        %6092 = vmatprep.subr.bf16.mxu0 0
        %6093 = vmatpush1.bf16.msra.mxu0 %v6048
        %6094 = vmatprep.subr.bf16.mxu0 0
        %6095 = vmatpush1.bf16.msra.mxu0 %v6049
        %6096 = vmatprep.subr.bf16.mxu0 0
        %6097 = vmatpush1.bf16.msra.mxu0 %v6050
        %6098 = vmatprep.subr.bf16.mxu0 0
        %6099 = vmatpush1.bf16.msra.mxu0 %v6051
        %6100 = vmatprep.mubr.bf16.mxu0 %v5932
        %6101 = vmatmul.mubr.bf16.gmra.mrb[0].mxu0 %v5931
        %v6102 = vpop.f32.mrb[0].mxu0
        %v6103 = vadd.f32 0.0, %v6102
        %v6104 = vpop.f32.mrb[0].mxu0
        %v6105 = vpop.f32.mrb[0].mxu0
        %v6106 = vadd.f32 0.0, %v6105
        %v6107 = vpop.f32.mrb[0].mxu0
        %6108 = vmatprep.mubr.bf16.mxu0 %v5934
        %6109 = vmatmul.mubr.bf16.gmra.mrb[0].mxu0 %v5933
        %v6110 = vpop.f32.mrb[0].mxu0
        %v6111 = vadd.f32 0.0, %v6110
        %v6112 = vpop.f32.mrb[0].mxu0
        %v6113 = vpop.f32.mrb[0].mxu0
        %v6114 = vadd.f32 0.0, %v6113
        %v6115 = vpop.f32.mrb[0].mxu0
        %6116 = vmatprep.mubr.bf16.mxu0 %v5936
        %6117 = vmatmul.mubr.bf16.gmra.mrb[0].mxu0 %v5935
        %v6118 = vpop.f32.mrb[0].mxu0
        %v6119 = vadd.f32 0.0, %v6118
        %v6120 = vpop.f32.mrb[0].mxu0
        %v6121 = vpop.f32.mrb[0].mxu0
        %v6122 = vadd.f32 0.0, %v6121
        %v6123 = vpop.f32.mrb[0].mxu0
        %6124 = vmatprep.mubr.bf16.mxu0 %v5938
        %6125 = vmatmul.mubr.bf16.gmra.mrb[0].mxu0 %v5937
        %v6126 = vpop.f32.mrb[0].mxu0
        %v6127 = vadd.f32 0.0, %v6126
        %v6128 = vpop.f32.mrb[0].mxu0
        %v6129 = vpop.f32.mrb[0].mxu0
        %v6130 = vpop.f32.mrb[0].mxu0
        %6131 = vdwg.mxu0
        %v6132 = vadd.f32 %v5910, %v6103
        %v6133 = vadd.f32 %v5911, %v6106
        %v6134 = vadd.f32 %v5912, %v6111
        %v6135 = vadd.f32 %v5913, %v6114
        %v6136 = vadd.f32 %v5914, %v6119
        %v6137 = vadd.f32 %v5915, %v6122
        %v6138 = vadd.f32 %v5916, %v6127
        %v6139 = vld [vmem:[#allocation2 + $0x2e] sm:$0xff]
        %v6140 = vld [vmem:[#allocation2 + $0x36] sm:$0xff]
        %v6141 = vld [vmem:[#allocation2 + $0x3e] sm:$0xff]
        %v6142 = vld [vmem:[#allocation2 + $0x46] sm:$0xff]
        %v6143 = vld [vmem:[#allocation2 + $0x4e] sm:$0xff]
        %v6144 = vld [vmem:[#allocation2 + $0x56] sm:$0xff]
        %v6145 = vld [vmem:[#allocation2 + $0x5e] sm:$0xff]
        %v6146 = vld [vmem:[#allocation2 + $0x2f] sm:$0xff]
        %v6147 = vld [vmem:[#allocation2 + $0x37] sm:$0xff]
        %v6148 = vld [vmem:[#allocation2 + $0x3f] sm:$0xff]
        %v6149 = vld [vmem:[#allocation2 + $0x47] sm:$0xff]
        %v6150 = vld [vmem:[#allocation2 + $0x4f] sm:$0xff]
        %v6151 = vld [vmem:[#allocation2 + $0x57] sm:$0xff]
        %v6152 = vld [vmem:[#allocation2 + $0x5f] sm:$0xff]
        %v6153 = vpack.c.bf16 %v6140, %v6139
        %v6154 = vpack.c.bf16 %v6147, %v6146
        %v6155 = vpack.c.bf16 %v6142, %v6141
        %v6156 = vpack.c.bf16 %v6149, %v6148
        %v6157 = vpack.c.bf16 %v6144, %v6143
        %v6158 = vpack.c.bf16 %v6151, %v6150
        %v6159 = vpack.c.bf16 %v6145, %v6145
        %v6160 = vpack.c.bf16 %v6152, %v6152
        %s6161 = scalar_lea.vmem [#allocation8], 2944
        %v6162 = vld [vmem:[%s6161] sm:$0xf]
        %v6163 = vld [vmem:[%s6161 + $0x4] sm:$0xf]
        %v6164 = vld [vmem:[%s6161 + $0x8] sm:$0xf]
        %v6165 = vld [vmem:[%s6161 + $0xc] sm:$0xf]
        %v6166 = vld [vmem:[%s6161 + $0x10] sm:$0xf]
        %v6167 = vld [vmem:[%s6161 + $0x14] sm:$0xf]
        %v6168 = vld [vmem:[%s6161 + $0x18] sm:$0xf]
        %v6169 = vld [vmem:[%s6161 + $0x1c] sm:$0xf]
        %v6170 = vld [vmem:[%s6161 + $0x20] sm:$0xf]
        %v6171 = vld [vmem:[%s6161 + $0x24] sm:$0xf]
        %v6172 = vld [vmem:[%s6161 + $0x28] sm:$0xf]
        %v6173 = vld [vmem:[%s6161 + $0x2c] sm:$0xf]
        %v6174 = vld [vmem:[%s6161 + $0x30] sm:$0xf]
        %v6175 = vld [vmem:[%s6161 + $0x34] sm:$0xf]
        %v6176 = vld [vmem:[%s6161 + $0x38] sm:$0xf]
        %v6177 = vld [vmem:[%s6161 + $0x3c] sm:$0xf]
        %v6178 = vld [vmem:[%s6161 + $0x40] sm:$0xf]
        %v6179 = vld [vmem:[%s6161 + $0x44] sm:$0xf]
        %v6180 = vld [vmem:[%s6161 + $0x48] sm:$0xf]
        %v6181 = vld [vmem:[%s6161 + $0x4c] sm:$0xf]
        %v6182 = vld [vmem:[%s6161 + $0x50] sm:$0xf]
        %v6183 = vld [vmem:[%s6161 + $0x54] sm:$0xf]
        %v6184 = vld [vmem:[%s6161 + $0x58] sm:$0xf]
        %v6185 = vld [vmem:[%s6161 + $0x5c] sm:$0xf]
        %v6186 = vld [vmem:[%s6161 + $0x60] sm:$0xf]
        %v6187 = vld [vmem:[%s6161 + $0x64] sm:$0xf]
        %v6188 = vld [vmem:[%s6161 + $0x68] sm:$0xf]
        %v6189 = vld [vmem:[%s6161 + $0x6c] sm:$0xf]
        %v6190 = vld [vmem:[%s6161 + $0x70] sm:$0xf]
        %v6191 = vld [vmem:[%s6161 + $0x74] sm:$0xf]
        %v6192 = vld [vmem:[%s6161 + $0x78] sm:$0xf]
        %v6193 = vld [vmem:[%s6161 + $0x7c] sm:$0xf]
        %v6226 = vunpack.c.l.b16 %v6162
        %v6227 = vunpack.c.l.b16 %v6163
        %v6228 = vunpack.c.l.b16 %v6164
        %v6229 = vunpack.c.l.b16 %v6165
        %v6230 = vunpack.c.l.b16 %v6166
        %v6231 = vunpack.c.l.b16 %v6167
        %v6232 = vunpack.c.l.b16 %v6168
        %v6233 = vunpack.c.l.b16 %v6169
        %v6234 = vunpack.c.l.b16 %v6170
        %v6235 = vunpack.c.l.b16 %v6171
        %v6236 = vunpack.c.l.b16 %v6172
        %v6237 = vunpack.c.l.b16 %v6173
        %v6238 = vunpack.c.l.b16 %v6174
        %v6239 = vunpack.c.l.b16 %v6175
        %v6240 = vunpack.c.l.b16 %v6176
        %v6241 = vunpack.c.l.b16 %v6177
        %v6242 = vunpack.c.l.b16 %v6178
        %v6243 = vunpack.c.l.b16 %v6179
        %v6244 = vunpack.c.l.b16 %v6180
        %v6245 = vunpack.c.l.b16 %v6181
        %v6246 = vunpack.c.l.b16 %v6182
        %v6247 = vunpack.c.l.b16 %v6183
        %v6248 = vunpack.c.l.b16 %v6184
        %v6249 = vunpack.c.l.b16 %v6185
        %v6250 = vunpack.c.l.b16 %v6186
        %v6251 = vunpack.c.l.b16 %v6187
        %v6252 = vunpack.c.l.b16 %v6188
        %v6253 = vunpack.c.l.b16 %v6189
        %v6254 = vunpack.c.l.b16 %v6190
        %v6255 = vunpack.c.l.b16 %v6191
        %v6256 = vunpack.c.l.b16 %v6192
        %v6257 = vunpack.c.l.b16 %v6193
        %v6258 = vpack.c.b16 %v6227, %v6226
        %v6259 = vpack.c.b16 %v6229, %v6228
        %v6260 = vpack.c.b16 %v6231, %v6230
        %v6261 = vpack.c.b16 %v6233, %v6232
        %v6262 = vpack.c.b16 %v6235, %v6234
        %v6263 = vpack.c.b16 %v6237, %v6236
        %v6264 = vpack.c.b16 %v6239, %v6238
        %v6265 = vpack.c.b16 %v6241, %v6240
        %v6266 = vpack.c.b16 %v6243, %v6242
        %v6267 = vpack.c.b16 %v6245, %v6244
        %v6268 = vpack.c.b16 %v6247, %v6246
        %v6269 = vpack.c.b16 %v6249, %v6248
        %v6270 = vpack.c.b16 %v6251, %v6250
        %v6271 = vpack.c.b16 %v6253, %v6252
        %v6272 = vpack.c.b16 %v6255, %v6254
        %v6273 = vpack.c.b16 %v6257, %v6256
        %6290 = vmatprep.subr.bf16.mxu0 0
        %6291 = vmatpush1.bf16.msra.mxu0 %v6258
        %6292 = vmatprep.subr.bf16.mxu0 0
        %6293 = vmatpush1.bf16.msra.mxu0 %v6259
        %6294 = vmatprep.subr.bf16.mxu0 0
        %6295 = vmatpush1.bf16.msra.mxu0 %v6260
        %6296 = vmatprep.subr.bf16.mxu0 0
        %6297 = vmatpush1.bf16.msra.mxu0 %v6261
        %6298 = vmatprep.subr.bf16.mxu0 0
        %6299 = vmatpush1.bf16.msra.mxu0 %v6262
        %6300 = vmatprep.subr.bf16.mxu0 0
        %6301 = vmatpush1.bf16.msra.mxu0 %v6263
        %6302 = vmatprep.subr.bf16.mxu0 0
        %6303 = vmatpush1.bf16.msra.mxu0 %v6264
        %6304 = vmatprep.subr.bf16.mxu0 0
        %6305 = vmatpush1.bf16.msra.mxu0 %v6265
        %6306 = vmatprep.subr.bf16.mxu0 0
        %6307 = vmatpush1.bf16.msra.mxu0 %v6266
        %6308 = vmatprep.subr.bf16.mxu0 0
        %6309 = vmatpush1.bf16.msra.mxu0 %v6267
        %6310 = vmatprep.subr.bf16.mxu0 0
        %6311 = vmatpush1.bf16.msra.mxu0 %v6268
        %6312 = vmatprep.subr.bf16.mxu0 0
        %6313 = vmatpush1.bf16.msra.mxu0 %v6269
        %6314 = vmatprep.subr.bf16.mxu0 0
        %6315 = vmatpush1.bf16.msra.mxu0 %v6270
        %6316 = vmatprep.subr.bf16.mxu0 0
        %6317 = vmatpush1.bf16.msra.mxu0 %v6271
        %6318 = vmatprep.subr.bf16.mxu0 0
        %6319 = vmatpush1.bf16.msra.mxu0 %v6272
        %6320 = vmatprep.subr.bf16.mxu0 0
        %6321 = vmatpush1.bf16.msra.mxu0 %v6273
        %6322 = vmatprep.mubr.bf16.mxu0 %v6154
        %6323 = vmatmul.mubr.bf16.gmra.mrb[0].mxu0 %v6153
        %v6324 = vpop.f32.mrb[0].mxu0
        %v6325 = vadd.f32 0.0, %v6324
        %v6326 = vpop.f32.mrb[0].mxu0
        %v6327 = vpop.f32.mrb[0].mxu0
        %v6328 = vadd.f32 0.0, %v6327
        %v6329 = vpop.f32.mrb[0].mxu0
        %6330 = vmatprep.mubr.bf16.mxu0 %v6156
        %6331 = vmatmul.mubr.bf16.gmra.mrb[0].mxu0 %v6155
        %v6332 = vpop.f32.mrb[0].mxu0
        %v6333 = vadd.f32 0.0, %v6332
        %v6334 = vpop.f32.mrb[0].mxu0
        %v6335 = vpop.f32.mrb[0].mxu0
        %v6336 = vadd.f32 0.0, %v6335
        %v6337 = vpop.f32.mrb[0].mxu0
        %6338 = vmatprep.mubr.bf16.mxu0 %v6158
        %6339 = vmatmul.mubr.bf16.gmra.mrb[0].mxu0 %v6157
        %v6340 = vpop.f32.mrb[0].mxu0
        %v6341 = vadd.f32 0.0, %v6340
        %v6342 = vpop.f32.mrb[0].mxu0
        %v6343 = vpop.f32.mrb[0].mxu0
        %v6344 = vadd.f32 0.0, %v6343
        %v6345 = vpop.f32.mrb[0].mxu0
        %6346 = vmatprep.mubr.bf16.mxu0 %v6160
        %6347 = vmatmul.mubr.bf16.gmra.mrb[0].mxu0 %v6159
        %v6348 = vpop.f32.mrb[0].mxu0
        %v6349 = vadd.f32 0.0, %v6348
        %v6350 = vpop.f32.mrb[0].mxu0
        %v6351 = vpop.f32.mrb[0].mxu0
        %v6352 = vpop.f32.mrb[0].mxu0
        %6353 = vdwg.mxu0
        %v6354 = vadd.f32 %v6132, %v6325
        %v6355 = vadd.f32 %v6133, %v6328
        %v6356 = vadd.f32 %v6134, %v6333
        %v6357 = vadd.f32 %v6135, %v6336
        %v6358 = vadd.f32 %v6136, %v6341
        %v6359 = vadd.f32 %v6137, %v6344
        %v6360 = vadd.f32 %v6138, %v6349
        %v6361 = vld [vmem:[#allocation2 + $0x30] sm:$0xff]
        %v6362 = vld [vmem:[#allocation2 + $0x38] sm:$0xff]
        %v6363 = vld [vmem:[#allocation2 + $0x40] sm:$0xff]
        %v6364 = vld [vmem:[#allocation2 + $0x48] sm:$0xff]
        %v6365 = vld [vmem:[#allocation2 + $0x50] sm:$0xff]
        %v6366 = vld [vmem:[#allocation2 + $0x58] sm:$0xff]
        %v6367 = vld [vmem:[#allocation2 + $0x60] sm:$0xff]
        %v6368 = vld [vmem:[#allocation2 + $0x31] sm:$0xff]
        %v6369 = vld [vmem:[#allocation2 + $0x39] sm:$0xff]
        %v6370 = vld [vmem:[#allocation2 + $0x41] sm:$0xff]
        %v6371 = vld [vmem:[#allocation2 + $0x49] sm:$0xff]
        %v6372 = vld [vmem:[#allocation2 + $0x51] sm:$0xff]
        %v6373 = vld [vmem:[#allocation2 + $0x59] sm:$0xff]
        %v6374 = vld [vmem:[#allocation2 + $0x61] sm:$0xff]
        %v6375 = vpack.c.bf16 %v6362, %v6361
        %v6376 = vpack.c.bf16 %v6369, %v6368
        %v6377 = vpack.c.bf16 %v6364, %v6363
        %v6378 = vpack.c.bf16 %v6371, %v6370
        %v6379 = vpack.c.bf16 %v6366, %v6365
        %v6380 = vpack.c.bf16 %v6373, %v6372
        %v6381 = vpack.c.bf16 %v6367, %v6367
        %v6382 = vpack.c.bf16 %v6374, %v6374
        %s6383 = scalar_lea.vmem [#allocation8], 3072
        %v6384 = vld [vmem:[%s6383] sm:$0xf]
        %v6385 = vld [vmem:[%s6383 + $0x4] sm:$0xf]
        %v6386 = vld [vmem:[%s6383 + $0x8] sm:$0xf]
        %v6387 = vld [vmem:[%s6383 + $0xc] sm:$0xf]
        %v6388 = vld [vmem:[%s6383 + $0x10] sm:$0xf]
        %v6389 = vld [vmem:[%s6383 + $0x14] sm:$0xf]
        %v6390 = vld [vmem:[%s6383 + $0x18] sm:$0xf]
        %v6391 = vld [vmem:[%s6383 + $0x1c] sm:$0xf]
        %v6392 = vld [vmem:[%s6383 + $0x20] sm:$0xf]
        %v6393 = vld [vmem:[%s6383 + $0x24] sm:$0xf]
        %v6394 = vld [vmem:[%s6383 + $0x28] sm:$0xf]
        %v6395 = vld [vmem:[%s6383 + $0x2c] sm:$0xf]
        %v6396 = vld [vmem:[%s6383 + $0x30] sm:$0xf]
        %v6397 = vld [vmem:[%s6383 + $0x34] sm:$0xf]
        %v6398 = vld [vmem:[%s6383 + $0x38] sm:$0xf]
        %v6399 = vld [vmem:[%s6383 + $0x3c] sm:$0xf]
        %v6400 = vld [vmem:[%s6383 + $0x40] sm:$0xf]
        %v6401 = vld [vmem:[%s6383 + $0x44] sm:$0xf]
        %v6402 = vld [vmem:[%s6383 + $0x48] sm:$0xf]
        %v6403 = vld [vmem:[%s6383 + $0x4c] sm:$0xf]
        %v6404 = vld [vmem:[%s6383 + $0x50] sm:$0xf]
        %v6405 = vld [vmem:[%s6383 + $0x54] sm:$0xf]
        %v6406 = vld [vmem:[%s6383 + $0x58] sm:$0xf]
        %v6407 = vld [vmem:[%s6383 + $0x5c] sm:$0xf]
        %v6408 = vld [vmem:[%s6383 + $0x60] sm:$0xf]
        %v6409 = vld [vmem:[%s6383 + $0x64] sm:$0xf]
        %v6410 = vld [vmem:[%s6383 + $0x68] sm:$0xf]
        %v6411 = vld [vmem:[%s6383 + $0x6c] sm:$0xf]
        %v6412 = vld [vmem:[%s6383 + $0x70] sm:$0xf]
        %v6413 = vld [vmem:[%s6383 + $0x74] sm:$0xf]
        %v6414 = vld [vmem:[%s6383 + $0x78] sm:$0xf]
        %v6415 = vld [vmem:[%s6383 + $0x7c] sm:$0xf]
        %v6448 = vunpack.c.l.b16 %v6384
        %v6449 = vunpack.c.l.b16 %v6385
        %v6450 = vunpack.c.l.b16 %v6386
        %v6451 = vunpack.c.l.b16 %v6387
        %v6452 = vunpack.c.l.b16 %v6388
        %v6453 = vunpack.c.l.b16 %v6389
        %v6454 = vunpack.c.l.b16 %v6390
        %v6455 = vunpack.c.l.b16 %v6391
        %v6456 = vunpack.c.l.b16 %v6392
        %v6457 = vunpack.c.l.b16 %v6393
        %v6458 = vunpack.c.l.b16 %v6394
        %v6459 = vunpack.c.l.b16 %v6395
        %v6460 = vunpack.c.l.b16 %v6396
        %v6461 = vunpack.c.l.b16 %v6397
        %v6462 = vunpack.c.l.b16 %v6398
        %v6463 = vunpack.c.l.b16 %v6399
        %v6464 = vunpack.c.l.b16 %v6400
        %v6465 = vunpack.c.l.b16 %v6401
        %v6466 = vunpack.c.l.b16 %v6402
        %v6467 = vunpack.c.l.b16 %v6403
        %v6468 = vunpack.c.l.b16 %v6404
        %v6469 = vunpack.c.l.b16 %v6405
        %v6470 = vunpack.c.l.b16 %v6406
        %v6471 = vunpack.c.l.b16 %v6407
        %v6472 = vunpack.c.l.b16 %v6408
        %v6473 = vunpack.c.l.b16 %v6409
        %v6474 = vunpack.c.l.b16 %v6410
        %v6475 = vunpack.c.l.b16 %v6411
        %v6476 = vunpack.c.l.b16 %v6412
        %v6477 = vunpack.c.l.b16 %v6413
        %v6478 = vunpack.c.l.b16 %v6414
        %v6479 = vunpack.c.l.b16 %v6415
        %v6480 = vpack.c.b16 %v6449, %v6448
        %v6481 = vpack.c.b16 %v6451, %v6450
        %v6482 = vpack.c.b16 %v6453, %v6452
        %v6483 = vpack.c.b16 %v6455, %v6454
        %v6484 = vpack.c.b16 %v6457, %v6456
        %v6485 = vpack.c.b16 %v6459, %v6458
        %v6486 = vpack.c.b16 %v6461, %v6460
        %v6487 = vpack.c.b16 %v6463, %v6462
        %v6488 = vpack.c.b16 %v6465, %v6464
        %v6489 = vpack.c.b16 %v6467, %v6466
        %v6490 = vpack.c.b16 %v6469, %v6468
        %v6491 = vpack.c.b16 %v6471, %v6470
        %v6492 = vpack.c.b16 %v6473, %v6472
        %v6493 = vpack.c.b16 %v6475, %v6474
        %v6494 = vpack.c.b16 %v6477, %v6476
        %v6495 = vpack.c.b16 %v6479, %v6478
        %6512 = vmatprep.subr.bf16.mxu0 0
        %6513 = vmatpush1.bf16.msra.mxu0 %v6480
        %6514 = vmatprep.subr.bf16.mxu0 0
        %6515 = vmatpush1.bf16.msra.mxu0 %v6481
        %6516 = vmatprep.subr.bf16.mxu0 0
        %6517 = vmatpush1.bf16.msra.mxu0 %v6482
        %6518 = vmatprep.subr.bf16.mxu0 0
        %6519 = vmatpush1.bf16.msra.mxu0 %v6483
        %6520 = vmatprep.subr.bf16.mxu0 0
        %6521 = vmatpush1.bf16.msra.mxu0 %v6484
        %6522 = vmatprep.subr.bf16.mxu0 0
        %6523 = vmatpush1.bf16.msra.mxu0 %v6485
        %6524 = vmatprep.subr.bf16.mxu0 0
        %6525 = vmatpush1.bf16.msra.mxu0 %v6486
        %6526 = vmatprep.subr.bf16.mxu0 0
        %6527 = vmatpush1.bf16.msra.mxu0 %v6487
        %6528 = vmatprep.subr.bf16.mxu0 0
        %6529 = vmatpush1.bf16.msra.mxu0 %v6488
        %6530 = vmatprep.subr.bf16.mxu0 0
        %6531 = vmatpush1.bf16.msra.mxu0 %v6489
        %6532 = vmatprep.subr.bf16.mxu0 0
        %6533 = vmatpush1.bf16.msra.mxu0 %v6490
        %6534 = vmatprep.subr.bf16.mxu0 0
        %6535 = vmatpush1.bf16.msra.mxu0 %v6491
        %6536 = vmatprep.subr.bf16.mxu0 0
        %6537 = vmatpush1.bf16.msra.mxu0 %v6492
        %6538 = vmatprep.subr.bf16.mxu0 0
        %6539 = vmatpush1.bf16.msra.mxu0 %v6493
        %6540 = vmatprep.subr.bf16.mxu0 0
        %6541 = vmatpush1.bf16.msra.mxu0 %v6494
        %6542 = vmatprep.subr.bf16.mxu0 0
        %6543 = vmatpush1.bf16.msra.mxu0 %v6495
        %6544 = vmatprep.mubr.bf16.mxu0 %v6376
        %6545 = vmatmul.mubr.bf16.gmra.mrb[0].mxu0 %v6375
        %v6546 = vpop.f32.mrb[0].mxu0
        %v6547 = vadd.f32 0.0, %v6546
        %v6548 = vpop.f32.mrb[0].mxu0
        %v6549 = vpop.f32.mrb[0].mxu0
        %v6550 = vadd.f32 0.0, %v6549
        %v6551 = vpop.f32.mrb[0].mxu0
        %6552 = vmatprep.mubr.bf16.mxu0 %v6378
        %6553 = vmatmul.mubr.bf16.gmra.mrb[0].mxu0 %v6377
        %v6554 = vpop.f32.mrb[0].mxu0
        %v6555 = vadd.f32 0.0, %v6554
        %v6556 = vpop.f32.mrb[0].mxu0
        %v6557 = vpop.f32.mrb[0].mxu0
        %v6558 = vadd.f32 0.0, %v6557
        %v6559 = vpop.f32.mrb[0].mxu0
        %6560 = vmatprep.mubr.bf16.mxu0 %v6380
        %6561 = vmatmul.mubr.bf16.gmra.mrb[0].mxu0 %v6379
        %v6562 = vpop.f32.mrb[0].mxu0
        %v6563 = vadd.f32 0.0, %v6562
        %v6564 = vpop.f32.mrb[0].mxu0
        %v6565 = vpop.f32.mrb[0].mxu0
        %v6566 = vadd.f32 0.0, %v6565
        %v6567 = vpop.f32.mrb[0].mxu0
        %6568 = vmatprep.mubr.bf16.mxu0 %v6382
        %6569 = vmatmul.mubr.bf16.gmra.mrb[0].mxu0 %v6381
        %v6570 = vpop.f32.mrb[0].mxu0
        %v6571 = vadd.f32 0.0, %v6570
        %v6572 = vpop.f32.mrb[0].mxu0
        %v6573 = vpop.f32.mrb[0].mxu0
        %v6574 = vpop.f32.mrb[0].mxu0
        %6575 = vdwg.mxu0
        %v6576 = vadd.f32 %v6354, %v6547
        %v6577 = vadd.f32 %v6355, %v6550
        %v6578 = vadd.f32 %v6356, %v6555
        %v6579 = vadd.f32 %v6357, %v6558
        %v6580 = vadd.f32 %v6358, %v6563
        %v6581 = vadd.f32 %v6359, %v6566
        %v6582 = vadd.f32 %v6360, %v6571
        %v6583 = vld [vmem:[#allocation9] sm:$0x1]
        %v6585 = vlaneseq
        %v6586 = vshrl.u32 %v6585, 7
        %v6587 = vsub.s32 0, %v6586
        %v6588 = vrot.slane %v6583, %v6587
        %v6590 = vadd.f32 %v6576, %v6588
        %v6591 = vadd.f32 %v6577, %v6588
        %v6592 = vadd.f32 %v6578, %v6588
        %v6593 = vadd.f32 %v6579, %v6588
        %v6594 = vadd.f32 %v6580, %v6588
        %v6595 = vadd.f32 %v6581, %v6588
        %v6596 = vadd.f32 %v6582, %v6588
        %v6597 = vld [vmem:[#allocation11] sm:$0x1]
        %v6599 = vrot.slane %v6590, 1
        %v6601 = vmax.f32 %v6590, %v6599
        %v6603 = vrot.slane %v6601, 2
        %v6605 = vpack.c.bf16 %v6601, %v6601
        %v6606 = vpack.c.bf16 %v6603, %v6603
        %v6607 = vld [vmem:[%s5] sm:$0xf]
        %v6608 = vld [vmem:[%s5 + $0x4] sm:$0xf]
        %v6609 = vld [vmem:[%s5 + $0x8] sm:$0xf]
        %v6610 = vld [vmem:[%s5 + $0xc] sm:$0xf]
        %v6611 = vld [vmem:[%s5 + $0x10] sm:$0xf]
        %v6612 = vld [vmem:[%s5 + $0x14] sm:$0xf]
        %v6613 = vld [vmem:[%s5 + $0x18] sm:$0xf]
        %v6614 = vld [vmem:[%s5 + $0x1c] sm:$0xf]
        %v6615 = vld [vmem:[%s5 + $0x20] sm:$0xf]
        %v6616 = vld [vmem:[%s5 + $0x24] sm:$0xf]
        %v6617 = vld [vmem:[%s5 + $0x28] sm:$0xf]
        %v6618 = vld [vmem:[%s5 + $0x2c] sm:$0xf]
        %v6619 = vld [vmem:[%s5 + $0x30] sm:$0xf]
        %v6620 = vld [vmem:[%s5 + $0x34] sm:$0xf]
        %v6621 = vld [vmem:[%s5 + $0x38] sm:$0xf]
        %v6622 = vld [vmem:[%s5 + $0x3c] sm:$0xf]
        %v6623 = vld [vmem:[%s5 + $0x40] sm:$0xf]
        %v6624 = vld [vmem:[%s5 + $0x44] sm:$0xf]
        %v6625 = vld [vmem:[%s5 + $0x48] sm:$0xf]
        %v6626 = vld [vmem:[%s5 + $0x4c] sm:$0xf]
        %v6627 = vld [vmem:[%s5 + $0x50] sm:$0xf]
        %v6628 = vld [vmem:[%s5 + $0x54] sm:$0xf]
        %v6629 = vld [vmem:[%s5 + $0x58] sm:$0xf]
        %v6630 = vld [vmem:[%s5 + $0x5c] sm:$0xf]
        %v6631 = vld [vmem:[%s5 + $0x60] sm:$0xf]
        %v6632 = vld [vmem:[%s5 + $0x64] sm:$0xf]
        %v6633 = vld [vmem:[%s5 + $0x68] sm:$0xf]
        %v6634 = vld [vmem:[%s5 + $0x6c] sm:$0xf]
        %v6635 = vld [vmem:[%s5 + $0x70] sm:$0xf]
        %v6636 = vld [vmem:[%s5 + $0x74] sm:$0xf]
        %v6637 = vld [vmem:[%s5 + $0x78] sm:$0xf]
        %v6638 = vld [vmem:[%s5 + $0x7c] sm:$0xf]
        %v6671 = vunpack.c.l.b16 %v6607
        %v6672 = vunpack.c.l.b16 %v6608
        %v6673 = vunpack.c.l.b16 %v6609
        %v6674 = vunpack.c.l.b16 %v6610
        %v6675 = vunpack.c.l.b16 %v6611
        %v6676 = vunpack.c.l.b16 %v6612
        %v6677 = vunpack.c.l.b16 %v6613
        %v6678 = vunpack.c.l.b16 %v6614
        %v6679 = vunpack.c.l.b16 %v6615
        %v6680 = vunpack.c.l.b16 %v6616
        %v6681 = vunpack.c.l.b16 %v6617
        %v6682 = vunpack.c.l.b16 %v6618
        %v6683 = vunpack.c.l.b16 %v6619
        %v6684 = vunpack.c.l.b16 %v6620
        %v6685 = vunpack.c.l.b16 %v6621
        %v6686 = vunpack.c.l.b16 %v6622
        %v6687 = vunpack.c.l.b16 %v6623
        %v6688 = vunpack.c.l.b16 %v6624
        %v6689 = vunpack.c.l.b16 %v6625
        %v6690 = vunpack.c.l.b16 %v6626
        %v6691 = vunpack.c.l.b16 %v6627
        %v6692 = vunpack.c.l.b16 %v6628
        %v6693 = vunpack.c.l.b16 %v6629
        %v6694 = vunpack.c.l.b16 %v6630
        %v6695 = vunpack.c.l.b16 %v6631
        %v6696 = vunpack.c.l.b16 %v6632
        %v6697 = vunpack.c.l.b16 %v6633
        %v6698 = vunpack.c.l.b16 %v6634
        %v6699 = vunpack.c.l.b16 %v6635
        %v6700 = vunpack.c.l.b16 %v6636
        %v6701 = vunpack.c.l.b16 %v6637
        %v6702 = vunpack.c.l.b16 %v6638
        %v6703 = vpack.c.b16 %v6672, %v6671
        %v6704 = vpack.c.b16 %v6674, %v6673
        %v6705 = vpack.c.b16 %v6676, %v6675
        %v6706 = vpack.c.b16 %v6678, %v6677
        %v6707 = vpack.c.b16 %v6680, %v6679
        %v6708 = vpack.c.b16 %v6682, %v6681
        %v6709 = vpack.c.b16 %v6684, %v6683
        %v6710 = vpack.c.b16 %v6686, %v6685
        %v6711 = vpack.c.b16 %v6688, %v6687
        %v6712 = vpack.c.b16 %v6690, %v6689
        %v6713 = vpack.c.b16 %v6692, %v6691
        %v6714 = vpack.c.b16 %v6694, %v6693
        %v6715 = vpack.c.b16 %v6696, %v6695
        %v6716 = vpack.c.b16 %v6698, %v6697
        %v6717 = vpack.c.b16 %v6700, %v6699
        %v6718 = vpack.c.b16 %v6702, %v6701
        %6735 = vmatprep.subr.bf16.mxu0 0
        %6736 = vmatpush1.bf16.msra.mxu0 %v6703
        %6737 = vmatprep.subr.bf16.mxu0 0
        %6738 = vmatpush1.bf16.msra.mxu0 %v6704
        %6739 = vmatprep.subr.bf16.mxu0 0
        %6740 = vmatpush1.bf16.msra.mxu0 %v6705
        %6741 = vmatprep.subr.bf16.mxu0 0
        %6742 = vmatpush1.bf16.msra.mxu0 %v6706
        %6743 = vmatprep.subr.bf16.mxu0 0
        %6744 = vmatpush1.bf16.msra.mxu0 %v6707
        %6745 = vmatprep.subr.bf16.mxu0 0
        %6746 = vmatpush1.bf16.msra.mxu0 %v6708
        %6747 = vmatprep.subr.bf16.mxu0 0
        %6748 = vmatpush1.bf16.msra.mxu0 %v6709
        %6749 = vmatprep.subr.bf16.mxu0 0
        %6750 = vmatpush1.bf16.msra.mxu0 %v6710
        %6751 = vmatprep.subr.bf16.mxu0 0
        %6752 = vmatpush1.bf16.msra.mxu0 %v6711
        %6753 = vmatprep.subr.bf16.mxu0 0
        %6754 = vmatpush1.bf16.msra.mxu0 %v6712
        %6755 = vmatprep.subr.bf16.mxu0 0
        %6756 = vmatpush1.bf16.msra.mxu0 %v6713
        %6757 = vmatprep.subr.bf16.mxu0 0
        %6758 = vmatpush1.bf16.msra.mxu0 %v6714
        %6759 = vmatprep.subr.bf16.mxu0 0
        %6760 = vmatpush1.bf16.msra.mxu0 %v6715
        %6761 = vmatprep.subr.bf16.mxu0 0
        %6762 = vmatpush1.bf16.msra.mxu0 %v6716
        %6763 = vmatprep.subr.bf16.mxu0 0
        %6764 = vmatpush1.bf16.msra.mxu0 %v6717
        %6765 = vmatprep.subr.bf16.mxu0 0
        %6766 = vmatpush1.bf16.msra.mxu0 %v6718
        %6767 = vmatprep.mubr.bf16.mxu0 %v6606
        %6768 = vmatmul.mubr.bf16.gmra.mrb[0].mxu0 %v6605
        %v6769 = vpop.f32.mrb[0].mxu0
        %v6770 = vadd.f32 0.0, %v6769
        %v6771 = vpop.f32.mrb[0].mxu0
        %v6772 = vpop.f32.mrb[0].mxu0
        %v6773 = vpop.f32.mrb[0].mxu0
        %6774 = vdwg.mxu0
        %v6775 = vadd.f32 %v6597, %v6770
        %s6776 = scalar_lea.vmem %s5, 128
        %v6777 = vld [vmem:[%s6776] sm:$0xf]
        %v6778 = vld [vmem:[%s6776 + $0x4] sm:$0xf]
        %v6779 = vld [vmem:[%s6776 + $0x8] sm:$0xf]
        %v6780 = vld [vmem:[%s6776 + $0xc] sm:$0xf]
        %v6781 = vld [vmem:[%s6776 + $0x10] sm:$0xf]
        %v6782 = vld [vmem:[%s6776 + $0x14] sm:$0xf]
        %v6783 = vld [vmem:[%s6776 + $0x18] sm:$0xf]
        %v6784 = vld [vmem:[%s6776 + $0x1c] sm:$0xf]
        %v6785 = vld [vmem:[%s6776 + $0x20] sm:$0xf]
        %v6786 = vld [vmem:[%s6776 + $0x24] sm:$0xf]
        %v6787 = vld [vmem:[%s6776 + $0x28] sm:$0xf]
        %v6788 = vld [vmem:[%s6776 + $0x2c] sm:$0xf]
        %v6789 = vld [vmem:[%s6776 + $0x30] sm:$0xf]
        %v6790 = vld [vmem:[%s6776 + $0x34] sm:$0xf]
        %v6791 = vld [vmem:[%s6776 + $0x38] sm:$0xf]
        %v6792 = vld [vmem:[%s6776 + $0x3c] sm:$0xf]
        %v6793 = vld [vmem:[%s6776 + $0x40] sm:$0xf]
        %v6794 = vld [vmem:[%s6776 + $0x44] sm:$0xf]
        %v6795 = vld [vmem:[%s6776 + $0x48] sm:$0xf]
        %v6796 = vld [vmem:[%s6776 + $0x4c] sm:$0xf]
        %v6797 = vld [vmem:[%s6776 + $0x50] sm:$0xf]
        %v6798 = vld [vmem:[%s6776 + $0x54] sm:$0xf]
        %v6799 = vld [vmem:[%s6776 + $0x58] sm:$0xf]
        %v6800 = vld [vmem:[%s6776 + $0x5c] sm:$0xf]
        %v6801 = vld [vmem:[%s6776 + $0x60] sm:$0xf]
        %v6802 = vld [vmem:[%s6776 + $0x64] sm:$0xf]
        %v6803 = vld [vmem:[%s6776 + $0x68] sm:$0xf]
        %v6804 = vld [vmem:[%s6776 + $0x6c] sm:$0xf]
        %v6805 = vld [vmem:[%s6776 + $0x70] sm:$0xf]
        %v6806 = vld [vmem:[%s6776 + $0x74] sm:$0xf]
        %v6807 = vld [vmem:[%s6776 + $0x78] sm:$0xf]
        %v6808 = vld [vmem:[%s6776 + $0x7c] sm:$0xf]
        %v6811 = vrot.slane %v6605, 2
        %v6812 = vrot.slane %v6606, 2
        %v6847 = vunpack.c.l.b16 %v6777
        %v6848 = vunpack.c.l.b16 %v6778
        %v6849 = vunpack.c.l.b16 %v6779
        %v6850 = vunpack.c.l.b16 %v6780
        %v6851 = vunpack.c.l.b16 %v6781
        %v6852 = vunpack.c.l.b16 %v6782
        %v6853 = vunpack.c.l.b16 %v6783
        %v6854 = vunpack.c.l.b16 %v6784
        %v6855 = vunpack.c.l.b16 %v6785
        %v6856 = vunpack.c.l.b16 %v6786
        %v6857 = vunpack.c.l.b16 %v6787
        %v6858 = vunpack.c.l.b16 %v6788
        %v6859 = vunpack.c.l.b16 %v6789
        %v6860 = vunpack.c.l.b16 %v6790
        %v6861 = vunpack.c.l.b16 %v6791
        %v6862 = vunpack.c.l.b16 %v6792
        %v6863 = vunpack.c.l.b16 %v6793
        %v6864 = vunpack.c.l.b16 %v6794
        %v6865 = vunpack.c.l.b16 %v6795
        %v6866 = vunpack.c.l.b16 %v6796
        %v6867 = vunpack.c.l.b16 %v6797
        %v6868 = vunpack.c.l.b16 %v6798
        %v6869 = vunpack.c.l.b16 %v6799
        %v6870 = vunpack.c.l.b16 %v6800
        %v6871 = vunpack.c.l.b16 %v6801
        %v6872 = vunpack.c.l.b16 %v6802
        %v6873 = vunpack.c.l.b16 %v6803
        %v6874 = vunpack.c.l.b16 %v6804
        %v6875 = vunpack.c.l.b16 %v6805
        %v6876 = vunpack.c.l.b16 %v6806
        %v6877 = vunpack.c.l.b16 %v6807
        %v6878 = vunpack.c.l.b16 %v6808
        %v6879 = vpack.c.b16 %v6848, %v6847
        %v6880 = vpack.c.b16 %v6850, %v6849
        %v6881 = vpack.c.b16 %v6852, %v6851
        %v6882 = vpack.c.b16 %v6854, %v6853
        %v6883 = vpack.c.b16 %v6856, %v6855
        %v6884 = vpack.c.b16 %v6858, %v6857
        %v6885 = vpack.c.b16 %v6860, %v6859
        %v6886 = vpack.c.b16 %v6862, %v6861
        %v6887 = vpack.c.b16 %v6864, %v6863
        %v6888 = vpack.c.b16 %v6866, %v6865
        %v6889 = vpack.c.b16 %v6868, %v6867
        %v6890 = vpack.c.b16 %v6870, %v6869
        %v6891 = vpack.c.b16 %v6872, %v6871
        %v6892 = vpack.c.b16 %v6874, %v6873
        %v6893 = vpack.c.b16 %v6876, %v6875
        %v6894 = vpack.c.b16 %v6878, %v6877
        %6911 = vmatprep.subr.bf16.mxu0 0
        %6912 = vmatpush1.bf16.msra.mxu0 %v6879
        %6913 = vmatprep.subr.bf16.mxu0 0
        %6914 = vmatpush1.bf16.msra.mxu0 %v6880
        %6915 = vmatprep.subr.bf16.mxu0 0
        %6916 = vmatpush1.bf16.msra.mxu0 %v6881
        %6917 = vmatprep.subr.bf16.mxu0 0
        %6918 = vmatpush1.bf16.msra.mxu0 %v6882
        %6919 = vmatprep.subr.bf16.mxu0 0
        %6920 = vmatpush1.bf16.msra.mxu0 %v6883
        %6921 = vmatprep.subr.bf16.mxu0 0
        %6922 = vmatpush1.bf16.msra.mxu0 %v6884
        %6923 = vmatprep.subr.bf16.mxu0 0
        %6924 = vmatpush1.bf16.msra.mxu0 %v6885
        %6925 = vmatprep.subr.bf16.mxu0 0
        %6926 = vmatpush1.bf16.msra.mxu0 %v6886
        %6927 = vmatprep.subr.bf16.mxu0 0
        %6928 = vmatpush1.bf16.msra.mxu0 %v6887
        %6929 = vmatprep.subr.bf16.mxu0 0
        %6930 = vmatpush1.bf16.msra.mxu0 %v6888
        %6931 = vmatprep.subr.bf16.mxu0 0
        %6932 = vmatpush1.bf16.msra.mxu0 %v6889
        %6933 = vmatprep.subr.bf16.mxu0 0
        %6934 = vmatpush1.bf16.msra.mxu0 %v6890
        %6935 = vmatprep.subr.bf16.mxu0 0
        %6936 = vmatpush1.bf16.msra.mxu0 %v6891
        %6937 = vmatprep.subr.bf16.mxu0 0
        %6938 = vmatpush1.bf16.msra.mxu0 %v6892
        %6939 = vmatprep.subr.bf16.mxu0 0
        %6940 = vmatpush1.bf16.msra.mxu0 %v6893
        %6941 = vmatprep.subr.bf16.mxu0 0
        %6942 = vmatpush1.bf16.msra.mxu0 %v6894
        %6943 = vmatprep.mubr.bf16.mxu0 %v6812
        %6944 = vmatmul.mubr.bf16.gmra.mrb[0].mxu0 %v6811
        %v6945 = vpop.f32.mrb[0].mxu0
        %v6946 = vadd.f32 0.0, %v6945
        %v6947 = vpop.f32.mrb[0].mxu0
        %v6948 = vpop.f32.mrb[0].mxu0
        %v6949 = vpop.f32.mrb[0].mxu0
        %6950 = vdwg.mxu0
        %v6951 = vadd.f32 %v6775, %v6946
        %v6953 = vrot.slane %v6591, 1
        %v6955 = vmax.f32 %v6591, %v6953
        %v6957 = vrot.slane %v6955, 2
        %v6959 = vpack.c.bf16 %v6955, %v6955
        %v6960 = vpack.c.bf16 %v6957, %v6957
        %s6961 = scalar_lea.vmem %s5, 256
        %v6962 = vld [vmem:[%s6961] sm:$0xf]
        %v6963 = vld [vmem:[%s6961 + $0x4] sm:$0xf]
        %v6964 = vld [vmem:[%s6961 + $0x8] sm:$0xf]
        %v6965 = vld [vmem:[%s6961 + $0xc] sm:$0xf]
        %v6966 = vld [vmem:[%s6961 + $0x10] sm:$0xf]
        %v6967 = vld [vmem:[%s6961 + $0x14] sm:$0xf]
        %v6968 = vld [vmem:[%s6961 + $0x18] sm:$0xf]
        %v6969 = vld [vmem:[%s6961 + $0x1c] sm:$0xf]
        %v6970 = vld [vmem:[%s6961 + $0x20] sm:$0xf]
        %v6971 = vld [vmem:[%s6961 + $0x24] sm:$0xf]
        %v6972 = vld [vmem:[%s6961 + $0x28] sm:$0xf]
        %v6973 = vld [vmem:[%s6961 + $0x2c] sm:$0xf]
        %v6974 = vld [vmem:[%s6961 + $0x30] sm:$0xf]
        %v6975 = vld [vmem:[%s6961 + $0x34] sm:$0xf]
        %v6976 = vld [vmem:[%s6961 + $0x38] sm:$0xf]
        %v6977 = vld [vmem:[%s6961 + $0x3c] sm:$0xf]
        %v6978 = vld [vmem:[%s6961 + $0x40] sm:$0xf]
        %v6979 = vld [vmem:[%s6961 + $0x44] sm:$0xf]
        %v6980 = vld [vmem:[%s6961 + $0x48] sm:$0xf]
        %v6981 = vld [vmem:[%s6961 + $0x4c] sm:$0xf]
        %v6982 = vld [vmem:[%s6961 + $0x50] sm:$0xf]
        %v6983 = vld [vmem:[%s6961 + $0x54] sm:$0xf]
        %v6984 = vld [vmem:[%s6961 + $0x58] sm:$0xf]
        %v6985 = vld [vmem:[%s6961 + $0x5c] sm:$0xf]
        %v6986 = vld [vmem:[%s6961 + $0x60] sm:$0xf]
        %v6987 = vld [vmem:[%s6961 + $0x64] sm:$0xf]
        %v6988 = vld [vmem:[%s6961 + $0x68] sm:$0xf]
        %v6989 = vld [vmem:[%s6961 + $0x6c] sm:$0xf]
        %v6990 = vld [vmem:[%s6961 + $0x70] sm:$0xf]
        %v6991 = vld [vmem:[%s6961 + $0x74] sm:$0xf]
        %v6992 = vld [vmem:[%s6961 + $0x78] sm:$0xf]
        %v6993 = vld [vmem:[%s6961 + $0x7c] sm:$0xf]
        %v7026 = vunpack.c.l.b16 %v6962
        %v7027 = vunpack.c.l.b16 %v6963
        %v7028 = vunpack.c.l.b16 %v6964
        %v7029 = vunpack.c.l.b16 %v6965
        %v7030 = vunpack.c.l.b16 %v6966
        %v7031 = vunpack.c.l.b16 %v6967
        %v7032 = vunpack.c.l.b16 %v6968
        %v7033 = vunpack.c.l.b16 %v6969
        %v7034 = vunpack.c.l.b16 %v6970
        %v7035 = vunpack.c.l.b16 %v6971
        %v7036 = vunpack.c.l.b16 %v6972
        %v7037 = vunpack.c.l.b16 %v6973
        %v7038 = vunpack.c.l.b16 %v6974
        %v7039 = vunpack.c.l.b16 %v6975
        %v7040 = vunpack.c.l.b16 %v6976
        %v7041 = vunpack.c.l.b16 %v6977
        %v7042 = vunpack.c.l.b16 %v6978
        %v7043 = vunpack.c.l.b16 %v6979
        %v7044 = vunpack.c.l.b16 %v6980
        %v7045 = vunpack.c.l.b16 %v6981
        %v7046 = vunpack.c.l.b16 %v6982
        %v7047 = vunpack.c.l.b16 %v6983
        %v7048 = vunpack.c.l.b16 %v6984
        %v7049 = vunpack.c.l.b16 %v6985
        %v7050 = vunpack.c.l.b16 %v6986
        %v7051 = vunpack.c.l.b16 %v6987
        %v7052 = vunpack.c.l.b16 %v6988
        %v7053 = vunpack.c.l.b16 %v6989
        %v7054 = vunpack.c.l.b16 %v6990
        %v7055 = vunpack.c.l.b16 %v6991
        %v7056 = vunpack.c.l.b16 %v6992
        %v7057 = vunpack.c.l.b16 %v6993
        %v7058 = vpack.c.b16 %v7027, %v7026
        %v7059 = vpack.c.b16 %v7029, %v7028
        %v7060 = vpack.c.b16 %v7031, %v7030
        %v7061 = vpack.c.b16 %v7033, %v7032
        %v7062 = vpack.c.b16 %v7035, %v7034
        %v7063 = vpack.c.b16 %v7037, %v7036
        %v7064 = vpack.c.b16 %v7039, %v7038
        %v7065 = vpack.c.b16 %v7041, %v7040
        %v7066 = vpack.c.b16 %v7043, %v7042
        %v7067 = vpack.c.b16 %v7045, %v7044
        %v7068 = vpack.c.b16 %v7047, %v7046
        %v7069 = vpack.c.b16 %v7049, %v7048
        %v7070 = vpack.c.b16 %v7051, %v7050
        %v7071 = vpack.c.b16 %v7053, %v7052
        %v7072 = vpack.c.b16 %v7055, %v7054
        %v7073 = vpack.c.b16 %v7057, %v7056
        %7090 = vmatprep.subr.bf16.mxu0 0
        %7091 = vmatpush1.bf16.msra.mxu0 %v7058
        %7092 = vmatprep.subr.bf16.mxu0 0
        %7093 = vmatpush1.bf16.msra.mxu0 %v7059
        %7094 = vmatprep.subr.bf16.mxu0 0
        %7095 = vmatpush1.bf16.msra.mxu0 %v7060
        %7096 = vmatprep.subr.bf16.mxu0 0
        %7097 = vmatpush1.bf16.msra.mxu0 %v7061
        %7098 = vmatprep.subr.bf16.mxu0 0
        %7099 = vmatpush1.bf16.msra.mxu0 %v7062
        %7100 = vmatprep.subr.bf16.mxu0 0
        %7101 = vmatpush1.bf16.msra.mxu0 %v7063
        %7102 = vmatprep.subr.bf16.mxu0 0
        %7103 = vmatpush1.bf16.msra.mxu0 %v7064
        %7104 = vmatprep.subr.bf16.mxu0 0
        %7105 = vmatpush1.bf16.msra.mxu0 %v7065
        %7106 = vmatprep.subr.bf16.mxu0 0
        %7107 = vmatpush1.bf16.msra.mxu0 %v7066
        %7108 = vmatprep.subr.bf16.mxu0 0
        %7109 = vmatpush1.bf16.msra.mxu0 %v7067
        %7110 = vmatprep.subr.bf16.mxu0 0
        %7111 = vmatpush1.bf16.msra.mxu0 %v7068
        %7112 = vmatprep.subr.bf16.mxu0 0
        %7113 = vmatpush1.bf16.msra.mxu0 %v7069
        %7114 = vmatprep.subr.bf16.mxu0 0
        %7115 = vmatpush1.bf16.msra.mxu0 %v7070
        %7116 = vmatprep.subr.bf16.mxu0 0
        %7117 = vmatpush1.bf16.msra.mxu0 %v7071
        %7118 = vmatprep.subr.bf16.mxu0 0
        %7119 = vmatpush1.bf16.msra.mxu0 %v7072
        %7120 = vmatprep.subr.bf16.mxu0 0
        %7121 = vmatpush1.bf16.msra.mxu0 %v7073
        %7122 = vmatprep.mubr.bf16.mxu0 %v6960
        %7123 = vmatmul.mubr.bf16.gmra.mrb[0].mxu0 %v6959
        %v7124 = vpop.f32.mrb[0].mxu0
        %v7125 = vadd.f32 0.0, %v7124
        %v7126 = vpop.f32.mrb[0].mxu0
        %v7127 = vpop.f32.mrb[0].mxu0
        %v7128 = vpop.f32.mrb[0].mxu0
        %7129 = vdwg.mxu0
        %v7130 = vadd.f32 %v6951, %v7125
        %s7131 = scalar_lea.vmem %s5, 384
        %v7132 = vld [vmem:[%s7131] sm:$0xf]
        %v7133 = vld [vmem:[%s7131 + $0x4] sm:$0xf]
        %v7134 = vld [vmem:[%s7131 + $0x8] sm:$0xf]
        %v7135 = vld [vmem:[%s7131 + $0xc] sm:$0xf]
        %v7136 = vld [vmem:[%s7131 + $0x10] sm:$0xf]
        %v7137 = vld [vmem:[%s7131 + $0x14] sm:$0xf]
        %v7138 = vld [vmem:[%s7131 + $0x18] sm:$0xf]
        %v7139 = vld [vmem:[%s7131 + $0x1c] sm:$0xf]
        %v7140 = vld [vmem:[%s7131 + $0x20] sm:$0xf]
        %v7141 = vld [vmem:[%s7131 + $0x24] sm:$0xf]
        %v7142 = vld [vmem:[%s7131 + $0x28] sm:$0xf]
        %v7143 = vld [vmem:[%s7131 + $0x2c] sm:$0xf]
        %v7144 = vld [vmem:[%s7131 + $0x30] sm:$0xf]
        %v7145 = vld [vmem:[%s7131 + $0x34] sm:$0xf]
        %v7146 = vld [vmem:[%s7131 + $0x38] sm:$0xf]
        %v7147 = vld [vmem:[%s7131 + $0x3c] sm:$0xf]
        %v7148 = vld [vmem:[%s7131 + $0x40] sm:$0xf]
        %v7149 = vld [vmem:[%s7131 + $0x44] sm:$0xf]
        %v7150 = vld [vmem:[%s7131 + $0x48] sm:$0xf]
        %v7151 = vld [vmem:[%s7131 + $0x4c] sm:$0xf]
        %v7152 = vld [vmem:[%s7131 + $0x50] sm:$0xf]
        %v7153 = vld [vmem:[%s7131 + $0x54] sm:$0xf]
        %v7154 = vld [vmem:[%s7131 + $0x58] sm:$0xf]
        %v7155 = vld [vmem:[%s7131 + $0x5c] sm:$0xf]
        %v7156 = vld [vmem:[%s7131 + $0x60] sm:$0xf]
        %v7157 = vld [vmem:[%s7131 + $0x64] sm:$0xf]
        %v7158 = vld [vmem:[%s7131 + $0x68] sm:$0xf]
        %v7159 = vld [vmem:[%s7131 + $0x6c] sm:$0xf]
        %v7160 = vld [vmem:[%s7131 + $0x70] sm:$0xf]
        %v7161 = vld [vmem:[%s7131 + $0x74] sm:$0xf]
        %v7162 = vld [vmem:[%s7131 + $0x78] sm:$0xf]
        %v7163 = vld [vmem:[%s7131 + $0x7c] sm:$0xf]
        %v7166 = vrot.slane %v6959, 2
        %v7167 = vrot.slane %v6960, 2
        %v7202 = vunpack.c.l.b16 %v7132
        %v7203 = vunpack.c.l.b16 %v7133
        %v7204 = vunpack.c.l.b16 %v7134
        %v7205 = vunpack.c.l.b16 %v7135
        %v7206 = vunpack.c.l.b16 %v7136
        %v7207 = vunpack.c.l.b16 %v7137
        %v7208 = vunpack.c.l.b16 %v7138
        %v7209 = vunpack.c.l.b16 %v7139
        %v7210 = vunpack.c.l.b16 %v7140
        %v7211 = vunpack.c.l.b16 %v7141
        %v7212 = vunpack.c.l.b16 %v7142
        %v7213 = vunpack.c.l.b16 %v7143
        %v7214 = vunpack.c.l.b16 %v7144
        %v7215 = vunpack.c.l.b16 %v7145
        %v7216 = vunpack.c.l.b16 %v7146
        %v7217 = vunpack.c.l.b16 %v7147
        %v7218 = vunpack.c.l.b16 %v7148
        %v7219 = vunpack.c.l.b16 %v7149
        %v7220 = vunpack.c.l.b16 %v7150
        %v7221 = vunpack.c.l.b16 %v7151
        %v7222 = vunpack.c.l.b16 %v7152
        %v7223 = vunpack.c.l.b16 %v7153
        %v7224 = vunpack.c.l.b16 %v7154
        %v7225 = vunpack.c.l.b16 %v7155
        %v7226 = vunpack.c.l.b16 %v7156
        %v7227 = vunpack.c.l.b16 %v7157
        %v7228 = vunpack.c.l.b16 %v7158
        %v7229 = vunpack.c.l.b16 %v7159
        %v7230 = vunpack.c.l.b16 %v7160
        %v7231 = vunpack.c.l.b16 %v7161
        %v7232 = vunpack.c.l.b16 %v7162
        %v7233 = vunpack.c.l.b16 %v7163
        %v7234 = vpack.c.b16 %v7203, %v7202
        %v7235 = vpack.c.b16 %v7205, %v7204
        %v7236 = vpack.c.b16 %v7207, %v7206
        %v7237 = vpack.c.b16 %v7209, %v7208
        %v7238 = vpack.c.b16 %v7211, %v7210
        %v7239 = vpack.c.b16 %v7213, %v7212
        %v7240 = vpack.c.b16 %v7215, %v7214
        %v7241 = vpack.c.b16 %v7217, %v7216
        %v7242 = vpack.c.b16 %v7219, %v7218
        %v7243 = vpack.c.b16 %v7221, %v7220
        %v7244 = vpack.c.b16 %v7223, %v7222
        %v7245 = vpack.c.b16 %v7225, %v7224
        %v7246 = vpack.c.b16 %v7227, %v7226
        %v7247 = vpack.c.b16 %v7229, %v7228
        %v7248 = vpack.c.b16 %v7231, %v7230
        %v7249 = vpack.c.b16 %v7233, %v7232
        %7266 = vmatprep.subr.bf16.mxu0 0
        %7267 = vmatpush1.bf16.msra.mxu0 %v7234
        %7268 = vmatprep.subr.bf16.mxu0 0
        %7269 = vmatpush1.bf16.msra.mxu0 %v7235
        %7270 = vmatprep.subr.bf16.mxu0 0
        %7271 = vmatpush1.bf16.msra.mxu0 %v7236
        %7272 = vmatprep.subr.bf16.mxu0 0
        %7273 = vmatpush1.bf16.msra.mxu0 %v7237
        %7274 = vmatprep.subr.bf16.mxu0 0
        %7275 = vmatpush1.bf16.msra.mxu0 %v7238
        %7276 = vmatprep.subr.bf16.mxu0 0
        %7277 = vmatpush1.bf16.msra.mxu0 %v7239
        %7278 = vmatprep.subr.bf16.mxu0 0
        %7279 = vmatpush1.bf16.msra.mxu0 %v7240
        %7280 = vmatprep.subr.bf16.mxu0 0
        %7281 = vmatpush1.bf16.msra.mxu0 %v7241
        %7282 = vmatprep.subr.bf16.mxu0 0
        %7283 = vmatpush1.bf16.msra.mxu0 %v7242
        %7284 = vmatprep.subr.bf16.mxu0 0
        %7285 = vmatpush1.bf16.msra.mxu0 %v7243
        %7286 = vmatprep.subr.bf16.mxu0 0
        %7287 = vmatpush1.bf16.msra.mxu0 %v7244
        %7288 = vmatprep.subr.bf16.mxu0 0
        %7289 = vmatpush1.bf16.msra.mxu0 %v7245
        %7290 = vmatprep.subr.bf16.mxu0 0
        %7291 = vmatpush1.bf16.msra.mxu0 %v7246
        %7292 = vmatprep.subr.bf16.mxu0 0
        %7293 = vmatpush1.bf16.msra.mxu0 %v7247
        %7294 = vmatprep.subr.bf16.mxu0 0
        %7295 = vmatpush1.bf16.msra.mxu0 %v7248
        %7296 = vmatprep.subr.bf16.mxu0 0
        %7297 = vmatpush1.bf16.msra.mxu0 %v7249
        %7298 = vmatprep.mubr.bf16.mxu0 %v7167
        %7299 = vmatmul.mubr.bf16.gmra.mrb[0].mxu0 %v7166
        %v7300 = vpop.f32.mrb[0].mxu0
        %v7301 = vadd.f32 0.0, %v7300
        %v7302 = vpop.f32.mrb[0].mxu0
        %v7303 = vpop.f32.mrb[0].mxu0
        %v7304 = vpop.f32.mrb[0].mxu0
        %7305 = vdwg.mxu0
        %v7306 = vadd.f32 %v7130, %v7301
        %v7308 = vrot.slane %v6592, 1
        %v7310 = vmax.f32 %v6592, %v7308
        %v7312 = vrot.slane %v7310, 2
        %v7314 = vpack.c.bf16 %v7310, %v7310
        %v7315 = vpack.c.bf16 %v7312, %v7312
        %s7316 = scalar_lea.vmem %s5, 512
        %v7317 = vld [vmem:[%s7316] sm:$0xf]
        %v7318 = vld [vmem:[%s7316 + $0x4] sm:$0xf]
        %v7319 = vld [vmem:[%s7316 + $0x8] sm:$0xf]
        %v7320 = vld [vmem:[%s7316 + $0xc] sm:$0xf]
        %v7321 = vld [vmem:[%s7316 + $0x10] sm:$0xf]
        %v7322 = vld [vmem:[%s7316 + $0x14] sm:$0xf]
        %v7323 = vld [vmem:[%s7316 + $0x18] sm:$0xf]
        %v7324 = vld [vmem:[%s7316 + $0x1c] sm:$0xf]
        %v7325 = vld [vmem:[%s7316 + $0x20] sm:$0xf]
        %v7326 = vld [vmem:[%s7316 + $0x24] sm:$0xf]
        %v7327 = vld [vmem:[%s7316 + $0x28] sm:$0xf]
        %v7328 = vld [vmem:[%s7316 + $0x2c] sm:$0xf]
        %v7329 = vld [vmem:[%s7316 + $0x30] sm:$0xf]
        %v7330 = vld [vmem:[%s7316 + $0x34] sm:$0xf]
        %v7331 = vld [vmem:[%s7316 + $0x38] sm:$0xf]
        %v7332 = vld [vmem:[%s7316 + $0x3c] sm:$0xf]
        %v7333 = vld [vmem:[%s7316 + $0x40] sm:$0xf]
        %v7334 = vld [vmem:[%s7316 + $0x44] sm:$0xf]
        %v7335 = vld [vmem:[%s7316 + $0x48] sm:$0xf]
        %v7336 = vld [vmem:[%s7316 + $0x4c] sm:$0xf]
        %v7337 = vld [vmem:[%s7316 + $0x50] sm:$0xf]
        %v7338 = vld [vmem:[%s7316 + $0x54] sm:$0xf]
        %v7339 = vld [vmem:[%s7316 + $0x58] sm:$0xf]
        %v7340 = vld [vmem:[%s7316 + $0x5c] sm:$0xf]
        %v7341 = vld [vmem:[%s7316 + $0x60] sm:$0xf]
        %v7342 = vld [vmem:[%s7316 + $0x64] sm:$0xf]
        %v7343 = vld [vmem:[%s7316 + $0x68] sm:$0xf]
        %v7344 = vld [vmem:[%s7316 + $0x6c] sm:$0xf]
        %v7345 = vld [vmem:[%s7316 + $0x70] sm:$0xf]
        %v7346 = vld [vmem:[%s7316 + $0x74] sm:$0xf]
        %v7347 = vld [vmem:[%s7316 + $0x78] sm:$0xf]
        %v7348 = vld [vmem:[%s7316 + $0x7c] sm:$0xf]
        %v7381 = vunpack.c.l.b16 %v7317
        %v7382 = vunpack.c.l.b16 %v7318
        %v7383 = vunpack.c.l.b16 %v7319
        %v7384 = vunpack.c.l.b16 %v7320
        %v7385 = vunpack.c.l.b16 %v7321
        %v7386 = vunpack.c.l.b16 %v7322
        %v7387 = vunpack.c.l.b16 %v7323
        %v7388 = vunpack.c.l.b16 %v7324
        %v7389 = vunpack.c.l.b16 %v7325
        %v7390 = vunpack.c.l.b16 %v7326
        %v7391 = vunpack.c.l.b16 %v7327
        %v7392 = vunpack.c.l.b16 %v7328
        %v7393 = vunpack.c.l.b16 %v7329
        %v7394 = vunpack.c.l.b16 %v7330
        %v7395 = vunpack.c.l.b16 %v7331
        %v7396 = vunpack.c.l.b16 %v7332
        %v7397 = vunpack.c.l.b16 %v7333
        %v7398 = vunpack.c.l.b16 %v7334
        %v7399 = vunpack.c.l.b16 %v7335
        %v7400 = vunpack.c.l.b16 %v7336
        %v7401 = vunpack.c.l.b16 %v7337
        %v7402 = vunpack.c.l.b16 %v7338
        %v7403 = vunpack.c.l.b16 %v7339
        %v7404 = vunpack.c.l.b16 %v7340
        %v7405 = vunpack.c.l.b16 %v7341
        %v7406 = vunpack.c.l.b16 %v7342
        %v7407 = vunpack.c.l.b16 %v7343
        %v7408 = vunpack.c.l.b16 %v7344
        %v7409 = vunpack.c.l.b16 %v7345
        %v7410 = vunpack.c.l.b16 %v7346
        %v7411 = vunpack.c.l.b16 %v7347
        %v7412 = vunpack.c.l.b16 %v7348
        %v7413 = vpack.c.b16 %v7382, %v7381
        %v7414 = vpack.c.b16 %v7384, %v7383
        %v7415 = vpack.c.b16 %v7386, %v7385
        %v7416 = vpack.c.b16 %v7388, %v7387
        %v7417 = vpack.c.b16 %v7390, %v7389
        %v7418 = vpack.c.b16 %v7392, %v7391
        %v7419 = vpack.c.b16 %v7394, %v7393
        %v7420 = vpack.c.b16 %v7396, %v7395
        %v7421 = vpack.c.b16 %v7398, %v7397
        %v7422 = vpack.c.b16 %v7400, %v7399
        %v7423 = vpack.c.b16 %v7402, %v7401
        %v7424 = vpack.c.b16 %v7404, %v7403
        %v7425 = vpack.c.b16 %v7406, %v7405
        %v7426 = vpack.c.b16 %v7408, %v7407
        %v7427 = vpack.c.b16 %v7410, %v7409
        %v7428 = vpack.c.b16 %v7412, %v7411
        %7445 = vmatprep.subr.bf16.mxu0 0
        %7446 = vmatpush1.bf16.msra.mxu0 %v7413
        %7447 = vmatprep.subr.bf16.mxu0 0
        %7448 = vmatpush1.bf16.msra.mxu0 %v7414
        %7449 = vmatprep.subr.bf16.mxu0 0
        %7450 = vmatpush1.bf16.msra.mxu0 %v7415
        %7451 = vmatprep.subr.bf16.mxu0 0
        %7452 = vmatpush1.bf16.msra.mxu0 %v7416
        %7453 = vmatprep.subr.bf16.mxu0 0
        %7454 = vmatpush1.bf16.msra.mxu0 %v7417
        %7455 = vmatprep.subr.bf16.mxu0 0
        %7456 = vmatpush1.bf16.msra.mxu0 %v7418
        %7457 = vmatprep.subr.bf16.mxu0 0
        %7458 = vmatpush1.bf16.msra.mxu0 %v7419
        %7459 = vmatprep.subr.bf16.mxu0 0
        %7460 = vmatpush1.bf16.msra.mxu0 %v7420
        %7461 = vmatprep.subr.bf16.mxu0 0
        %7462 = vmatpush1.bf16.msra.mxu0 %v7421
        %7463 = vmatprep.subr.bf16.mxu0 0
        %7464 = vmatpush1.bf16.msra.mxu0 %v7422
        %7465 = vmatprep.subr.bf16.mxu0 0
        %7466 = vmatpush1.bf16.msra.mxu0 %v7423
        %7467 = vmatprep.subr.bf16.mxu0 0
        %7468 = vmatpush1.bf16.msra.mxu0 %v7424
        %7469 = vmatprep.subr.bf16.mxu0 0
        %7470 = vmatpush1.bf16.msra.mxu0 %v7425
        %7471 = vmatprep.subr.bf16.mxu0 0
        %7472 = vmatpush1.bf16.msra.mxu0 %v7426
        %7473 = vmatprep.subr.bf16.mxu0 0
        %7474 = vmatpush1.bf16.msra.mxu0 %v7427
        %7475 = vmatprep.subr.bf16.mxu0 0
        %7476 = vmatpush1.bf16.msra.mxu0 %v7428
        %7477 = vmatprep.mubr.bf16.mxu0 %v7315
        %7478 = vmatmul.mubr.bf16.gmra.mrb[0].mxu0 %v7314
        %v7479 = vpop.f32.mrb[0].mxu0
        %v7480 = vadd.f32 0.0, %v7479
        %v7481 = vpop.f32.mrb[0].mxu0
        %v7482 = vpop.f32.mrb[0].mxu0
        %v7483 = vpop.f32.mrb[0].mxu0
        %7484 = vdwg.mxu0
        %v7485 = vadd.f32 %v7306, %v7480
        %s7486 = scalar_lea.vmem %s5, 640
        %v7487 = vld [vmem:[%s7486] sm:$0xf]
        %v7488 = vld [vmem:[%s7486 + $0x4] sm:$0xf]
        %v7489 = vld [vmem:[%s7486 + $0x8] sm:$0xf]
        %v7490 = vld [vmem:[%s7486 + $0xc] sm:$0xf]
        %v7491 = vld [vmem:[%s7486 + $0x10] sm:$0xf]
        %v7492 = vld [vmem:[%s7486 + $0x14] sm:$0xf]
        %v7493 = vld [vmem:[%s7486 + $0x18] sm:$0xf]
        %v7494 = vld [vmem:[%s7486 + $0x1c] sm:$0xf]
        %v7495 = vld [vmem:[%s7486 + $0x20] sm:$0xf]
        %v7496 = vld [vmem:[%s7486 + $0x24] sm:$0xf]
        %v7497 = vld [vmem:[%s7486 + $0x28] sm:$0xf]
        %v7498 = vld [vmem:[%s7486 + $0x2c] sm:$0xf]
        %v7499 = vld [vmem:[%s7486 + $0x30] sm:$0xf]
        %v7500 = vld [vmem:[%s7486 + $0x34] sm:$0xf]
        %v7501 = vld [vmem:[%s7486 + $0x38] sm:$0xf]
        %v7502 = vld [vmem:[%s7486 + $0x3c] sm:$0xf]
        %v7503 = vld [vmem:[%s7486 + $0x40] sm:$0xf]
        %v7504 = vld [vmem:[%s7486 + $0x44] sm:$0xf]
        %v7505 = vld [vmem:[%s7486 + $0x48] sm:$0xf]
        %v7506 = vld [vmem:[%s7486 + $0x4c] sm:$0xf]
        %v7507 = vld [vmem:[%s7486 + $0x50] sm:$0xf]
        %v7508 = vld [vmem:[%s7486 + $0x54] sm:$0xf]
        %v7509 = vld [vmem:[%s7486 + $0x58] sm:$0xf]
        %v7510 = vld [vmem:[%s7486 + $0x5c] sm:$0xf]
        %v7511 = vld [vmem:[%s7486 + $0x60] sm:$0xf]
        %v7512 = vld [vmem:[%s7486 + $0x64] sm:$0xf]
        %v7513 = vld [vmem:[%s7486 + $0x68] sm:$0xf]
        %v7514 = vld [vmem:[%s7486 + $0x6c] sm:$0xf]
        %v7515 = vld [vmem:[%s7486 + $0x70] sm:$0xf]
        %v7516 = vld [vmem:[%s7486 + $0x74] sm:$0xf]
        %v7517 = vld [vmem:[%s7486 + $0x78] sm:$0xf]
        %v7518 = vld [vmem:[%s7486 + $0x7c] sm:$0xf]
        %v7521 = vrot.slane %v7314, 2
        %v7522 = vrot.slane %v7315, 2
        %v7557 = vunpack.c.l.b16 %v7487
        %v7558 = vunpack.c.l.b16 %v7488
        %v7559 = vunpack.c.l.b16 %v7489
        %v7560 = vunpack.c.l.b16 %v7490
        %v7561 = vunpack.c.l.b16 %v7491
        %v7562 = vunpack.c.l.b16 %v7492
        %v7563 = vunpack.c.l.b16 %v7493
        %v7564 = vunpack.c.l.b16 %v7494
        %v7565 = vunpack.c.l.b16 %v7495
        %v7566 = vunpack.c.l.b16 %v7496
        %v7567 = vunpack.c.l.b16 %v7497
        %v7568 = vunpack.c.l.b16 %v7498
        %v7569 = vunpack.c.l.b16 %v7499
        %v7570 = vunpack.c.l.b16 %v7500
        %v7571 = vunpack.c.l.b16 %v7501
        %v7572 = vunpack.c.l.b16 %v7502
        %v7573 = vunpack.c.l.b16 %v7503
        %v7574 = vunpack.c.l.b16 %v7504
        %v7575 = vunpack.c.l.b16 %v7505
        %v7576 = vunpack.c.l.b16 %v7506
        %v7577 = vunpack.c.l.b16 %v7507
        %v7578 = vunpack.c.l.b16 %v7508
        %v7579 = vunpack.c.l.b16 %v7509
        %v7580 = vunpack.c.l.b16 %v7510
        %v7581 = vunpack.c.l.b16 %v7511
        %v7582 = vunpack.c.l.b16 %v7512
        %v7583 = vunpack.c.l.b16 %v7513
        %v7584 = vunpack.c.l.b16 %v7514
        %v7585 = vunpack.c.l.b16 %v7515
        %v7586 = vunpack.c.l.b16 %v7516
        %v7587 = vunpack.c.l.b16 %v7517
        %v7588 = vunpack.c.l.b16 %v7518
        %v7589 = vpack.c.b16 %v7558, %v7557
        %v7590 = vpack.c.b16 %v7560, %v7559
        %v7591 = vpack.c.b16 %v7562, %v7561
        %v7592 = vpack.c.b16 %v7564, %v7563
        %v7593 = vpack.c.b16 %v7566, %v7565
        %v7594 = vpack.c.b16 %v7568, %v7567
        %v7595 = vpack.c.b16 %v7570, %v7569
        %v7596 = vpack.c.b16 %v7572, %v7571
        %v7597 = vpack.c.b16 %v7574, %v7573
        %v7598 = vpack.c.b16 %v7576, %v7575
        %v7599 = vpack.c.b16 %v7578, %v7577
        %v7600 = vpack.c.b16 %v7580, %v7579
        %v7601 = vpack.c.b16 %v7582, %v7581
        %v7602 = vpack.c.b16 %v7584, %v7583
        %v7603 = vpack.c.b16 %v7586, %v7585
        %v7604 = vpack.c.b16 %v7588, %v7587
        %7621 = vmatprep.subr.bf16.mxu0 0
        %7622 = vmatpush1.bf16.msra.mxu0 %v7589
        %7623 = vmatprep.subr.bf16.mxu0 0
        %7624 = vmatpush1.bf16.msra.mxu0 %v7590
        %7625 = vmatprep.subr.bf16.mxu0 0
        %7626 = vmatpush1.bf16.msra.mxu0 %v7591
        %7627 = vmatprep.subr.bf16.mxu0 0
        %7628 = vmatpush1.bf16.msra.mxu0 %v7592
        %7629 = vmatprep.subr.bf16.mxu0 0
        %7630 = vmatpush1.bf16.msra.mxu0 %v7593
        %7631 = vmatprep.subr.bf16.mxu0 0
        %7632 = vmatpush1.bf16.msra.mxu0 %v7594
        %7633 = vmatprep.subr.bf16.mxu0 0
        %7634 = vmatpush1.bf16.msra.mxu0 %v7595
        %7635 = vmatprep.subr.bf16.mxu0 0
        %7636 = vmatpush1.bf16.msra.mxu0 %v7596
        %7637 = vmatprep.subr.bf16.mxu0 0
        %7638 = vmatpush1.bf16.msra.mxu0 %v7597
        %7639 = vmatprep.subr.bf16.mxu0 0
        %7640 = vmatpush1.bf16.msra.mxu0 %v7598
        %7641 = vmatprep.subr.bf16.mxu0 0
        %7642 = vmatpush1.bf16.msra.mxu0 %v7599
        %7643 = vmatprep.subr.bf16.mxu0 0
        %7644 = vmatpush1.bf16.msra.mxu0 %v7600
        %7645 = vmatprep.subr.bf16.mxu0 0
        %7646 = vmatpush1.bf16.msra.mxu0 %v7601
        %7647 = vmatprep.subr.bf16.mxu0 0
        %7648 = vmatpush1.bf16.msra.mxu0 %v7602
        %7649 = vmatprep.subr.bf16.mxu0 0
        %7650 = vmatpush1.bf16.msra.mxu0 %v7603
        %7651 = vmatprep.subr.bf16.mxu0 0
        %7652 = vmatpush1.bf16.msra.mxu0 %v7604
        %7653 = vmatprep.mubr.bf16.mxu0 %v7522
        %7654 = vmatmul.mubr.bf16.gmra.mrb[0].mxu0 %v7521
        %v7655 = vpop.f32.mrb[0].mxu0
        %v7656 = vadd.f32 0.0, %v7655
        %v7657 = vpop.f32.mrb[0].mxu0
        %v7658 = vpop.f32.mrb[0].mxu0
        %v7659 = vpop.f32.mrb[0].mxu0
        %7660 = vdwg.mxu0
        %v7661 = vadd.f32 %v7485, %v7656
        %v7663 = vrot.slane %v6593, 1
        %v7665 = vmax.f32 %v6593, %v7663
        %v7667 = vrot.slane %v7665, 2
        %v7669 = vpack.c.bf16 %v7665, %v7665
        %v7670 = vpack.c.bf16 %v7667, %v7667
        %s7671 = scalar_lea.vmem %s5, 768
        %v7672 = vld [vmem:[%s7671] sm:$0xf]
        %v7673 = vld [vmem:[%s7671 + $0x4] sm:$0xf]
        %v7674 = vld [vmem:[%s7671 + $0x8] sm:$0xf]
        %v7675 = vld [vmem:[%s7671 + $0xc] sm:$0xf]
        %v7676 = vld [vmem:[%s7671 + $0x10] sm:$0xf]
        %v7677 = vld [vmem:[%s7671 + $0x14] sm:$0xf]
        %v7678 = vld [vmem:[%s7671 + $0x18] sm:$0xf]
        %v7679 = vld [vmem:[%s7671 + $0x1c] sm:$0xf]
        %v7680 = vld [vmem:[%s7671 + $0x20] sm:$0xf]
        %v7681 = vld [vmem:[%s7671 + $0x24] sm:$0xf]
        %v7682 = vld [vmem:[%s7671 + $0x28] sm:$0xf]
        %v7683 = vld [vmem:[%s7671 + $0x2c] sm:$0xf]
        %v7684 = vld [vmem:[%s7671 + $0x30] sm:$0xf]
        %v7685 = vld [vmem:[%s7671 + $0x34] sm:$0xf]
        %v7686 = vld [vmem:[%s7671 + $0x38] sm:$0xf]
        %v7687 = vld [vmem:[%s7671 + $0x3c] sm:$0xf]
        %v7688 = vld [vmem:[%s7671 + $0x40] sm:$0xf]
        %v7689 = vld [vmem:[%s7671 + $0x44] sm:$0xf]
        %v7690 = vld [vmem:[%s7671 + $0x48] sm:$0xf]
        %v7691 = vld [vmem:[%s7671 + $0x4c] sm:$0xf]
        %v7692 = vld [vmem:[%s7671 + $0x50] sm:$0xf]
        %v7693 = vld [vmem:[%s7671 + $0x54] sm:$0xf]
        %v7694 = vld [vmem:[%s7671 + $0x58] sm:$0xf]
        %v7695 = vld [vmem:[%s7671 + $0x5c] sm:$0xf]
        %v7696 = vld [vmem:[%s7671 + $0x60] sm:$0xf]
        %v7697 = vld [vmem:[%s7671 + $0x64] sm:$0xf]
        %v7698 = vld [vmem:[%s7671 + $0x68] sm:$0xf]
        %v7699 = vld [vmem:[%s7671 + $0x6c] sm:$0xf]
        %v7700 = vld [vmem:[%s7671 + $0x70] sm:$0xf]
        %v7701 = vld [vmem:[%s7671 + $0x74] sm:$0xf]
        %v7702 = vld [vmem:[%s7671 + $0x78] sm:$0xf]
        %v7703 = vld [vmem:[%s7671 + $0x7c] sm:$0xf]
        %v7736 = vunpack.c.l.b16 %v7672
        %v7737 = vunpack.c.l.b16 %v7673
        %v7738 = vunpack.c.l.b16 %v7674
        %v7739 = vunpack.c.l.b16 %v7675
        %v7740 = vunpack.c.l.b16 %v7676
        %v7741 = vunpack.c.l.b16 %v7677
        %v7742 = vunpack.c.l.b16 %v7678
        %v7743 = vunpack.c.l.b16 %v7679
        %v7744 = vunpack.c.l.b16 %v7680
        %v7745 = vunpack.c.l.b16 %v7681
        %v7746 = vunpack.c.l.b16 %v7682
        %v7747 = vunpack.c.l.b16 %v7683
        %v7748 = vunpack.c.l.b16 %v7684
        %v7749 = vunpack.c.l.b16 %v7685
        %v7750 = vunpack.c.l.b16 %v7686
        %v7751 = vunpack.c.l.b16 %v7687
        %v7752 = vunpack.c.l.b16 %v7688
        %v7753 = vunpack.c.l.b16 %v7689
        %v7754 = vunpack.c.l.b16 %v7690
        %v7755 = vunpack.c.l.b16 %v7691
        %v7756 = vunpack.c.l.b16 %v7692
        %v7757 = vunpack.c.l.b16 %v7693
        %v7758 = vunpack.c.l.b16 %v7694
        %v7759 = vunpack.c.l.b16 %v7695
        %v7760 = vunpack.c.l.b16 %v7696
        %v7761 = vunpack.c.l.b16 %v7697
        %v7762 = vunpack.c.l.b16 %v7698
        %v7763 = vunpack.c.l.b16 %v7699
        %v7764 = vunpack.c.l.b16 %v7700
        %v7765 = vunpack.c.l.b16 %v7701
        %v7766 = vunpack.c.l.b16 %v7702
        %v7767 = vunpack.c.l.b16 %v7703
        %v7768 = vpack.c.b16 %v7737, %v7736
        %v7769 = vpack.c.b16 %v7739, %v7738
        %v7770 = vpack.c.b16 %v7741, %v7740
        %v7771 = vpack.c.b16 %v7743, %v7742
        %v7772 = vpack.c.b16 %v7745, %v7744
        %v7773 = vpack.c.b16 %v7747, %v7746
        %v7774 = vpack.c.b16 %v7749, %v7748
        %v7775 = vpack.c.b16 %v7751, %v7750
        %v7776 = vpack.c.b16 %v7753, %v7752
        %v7777 = vpack.c.b16 %v7755, %v7754
        %v7778 = vpack.c.b16 %v7757, %v7756
        %v7779 = vpack.c.b16 %v7759, %v7758
        %v7780 = vpack.c.b16 %v7761, %v7760
        %v7781 = vpack.c.b16 %v7763, %v7762
        %v7782 = vpack.c.b16 %v7765, %v7764
        %v7783 = vpack.c.b16 %v7767, %v7766
        %7800 = vmatprep.subr.bf16.mxu0 0
        %7801 = vmatpush1.bf16.msra.mxu0 %v7768
        %7802 = vmatprep.subr.bf16.mxu0 0
        %7803 = vmatpush1.bf16.msra.mxu0 %v7769
        %7804 = vmatprep.subr.bf16.mxu0 0
        %7805 = vmatpush1.bf16.msra.mxu0 %v7770
        %7806 = vmatprep.subr.bf16.mxu0 0
        %7807 = vmatpush1.bf16.msra.mxu0 %v7771
        %7808 = vmatprep.subr.bf16.mxu0 0
        %7809 = vmatpush1.bf16.msra.mxu0 %v7772
        %7810 = vmatprep.subr.bf16.mxu0 0
        %7811 = vmatpush1.bf16.msra.mxu0 %v7773
        %7812 = vmatprep.subr.bf16.mxu0 0
        %7813 = vmatpush1.bf16.msra.mxu0 %v7774
        %7814 = vmatprep.subr.bf16.mxu0 0
        %7815 = vmatpush1.bf16.msra.mxu0 %v7775
        %7816 = vmatprep.subr.bf16.mxu0 0
        %7817 = vmatpush1.bf16.msra.mxu0 %v7776
        %7818 = vmatprep.subr.bf16.mxu0 0
        %7819 = vmatpush1.bf16.msra.mxu0 %v7777
        %7820 = vmatprep.subr.bf16.mxu0 0
        %7821 = vmatpush1.bf16.msra.mxu0 %v7778
        %7822 = vmatprep.subr.bf16.mxu0 0
        %7823 = vmatpush1.bf16.msra.mxu0 %v7779
        %7824 = vmatprep.subr.bf16.mxu0 0
        %7825 = vmatpush1.bf16.msra.mxu0 %v7780
        %7826 = vmatprep.subr.bf16.mxu0 0
        %7827 = vmatpush1.bf16.msra.mxu0 %v7781
        %7828 = vmatprep.subr.bf16.mxu0 0
        %7829 = vmatpush1.bf16.msra.mxu0 %v7782
        %7830 = vmatprep.subr.bf16.mxu0 0
        %7831 = vmatpush1.bf16.msra.mxu0 %v7783
        %7832 = vmatprep.mubr.bf16.mxu0 %v7670
        %7833 = vmatmul.mubr.bf16.gmra.mrb[0].mxu0 %v7669
        %v7834 = vpop.f32.mrb[0].mxu0
        %v7835 = vadd.f32 0.0, %v7834
        %v7836 = vpop.f32.mrb[0].mxu0
        %v7837 = vpop.f32.mrb[0].mxu0
        %v7838 = vpop.f32.mrb[0].mxu0
        %7839 = vdwg.mxu0
        %v7840 = vadd.f32 %v7661, %v7835
        %s7841 = scalar_lea.vmem %s5, 896
        %v7842 = vld [vmem:[%s7841] sm:$0xf]
        %v7843 = vld [vmem:[%s7841 + $0x4] sm:$0xf]
        %v7844 = vld [vmem:[%s7841 + $0x8] sm:$0xf]
        %v7845 = vld [vmem:[%s7841 + $0xc] sm:$0xf]
        %v7846 = vld [vmem:[%s7841 + $0x10] sm:$0xf]
        %v7847 = vld [vmem:[%s7841 + $0x14] sm:$0xf]
        %v7848 = vld [vmem:[%s7841 + $0x18] sm:$0xf]
        %v7849 = vld [vmem:[%s7841 + $0x1c] sm:$0xf]
        %v7850 = vld [vmem:[%s7841 + $0x20] sm:$0xf]
        %v7851 = vld [vmem:[%s7841 + $0x24] sm:$0xf]
        %v7852 = vld [vmem:[%s7841 + $0x28] sm:$0xf]
        %v7853 = vld [vmem:[%s7841 + $0x2c] sm:$0xf]
        %v7854 = vld [vmem:[%s7841 + $0x30] sm:$0xf]
        %v7855 = vld [vmem:[%s7841 + $0x34] sm:$0xf]
        %v7856 = vld [vmem:[%s7841 + $0x38] sm:$0xf]
        %v7857 = vld [vmem:[%s7841 + $0x3c] sm:$0xf]
        %v7858 = vld [vmem:[%s7841 + $0x40] sm:$0xf]
        %v7859 = vld [vmem:[%s7841 + $0x44] sm:$0xf]
        %v7860 = vld [vmem:[%s7841 + $0x48] sm:$0xf]
        %v7861 = vld [vmem:[%s7841 + $0x4c] sm:$0xf]
        %v7862 = vld [vmem:[%s7841 + $0x50] sm:$0xf]
        %v7863 = vld [vmem:[%s7841 + $0x54] sm:$0xf]
        %v7864 = vld [vmem:[%s7841 + $0x58] sm:$0xf]
        %v7865 = vld [vmem:[%s7841 + $0x5c] sm:$0xf]
        %v7866 = vld [vmem:[%s7841 + $0x60] sm:$0xf]
        %v7867 = vld [vmem:[%s7841 + $0x64] sm:$0xf]
        %v7868 = vld [vmem:[%s7841 + $0x68] sm:$0xf]
        %v7869 = vld [vmem:[%s7841 + $0x6c] sm:$0xf]
        %v7870 = vld [vmem:[%s7841 + $0x70] sm:$0xf]
        %v7871 = vld [vmem:[%s7841 + $0x74] sm:$0xf]
        %v7872 = vld [vmem:[%s7841 + $0x78] sm:$0xf]
        %v7873 = vld [vmem:[%s7841 + $0x7c] sm:$0xf]
        %v7876 = vrot.slane %v7669, 2
        %v7877 = vrot.slane %v7670, 2
        %v7912 = vunpack.c.l.b16 %v7842
        %v7913 = vunpack.c.l.b16 %v7843
        %v7914 = vunpack.c.l.b16 %v7844
        %v7915 = vunpack.c.l.b16 %v7845
        %v7916 = vunpack.c.l.b16 %v7846
        %v7917 = vunpack.c.l.b16 %v7847
        %v7918 = vunpack.c.l.b16 %v7848
        %v7919 = vunpack.c.l.b16 %v7849
        %v7920 = vunpack.c.l.b16 %v7850
        %v7921 = vunpack.c.l.b16 %v7851
        %v7922 = vunpack.c.l.b16 %v7852
        %v7923 = vunpack.c.l.b16 %v7853
        %v7924 = vunpack.c.l.b16 %v7854
        %v7925 = vunpack.c.l.b16 %v7855
        %v7926 = vunpack.c.l.b16 %v7856
        %v7927 = vunpack.c.l.b16 %v7857
        %v7928 = vunpack.c.l.b16 %v7858
        %v7929 = vunpack.c.l.b16 %v7859
        %v7930 = vunpack.c.l.b16 %v7860
        %v7931 = vunpack.c.l.b16 %v7861
        %v7932 = vunpack.c.l.b16 %v7862
        %v7933 = vunpack.c.l.b16 %v7863
        %v7934 = vunpack.c.l.b16 %v7864
        %v7935 = vunpack.c.l.b16 %v7865
        %v7936 = vunpack.c.l.b16 %v7866
        %v7937 = vunpack.c.l.b16 %v7867
        %v7938 = vunpack.c.l.b16 %v7868
        %v7939 = vunpack.c.l.b16 %v7869
        %v7940 = vunpack.c.l.b16 %v7870
        %v7941 = vunpack.c.l.b16 %v7871
        %v7942 = vunpack.c.l.b16 %v7872
        %v7943 = vunpack.c.l.b16 %v7873
        %v7944 = vpack.c.b16 %v7913, %v7912
        %v7945 = vpack.c.b16 %v7915, %v7914
        %v7946 = vpack.c.b16 %v7917, %v7916
        %v7947 = vpack.c.b16 %v7919, %v7918
        %v7948 = vpack.c.b16 %v7921, %v7920
        %v7949 = vpack.c.b16 %v7923, %v7922
        %v7950 = vpack.c.b16 %v7925, %v7924
        %v7951 = vpack.c.b16 %v7927, %v7926
        %v7952 = vpack.c.b16 %v7929, %v7928
        %v7953 = vpack.c.b16 %v7931, %v7930
        %v7954 = vpack.c.b16 %v7933, %v7932
        %v7955 = vpack.c.b16 %v7935, %v7934
        %v7956 = vpack.c.b16 %v7937, %v7936
        %v7957 = vpack.c.b16 %v7939, %v7938
        %v7958 = vpack.c.b16 %v7941, %v7940
        %v7959 = vpack.c.b16 %v7943, %v7942
        %7976 = vmatprep.subr.bf16.mxu0 0
        %7977 = vmatpush1.bf16.msra.mxu0 %v7944
        %7978 = vmatprep.subr.bf16.mxu0 0
        %7979 = vmatpush1.bf16.msra.mxu0 %v7945
        %7980 = vmatprep.subr.bf16.mxu0 0
        %7981 = vmatpush1.bf16.msra.mxu0 %v7946
        %7982 = vmatprep.subr.bf16.mxu0 0
        %7983 = vmatpush1.bf16.msra.mxu0 %v7947
        %7984 = vmatprep.subr.bf16.mxu0 0
        %7985 = vmatpush1.bf16.msra.mxu0 %v7948
        %7986 = vmatprep.subr.bf16.mxu0 0
        %7987 = vmatpush1.bf16.msra.mxu0 %v7949
        %7988 = vmatprep.subr.bf16.mxu0 0
        %7989 = vmatpush1.bf16.msra.mxu0 %v7950
        %7990 = vmatprep.subr.bf16.mxu0 0
        %7991 = vmatpush1.bf16.msra.mxu0 %v7951
        %7992 = vmatprep.subr.bf16.mxu0 0
        %7993 = vmatpush1.bf16.msra.mxu0 %v7952
        %7994 = vmatprep.subr.bf16.mxu0 0
        %7995 = vmatpush1.bf16.msra.mxu0 %v7953
        %7996 = vmatprep.subr.bf16.mxu0 0
        %7997 = vmatpush1.bf16.msra.mxu0 %v7954
        %7998 = vmatprep.subr.bf16.mxu0 0
        %7999 = vmatpush1.bf16.msra.mxu0 %v7955
        %8000 = vmatprep.subr.bf16.mxu0 0
        %8001 = vmatpush1.bf16.msra.mxu0 %v7956
        %8002 = vmatprep.subr.bf16.mxu0 0
        %8003 = vmatpush1.bf16.msra.mxu0 %v7957
        %8004 = vmatprep.subr.bf16.mxu0 0
        %8005 = vmatpush1.bf16.msra.mxu0 %v7958
        %8006 = vmatprep.subr.bf16.mxu0 0
        %8007 = vmatpush1.bf16.msra.mxu0 %v7959
        %8008 = vmatprep.mubr.bf16.mxu0 %v7877
        %8009 = vmatmul.mubr.bf16.gmra.mrb[0].mxu0 %v7876
        %v8010 = vpop.f32.mrb[0].mxu0
        %v8011 = vadd.f32 0.0, %v8010
        %v8012 = vpop.f32.mrb[0].mxu0
        %v8013 = vpop.f32.mrb[0].mxu0
        %v8014 = vpop.f32.mrb[0].mxu0
        %8015 = vdwg.mxu0
        %v8016 = vadd.f32 %v7840, %v8011
        %v8018 = vrot.slane %v6594, 1
        %v8020 = vmax.f32 %v6594, %v8018
        %v8022 = vrot.slane %v8020, 2
        %v8024 = vpack.c.bf16 %v8020, %v8020
        %v8025 = vpack.c.bf16 %v8022, %v8022
        %s8026 = scalar_lea.vmem %s5, 1024
        %v8027 = vld [vmem:[%s8026] sm:$0xf]
        %v8028 = vld [vmem:[%s8026 + $0x4] sm:$0xf]
        %v8029 = vld [vmem:[%s8026 + $0x8] sm:$0xf]
        %v8030 = vld [vmem:[%s8026 + $0xc] sm:$0xf]
        %v8031 = vld [vmem:[%s8026 + $0x10] sm:$0xf]
        %v8032 = vld [vmem:[%s8026 + $0x14] sm:$0xf]
        %v8033 = vld [vmem:[%s8026 + $0x18] sm:$0xf]
        %v8034 = vld [vmem:[%s8026 + $0x1c] sm:$0xf]
        %v8035 = vld [vmem:[%s8026 + $0x20] sm:$0xf]
        %v8036 = vld [vmem:[%s8026 + $0x24] sm:$0xf]
        %v8037 = vld [vmem:[%s8026 + $0x28] sm:$0xf]
        %v8038 = vld [vmem:[%s8026 + $0x2c] sm:$0xf]
        %v8039 = vld [vmem:[%s8026 + $0x30] sm:$0xf]
        %v8040 = vld [vmem:[%s8026 + $0x34] sm:$0xf]
        %v8041 = vld [vmem:[%s8026 + $0x38] sm:$0xf]
        %v8042 = vld [vmem:[%s8026 + $0x3c] sm:$0xf]
        %v8043 = vld [vmem:[%s8026 + $0x40] sm:$0xf]
        %v8044 = vld [vmem:[%s8026 + $0x44] sm:$0xf]
        %v8045 = vld [vmem:[%s8026 + $0x48] sm:$0xf]
        %v8046 = vld [vmem:[%s8026 + $0x4c] sm:$0xf]
        %v8047 = vld [vmem:[%s8026 + $0x50] sm:$0xf]
        %v8048 = vld [vmem:[%s8026 + $0x54] sm:$0xf]
        %v8049 = vld [vmem:[%s8026 + $0x58] sm:$0xf]
        %v8050 = vld [vmem:[%s8026 + $0x5c] sm:$0xf]
        %v8051 = vld [vmem:[%s8026 + $0x60] sm:$0xf]
        %v8052 = vld [vmem:[%s8026 + $0x64] sm:$0xf]
        %v8053 = vld [vmem:[%s8026 + $0x68] sm:$0xf]
        %v8054 = vld [vmem:[%s8026 + $0x6c] sm:$0xf]
        %v8055 = vld [vmem:[%s8026 + $0x70] sm:$0xf]
        %v8056 = vld [vmem:[%s8026 + $0x74] sm:$0xf]
        %v8057 = vld [vmem:[%s8026 + $0x78] sm:$0xf]
        %v8058 = vld [vmem:[%s8026 + $0x7c] sm:$0xf]
        %v8091 = vunpack.c.l.b16 %v8027
        %v8092 = vunpack.c.l.b16 %v8028
        %v8093 = vunpack.c.l.b16 %v8029
        %v8094 = vunpack.c.l.b16 %v8030
        %v8095 = vunpack.c.l.b16 %v8031
        %v8096 = vunpack.c.l.b16 %v8032
        %v8097 = vunpack.c.l.b16 %v8033
        %v8098 = vunpack.c.l.b16 %v8034
        %v8099 = vunpack.c.l.b16 %v8035
        %v8100 = vunpack.c.l.b16 %v8036
        %v8101 = vunpack.c.l.b16 %v8037
        %v8102 = vunpack.c.l.b16 %v8038
        %v8103 = vunpack.c.l.b16 %v8039
        %v8104 = vunpack.c.l.b16 %v8040
        %v8105 = vunpack.c.l.b16 %v8041
        %v8106 = vunpack.c.l.b16 %v8042
        %v8107 = vunpack.c.l.b16 %v8043
        %v8108 = vunpack.c.l.b16 %v8044
        %v8109 = vunpack.c.l.b16 %v8045
        %v8110 = vunpack.c.l.b16 %v8046
        %v8111 = vunpack.c.l.b16 %v8047
        %v8112 = vunpack.c.l.b16 %v8048
        %v8113 = vunpack.c.l.b16 %v8049
        %v8114 = vunpack.c.l.b16 %v8050
        %v8115 = vunpack.c.l.b16 %v8051
        %v8116 = vunpack.c.l.b16 %v8052
        %v8117 = vunpack.c.l.b16 %v8053
        %v8118 = vunpack.c.l.b16 %v8054
        %v8119 = vunpack.c.l.b16 %v8055
        %v8120 = vunpack.c.l.b16 %v8056
        %v8121 = vunpack.c.l.b16 %v8057
        %v8122 = vunpack.c.l.b16 %v8058
        %v8123 = vpack.c.b16 %v8092, %v8091
        %v8124 = vpack.c.b16 %v8094, %v8093
        %v8125 = vpack.c.b16 %v8096, %v8095
        %v8126 = vpack.c.b16 %v8098, %v8097
        %v8127 = vpack.c.b16 %v8100, %v8099
        %v8128 = vpack.c.b16 %v8102, %v8101
        %v8129 = vpack.c.b16 %v8104, %v8103
        %v8130 = vpack.c.b16 %v8106, %v8105
        %v8131 = vpack.c.b16 %v8108, %v8107
        %v8132 = vpack.c.b16 %v8110, %v8109
        %v8133 = vpack.c.b16 %v8112, %v8111
        %v8134 = vpack.c.b16 %v8114, %v8113
        %v8135 = vpack.c.b16 %v8116, %v8115
        %v8136 = vpack.c.b16 %v8118, %v8117
        %v8137 = vpack.c.b16 %v8120, %v8119
        %v8138 = vpack.c.b16 %v8122, %v8121
        %8155 = vmatprep.subr.bf16.mxu0 0
        %8156 = vmatpush1.bf16.msra.mxu0 %v8123
        %8157 = vmatprep.subr.bf16.mxu0 0
        %8158 = vmatpush1.bf16.msra.mxu0 %v8124
        %8159 = vmatprep.subr.bf16.mxu0 0
        %8160 = vmatpush1.bf16.msra.mxu0 %v8125
        %8161 = vmatprep.subr.bf16.mxu0 0
        %8162 = vmatpush1.bf16.msra.mxu0 %v8126
        %8163 = vmatprep.subr.bf16.mxu0 0
        %8164 = vmatpush1.bf16.msra.mxu0 %v8127
        %8165 = vmatprep.subr.bf16.mxu0 0
        %8166 = vmatpush1.bf16.msra.mxu0 %v8128
        %8167 = vmatprep.subr.bf16.mxu0 0
        %8168 = vmatpush1.bf16.msra.mxu0 %v8129
        %8169 = vmatprep.subr.bf16.mxu0 0
        %8170 = vmatpush1.bf16.msra.mxu0 %v8130
        %8171 = vmatprep.subr.bf16.mxu0 0
        %8172 = vmatpush1.bf16.msra.mxu0 %v8131
        %8173 = vmatprep.subr.bf16.mxu0 0
        %8174 = vmatpush1.bf16.msra.mxu0 %v8132
        %8175 = vmatprep.subr.bf16.mxu0 0
        %8176 = vmatpush1.bf16.msra.mxu0 %v8133
        %8177 = vmatprep.subr.bf16.mxu0 0
        %8178 = vmatpush1.bf16.msra.mxu0 %v8134
        %8179 = vmatprep.subr.bf16.mxu0 0
        %8180 = vmatpush1.bf16.msra.mxu0 %v8135
        %8181 = vmatprep.subr.bf16.mxu0 0
        %8182 = vmatpush1.bf16.msra.mxu0 %v8136
        %8183 = vmatprep.subr.bf16.mxu0 0
        %8184 = vmatpush1.bf16.msra.mxu0 %v8137
        %8185 = vmatprep.subr.bf16.mxu0 0
        %8186 = vmatpush1.bf16.msra.mxu0 %v8138
        %8187 = vmatprep.mubr.bf16.mxu0 %v8025
        %8188 = vmatmul.mubr.bf16.gmra.mrb[0].mxu0 %v8024
        %v8189 = vpop.f32.mrb[0].mxu0
        %v8190 = vadd.f32 0.0, %v8189
        %v8191 = vpop.f32.mrb[0].mxu0
        %v8192 = vpop.f32.mrb[0].mxu0
        %v8193 = vpop.f32.mrb[0].mxu0
        %8194 = vdwg.mxu0
        %v8195 = vadd.f32 %v8016, %v8190
        %s8196 = scalar_lea.vmem %s5, 1152
        %v8197 = vld [vmem:[%s8196] sm:$0xf]
        %v8198 = vld [vmem:[%s8196 + $0x4] sm:$0xf]
        %v8199 = vld [vmem:[%s8196 + $0x8] sm:$0xf]
        %v8200 = vld [vmem:[%s8196 + $0xc] sm:$0xf]
        %v8201 = vld [vmem:[%s8196 + $0x10] sm:$0xf]
        %v8202 = vld [vmem:[%s8196 + $0x14] sm:$0xf]
        %v8203 = vld [vmem:[%s8196 + $0x18] sm:$0xf]
        %v8204 = vld [vmem:[%s8196 + $0x1c] sm:$0xf]
        %v8205 = vld [vmem:[%s8196 + $0x20] sm:$0xf]
        %v8206 = vld [vmem:[%s8196 + $0x24] sm:$0xf]
        %v8207 = vld [vmem:[%s8196 + $0x28] sm:$0xf]
        %v8208 = vld [vmem:[%s8196 + $0x2c] sm:$0xf]
        %v8209 = vld [vmem:[%s8196 + $0x30] sm:$0xf]
        %v8210 = vld [vmem:[%s8196 + $0x34] sm:$0xf]
        %v8211 = vld [vmem:[%s8196 + $0x38] sm:$0xf]
        %v8212 = vld [vmem:[%s8196 + $0x3c] sm:$0xf]
        %v8213 = vld [vmem:[%s8196 + $0x40] sm:$0xf]
        %v8214 = vld [vmem:[%s8196 + $0x44] sm:$0xf]
        %v8215 = vld [vmem:[%s8196 + $0x48] sm:$0xf]
        %v8216 = vld [vmem:[%s8196 + $0x4c] sm:$0xf]
        %v8217 = vld [vmem:[%s8196 + $0x50] sm:$0xf]
        %v8218 = vld [vmem:[%s8196 + $0x54] sm:$0xf]
        %v8219 = vld [vmem:[%s8196 + $0x58] sm:$0xf]
        %v8220 = vld [vmem:[%s8196 + $0x5c] sm:$0xf]
        %v8221 = vld [vmem:[%s8196 + $0x60] sm:$0xf]
        %v8222 = vld [vmem:[%s8196 + $0x64] sm:$0xf]
        %v8223 = vld [vmem:[%s8196 + $0x68] sm:$0xf]
        %v8224 = vld [vmem:[%s8196 + $0x6c] sm:$0xf]
        %v8225 = vld [vmem:[%s8196 + $0x70] sm:$0xf]
        %v8226 = vld [vmem:[%s8196 + $0x74] sm:$0xf]
        %v8227 = vld [vmem:[%s8196 + $0x78] sm:$0xf]
        %v8228 = vld [vmem:[%s8196 + $0x7c] sm:$0xf]
        %v8231 = vrot.slane %v8024, 2
        %v8232 = vrot.slane %v8025, 2
        %v8267 = vunpack.c.l.b16 %v8197
        %v8268 = vunpack.c.l.b16 %v8198
        %v8269 = vunpack.c.l.b16 %v8199
        %v8270 = vunpack.c.l.b16 %v8200
        %v8271 = vunpack.c.l.b16 %v8201
        %v8272 = vunpack.c.l.b16 %v8202
        %v8273 = vunpack.c.l.b16 %v8203
        %v8274 = vunpack.c.l.b16 %v8204
        %v8275 = vunpack.c.l.b16 %v8205
        %v8276 = vunpack.c.l.b16 %v8206
        %v8277 = vunpack.c.l.b16 %v8207
        %v8278 = vunpack.c.l.b16 %v8208
        %v8279 = vunpack.c.l.b16 %v8209
        %v8280 = vunpack.c.l.b16 %v8210
        %v8281 = vunpack.c.l.b16 %v8211
        %v8282 = vunpack.c.l.b16 %v8212
        %v8283 = vunpack.c.l.b16 %v8213
        %v8284 = vunpack.c.l.b16 %v8214
        %v8285 = vunpack.c.l.b16 %v8215
        %v8286 = vunpack.c.l.b16 %v8216
        %v8287 = vunpack.c.l.b16 %v8217
        %v8288 = vunpack.c.l.b16 %v8218
        %v8289 = vunpack.c.l.b16 %v8219
        %v8290 = vunpack.c.l.b16 %v8220
        %v8291 = vunpack.c.l.b16 %v8221
        %v8292 = vunpack.c.l.b16 %v8222
        %v8293 = vunpack.c.l.b16 %v8223
        %v8294 = vunpack.c.l.b16 %v8224
        %v8295 = vunpack.c.l.b16 %v8225
        %v8296 = vunpack.c.l.b16 %v8226
        %v8297 = vunpack.c.l.b16 %v8227
        %v8298 = vunpack.c.l.b16 %v8228
        %v8299 = vpack.c.b16 %v8268, %v8267
        %v8300 = vpack.c.b16 %v8270, %v8269
        %v8301 = vpack.c.b16 %v8272, %v8271
        %v8302 = vpack.c.b16 %v8274, %v8273
        %v8303 = vpack.c.b16 %v8276, %v8275
        %v8304 = vpack.c.b16 %v8278, %v8277
        %v8305 = vpack.c.b16 %v8280, %v8279
        %v8306 = vpack.c.b16 %v8282, %v8281
        %v8307 = vpack.c.b16 %v8284, %v8283
        %v8308 = vpack.c.b16 %v8286, %v8285
        %v8309 = vpack.c.b16 %v8288, %v8287
        %v8310 = vpack.c.b16 %v8290, %v8289
        %v8311 = vpack.c.b16 %v8292, %v8291
        %v8312 = vpack.c.b16 %v8294, %v8293
        %v8313 = vpack.c.b16 %v8296, %v8295
        %v8314 = vpack.c.b16 %v8298, %v8297
        %8331 = vmatprep.subr.bf16.mxu0 0
        %8332 = vmatpush1.bf16.msra.mxu0 %v8299
        %8333 = vmatprep.subr.bf16.mxu0 0
        %8334 = vmatpush1.bf16.msra.mxu0 %v8300
        %8335 = vmatprep.subr.bf16.mxu0 0
        %8336 = vmatpush1.bf16.msra.mxu0 %v8301
        %8337 = vmatprep.subr.bf16.mxu0 0
        %8338 = vmatpush1.bf16.msra.mxu0 %v8302
        %8339 = vmatprep.subr.bf16.mxu0 0
        %8340 = vmatpush1.bf16.msra.mxu0 %v8303
        %8341 = vmatprep.subr.bf16.mxu0 0
        %8342 = vmatpush1.bf16.msra.mxu0 %v8304
        %8343 = vmatprep.subr.bf16.mxu0 0
        %8344 = vmatpush1.bf16.msra.mxu0 %v8305
        %8345 = vmatprep.subr.bf16.mxu0 0
        %8346 = vmatpush1.bf16.msra.mxu0 %v8306
        %8347 = vmatprep.subr.bf16.mxu0 0
        %8348 = vmatpush1.bf16.msra.mxu0 %v8307
        %8349 = vmatprep.subr.bf16.mxu0 0
        %8350 = vmatpush1.bf16.msra.mxu0 %v8308
        %8351 = vmatprep.subr.bf16.mxu0 0
        %8352 = vmatpush1.bf16.msra.mxu0 %v8309
        %8353 = vmatprep.subr.bf16.mxu0 0
        %8354 = vmatpush1.bf16.msra.mxu0 %v8310
        %8355 = vmatprep.subr.bf16.mxu0 0
        %8356 = vmatpush1.bf16.msra.mxu0 %v8311
        %8357 = vmatprep.subr.bf16.mxu0 0
        %8358 = vmatpush1.bf16.msra.mxu0 %v8312
        %8359 = vmatprep.subr.bf16.mxu0 0
        %8360 = vmatpush1.bf16.msra.mxu0 %v8313
        %8361 = vmatprep.subr.bf16.mxu0 0
        %8362 = vmatpush1.bf16.msra.mxu0 %v8314
        %8363 = vmatprep.mubr.bf16.mxu0 %v8232
        %8364 = vmatmul.mubr.bf16.gmra.mrb[0].mxu0 %v8231
        %v8365 = vpop.f32.mrb[0].mxu0
        %v8366 = vadd.f32 0.0, %v8365
        %v8367 = vpop.f32.mrb[0].mxu0
        %v8368 = vpop.f32.mrb[0].mxu0
        %v8369 = vpop.f32.mrb[0].mxu0
        %8370 = vdwg.mxu0
        %v8371 = vadd.f32 %v8195, %v8366
        %v8373 = vrot.slane %v6595, 1
        %v8375 = vmax.f32 %v6595, %v8373
        %v8377 = vrot.slane %v8375, 2
        %v8379 = vpack.c.bf16 %v8375, %v8375
        %v8380 = vpack.c.bf16 %v8377, %v8377
        %s8381 = scalar_lea.vmem %s5, 1280
        %v8382 = vld [vmem:[%s8381] sm:$0xf]
        %v8383 = vld [vmem:[%s8381 + $0x4] sm:$0xf]
        %v8384 = vld [vmem:[%s8381 + $0x8] sm:$0xf]
        %v8385 = vld [vmem:[%s8381 + $0xc] sm:$0xf]
        %v8386 = vld [vmem:[%s8381 + $0x10] sm:$0xf]
        %v8387 = vld [vmem:[%s8381 + $0x14] sm:$0xf]
        %v8388 = vld [vmem:[%s8381 + $0x18] sm:$0xf]
        %v8389 = vld [vmem:[%s8381 + $0x1c] sm:$0xf]
        %v8390 = vld [vmem:[%s8381 + $0x20] sm:$0xf]
        %v8391 = vld [vmem:[%s8381 + $0x24] sm:$0xf]
        %v8392 = vld [vmem:[%s8381 + $0x28] sm:$0xf]
        %v8393 = vld [vmem:[%s8381 + $0x2c] sm:$0xf]
        %v8394 = vld [vmem:[%s8381 + $0x30] sm:$0xf]
        %v8395 = vld [vmem:[%s8381 + $0x34] sm:$0xf]
        %v8396 = vld [vmem:[%s8381 + $0x38] sm:$0xf]
        %v8397 = vld [vmem:[%s8381 + $0x3c] sm:$0xf]
        %v8398 = vld [vmem:[%s8381 + $0x40] sm:$0xf]
        %v8399 = vld [vmem:[%s8381 + $0x44] sm:$0xf]
        %v8400 = vld [vmem:[%s8381 + $0x48] sm:$0xf]
        %v8401 = vld [vmem:[%s8381 + $0x4c] sm:$0xf]
        %v8402 = vld [vmem:[%s8381 + $0x50] sm:$0xf]
        %v8403 = vld [vmem:[%s8381 + $0x54] sm:$0xf]
        %v8404 = vld [vmem:[%s8381 + $0x58] sm:$0xf]
        %v8405 = vld [vmem:[%s8381 + $0x5c] sm:$0xf]
        %v8406 = vld [vmem:[%s8381 + $0x60] sm:$0xf]
        %v8407 = vld [vmem:[%s8381 + $0x64] sm:$0xf]
        %v8408 = vld [vmem:[%s8381 + $0x68] sm:$0xf]
        %v8409 = vld [vmem:[%s8381 + $0x6c] sm:$0xf]
        %v8410 = vld [vmem:[%s8381 + $0x70] sm:$0xf]
        %v8411 = vld [vmem:[%s8381 + $0x74] sm:$0xf]
        %v8412 = vld [vmem:[%s8381 + $0x78] sm:$0xf]
        %v8413 = vld [vmem:[%s8381 + $0x7c] sm:$0xf]
        %v8446 = vunpack.c.l.b16 %v8382
        %v8447 = vunpack.c.l.b16 %v8383
        %v8448 = vunpack.c.l.b16 %v8384
        %v8449 = vunpack.c.l.b16 %v8385
        %v8450 = vunpack.c.l.b16 %v8386
        %v8451 = vunpack.c.l.b16 %v8387
        %v8452 = vunpack.c.l.b16 %v8388
        %v8453 = vunpack.c.l.b16 %v8389
        %v8454 = vunpack.c.l.b16 %v8390
        %v8455 = vunpack.c.l.b16 %v8391
        %v8456 = vunpack.c.l.b16 %v8392
        %v8457 = vunpack.c.l.b16 %v8393
        %v8458 = vunpack.c.l.b16 %v8394
        %v8459 = vunpack.c.l.b16 %v8395
        %v8460 = vunpack.c.l.b16 %v8396
        %v8461 = vunpack.c.l.b16 %v8397
        %v8462 = vunpack.c.l.b16 %v8398
        %v8463 = vunpack.c.l.b16 %v8399
        %v8464 = vunpack.c.l.b16 %v8400
        %v8465 = vunpack.c.l.b16 %v8401
        %v8466 = vunpack.c.l.b16 %v8402
        %v8467 = vunpack.c.l.b16 %v8403
        %v8468 = vunpack.c.l.b16 %v8404
        %v8469 = vunpack.c.l.b16 %v8405
        %v8470 = vunpack.c.l.b16 %v8406
        %v8471 = vunpack.c.l.b16 %v8407
        %v8472 = vunpack.c.l.b16 %v8408
        %v8473 = vunpack.c.l.b16 %v8409
        %v8474 = vunpack.c.l.b16 %v8410
        %v8475 = vunpack.c.l.b16 %v8411
        %v8476 = vunpack.c.l.b16 %v8412
        %v8477 = vunpack.c.l.b16 %v8413
        %v8478 = vpack.c.b16 %v8447, %v8446
        %v8479 = vpack.c.b16 %v8449, %v8448
        %v8480 = vpack.c.b16 %v8451, %v8450
        %v8481 = vpack.c.b16 %v8453, %v8452
        %v8482 = vpack.c.b16 %v8455, %v8454
        %v8483 = vpack.c.b16 %v8457, %v8456
        %v8484 = vpack.c.b16 %v8459, %v8458
        %v8485 = vpack.c.b16 %v8461, %v8460
        %v8486 = vpack.c.b16 %v8463, %v8462
        %v8487 = vpack.c.b16 %v8465, %v8464
        %v8488 = vpack.c.b16 %v8467, %v8466
        %v8489 = vpack.c.b16 %v8469, %v8468
        %v8490 = vpack.c.b16 %v8471, %v8470
        %v8491 = vpack.c.b16 %v8473, %v8472
        %v8492 = vpack.c.b16 %v8475, %v8474
        %v8493 = vpack.c.b16 %v8477, %v8476
        %8510 = vmatprep.subr.bf16.mxu0 0
        %8511 = vmatpush1.bf16.msra.mxu0 %v8478
        %8512 = vmatprep.subr.bf16.mxu0 0
        %8513 = vmatpush1.bf16.msra.mxu0 %v8479
        %8514 = vmatprep.subr.bf16.mxu0 0
        %8515 = vmatpush1.bf16.msra.mxu0 %v8480
        %8516 = vmatprep.subr.bf16.mxu0 0
        %8517 = vmatpush1.bf16.msra.mxu0 %v8481
        %8518 = vmatprep.subr.bf16.mxu0 0
        %8519 = vmatpush1.bf16.msra.mxu0 %v8482
        %8520 = vmatprep.subr.bf16.mxu0 0
        %8521 = vmatpush1.bf16.msra.mxu0 %v8483
        %8522 = vmatprep.subr.bf16.mxu0 0
        %8523 = vmatpush1.bf16.msra.mxu0 %v8484
        %8524 = vmatprep.subr.bf16.mxu0 0
        %8525 = vmatpush1.bf16.msra.mxu0 %v8485
        %8526 = vmatprep.subr.bf16.mxu0 0
        %8527 = vmatpush1.bf16.msra.mxu0 %v8486
        %8528 = vmatprep.subr.bf16.mxu0 0
        %8529 = vmatpush1.bf16.msra.mxu0 %v8487
        %8530 = vmatprep.subr.bf16.mxu0 0
        %8531 = vmatpush1.bf16.msra.mxu0 %v8488
        %8532 = vmatprep.subr.bf16.mxu0 0
        %8533 = vmatpush1.bf16.msra.mxu0 %v8489
        %8534 = vmatprep.subr.bf16.mxu0 0
        %8535 = vmatpush1.bf16.msra.mxu0 %v8490
        %8536 = vmatprep.subr.bf16.mxu0 0
        %8537 = vmatpush1.bf16.msra.mxu0 %v8491
        %8538 = vmatprep.subr.bf16.mxu0 0
        %8539 = vmatpush1.bf16.msra.mxu0 %v8492
        %8540 = vmatprep.subr.bf16.mxu0 0
        %8541 = vmatpush1.bf16.msra.mxu0 %v8493
        %8542 = vmatprep.mubr.bf16.mxu0 %v8380
        %8543 = vmatmul.mubr.bf16.gmra.mrb[0].mxu0 %v8379
        %v8544 = vpop.f32.mrb[0].mxu0
        %v8545 = vadd.f32 0.0, %v8544
        %v8546 = vpop.f32.mrb[0].mxu0
        %v8547 = vpop.f32.mrb[0].mxu0
        %v8548 = vpop.f32.mrb[0].mxu0
        %8549 = vdwg.mxu0
        %v8550 = vadd.f32 %v8371, %v8545
        %s8551 = scalar_lea.vmem %s5, 1408
        %v8552 = vld [vmem:[%s8551] sm:$0xf]
        %v8553 = vld [vmem:[%s8551 + $0x4] sm:$0xf]
        %v8554 = vld [vmem:[%s8551 + $0x8] sm:$0xf]
        %v8555 = vld [vmem:[%s8551 + $0xc] sm:$0xf]
        %v8556 = vld [vmem:[%s8551 + $0x10] sm:$0xf]
        %v8557 = vld [vmem:[%s8551 + $0x14] sm:$0xf]
        %v8558 = vld [vmem:[%s8551 + $0x18] sm:$0xf]
        %v8559 = vld [vmem:[%s8551 + $0x1c] sm:$0xf]
        %v8560 = vld [vmem:[%s8551 + $0x20] sm:$0xf]
        %v8561 = vld [vmem:[%s8551 + $0x24] sm:$0xf]
        %v8562 = vld [vmem:[%s8551 + $0x28] sm:$0xf]
        %v8563 = vld [vmem:[%s8551 + $0x2c] sm:$0xf]
        %v8564 = vld [vmem:[%s8551 + $0x30] sm:$0xf]
        %v8565 = vld [vmem:[%s8551 + $0x34] sm:$0xf]
        %v8566 = vld [vmem:[%s8551 + $0x38] sm:$0xf]
        %v8567 = vld [vmem:[%s8551 + $0x3c] sm:$0xf]
        %v8568 = vld [vmem:[%s8551 + $0x40] sm:$0xf]
        %v8569 = vld [vmem:[%s8551 + $0x44] sm:$0xf]
        %v8570 = vld [vmem:[%s8551 + $0x48] sm:$0xf]
        %v8571 = vld [vmem:[%s8551 + $0x4c] sm:$0xf]
        %v8572 = vld [vmem:[%s8551 + $0x50] sm:$0xf]
        %v8573 = vld [vmem:[%s8551 + $0x54] sm:$0xf]
        %v8574 = vld [vmem:[%s8551 + $0x58] sm:$0xf]
        %v8575 = vld [vmem:[%s8551 + $0x5c] sm:$0xf]
        %v8576 = vld [vmem:[%s8551 + $0x60] sm:$0xf]
        %v8577 = vld [vmem:[%s8551 + $0x64] sm:$0xf]
        %v8578 = vld [vmem:[%s8551 + $0x68] sm:$0xf]
        %v8579 = vld [vmem:[%s8551 + $0x6c] sm:$0xf]
        %v8580 = vld [vmem:[%s8551 + $0x70] sm:$0xf]
        %v8581 = vld [vmem:[%s8551 + $0x74] sm:$0xf]
        %v8582 = vld [vmem:[%s8551 + $0x78] sm:$0xf]
        %v8583 = vld [vmem:[%s8551 + $0x7c] sm:$0xf]
        %v8586 = vrot.slane %v8379, 2
        %v8587 = vrot.slane %v8380, 2
        %v8622 = vunpack.c.l.b16 %v8552
        %v8623 = vunpack.c.l.b16 %v8553
        %v8624 = vunpack.c.l.b16 %v8554
        %v8625 = vunpack.c.l.b16 %v8555
        %v8626 = vunpack.c.l.b16 %v8556
        %v8627 = vunpack.c.l.b16 %v8557
        %v8628 = vunpack.c.l.b16 %v8558
        %v8629 = vunpack.c.l.b16 %v8559
        %v8630 = vunpack.c.l.b16 %v8560
        %v8631 = vunpack.c.l.b16 %v8561
        %v8632 = vunpack.c.l.b16 %v8562
        %v8633 = vunpack.c.l.b16 %v8563
        %v8634 = vunpack.c.l.b16 %v8564
        %v8635 = vunpack.c.l.b16 %v8565
        %v8636 = vunpack.c.l.b16 %v8566
        %v8637 = vunpack.c.l.b16 %v8567
        %v8638 = vunpack.c.l.b16 %v8568
        %v8639 = vunpack.c.l.b16 %v8569
        %v8640 = vunpack.c.l.b16 %v8570
        %v8641 = vunpack.c.l.b16 %v8571
        %v8642 = vunpack.c.l.b16 %v8572
        %v8643 = vunpack.c.l.b16 %v8573
        %v8644 = vunpack.c.l.b16 %v8574
        %v8645 = vunpack.c.l.b16 %v8575
        %v8646 = vunpack.c.l.b16 %v8576
        %v8647 = vunpack.c.l.b16 %v8577
        %v8648 = vunpack.c.l.b16 %v8578
        %v8649 = vunpack.c.l.b16 %v8579
        %v8650 = vunpack.c.l.b16 %v8580
        %v8651 = vunpack.c.l.b16 %v8581
        %v8652 = vunpack.c.l.b16 %v8582
        %v8653 = vunpack.c.l.b16 %v8583
        %v8654 = vpack.c.b16 %v8623, %v8622
        %v8655 = vpack.c.b16 %v8625, %v8624
        %v8656 = vpack.c.b16 %v8627, %v8626
        %v8657 = vpack.c.b16 %v8629, %v8628
        %v8658 = vpack.c.b16 %v8631, %v8630
        %v8659 = vpack.c.b16 %v8633, %v8632
        %v8660 = vpack.c.b16 %v8635, %v8634
        %v8661 = vpack.c.b16 %v8637, %v8636
        %v8662 = vpack.c.b16 %v8639, %v8638
        %v8663 = vpack.c.b16 %v8641, %v8640
        %v8664 = vpack.c.b16 %v8643, %v8642
        %v8665 = vpack.c.b16 %v8645, %v8644
        %v8666 = vpack.c.b16 %v8647, %v8646
        %v8667 = vpack.c.b16 %v8649, %v8648
        %v8668 = vpack.c.b16 %v8651, %v8650
        %v8669 = vpack.c.b16 %v8653, %v8652
        %8686 = vmatprep.subr.bf16.mxu0 0
        %8687 = vmatpush1.bf16.msra.mxu0 %v8654
        %8688 = vmatprep.subr.bf16.mxu0 0
        %8689 = vmatpush1.bf16.msra.mxu0 %v8655
        %8690 = vmatprep.subr.bf16.mxu0 0
        %8691 = vmatpush1.bf16.msra.mxu0 %v8656
        %8692 = vmatprep.subr.bf16.mxu0 0
        %8693 = vmatpush1.bf16.msra.mxu0 %v8657
        %8694 = vmatprep.subr.bf16.mxu0 0
        %8695 = vmatpush1.bf16.msra.mxu0 %v8658
        %8696 = vmatprep.subr.bf16.mxu0 0
        %8697 = vmatpush1.bf16.msra.mxu0 %v8659
        %8698 = vmatprep.subr.bf16.mxu0 0
        %8699 = vmatpush1.bf16.msra.mxu0 %v8660
        %8700 = vmatprep.subr.bf16.mxu0 0
        %8701 = vmatpush1.bf16.msra.mxu0 %v8661
        %8702 = vmatprep.subr.bf16.mxu0 0
        %8703 = vmatpush1.bf16.msra.mxu0 %v8662
        %8704 = vmatprep.subr.bf16.mxu0 0
        %8705 = vmatpush1.bf16.msra.mxu0 %v8663
        %8706 = vmatprep.subr.bf16.mxu0 0
        %8707 = vmatpush1.bf16.msra.mxu0 %v8664
        %8708 = vmatprep.subr.bf16.mxu0 0
        %8709 = vmatpush1.bf16.msra.mxu0 %v8665
        %8710 = vmatprep.subr.bf16.mxu0 0
        %8711 = vmatpush1.bf16.msra.mxu0 %v8666
        %8712 = vmatprep.subr.bf16.mxu0 0
        %8713 = vmatpush1.bf16.msra.mxu0 %v8667
        %8714 = vmatprep.subr.bf16.mxu0 0
        %8715 = vmatpush1.bf16.msra.mxu0 %v8668
        %8716 = vmatprep.subr.bf16.mxu0 0
        %8717 = vmatpush1.bf16.msra.mxu0 %v8669
        %8718 = vmatprep.mubr.bf16.mxu0 %v8587
        %8719 = vmatmul.mubr.bf16.gmra.mrb[0].mxu0 %v8586
        %v8720 = vpop.f32.mrb[0].mxu0
        %v8721 = vadd.f32 0.0, %v8720
        %v8722 = vpop.f32.mrb[0].mxu0
        %v8723 = vpop.f32.mrb[0].mxu0
        %v8724 = vpop.f32.mrb[0].mxu0
        %8725 = vdwg.mxu0
        %v8726 = vadd.f32 %v8550, %v8721
        %v8728 = vrot.slane %v6596, 1
        %v8730 = vmax.f32 %v6596, %v8728
        %v8732 = vrot.slane %v8730, 2
        %v8734 = vpack.c.bf16 %v8730, %v8730
        %v8735 = vpack.c.bf16 %v8732, %v8732
        %s8736 = scalar_lea.vmem %s5, 1536
        %v8737 = vld [vmem:[%s8736] sm:$0xf]
        %v8738 = vld [vmem:[%s8736 + $0x4] sm:$0xf]
        %v8739 = vld [vmem:[%s8736 + $0x8] sm:$0xf]
        %v8740 = vld [vmem:[%s8736 + $0xc] sm:$0xf]
        %v8741 = vld [vmem:[%s8736 + $0x10] sm:$0xf]
        %v8742 = vld [vmem:[%s8736 + $0x14] sm:$0xf]
        %v8743 = vld [vmem:[%s8736 + $0x18] sm:$0xf]
        %v8744 = vld [vmem:[%s8736 + $0x1c] sm:$0xf]
        %v8745 = vld [vmem:[%s8736 + $0x20] sm:$0xf]
        %v8746 = vld [vmem:[%s8736 + $0x24] sm:$0xf]
        %v8747 = vld [vmem:[%s8736 + $0x28] sm:$0xf]
        %v8748 = vld [vmem:[%s8736 + $0x2c] sm:$0xf]
        %v8749 = vld [vmem:[%s8736 + $0x30] sm:$0xf]
        %v8750 = vld [vmem:[%s8736 + $0x34] sm:$0xf]
        %v8751 = vld [vmem:[%s8736 + $0x38] sm:$0xf]
        %v8752 = vld [vmem:[%s8736 + $0x3c] sm:$0xf]
        %v8753 = vld [vmem:[%s8736 + $0x40] sm:$0xf]
        %v8754 = vld [vmem:[%s8736 + $0x44] sm:$0xf]
        %v8755 = vld [vmem:[%s8736 + $0x48] sm:$0xf]
        %v8756 = vld [vmem:[%s8736 + $0x4c] sm:$0xf]
        %v8757 = vld [vmem:[%s8736 + $0x50] sm:$0xf]
        %v8758 = vld [vmem:[%s8736 + $0x54] sm:$0xf]
        %v8759 = vld [vmem:[%s8736 + $0x58] sm:$0xf]
        %v8760 = vld [vmem:[%s8736 + $0x5c] sm:$0xf]
        %v8761 = vld [vmem:[%s8736 + $0x60] sm:$0xf]
        %v8762 = vld [vmem:[%s8736 + $0x64] sm:$0xf]
        %v8763 = vld [vmem:[%s8736 + $0x68] sm:$0xf]
        %v8764 = vld [vmem:[%s8736 + $0x6c] sm:$0xf]
        %v8765 = vld [vmem:[%s8736 + $0x70] sm:$0xf]
        %v8766 = vld [vmem:[%s8736 + $0x74] sm:$0xf]
        %v8767 = vld [vmem:[%s8736 + $0x78] sm:$0xf]
        %v8768 = vld [vmem:[%s8736 + $0x7c] sm:$0xf]
        %v8801 = vunpack.c.l.b16 %v8737
        %v8802 = vunpack.c.l.b16 %v8738
        %v8803 = vunpack.c.l.b16 %v8739
        %v8804 = vunpack.c.l.b16 %v8740
        %v8805 = vunpack.c.l.b16 %v8741
        %v8806 = vunpack.c.l.b16 %v8742
        %v8807 = vunpack.c.l.b16 %v8743
        %v8808 = vunpack.c.l.b16 %v8744
        %v8809 = vunpack.c.l.b16 %v8745
        %v8810 = vunpack.c.l.b16 %v8746
        %v8811 = vunpack.c.l.b16 %v8747
        %v8812 = vunpack.c.l.b16 %v8748
        %v8813 = vunpack.c.l.b16 %v8749
        %v8814 = vunpack.c.l.b16 %v8750
        %v8815 = vunpack.c.l.b16 %v8751
        %v8816 = vunpack.c.l.b16 %v8752
        %v8817 = vunpack.c.l.b16 %v8753
        %v8818 = vunpack.c.l.b16 %v8754
        %v8819 = vunpack.c.l.b16 %v8755
        %v8820 = vunpack.c.l.b16 %v8756
        %v8821 = vunpack.c.l.b16 %v8757
        %v8822 = vunpack.c.l.b16 %v8758
        %v8823 = vunpack.c.l.b16 %v8759
        %v8824 = vunpack.c.l.b16 %v8760
        %v8825 = vunpack.c.l.b16 %v8761
        %v8826 = vunpack.c.l.b16 %v8762
        %v8827 = vunpack.c.l.b16 %v8763
        %v8828 = vunpack.c.l.b16 %v8764
        %v8829 = vunpack.c.l.b16 %v8765
        %v8830 = vunpack.c.l.b16 %v8766
        %v8831 = vunpack.c.l.b16 %v8767
        %v8832 = vunpack.c.l.b16 %v8768
        %v8833 = vpack.c.b16 %v8802, %v8801
        %v8834 = vpack.c.b16 %v8804, %v8803
        %v8835 = vpack.c.b16 %v8806, %v8805
        %v8836 = vpack.c.b16 %v8808, %v8807
        %v8837 = vpack.c.b16 %v8810, %v8809
        %v8838 = vpack.c.b16 %v8812, %v8811
        %v8839 = vpack.c.b16 %v8814, %v8813
        %v8840 = vpack.c.b16 %v8816, %v8815
        %v8841 = vpack.c.b16 %v8818, %v8817
        %v8842 = vpack.c.b16 %v8820, %v8819
        %v8843 = vpack.c.b16 %v8822, %v8821
        %v8844 = vpack.c.b16 %v8824, %v8823
        %v8845 = vpack.c.b16 %v8826, %v8825
        %v8846 = vpack.c.b16 %v8828, %v8827
        %v8847 = vpack.c.b16 %v8830, %v8829
        %v8848 = vpack.c.b16 %v8832, %v8831
        %8865 = vmatprep.subr.bf16.mxu0 0
        %8866 = vmatpush1.bf16.msra.mxu0 %v8833
        %8867 = vmatprep.subr.bf16.mxu0 0
        %8868 = vmatpush1.bf16.msra.mxu0 %v8834
        %8869 = vmatprep.subr.bf16.mxu0 0
        %8870 = vmatpush1.bf16.msra.mxu0 %v8835
        %8871 = vmatprep.subr.bf16.mxu0 0
        %8872 = vmatpush1.bf16.msra.mxu0 %v8836
        %8873 = vmatprep.subr.bf16.mxu0 0
        %8874 = vmatpush1.bf16.msra.mxu0 %v8837
        %8875 = vmatprep.subr.bf16.mxu0 0
        %8876 = vmatpush1.bf16.msra.mxu0 %v8838
        %8877 = vmatprep.subr.bf16.mxu0 0
        %8878 = vmatpush1.bf16.msra.mxu0 %v8839
        %8879 = vmatprep.subr.bf16.mxu0 0
        %8880 = vmatpush1.bf16.msra.mxu0 %v8840
        %8881 = vmatprep.subr.bf16.mxu0 0
        %8882 = vmatpush1.bf16.msra.mxu0 %v8841
        %8883 = vmatprep.subr.bf16.mxu0 0
        %8884 = vmatpush1.bf16.msra.mxu0 %v8842
        %8885 = vmatprep.subr.bf16.mxu0 0
        %8886 = vmatpush1.bf16.msra.mxu0 %v8843
        %8887 = vmatprep.subr.bf16.mxu0 0
        %8888 = vmatpush1.bf16.msra.mxu0 %v8844
        %8889 = vmatprep.subr.bf16.mxu0 0
        %8890 = vmatpush1.bf16.msra.mxu0 %v8845
        %8891 = vmatprep.subr.bf16.mxu0 0
        %8892 = vmatpush1.bf16.msra.mxu0 %v8846
        %8893 = vmatprep.subr.bf16.mxu0 0
        %8894 = vmatpush1.bf16.msra.mxu0 %v8847
        %8895 = vmatprep.subr.bf16.mxu0 0
        %8896 = vmatpush1.bf16.msra.mxu0 %v8848
        %8897 = vmatprep.mubr.bf16.mxu0 %v8735
        %8898 = vmatmul.mubr.bf16.gmra.mrb[0].mxu0 %v8734
        %v8899 = vpop.f32.mrb[0].mxu0
        %v8900 = vadd.f32 0.0, %v8899
        %v8901 = vpop.f32.mrb[0].mxu0
        %v8902 = vpop.f32.mrb[0].mxu0
        %v8903 = vpop.f32.mrb[0].mxu0
        %8904 = vdwg.mxu0
        %v8905 = vadd.f32 %v8726, %v8900
        %v8906 = vmax.f32 %v8905, 0.0
        %v8907 = vpack.c.bf16 %v8906, %v8906
        %v8908 = vld [vmem:[#allocation12] sm:$0xf]
        %v8909 = vld [vmem:[#allocation12 + $0x4] sm:$0xf]
        %v8910 = vld [vmem:[#allocation12 + $0x8] sm:$0xf]
        %v8911 = vld [vmem:[#allocation12 + $0xc] sm:$0xf]
        %v8912 = vld [vmem:[#allocation12 + $0x10] sm:$0xf]
        %v8913 = vld [vmem:[#allocation12 + $0x14] sm:$0xf]
        %v8914 = vld [vmem:[#allocation12 + $0x18] sm:$0xf]
        %v8915 = vld [vmem:[#allocation12 + $0x1c] sm:$0xf]
        %v8916 = vld [vmem:[#allocation12 + $0x20] sm:$0xf]
        %v8917 = vld [vmem:[#allocation12 + $0x24] sm:$0xf]
        %v8918 = vld [vmem:[#allocation12 + $0x28] sm:$0xf]
        %v8919 = vld [vmem:[#allocation12 + $0x2c] sm:$0xf]
        %v8920 = vld [vmem:[#allocation12 + $0x30] sm:$0xf]
        %v8921 = vld [vmem:[#allocation12 + $0x34] sm:$0xf]
        %v8922 = vld [vmem:[#allocation12 + $0x38] sm:$0xf]
        %v8923 = vld [vmem:[#allocation12 + $0x3c] sm:$0xf]
        %v8924 = vld [vmem:[#allocation14] sm:$0x1]
        %v8941 = vunpack.c.l.b16 %v8908
        %v8942 = vunpack.c.l.b16 %v8909
        %v8943 = vunpack.c.l.b16 %v8910
        %v8944 = vunpack.c.l.b16 %v8911
        %v8945 = vunpack.c.l.b16 %v8912
        %v8946 = vunpack.c.l.b16 %v8913
        %v8947 = vunpack.c.l.b16 %v8914
        %v8948 = vunpack.c.l.b16 %v8915
        %v8949 = vunpack.c.l.b16 %v8916
        %v8950 = vunpack.c.l.b16 %v8917
        %v8951 = vunpack.c.l.b16 %v8918
        %v8952 = vunpack.c.l.b16 %v8919
        %v8953 = vunpack.c.l.b16 %v8920
        %v8954 = vunpack.c.l.b16 %v8921
        %v8955 = vunpack.c.l.b16 %v8922
        %v8956 = vunpack.c.l.b16 %v8923
        %v8957 = vpack.c.b16 %v8942, %v8941
        %v8958 = vpack.c.b16 %v8944, %v8943
        %v8959 = vpack.c.b16 %v8946, %v8945
        %v8960 = vpack.c.b16 %v8948, %v8947
        %v8961 = vpack.c.b16 %v8950, %v8949
        %v8962 = vpack.c.b16 %v8952, %v8951
        %v8963 = vpack.c.b16 %v8954, %v8953
        %v8964 = vpack.c.b16 %v8956, %v8955
        %8973 = vmatprep.subr.bf16.mxu0 0
        %8974 = vmatpush1.bf16.msra.mxu0 %v8957
        %8975 = vmatprep.subr.bf16.mxu0 0
        %8976 = vmatpush1.bf16.msra.mxu0 %v8958
        %8977 = vmatprep.subr.bf16.mxu0 0
        %8978 = vmatpush1.bf16.msra.mxu0 %v8959
        %8979 = vmatprep.subr.bf16.mxu0 0
        %8980 = vmatpush1.bf16.msra.mxu0 %v8960
        %8981 = vmatprep.subr.bf16.mxu0 0
        %8982 = vmatpush1.bf16.msra.mxu0 %v8961
        %8983 = vmatprep.subr.bf16.mxu0 0
        %8984 = vmatpush1.bf16.msra.mxu0 %v8962
        %8985 = vmatprep.subr.bf16.mxu0 0
        %8986 = vmatpush1.bf16.msra.mxu0 %v8963
        %8987 = vmatprep.subr.bf16.mxu0 0
        %8988 = vmatpush1.bf16.msra.mxu0 %v8964
        %8989 = vmatprep.subr.bf16.mxu0 0
        %8990 = vmatpush1.bf16.msra.mxu0 0
        %8991 = vmatprep.subr.bf16.mxu0 0
        %8992 = vmatpush1.bf16.msra.mxu0 0
        %8993 = vmatprep.subr.bf16.mxu0 0
        %8994 = vmatpush1.bf16.msra.mxu0 0
        %8995 = vmatprep.subr.bf16.mxu0 0
        %8996 = vmatpush1.bf16.msra.mxu0 0
        %8997 = vmatprep.subr.bf16.mxu0 0
        %8998 = vmatpush1.bf16.msra.mxu0 0
        %8999 = vmatprep.subr.bf16.mxu0 0
        %9000 = vmatpush1.bf16.msra.mxu0 0
        %9001 = vmatprep.subr.bf16.mxu0 0
        %9002 = vmatpush1.bf16.msra.mxu0 0
        %9003 = vmatprep.subr.bf16.mxu0 0
        %9004 = vmatpush1.bf16.msra.mxu0 0
        %9005 = vmatprep.mubr.bf16.mxu0 0
        %9006 = vmatmul.mubr.bf16.gmra.mrb[0].mxu0 %v8907
        %v9007 = vpop.f32.mrb[0].mxu0
        %v9008 = vadd.f32 %v8924, %v9007
        %v9009 = vpop.f32.mrb[0].mxu0
        %v9010 = vpop.f32.mrb[0].mxu0
        %v9011 = vpop.f32.mrb[0].mxu0
        %9012 = vdwg.mxu0
        %vm9013 = vcmask 1040384
        %v9014 = vsel %vm9013, %v9008, -inf
        %9015 = vmax.xlane.f32.xlu0 %v9014
        %v9016 = vpop.xlane.xlu0 %9015
        %v9017 = vsub.f32 %v9008, %v9016
        %v9018 = vmul.f32 %v9017, 1.442695
        %v9019 = vpow.pop %v9018
        %v9020 = vsel %vm9013, %v9019, 0.0
        %9021 = vadd.xlane.f32.xlu0 %v9020
        %v9022 = vpop.xlane.xlu0 %9021
        %v9023 = vrcp.pop %v9022
        %v9024 = vmul.f32 %v9019, %v9023
        %9025 = vst [vmem:[%s418] sm:$0x1] %v9024
        %s9026 = sand.u32 %s229, 1
        %s9027 = scalar_lea.sflag [#allocation5], %s9026
        %s9028 = sand.u32 %s229, 1
        %s9029 = scalar_lea.vmem [#allocation15], %s9028
        // Predicated region
        $region85: #{forward.1} parent=55 // pred_check
          %p9030 = pneg %p239
        $region86: #{forward.1} parent=55 // pred_check_branch
          %9032 = sbr.rel (%p9030) target = $region88
        $region87: #{forward.1} parent=55 // pred_region
          %s9034 = ssub.s32 16, 16
          %9035 = vsyncadd %s9027, %s9034
          %s9036 = smul.addr %s27, 16
          %s9037 = scalar_lea.hbm %s9, %s9036
          %s9039 = sshll.u32 %s9029, 4
          %s9040 = int_to_ptr.vmem [resolvable:$true] %s9039
          %9042 = dma.vmem_to_hbm [thread:$0]  %s9040, 16, %s9037, %s9027
        $region88: #{forward.1} parent=55 // pred_fallthru
          _
      $region56: #{forward.1} parent=5 // pred_fallthru
        _
      %p9043 = scmp.le.s32.totalorder 2, %s22
      // Predicated region
      $region89: #{forward.1} parent=5 // pred_check
        %p9044 = pneg %p9043
      $region90: #{forward.1} parent=5 // pred_check_branch
        %9046 = sbr.rel (%p9044) target = $region92
      $region91: #{forward.1} parent=5 // pred_region
        %s9047 = ssub.s32 %s22, 2
        // Predicated region
        $region93: #{forward.1} parent=91 // pred_check
          %p9048 = pneg %p245
        $region94: #{forward.1} parent=91 // pred_check_branch
          %9050 = sbr.rel (%p9048) target = $region96
        $region95: #{forward.1} parent=91 // pred_region
          %s9051 = sand.u32 %s230, 1
          %s9052 = scalar_lea.sflag [#allocation5], %s9051
          %s9053 = sand.u32 %s230, 1
          %s9054 = scalar_lea.vmem [#allocation15], %s9053
          %9055 = dma.done %s9052, 16
        $region96: #{forward.1} parent=91 // pred_fallthru
          _
      $region92: #{forward.1} parent=5 // pred_fallthru
        _
    $region6: #{forward.1} parent=1 // loop_footer
      %s26 = sadd.s32 1, %s22
    $region7: #{forward.1} parent=1 // loop_footer_branch
      %21 = sbr.rel target = $region3
    $region8: #{forward.1} parent=1 // loop_exit
      _
    %9056 = vsyncpa [#allocation4], 1
    %s9057 = scalar_lea.sflag [#allocation4], 1
    %9058 = vsyncpa %s9057, 1
    %9059 = vsyncpa [#allocation7], 1
    %9060 = vsyncpa [#allocation10], 1
    %9061 = vsyncpa [#allocation13], 1
    %9062 = vsyncpa [#allocation5], 1
    %s9063 = scalar_lea.sflag [#allocation5], 1
    %9064 = vsyncpa %s9063, 1

</llo_original>
